<compile_context>
chip_gen: v7x
topology: tpu7x:2x2x1
jax: 0.10.0
libtpu: 0.0.40
codegen_flags: <defaults>
</compile_context>

<pallas_src>
import jax
import jax.numpy as jnp
from jax.experimental import pallas as pl
from jax.experimental.pallas import tpu as pltpu

BN_EPS = 1e-5
K_IN = 28 * 28        # 784
K_PAD = 896           # 7 * 128 lane-aligned K for the first matmul
H = 512
N_OUT = 10
N_PAD = 128           # lane-dense output width


def _bn_relu_f32(h, gamma, beta):
    # Training-mode BatchNorm1d (batch mean, biased variance, eps=1e-5) fused
    # with ReLU. Stats in f32; apply folded into one scale + one shift.
    # Single-pass E[h^2]-E[h]^2 with a clamp at 0; h comes out of a zero-ish
    # mean matmul so cancellation is benign at these scales.
    inv_b = 1.0 / h.shape[0]
    mean = jnp.sum(h, axis=0, keepdims=True) * inv_b
    mean_sq = jnp.sum(h * h, axis=0, keepdims=True) * inv_b
    var = jnp.maximum(mean_sq - mean * mean, 0.0)
    a = gamma * jax.lax.rsqrt(var + BN_EPS)      # (1, H) scale
    c = beta - mean * a                          # (1, H) shift
    return jnp.maximum(h * a + c, 0.0)


def mlp_kernel(x_ref, w1_ref, w2_ref, w3_ref, aux_ref, out_ref):
    # x:   (B, 896)  bf16   (K zero-padded 784 -> 896)
    # w1:  (896,512) bf16
    # w2:  (512,512) bf16
    # w3:  (512,128) bf16   (N zero-padded 10 -> 128)
    # aux: (8, 512)  f32 rows = [g1, be1, g2, be2, b3(padded to 512), 0, 0, 0]
    # out: (B, 128)  f32    (lane-dense stores; columns >= 10 are exact zeros + b3 pad)
    aux = aux_ref[...]
    g1, be1 = aux[0:1, :], aux[1:2, :]
    g2, be2 = aux[2:3, :], aux[3:4, :]
    b3 = aux[4:5, 0:N_PAD]

    x = x_ref[...]

    # Layer 1: Linear (bias omitted -- cancels under train-mode BN) + BN + ReLU
    h = jnp.dot(x, w1_ref[...], preferred_element_type=jnp.float32)
    h = _bn_relu_f32(h, g1, be1)

    # Layer 2: Linear (bias omitted) + BN + ReLU; re-cast to bf16 only for the MXU
    h = jnp.dot(h.astype(jnp.bfloat16), w2_ref[...],
                preferred_element_type=jnp.float32)
    h = _bn_relu_f32(h, g2, be2)

    # Layer 3: Linear(512 -> 128 padded)
    out_ref[...] = jnp.dot(h.astype(jnp.bfloat16), w3_ref[...],
                           preferred_element_type=jnp.float32) + b3


@jax.jit
def net_forward(x_nchw, params):
    B = x_nchw.shape[0]
    # Flatten, cast to bf16 BEFORE padding (halves the bytes written), then
    # lane-pad K 784 -> 896.
    x = x_nchw.reshape(B, -1).astype(jnp.bfloat16)
    x = jnp.pad(x, ((0, 0), (0, K_PAD - K_IN)))

    vmem = pl.BlockSpec(memory_space=pltpu.MemorySpace.VMEM)
    out_pad = pl.pallas_call(
        mlp_kernel,
        out_shape=jax.ShapeDtypeStruct((B, N_PAD), jnp.float32),
        in_specs=[vmem] * 5,
        out_specs=vmem,
    )(x, params["w1"], params["w2"], params["w3"], params["aux"])
    return out_pad[:, :N_OUT]


def init_params(key):
    # PyTorch-default init: U(-1/sqrt(fan_in), 1/sqrt(fan_in)); BN gamma=1, beta=0.
    ks = jax.random.split(key, 6)

    def lin(kw, kb, fan_in, fan_out):
        bound = 1.0 / (fan_in ** 0.5)
        w = jax.random.uniform(kw, (fan_in, fan_out), jnp.float32, -bound, bound)
        b = jax.random.uniform(kb, (fan_out,), jnp.float32, -bound, bound)
        return w, b

    # b1/b2 are generated (to match PyTorch's RNG usage) but intentionally not
    # used: constant biases before training-mode BatchNorm are exact no-ops.
    w1, _b1 = lin(ks[0], ks[1], K_IN, H)
    w2, _b2 = lin(ks[2], ks[3], H, H)
    w3, b3 = lin(ks[4], ks[5], H, N_OUT)

    # Zero-pad w1 along K (784->896) and w3 along N (10->128); store weights bf16.
    w1p = jnp.pad(w1, ((0, K_PAD - K_IN), (0, 0))).astype(jnp.bfloat16)
    w3p = jnp.pad(w3, ((0, 0), (0, N_PAD - N_OUT))).astype(jnp.bfloat16)

    ones = jnp.ones((H,), jnp.float32)
    zeros = jnp.zeros((H,), jnp.float32)
    b3_row = zeros.at[:N_OUT].set(b3)
    aux = jnp.stack([ones, zeros,              # BN1 gamma, beta
                     ones, zeros,              # BN2 gamma, beta
                     b3_row,                   # layer-3 bias (padded to 512)
                     zeros, zeros, zeros],     # filler to 8 sublanes
                    axis=0)
    return {
        "w1": w1p,
        "w2": w2.astype(jnp.bfloat16),
        "w3": w3p,
        "aux": aux.astype(jnp.float32),        # (8, 512) single small f32 DMA
    }


def net_forward_ref(x_nchw, p):
    # Pure-JAX reference mirroring the kernel's numerics (bf16 MXU inputs,
    # f32 accumulation, f32 folded BN math).
    B = x_nchw.shape[0]
    x = x_nchw.reshape(B, -1).astype(jnp.bfloat16)
    x = jnp.pad(x, ((0, 0), (0, K_PAD - K_IN)))
    aux = p["aux"]
    g1, be1 = aux[0:1, :], aux[1:2, :]
    g2, be2 = aux[2:3, :], aux[3:4, :]
    b3 = aux[4:5, 0:N_PAD]

    h = jnp.dot(x, p["w1"], preferred_element_type=jnp.float32)
    h = _bn_relu_f32(h, g1, be1)
    h = jnp.dot(h.astype(jnp.bfloat16), p["w2"],
                preferred_element_type=jnp.float32)
    h = _bn_relu_f32(h, g2, be2)
    out = jnp.dot(h.astype(jnp.bfloat16), p["w3"],
                  preferred_element_type=jnp.float32) + b3
    return out[:, :N_OUT]


if __name__ == "__main__":
    key = jax.random.PRNGKey(0)
    k_params, k_x = jax.random.split(key)
    params = init_params(k_params)

    # MNIST-like input implied by Flatten + Linear(28*28, ...).
    # B=256: multiple of 256 (v6e/v7x MXU rows) and 128 (v5e); amortizes the
    # ~1.6 MB weight DMA while keeping the whole batch VMEM-resident (~3 MB).
    B = 256
    x = jax.random.normal(k_x, (B, 1, 28, 28), jnp.float32)

    out = jax.block_until_ready(net_forward(x, params))
    ref = net_forward_ref(x, params)

    assert out.shape == (B, N_OUT)
    assert jnp.allclose(out, ref, atol=5e-3, rtol=5e-3)

    print("KERNEL_OK")
</pallas_src>

<mosaic_0001>
module attributes {stable_mosaic.version = 11 : i64} {
  func.func @mlp_kernel(%arg0: memref<256x896xbf16, #tpu.memory_space<vmem>>, %arg1: memref<896x512xbf16, #tpu.memory_space<vmem>>, %arg2: memref<512x512xbf16, #tpu.memory_space<vmem>>, %arg3: memref<512x128xbf16, #tpu.memory_space<vmem>>, %arg4: memref<8x512xf32, #tpu.memory_space<vmem>>, %arg5: memref<256x128xf32, #tpu.memory_space<vmem>>) attributes {dimension_semantics = [], scalar_prefetch = 0 : i64, scratch_operands = 0 : i64, tpu.core_type = #tpu.core_type<tc>} {
    %c0 = arith.constant 0 : index
    %c0_0 = arith.constant 0 : index
    %0 = vector.load %arg4[%c0, %c0_0] : memref<8x512xf32, #tpu.memory_space<vmem>>, vector<8x512xf32>
    %1 = vector.extract_strided_slice %0 {offsets = [0, 0], sizes = [1, 512], strides = [1, 1]} : vector<8x512xf32> to vector<1x512xf32>
    %2 = vector.extract_strided_slice %0 {offsets = [1, 0], sizes = [1, 512], strides = [1, 1]} : vector<8x512xf32> to vector<1x512xf32>
    %3 = vector.extract_strided_slice %0 {offsets = [2, 0], sizes = [1, 512], strides = [1, 1]} : vector<8x512xf32> to vector<1x512xf32>
    %4 = vector.extract_strided_slice %0 {offsets = [3, 0], sizes = [1, 512], strides = [1, 1]} : vector<8x512xf32> to vector<1x512xf32>
    %5 = vector.extract_strided_slice %0 {offsets = [4, 0], sizes = [1, 128], strides = [1, 1]} : vector<8x512xf32> to vector<1x128xf32>
    %c0_1 = arith.constant 0 : index
    %c0_2 = arith.constant 0 : index
    %6 = vector.load %arg0[%c0_1, %c0_2] : memref<256x896xbf16, #tpu.memory_space<vmem>>, vector<256x896xbf16>
    %c0_3 = arith.constant 0 : index
    %c0_4 = arith.constant 0 : index
    %7 = vector.load %arg1[%c0_3, %c0_4] : memref<896x512xbf16, #tpu.memory_space<vmem>>, vector<896x512xbf16>
    %cst = arith.constant dense<0.000000e+00> : vector<256x512xf32>
    %8 = tpu.matmul %6, %7, %cst {dimension_numbers = #tpu.dot_dimension_numbers<[1], [0], [0], [1], [0, 0, 1, 1], [], []>} : vector<256x896xbf16>, vector<896x512xbf16>, vector<256x512xf32> -> vector<256x512xf32>
    %cst_5 = arith.constant dense<0.000000e+00> : vector<512xf32>
    %9 = vector.multi_reduction <add>, %8, %cst_5 [0] : vector<256x512xf32> to vector<512xf32>
    %10 = vector.shape_cast %9 : vector<512xf32> to vector<1x512xf32>
    %cst_6 = arith.constant 3.906250e-03 : f32
    %11 = vector.broadcast %cst_6 : f32 to vector<1x512xf32>
    %12 = arith.mulf %10, %11 : vector<1x512xf32>
    %13 = arith.mulf %8, %8 : vector<256x512xf32>
    %cst_7 = arith.constant dense<0.000000e+00> : vector<512xf32>
    %14 = vector.multi_reduction <add>, %13, %cst_7 [0] : vector<256x512xf32> to vector<512xf32>
    %15 = vector.shape_cast %14 : vector<512xf32> to vector<1x512xf32>
    %cst_8 = arith.constant 3.906250e-03 : f32
    %16 = vector.broadcast %cst_8 : f32 to vector<1x512xf32>
    %17 = arith.mulf %15, %16 : vector<1x512xf32>
    %18 = arith.mulf %12, %12 : vector<1x512xf32>
    %19 = arith.subf %17, %18 : vector<1x512xf32>
    %cst_9 = arith.constant 0.000000e+00 : f32
    %20 = vector.broadcast %cst_9 : f32 to vector<1x512xf32>
    %21 = arith.maximumf %19, %20 : vector<1x512xf32>
    %cst_10 = arith.constant 9.99999974E-6 : f32
    %22 = vector.broadcast %cst_10 : f32 to vector<1x512xf32>
    %23 = arith.addf %21, %22 : vector<1x512xf32>
    %24 = math.rsqrt %23 : vector<1x512xf32>
    %25 = arith.mulf %1, %24 : vector<1x512xf32>
    %26 = arith.mulf %12, %25 : vector<1x512xf32>
    %27 = arith.subf %2, %26 : vector<1x512xf32>
    %28 = vector.broadcast %25 : vector<1x512xf32> to vector<256x512xf32>
    %29 = arith.mulf %8, %28 : vector<256x512xf32>
    %30 = vector.broadcast %27 : vector<1x512xf32> to vector<256x512xf32>
    %31 = arith.addf %29, %30 : vector<256x512xf32>
    %cst_11 = arith.constant 0.000000e+00 : f32
    %32 = vector.broadcast %cst_11 : f32 to vector<256x512xf32>
    %33 = arith.maximumf %31, %32 : vector<256x512xf32>
    %34 = arith.truncf %33 : vector<256x512xf32> to vector<256x512xbf16>
    %c0_12 = arith.constant 0 : index
    %c0_13 = arith.constant 0 : index
    %35 = vector.load %arg2[%c0_12, %c0_13] : memref<512x512xbf16, #tpu.memory_space<vmem>>, vector<512x512xbf16>
    %cst_14 = arith.constant dense<0.000000e+00> : vector<256x512xf32>
    %36 = tpu.matmul %34, %35, %cst_14 {dimension_numbers = #tpu.dot_dimension_numbers<[1], [0], [0], [1], [0, 0, 1, 1], [], []>} : vector<256x512xbf16>, vector<512x512xbf16>, vector<256x512xf32> -> vector<256x512xf32>
    %cst_15 = arith.constant dense<0.000000e+00> : vector<512xf32>
    %37 = vector.multi_reduction <add>, %36, %cst_15 [0] : vector<256x512xf32> to vector<512xf32>
    %38 = vector.shape_cast %37 : vector<512xf32> to vector<1x512xf32>
    %cst_16 = arith.constant 3.906250e-03 : f32
    %39 = vector.broadcast %cst_16 : f32 to vector<1x512xf32>
    %40 = arith.mulf %38, %39 : vector<1x512xf32>
    %41 = arith.mulf %36, %36 : vector<256x512xf32>
    %cst_17 = arith.constant dense<0.000000e+00> : vector<512xf32>
    %42 = vector.multi_reduction <add>, %41, %cst_17 [0] : vector<256x512xf32> to vector<512xf32>
    %43 = vector.shape_cast %42 : vector<512xf32> to vector<1x512xf32>
    %cst_18 = arith.constant 3.906250e-03 : f32
    %44 = vector.broadcast %cst_18 : f32 to vector<1x512xf32>
    %45 = arith.mulf %43, %44 : vector<1x512xf32>
    %46 = arith.mulf %40, %40 : vector<1x512xf32>
    %47 = arith.subf %45, %46 : vector<1x512xf32>
    %cst_19 = arith.constant 0.000000e+00 : f32
    %48 = vector.broadcast %cst_19 : f32 to vector<1x512xf32>
    %49 = arith.maximumf %47, %48 : vector<1x512xf32>
    %cst_20 = arith.constant 9.99999974E-6 : f32
    %50 = vector.broadcast %cst_20 : f32 to vector<1x512xf32>
    %51 = arith.addf %49, %50 : vector<1x512xf32>
    %52 = math.rsqrt %51 : vector<1x512xf32>
    %53 = arith.mulf %3, %52 : vector<1x512xf32>
    %54 = arith.mulf %40, %53 : vector<1x512xf32>
    %55 = arith.subf %4, %54 : vector<1x512xf32>
    %56 = vector.broadcast %53 : vector<1x512xf32> to vector<256x512xf32>
    %57 = arith.mulf %36, %56 : vector<256x512xf32>
    %58 = vector.broadcast %55 : vector<1x512xf32> to vector<256x512xf32>
    %59 = arith.addf %57, %58 : vector<256x512xf32>
    %cst_21 = arith.constant 0.000000e+00 : f32
    %60 = vector.broadcast %cst_21 : f32 to vector<256x512xf32>
    %61 = arith.maximumf %59, %60 : vector<256x512xf32>
    %62 = arith.truncf %61 : vector<256x512xf32> to vector<256x512xbf16>
    %c0_22 = arith.constant 0 : index
    %c0_23 = arith.constant 0 : index
    %63 = vector.load %arg3[%c0_22, %c0_23] : memref<512x128xbf16, #tpu.memory_space<vmem>>, vector<512x128xbf16>
    %cst_24 = arith.constant dense<0.000000e+00> : vector<256x128xf32>
    %64 = tpu.matmul %62, %63, %cst_24 {dimension_numbers = #tpu.dot_dimension_numbers<[1], [0], [0], [1], [0, 0, 1, 1], [], []>} : vector<256x512xbf16>, vector<512x128xbf16>, vector<256x128xf32> -> vector<256x128xf32>
    %65 = vector.broadcast %5 : vector<1x128xf32> to vector<256x128xf32>
    %66 = arith.addf %64, %65 : vector<256x128xf32>
    %c0_25 = arith.constant 0 : index
    %c0_26 = arith.constant 0 : index
    %67 = vector.load %arg5[%c0_25, %c0_26] : memref<256x128xf32, #tpu.memory_space<vmem>>, vector<256x128xf32>
    tpu.vector_store %arg5[%c0_25, %c0_26], %66 {strides = array<i32>} : memref<256x128xf32, #tpu.memory_space<vmem>>, vector<256x128xf32>,
    return
  }
}

</mosaic_0001>

<llo_original>
// kernel: net_forward.1
$region0: #{net_forward.1}
  #allocation0 [shape = 'u32[]', space=smem, size = 0x4, offset = 0x4, fixed_abs, tag = 'smem constant byte address 0x4 - core index']
  #allocation1 [shape = 'u32[144,128]{1,0:T(1,128)}', space=vmem, size = 0x12000, scoped, tag = 'internal scratch']
  %s0 = inlined_call_operand.vmem [shape: bf16[256,896], index: 0, kind: input, shape index: {}]
  %s1 = inlined_call_operand.vmem [shape: bf16[896,512], index: 1, kind: input, shape index: {}]
  %s2 = inlined_call_operand.vmem [shape: bf16[512,512], index: 2, kind: input, shape index: {}]
  %s3 = inlined_call_operand.vmem [shape: bf16[512,128], index: 3, kind: input, shape index: {}]
  %s4 = inlined_call_operand.vmem [shape: f32[8,512], index: 4, kind: input, shape index: {}]
  %s5 = inlined_call_operand.vmem [shape: f32[256,128], index: 5, kind: output, shape index: {}]
  %s6 = sld [smem:[#allocation0]]
  $region30: #{net_forward.1} parent=0
    _
  %s8 = ssub.s32 1, %s6
  %s9 = scalar_select 0, %s8, %s6
  // Predicated region
  $region2: #{net_forward.1} parent=0 // pred_check
    _
  $region3: #{net_forward.1} parent=0 // pred_check_branch
    %11 = sbr.rel (0) target = $region5
  $region4: #{net_forward.1} parent=0 // pred_region
    _
  $region5: #{net_forward.1} parent=0 // pred_fallthru
    _
  // Predicated region
  $region6: #{net_forward.1} parent=0 // pred_check
    _
  $region7: #{net_forward.1} parent=0 // pred_check_branch
    %13 = sbr.rel (0) target = $region9
  $region8: #{net_forward.1} parent=0 // pred_region
    _
  $region9: #{net_forward.1} parent=0 // pred_fallthru
    _
  // Predicated region
  $region10: #{net_forward.1} parent=0 // pred_check
    _
  $region11: #{net_forward.1} parent=0 // pred_check_branch
    %15 = sbr.rel (0) target = $region13
  $region12: #{net_forward.1} parent=0 // pred_region
    _
  $region13: #{net_forward.1} parent=0 // pred_fallthru
    _
  // Predicated region
  $region14: #{net_forward.1} parent=0 // pred_check
    _
  $region15: #{net_forward.1} parent=0 // pred_check_branch
    %17 = sbr.rel (0) target = $region17
  $region16: #{net_forward.1} parent=0 // pred_region
    _
  $region17: #{net_forward.1} parent=0 // pred_fallthru
    _
  // Predicated region
  $region18: #{net_forward.1} parent=0 // pred_check
    _
  $region19: #{net_forward.1} parent=0 // pred_check_branch
    %19 = sbr.rel (0) target = $region21
  $region20: #{net_forward.1} parent=0 // pred_region
    _
  $region21: #{net_forward.1} parent=0 // pred_fallthru
    _
  %v21 = vld [vmem:[%s4] sm:$0xff]
  %v22 = vld [vmem:[%s4 + $0x8] sm:$0xff]
  %v23 = vld [vmem:[%s4 + $0x10] sm:$0xff]
  %v24 = vld [vmem:[%s4 + $0x18] sm:$0xff]
  %v25 = vld [vmem:[%s0] sm:$0xff]
  %v26 = vld [vmem:[%s0 + $0x8] sm:$0xff]
  %v27 = vld [vmem:[%s0 + $0x10] sm:$0xff]
  %v28 = vld [vmem:[%s0 + $0x18] sm:$0xf]
  %v29 = vld [vmem:[%s0 + $0x1c] sm:$0xff]
  %v30 = vld [vmem:[%s0 + $0x24] sm:$0xff]
  %v31 = vld [vmem:[%s0 + $0x2c] sm:$0xff]
  %v32 = vld [vmem:[%s0 + $0x34] sm:$0xf]
  %v33 = vld [vmem:[%s0 + $0x38] sm:$0xff]
  %v34 = vld [vmem:[%s0 + $0x40] sm:$0xff]
  %v35 = vld [vmem:[%s0 + $0x48] sm:$0xff]
  %v36 = vld [vmem:[%s0 + $0x50] sm:$0xf]
  %v37 = vld [vmem:[%s0 + $0x54] sm:$0xff]
  %v38 = vld [vmem:[%s0 + $0x5c] sm:$0xff]
  %v39 = vld [vmem:[%s0 + $0x64] sm:$0xff]
  %v40 = vld [vmem:[%s0 + $0x6c] sm:$0xf]
  %v41 = vld [vmem:[%s0 + $0x70] sm:$0xff]
  %v42 = vld [vmem:[%s0 + $0x78] sm:$0xff]
  %v43 = vld [vmem:[%s0 + $0x80] sm:$0xff]
  %v44 = vld [vmem:[%s0 + $0x88] sm:$0xf]
  %v45 = vld [vmem:[%s0 + $0x8c] sm:$0xff]
  %v46 = vld [vmem:[%s0 + $0x94] sm:$0xff]
  %v47 = vld [vmem:[%s0 + $0x9c] sm:$0xff]
  %v48 = vld [vmem:[%s0 + $0xa4] sm:$0xf]
  %v49 = vld [vmem:[%s0 + $0xa8] sm:$0xff]
  %v50 = vld [vmem:[%s0 + $0xb0] sm:$0xff]
  %v51 = vld [vmem:[%s0 + $0xb8] sm:$0xff]
  %v52 = vld [vmem:[%s0 + $0xc0] sm:$0xf]
  %v53 = vld [vmem:[%s0 + $0xc4] sm:$0xff]
  %v54 = vld [vmem:[%s0 + $0xcc] sm:$0xff]
  %v55 = vld [vmem:[%s0 + $0xd4] sm:$0xff]
  %v56 = vld [vmem:[%s0 + $0xdc] sm:$0xf]
  %v57 = vld [vmem:[%s0 + $0xe0] sm:$0xff]
  %v58 = vld [vmem:[%s0 + $0xe8] sm:$0xff]
  %v59 = vld [vmem:[%s0 + $0xf0] sm:$0xff]
  %v60 = vld [vmem:[%s0 + $0xf8] sm:$0xf]
  %v61 = vld [vmem:[%s0 + $0xfc] sm:$0xff]
  %v62 = vld [vmem:[%s0 + $0x104] sm:$0xff]
  %v63 = vld [vmem:[%s0 + $0x10c] sm:$0xff]
  %v64 = vld [vmem:[%s0 + $0x114] sm:$0xf]
  %v65 = vld [vmem:[%s0 + $0x118] sm:$0xff]
  %v66 = vld [vmem:[%s0 + $0x120] sm:$0xff]
  %v67 = vld [vmem:[%s0 + $0x128] sm:$0xff]
  %v68 = vld [vmem:[%s0 + $0x130] sm:$0xf]
  %v69 = vld [vmem:[%s0 + $0x134] sm:$0xff]
  %v70 = vld [vmem:[%s0 + $0x13c] sm:$0xff]
  %v71 = vld [vmem:[%s0 + $0x144] sm:$0xff]
  %v72 = vld [vmem:[%s0 + $0x14c] sm:$0xf]
  %v73 = vld [vmem:[%s0 + $0x150] sm:$0xff]
  %v74 = vld [vmem:[%s0 + $0x158] sm:$0xff]
  %v75 = vld [vmem:[%s0 + $0x160] sm:$0xff]
  %v76 = vld [vmem:[%s0 + $0x168] sm:$0xf]
  %v77 = vld [vmem:[%s0 + $0x16c] sm:$0xff]
  %v78 = vld [vmem:[%s0 + $0x174] sm:$0xff]
  %v79 = vld [vmem:[%s0 + $0x17c] sm:$0xff]
  %v80 = vld [vmem:[%s0 + $0x184] sm:$0xf]
  %v81 = vld [vmem:[%s0 + $0x188] sm:$0xff]
  %v82 = vld [vmem:[%s0 + $0x190] sm:$0xff]
  %v83 = vld [vmem:[%s0 + $0x198] sm:$0xff]
  %v84 = vld [vmem:[%s0 + $0x1a0] sm:$0xf]
  %v85 = vld [vmem:[%s0 + $0x1a4] sm:$0xff]
  %v86 = vld [vmem:[%s0 + $0x1ac] sm:$0xff]
  %v87 = vld [vmem:[%s0 + $0x1b4] sm:$0xff]
  %v88 = vld [vmem:[%s0 + $0x1bc] sm:$0xf]
  %v89 = vld [vmem:[%s0 + $0x1c0] sm:$0xff]
  %v90 = vld [vmem:[%s0 + $0x1c8] sm:$0xff]
  %v91 = vld [vmem:[%s0 + $0x1d0] sm:$0xff]
  %v92 = vld [vmem:[%s0 + $0x1d8] sm:$0xf]
  %v93 = vld [vmem:[%s0 + $0x1dc] sm:$0xff]
  %v94 = vld [vmem:[%s0 + $0x1e4] sm:$0xff]
  %v95 = vld [vmem:[%s0 + $0x1ec] sm:$0xff]
  %v96 = vld [vmem:[%s0 + $0x1f4] sm:$0xf]
  %v97 = vld [vmem:[%s0 + $0x1f8] sm:$0xff]
  %v98 = vld [vmem:[%s0 + $0x200] sm:$0xff]
  %v99 = vld [vmem:[%s0 + $0x208] sm:$0xff]
  %v100 = vld [vmem:[%s0 + $0x210] sm:$0xf]
  %v101 = vld [vmem:[%s0 + $0x214] sm:$0xff]
  %v102 = vld [vmem:[%s0 + $0x21c] sm:$0xff]
  %v103 = vld [vmem:[%s0 + $0x224] sm:$0xff]
  %v104 = vld [vmem:[%s0 + $0x22c] sm:$0xf]
  %v105 = vld [vmem:[%s0 + $0x230] sm:$0xff]
  %v106 = vld [vmem:[%s0 + $0x238] sm:$0xff]
  %v107 = vld [vmem:[%s0 + $0x240] sm:$0xff]
  %v108 = vld [vmem:[%s0 + $0x248] sm:$0xf]
  %v109 = vld [vmem:[%s0 + $0x24c] sm:$0xff]
  %v110 = vld [vmem:[%s0 + $0x254] sm:$0xff]
  %v111 = vld [vmem:[%s0 + $0x25c] sm:$0xff]
  %v112 = vld [vmem:[%s0 + $0x264] sm:$0xf]
  %v113 = vld [vmem:[%s0 + $0x268] sm:$0xff]
  %v114 = vld [vmem:[%s0 + $0x270] sm:$0xff]
  %v115 = vld [vmem:[%s0 + $0x278] sm:$0xff]
  %v116 = vld [vmem:[%s0 + $0x280] sm:$0xf]
  %v117 = vld [vmem:[%s0 + $0x284] sm:$0xff]
  %v118 = vld [vmem:[%s0 + $0x28c] sm:$0xff]
  %v119 = vld [vmem:[%s0 + $0x294] sm:$0xff]
  %v120 = vld [vmem:[%s0 + $0x29c] sm:$0xf]
  %v121 = vld [vmem:[%s0 + $0x2a0] sm:$0xff]
  %v122 = vld [vmem:[%s0 + $0x2a8] sm:$0xff]
  %v123 = vld [vmem:[%s0 + $0x2b0] sm:$0xff]
  %v124 = vld [vmem:[%s0 + $0x2b8] sm:$0xf]
  %v125 = vld [vmem:[%s0 + $0x2bc] sm:$0xff]
  %v126 = vld [vmem:[%s0 + $0x2c4] sm:$0xff]
  %v127 = vld [vmem:[%s0 + $0x2cc] sm:$0xff]
  %v128 = vld [vmem:[%s0 + $0x2d4] sm:$0xf]
  %v129 = vld [vmem:[%s0 + $0x2d8] sm:$0xff]
  %v130 = vld [vmem:[%s0 + $0x2e0] sm:$0xff]
  %v131 = vld [vmem:[%s0 + $0x2e8] sm:$0xff]
  %v132 = vld [vmem:[%s0 + $0x2f0] sm:$0xf]
  %v133 = vld [vmem:[%s0 + $0x2f4] sm:$0xff]
  %v134 = vld [vmem:[%s0 + $0x2fc] sm:$0xff]
  %v135 = vld [vmem:[%s0 + $0x304] sm:$0xff]
  %v136 = vld [vmem:[%s0 + $0x30c] sm:$0xf]
  %v137 = vld [vmem:[%s0 + $0x310] sm:$0xff]
  %v138 = vld [vmem:[%s0 + $0x318] sm:$0xff]
  %v139 = vld [vmem:[%s0 + $0x320] sm:$0xff]
  %v140 = vld [vmem:[%s0 + $0x328] sm:$0xf]
  %v141 = vld [vmem:[%s0 + $0x32c] sm:$0xff]
  %v142 = vld [vmem:[%s0 + $0x334] sm:$0xff]
  %v143 = vld [vmem:[%s0 + $0x33c] sm:$0xff]
  %v144 = vld [vmem:[%s0 + $0x344] sm:$0xf]
  %v145 = vld [vmem:[%s0 + $0x348] sm:$0xff]
  %v146 = vld [vmem:[%s0 + $0x350] sm:$0xff]
  %v147 = vld [vmem:[%s0 + $0x358] sm:$0xff]
  %v148 = vld [vmem:[%s0 + $0x360] sm:$0xf]
  %v149 = vld [vmem:[%s0 + $0x364] sm:$0xff]
  %v150 = vld [vmem:[%s0 + $0x36c] sm:$0xff]
  %v151 = vld [vmem:[%s0 + $0x374] sm:$0xff]
  %v152 = vld [vmem:[%s0 + $0x37c] sm:$0xf]
  %v153 = vld [vmem:[%s1] sm:$0xff]
  %v154 = vld [vmem:[%s1 + $0x8] sm:$0xff]
  %v155 = vld [vmem:[%s1 + $0x10] sm:$0xff]
  %v156 = vld [vmem:[%s1 + $0x18] sm:$0xff]
  %v157 = vld [vmem:[%s1 + $0x20] sm:$0xff]
  %v158 = vld [vmem:[%s1 + $0x28] sm:$0xff]
  %v159 = vld [vmem:[%s1 + $0x30] sm:$0xff]
  %v160 = vld [vmem:[%s1 + $0x38] sm:$0xff]
  %v161 = vld [vmem:[%s1 + $0x40] sm:$0xff]
  %v162 = vld [vmem:[%s1 + $0x48] sm:$0xff]
  %v163 = vld [vmem:[%s1 + $0x50] sm:$0xff]
  %v164 = vld [vmem:[%s1 + $0x58] sm:$0xff]
  %v165 = vld [vmem:[%s1 + $0x60] sm:$0xff]
  %v166 = vld [vmem:[%s1 + $0x68] sm:$0xff]
  %v167 = vld [vmem:[%s1 + $0x70] sm:$0xff]
  %v168 = vld [vmem:[%s1 + $0x78] sm:$0xff]
  %v169 = vld [vmem:[%s1 + $0x80] sm:$0xff]
  %v170 = vld [vmem:[%s1 + $0x88] sm:$0xff]
  %v171 = vld [vmem:[%s1 + $0x90] sm:$0xff]
  %v172 = vld [vmem:[%s1 + $0x98] sm:$0xff]
  %v173 = vld [vmem:[%s1 + $0xa0] sm:$0xff]
  %v174 = vld [vmem:[%s1 + $0xa8] sm:$0xff]
  %v175 = vld [vmem:[%s1 + $0xb0] sm:$0xff]
  %v176 = vld [vmem:[%s1 + $0xb8] sm:$0xff]
  %v177 = vld [vmem:[%s1 + $0xc0] sm:$0xff]
  %v178 = vld [vmem:[%s1 + $0xc8] sm:$0xff]
  %v179 = vld [vmem:[%s1 + $0xd0] sm:$0xff]
  %v180 = vld [vmem:[%s1 + $0xd8] sm:$0xff]
  %v181 = vld [vmem:[%s1 + $0xe0] sm:$0xff]
  %v182 = vld [vmem:[%s1 + $0xe8] sm:$0xff]
  %v183 = vld [vmem:[%s1 + $0xf0] sm:$0xff]
  %v184 = vld [vmem:[%s1 + $0xf8] sm:$0xff]
  %v185 = vld [vmem:[%s1 + $0x100] sm:$0xff]
  %v186 = vld [vmem:[%s1 + $0x108] sm:$0xff]
  %v187 = vld [vmem:[%s1 + $0x110] sm:$0xff]
  %v188 = vld [vmem:[%s1 + $0x118] sm:$0xff]
  %v189 = vld [vmem:[%s1 + $0x120] sm:$0xff]
  %v190 = vld [vmem:[%s1 + $0x128] sm:$0xff]
  %v191 = vld [vmem:[%s1 + $0x130] sm:$0xff]
  %v192 = vld [vmem:[%s1 + $0x138] sm:$0xff]
  %v193 = vld [vmem:[%s1 + $0x140] sm:$0xff]
  %v194 = vld [vmem:[%s1 + $0x148] sm:$0xff]
  %v195 = vld [vmem:[%s1 + $0x150] sm:$0xff]
  %v196 = vld [vmem:[%s1 + $0x158] sm:$0xff]
  %v197 = vld [vmem:[%s1 + $0x160] sm:$0xff]
  %v198 = vld [vmem:[%s1 + $0x168] sm:$0xff]
  %v199 = vld [vmem:[%s1 + $0x170] sm:$0xff]
  %v200 = vld [vmem:[%s1 + $0x178] sm:$0xff]
  %v201 = vld [vmem:[%s1 + $0x180] sm:$0xff]
  %v202 = vld [vmem:[%s1 + $0x188] sm:$0xff]
  %v203 = vld [vmem:[%s1 + $0x190] sm:$0xff]
  %v204 = vld [vmem:[%s1 + $0x198] sm:$0xff]
  %v205 = vld [vmem:[%s1 + $0x1a0] sm:$0xff]
  %v206 = vld [vmem:[%s1 + $0x1a8] sm:$0xff]
  %v207 = vld [vmem:[%s1 + $0x1b0] sm:$0xff]
  %v208 = vld [vmem:[%s1 + $0x1b8] sm:$0xff]
  %v209 = vld [vmem:[%s1 + $0x1c0] sm:$0xff]
  %v210 = vld [vmem:[%s1 + $0x1c8] sm:$0xff]
  %v211 = vld [vmem:[%s1 + $0x1d0] sm:$0xff]
  %v212 = vld [vmem:[%s1 + $0x1d8] sm:$0xff]
  %v213 = vld [vmem:[%s1 + $0x1e0] sm:$0xff]
  %v214 = vld [vmem:[%s1 + $0x1e8] sm:$0xff]
  %v215 = vld [vmem:[%s1 + $0x1f0] sm:$0xff]
  %v216 = vld [vmem:[%s1 + $0x1f8] sm:$0xff]
  %v217 = vld [vmem:[%s1 + $0x200] sm:$0xff]
  %v218 = vld [vmem:[%s1 + $0x208] sm:$0xff]
  %v219 = vld [vmem:[%s1 + $0x210] sm:$0xff]
  %v220 = vld [vmem:[%s1 + $0x218] sm:$0xff]
  %v221 = vld [vmem:[%s1 + $0x220] sm:$0xff]
  %v222 = vld [vmem:[%s1 + $0x228] sm:$0xff]
  %v223 = vld [vmem:[%s1 + $0x230] sm:$0xff]
  %v224 = vld [vmem:[%s1 + $0x238] sm:$0xff]
  %v225 = vld [vmem:[%s1 + $0x240] sm:$0xff]
  %v226 = vld [vmem:[%s1 + $0x248] sm:$0xff]
  %v227 = vld [vmem:[%s1 + $0x250] sm:$0xff]
  %v228 = vld [vmem:[%s1 + $0x258] sm:$0xff]
  %v229 = vld [vmem:[%s1 + $0x260] sm:$0xff]
  %v230 = vld [vmem:[%s1 + $0x268] sm:$0xff]
  %v231 = vld [vmem:[%s1 + $0x270] sm:$0xff]
  %v232 = vld [vmem:[%s1 + $0x278] sm:$0xff]
  %v233 = vld [vmem:[%s1 + $0x280] sm:$0xff]
  %v234 = vld [vmem:[%s1 + $0x288] sm:$0xff]
  %v235 = vld [vmem:[%s1 + $0x290] sm:$0xff]
  %v236 = vld [vmem:[%s1 + $0x298] sm:$0xff]
  %v237 = vld [vmem:[%s1 + $0x2a0] sm:$0xff]
  %v238 = vld [vmem:[%s1 + $0x2a8] sm:$0xff]
  %v239 = vld [vmem:[%s1 + $0x2b0] sm:$0xff]
  %v240 = vld [vmem:[%s1 + $0x2b8] sm:$0xff]
  %v241 = vld [vmem:[%s1 + $0x2c0] sm:$0xff]
  %v242 = vld [vmem:[%s1 + $0x2c8] sm:$0xff]
  %v243 = vld [vmem:[%s1 + $0x2d0] sm:$0xff]
  %v244 = vld [vmem:[%s1 + $0x2d8] sm:$0xff]
  %v245 = vld [vmem:[%s1 + $0x2e0] sm:$0xff]
  %v246 = vld [vmem:[%s1 + $0x2e8] sm:$0xff]
  %v247 = vld [vmem:[%s1 + $0x2f0] sm:$0xff]
  %v248 = vld [vmem:[%s1 + $0x2f8] sm:$0xff]
  %v249 = vld [vmem:[%s1 + $0x300] sm:$0xff]
  %v250 = vld [vmem:[%s1 + $0x308] sm:$0xff]
  %v251 = vld [vmem:[%s1 + $0x310] sm:$0xff]
  %v252 = vld [vmem:[%s1 + $0x318] sm:$0xff]
  %v253 = vld [vmem:[%s1 + $0x320] sm:$0xff]
  %v254 = vld [vmem:[%s1 + $0x328] sm:$0xff]
  %v255 = vld [vmem:[%s1 + $0x330] sm:$0xff]
  %v256 = vld [vmem:[%s1 + $0x338] sm:$0xff]
  %v257 = vld [vmem:[%s1 + $0x340] sm:$0xff]
  %v258 = vld [vmem:[%s1 + $0x348] sm:$0xff]
  %v259 = vld [vmem:[%s1 + $0x350] sm:$0xff]
  %v260 = vld [vmem:[%s1 + $0x358] sm:$0xff]
  %v261 = vld [vmem:[%s1 + $0x360] sm:$0xff]
  %v262 = vld [vmem:[%s1 + $0x368] sm:$0xff]
  %v263 = vld [vmem:[%s1 + $0x370] sm:$0xff]
  %v264 = vld [vmem:[%s1 + $0x378] sm:$0xff]
  %v265 = vld [vmem:[%s1 + $0x380] sm:$0xff]
  %v266 = vld [vmem:[%s1 + $0x388] sm:$0xff]
  %v267 = vld [vmem:[%s1 + $0x390] sm:$0xff]
  %v268 = vld [vmem:[%s1 + $0x398] sm:$0xff]
  %v269 = vld [vmem:[%s1 + $0x3a0] sm:$0xff]
  %v270 = vld [vmem:[%s1 + $0x3a8] sm:$0xff]
  %v271 = vld [vmem:[%s1 + $0x3b0] sm:$0xff]
  %v272 = vld [vmem:[%s1 + $0x3b8] sm:$0xff]
  %v273 = vld [vmem:[%s1 + $0x3c0] sm:$0xff]
  %v274 = vld [vmem:[%s1 + $0x3c8] sm:$0xff]
  %v275 = vld [vmem:[%s1 + $0x3d0] sm:$0xff]
  %v276 = vld [vmem:[%s1 + $0x3d8] sm:$0xff]
  %v277 = vld [vmem:[%s1 + $0x3e0] sm:$0xff]
  %v278 = vld [vmem:[%s1 + $0x3e8] sm:$0xff]
  %v279 = vld [vmem:[%s1 + $0x3f0] sm:$0xff]
  %v280 = vld [vmem:[%s1 + $0x3f8] sm:$0xff]
  %v281 = vld [vmem:[%s1 + $0x400] sm:$0xff]
  %v282 = vld [vmem:[%s1 + $0x408] sm:$0xff]
  %v283 = vld [vmem:[%s1 + $0x410] sm:$0xff]
  %v284 = vld [vmem:[%s1 + $0x418] sm:$0xff]
  %v285 = vld [vmem:[%s1 + $0x420] sm:$0xff]
  %v286 = vld [vmem:[%s1 + $0x428] sm:$0xff]
  %v287 = vld [vmem:[%s1 + $0x430] sm:$0xff]
  %v288 = vld [vmem:[%s1 + $0x438] sm:$0xff]
  %v289 = vld [vmem:[%s1 + $0x440] sm:$0xff]
  %v290 = vld [vmem:[%s1 + $0x448] sm:$0xff]
  %v291 = vld [vmem:[%s1 + $0x450] sm:$0xff]
  %v292 = vld [vmem:[%s1 + $0x458] sm:$0xff]
  %v293 = vld [vmem:[%s1 + $0x460] sm:$0xff]
  %v294 = vld [vmem:[%s1 + $0x468] sm:$0xff]
  %v295 = vld [vmem:[%s1 + $0x470] sm:$0xff]
  %v296 = vld [vmem:[%s1 + $0x478] sm:$0xff]
  %v297 = vld [vmem:[%s1 + $0x480] sm:$0xff]
  %v298 = vld [vmem:[%s1 + $0x488] sm:$0xff]
  %v299 = vld [vmem:[%s1 + $0x490] sm:$0xff]
  %v300 = vld [vmem:[%s1 + $0x498] sm:$0xff]
  %v301 = vld [vmem:[%s1 + $0x4a0] sm:$0xff]
  %v302 = vld [vmem:[%s1 + $0x4a8] sm:$0xff]
  %v303 = vld [vmem:[%s1 + $0x4b0] sm:$0xff]
  %v304 = vld [vmem:[%s1 + $0x4b8] sm:$0xff]
  %v305 = vld [vmem:[%s1 + $0x4c0] sm:$0xff]
  %v306 = vld [vmem:[%s1 + $0x4c8] sm:$0xff]
  %v307 = vld [vmem:[%s1 + $0x4d0] sm:$0xff]
  %v308 = vld [vmem:[%s1 + $0x4d8] sm:$0xff]
  %v309 = vld [vmem:[%s1 + $0x4e0] sm:$0xff]
  %v310 = vld [vmem:[%s1 + $0x4e8] sm:$0xff]
  %v311 = vld [vmem:[%s1 + $0x4f0] sm:$0xff]
  %v312 = vld [vmem:[%s1 + $0x4f8] sm:$0xff]
  %v313 = vld [vmem:[%s1 + $0x500] sm:$0xff]
  %v314 = vld [vmem:[%s1 + $0x508] sm:$0xff]
  %v315 = vld [vmem:[%s1 + $0x510] sm:$0xff]
  %v316 = vld [vmem:[%s1 + $0x518] sm:$0xff]
  %v317 = vld [vmem:[%s1 + $0x520] sm:$0xff]
  %v318 = vld [vmem:[%s1 + $0x528] sm:$0xff]
  %v319 = vld [vmem:[%s1 + $0x530] sm:$0xff]
  %v320 = vld [vmem:[%s1 + $0x538] sm:$0xff]
  %v321 = vld [vmem:[%s1 + $0x540] sm:$0xff]
  %v322 = vld [vmem:[%s1 + $0x548] sm:$0xff]
  %v323 = vld [vmem:[%s1 + $0x550] sm:$0xff]
  %v324 = vld [vmem:[%s1 + $0x558] sm:$0xff]
  %v325 = vld [vmem:[%s1 + $0x560] sm:$0xff]
  %v326 = vld [vmem:[%s1 + $0x568] sm:$0xff]
  %v327 = vld [vmem:[%s1 + $0x570] sm:$0xff]
  %v328 = vld [vmem:[%s1 + $0x578] sm:$0xff]
  %v329 = vld [vmem:[%s1 + $0x580] sm:$0xff]
  %v330 = vld [vmem:[%s1 + $0x588] sm:$0xff]
  %v331 = vld [vmem:[%s1 + $0x590] sm:$0xff]
  %v332 = vld [vmem:[%s1 + $0x598] sm:$0xff]
  %v333 = vld [vmem:[%s1 + $0x5a0] sm:$0xff]
  %v334 = vld [vmem:[%s1 + $0x5a8] sm:$0xff]
  %v335 = vld [vmem:[%s1 + $0x5b0] sm:$0xff]
  %v336 = vld [vmem:[%s1 + $0x5b8] sm:$0xff]
  %v337 = vld [vmem:[%s1 + $0x5c0] sm:$0xff]
  %v338 = vld [vmem:[%s1 + $0x5c8] sm:$0xff]
  %v339 = vld [vmem:[%s1 + $0x5d0] sm:$0xff]
  %v340 = vld [vmem:[%s1 + $0x5d8] sm:$0xff]
  %v341 = vld [vmem:[%s1 + $0x5e0] sm:$0xff]
  %v342 = vld [vmem:[%s1 + $0x5e8] sm:$0xff]
  %v343 = vld [vmem:[%s1 + $0x5f0] sm:$0xff]
  %v344 = vld [vmem:[%s1 + $0x5f8] sm:$0xff]
  %v345 = vld [vmem:[%s1 + $0x600] sm:$0xff]
  %v346 = vld [vmem:[%s1 + $0x608] sm:$0xff]
  %v347 = vld [vmem:[%s1 + $0x610] sm:$0xff]
  %v348 = vld [vmem:[%s1 + $0x618] sm:$0xff]
  %v349 = vld [vmem:[%s1 + $0x620] sm:$0xff]
  %v350 = vld [vmem:[%s1 + $0x628] sm:$0xff]
  %v351 = vld [vmem:[%s1 + $0x630] sm:$0xff]
  %v352 = vld [vmem:[%s1 + $0x638] sm:$0xff]
  %v353 = vld [vmem:[%s1 + $0x640] sm:$0xff]
  %v354 = vld [vmem:[%s1 + $0x648] sm:$0xff]
  %v355 = vld [vmem:[%s1 + $0x650] sm:$0xff]
  %v356 = vld [vmem:[%s1 + $0x658] sm:$0xff]
  %v357 = vld [vmem:[%s1 + $0x660] sm:$0xff]
  %v358 = vld [vmem:[%s1 + $0x668] sm:$0xff]
  %v359 = vld [vmem:[%s1 + $0x670] sm:$0xff]
  %v360 = vld [vmem:[%s1 + $0x678] sm:$0xff]
  %v361 = vld [vmem:[%s1 + $0x680] sm:$0xff]
  %v362 = vld [vmem:[%s1 + $0x688] sm:$0xff]
  %v363 = vld [vmem:[%s1 + $0x690] sm:$0xff]
  %v364 = vld [vmem:[%s1 + $0x698] sm:$0xff]
  %v365 = vld [vmem:[%s1 + $0x6a0] sm:$0xff]
  %v366 = vld [vmem:[%s1 + $0x6a8] sm:$0xff]
  %v367 = vld [vmem:[%s1 + $0x6b0] sm:$0xff]
  %v368 = vld [vmem:[%s1 + $0x6b8] sm:$0xff]
  %v369 = vld [vmem:[%s1 + $0x6c0] sm:$0xff]
  %v370 = vld [vmem:[%s1 + $0x6c8] sm:$0xff]
  %v371 = vld [vmem:[%s1 + $0x6d0] sm:$0xff]
  %v372 = vld [vmem:[%s1 + $0x6d8] sm:$0xff]
  %v373 = vld [vmem:[%s1 + $0x6e0] sm:$0xff]
  %v374 = vld [vmem:[%s1 + $0x6e8] sm:$0xff]
  %v375 = vld [vmem:[%s1 + $0x6f0] sm:$0xff]
  %v376 = vld [vmem:[%s1 + $0x6f8] sm:$0xff]
  %v505 = vunpack.c.l.b16 %v25
  %v506 = vunpack.c.h.b16 %v25
  %v507 = vunpack.c.l.b16 %v26
  %v508 = vunpack.c.h.b16 %v26
  %v509 = vunpack.c.l.b16 %v27
  %v510 = vunpack.c.h.b16 %v27
  %v511 = vunpack.c.l.b16 %v28
  %v512 = vunpack.c.l.b16 %v29
  %v513 = vunpack.c.h.b16 %v29
  %v514 = vunpack.c.l.b16 %v30
  %v515 = vunpack.c.h.b16 %v30
  %v516 = vunpack.c.l.b16 %v31
  %v517 = vunpack.c.h.b16 %v31
  %v518 = vunpack.c.l.b16 %v32
  %v519 = vunpack.c.l.b16 %v33
  %v520 = vunpack.c.h.b16 %v33
  %v521 = vunpack.c.l.b16 %v34
  %v522 = vunpack.c.h.b16 %v34
  %v523 = vunpack.c.l.b16 %v35
  %v524 = vunpack.c.h.b16 %v35
  %v525 = vunpack.c.l.b16 %v36
  %v526 = vunpack.c.l.b16 %v37
  %v527 = vunpack.c.h.b16 %v37
  %v528 = vunpack.c.l.b16 %v38
  %v529 = vunpack.c.h.b16 %v38
  %v530 = vunpack.c.l.b16 %v39
  %v531 = vunpack.c.h.b16 %v39
  %v532 = vunpack.c.l.b16 %v40
  %v533 = vunpack.c.l.b16 %v41
  %v534 = vunpack.c.h.b16 %v41
  %v535 = vunpack.c.l.b16 %v42
  %v536 = vunpack.c.h.b16 %v42
  %v537 = vunpack.c.l.b16 %v43
  %v538 = vunpack.c.h.b16 %v43
  %v539 = vunpack.c.l.b16 %v44
  %v540 = vunpack.c.l.b16 %v45
  %v541 = vunpack.c.h.b16 %v45
  %v542 = vunpack.c.l.b16 %v46
  %v543 = vunpack.c.h.b16 %v46
  %v544 = vunpack.c.l.b16 %v47
  %v545 = vunpack.c.h.b16 %v47
  %v546 = vunpack.c.l.b16 %v48
  %v547 = vunpack.c.l.b16 %v49
  %v548 = vunpack.c.h.b16 %v49
  %v549 = vunpack.c.l.b16 %v50
  %v550 = vunpack.c.h.b16 %v50
  %v551 = vunpack.c.l.b16 %v51
  %v552 = vunpack.c.h.b16 %v51
  %v553 = vunpack.c.l.b16 %v52
  %v554 = vunpack.c.l.b16 %v53
  %v555 = vunpack.c.h.b16 %v53
  %v556 = vunpack.c.l.b16 %v54
  %v557 = vunpack.c.h.b16 %v54
  %v558 = vunpack.c.l.b16 %v55
  %v559 = vunpack.c.h.b16 %v55
  %v560 = vunpack.c.l.b16 %v56
  %v561 = vunpack.c.l.b16 %v57
  %v562 = vunpack.c.h.b16 %v57
  %v563 = vunpack.c.l.b16 %v58
  %v564 = vunpack.c.h.b16 %v58
  %v565 = vunpack.c.l.b16 %v59
  %v566 = vunpack.c.h.b16 %v59
  %v567 = vunpack.c.l.b16 %v60
  %v568 = vunpack.c.l.b16 %v61
  %v569 = vunpack.c.h.b16 %v61
  %v570 = vunpack.c.l.b16 %v62
  %v571 = vunpack.c.h.b16 %v62
  %v572 = vunpack.c.l.b16 %v63
  %v573 = vunpack.c.h.b16 %v63
  %v574 = vunpack.c.l.b16 %v64
  %v575 = vunpack.c.l.b16 %v65
  %v576 = vunpack.c.h.b16 %v65
  %v577 = vunpack.c.l.b16 %v66
  %v578 = vunpack.c.h.b16 %v66
  %v579 = vunpack.c.l.b16 %v67
  %v580 = vunpack.c.h.b16 %v67
  %v581 = vunpack.c.l.b16 %v68
  %v582 = vunpack.c.l.b16 %v69
  %v583 = vunpack.c.h.b16 %v69
  %v584 = vunpack.c.l.b16 %v70
  %v585 = vunpack.c.h.b16 %v70
  %v586 = vunpack.c.l.b16 %v71
  %v587 = vunpack.c.h.b16 %v71
  %v588 = vunpack.c.l.b16 %v72
  %v589 = vunpack.c.l.b16 %v73
  %v590 = vunpack.c.h.b16 %v73
  %v591 = vunpack.c.l.b16 %v74
  %v592 = vunpack.c.h.b16 %v74
  %v593 = vunpack.c.l.b16 %v75
  %v594 = vunpack.c.h.b16 %v75
  %v595 = vunpack.c.l.b16 %v76
  %v596 = vunpack.c.l.b16 %v77
  %v597 = vunpack.c.h.b16 %v77
  %v598 = vunpack.c.l.b16 %v78
  %v599 = vunpack.c.h.b16 %v78
  %v600 = vunpack.c.l.b16 %v79
  %v601 = vunpack.c.h.b16 %v79
  %v602 = vunpack.c.l.b16 %v80
  %v603 = vunpack.c.l.b16 %v81
  %v604 = vunpack.c.h.b16 %v81
  %v605 = vunpack.c.l.b16 %v82
  %v606 = vunpack.c.h.b16 %v82
  %v607 = vunpack.c.l.b16 %v83
  %v608 = vunpack.c.h.b16 %v83
  %v609 = vunpack.c.l.b16 %v84
  %v610 = vunpack.c.l.b16 %v85
  %v611 = vunpack.c.h.b16 %v85
  %v612 = vunpack.c.l.b16 %v86
  %v613 = vunpack.c.h.b16 %v86
  %v614 = vunpack.c.l.b16 %v87
  %v615 = vunpack.c.h.b16 %v87
  %v616 = vunpack.c.l.b16 %v88
  %v617 = vunpack.c.l.b16 %v89
  %v618 = vunpack.c.h.b16 %v89
  %v619 = vunpack.c.l.b16 %v90
  %v620 = vunpack.c.h.b16 %v90
  %v621 = vunpack.c.l.b16 %v91
  %v622 = vunpack.c.h.b16 %v91
  %v623 = vunpack.c.l.b16 %v92
  %v624 = vunpack.c.l.b16 %v93
  %v625 = vunpack.c.h.b16 %v93
  %v626 = vunpack.c.l.b16 %v94
  %v627 = vunpack.c.h.b16 %v94
  %v628 = vunpack.c.l.b16 %v95
  %v629 = vunpack.c.h.b16 %v95
  %v630 = vunpack.c.l.b16 %v96
  %v631 = vunpack.c.l.b16 %v97
  %v632 = vunpack.c.h.b16 %v97
  %v633 = vunpack.c.l.b16 %v98
  %v634 = vunpack.c.h.b16 %v98
  %v635 = vunpack.c.l.b16 %v99
  %v636 = vunpack.c.h.b16 %v99
  %v637 = vunpack.c.l.b16 %v100
  %v638 = vunpack.c.l.b16 %v101
  %v639 = vunpack.c.h.b16 %v101
  %v640 = vunpack.c.l.b16 %v102
  %v641 = vunpack.c.h.b16 %v102
  %v642 = vunpack.c.l.b16 %v103
  %v643 = vunpack.c.h.b16 %v103
  %v644 = vunpack.c.l.b16 %v104
  %v645 = vunpack.c.l.b16 %v105
  %v646 = vunpack.c.h.b16 %v105
  %v647 = vunpack.c.l.b16 %v106
  %v648 = vunpack.c.h.b16 %v106
  %v649 = vunpack.c.l.b16 %v107
  %v650 = vunpack.c.h.b16 %v107
  %v651 = vunpack.c.l.b16 %v108
  %v652 = vunpack.c.l.b16 %v109
  %v653 = vunpack.c.h.b16 %v109
  %v654 = vunpack.c.l.b16 %v110
  %v655 = vunpack.c.h.b16 %v110
  %v656 = vunpack.c.l.b16 %v111
  %v657 = vunpack.c.h.b16 %v111
  %v658 = vunpack.c.l.b16 %v112
  %v659 = vunpack.c.l.b16 %v113
  %v660 = vunpack.c.h.b16 %v113
  %v661 = vunpack.c.l.b16 %v114
  %v662 = vunpack.c.h.b16 %v114
  %v663 = vunpack.c.l.b16 %v115
  %v664 = vunpack.c.h.b16 %v115
  %v665 = vunpack.c.l.b16 %v116
  %v666 = vunpack.c.l.b16 %v117
  %v667 = vunpack.c.h.b16 %v117
  %v668 = vunpack.c.l.b16 %v118
  %v669 = vunpack.c.h.b16 %v118
  %v670 = vunpack.c.l.b16 %v119
  %v671 = vunpack.c.h.b16 %v119
  %v672 = vunpack.c.l.b16 %v120
  %v673 = vunpack.c.l.b16 %v121
  %v674 = vunpack.c.h.b16 %v121
  %v675 = vunpack.c.l.b16 %v122
  %v676 = vunpack.c.h.b16 %v122
  %v677 = vunpack.c.l.b16 %v123
  %v678 = vunpack.c.h.b16 %v123
  %v679 = vunpack.c.l.b16 %v124
  %v680 = vunpack.c.l.b16 %v125
  %v681 = vunpack.c.h.b16 %v125
  %v682 = vunpack.c.l.b16 %v126
  %v683 = vunpack.c.h.b16 %v126
  %v684 = vunpack.c.l.b16 %v127
  %v685 = vunpack.c.h.b16 %v127
  %v686 = vunpack.c.l.b16 %v128
  %v687 = vunpack.c.l.b16 %v129
  %v688 = vunpack.c.h.b16 %v129
  %v689 = vunpack.c.l.b16 %v130
  %v690 = vunpack.c.h.b16 %v130
  %v691 = vunpack.c.l.b16 %v131
  %v692 = vunpack.c.h.b16 %v131
  %v693 = vunpack.c.l.b16 %v132
  %v694 = vunpack.c.l.b16 %v133
  %v695 = vunpack.c.h.b16 %v133
  %v696 = vunpack.c.l.b16 %v134
  %v697 = vunpack.c.h.b16 %v134
  %v698 = vunpack.c.l.b16 %v135
  %v699 = vunpack.c.h.b16 %v135
  %v700 = vunpack.c.l.b16 %v136
  %v701 = vunpack.c.l.b16 %v137
  %v702 = vunpack.c.h.b16 %v137
  %v703 = vunpack.c.l.b16 %v138
  %v704 = vunpack.c.h.b16 %v138
  %v705 = vunpack.c.l.b16 %v139
  %v706 = vunpack.c.h.b16 %v139
  %v707 = vunpack.c.l.b16 %v140
  %v708 = vunpack.c.l.b16 %v141
  %v709 = vunpack.c.h.b16 %v141
  %v710 = vunpack.c.l.b16 %v142
  %v711 = vunpack.c.h.b16 %v142
  %v712 = vunpack.c.l.b16 %v143
  %v713 = vunpack.c.h.b16 %v143
  %v714 = vunpack.c.l.b16 %v144
  %v715 = vunpack.c.l.b16 %v145
  %v716 = vunpack.c.h.b16 %v145
  %v717 = vunpack.c.l.b16 %v146
  %v718 = vunpack.c.h.b16 %v146
  %v719 = vunpack.c.l.b16 %v147
  %v720 = vunpack.c.h.b16 %v147
  %v721 = vunpack.c.l.b16 %v148
  %v722 = vunpack.c.l.b16 %v149
  %v723 = vunpack.c.h.b16 %v149
  %v724 = vunpack.c.l.b16 %v150
  %v725 = vunpack.c.h.b16 %v150
  %v726 = vunpack.c.l.b16 %v151
  %v727 = vunpack.c.h.b16 %v151
  %v728 = vunpack.c.l.b16 %v152
  %v729 = vpack.c.b16 %v512, %v505
  %v730 = vpack.c.b16 %v513, %v506
  %v731 = vpack.c.b16 %v514, %v507
  %v732 = vpack.c.b16 %v515, %v508
  %v733 = vpack.c.b16 %v516, %v509
  %v734 = vpack.c.b16 %v517, %v510
  %v735 = vpack.c.b16 %v518, %v511
  %v736 = vpack.c.b16 %v526, %v519
  %v737 = vpack.c.b16 %v527, %v520
  %v738 = vpack.c.b16 %v528, %v521
  %v739 = vpack.c.b16 %v529, %v522
  %v740 = vpack.c.b16 %v530, %v523
  %v741 = vpack.c.b16 %v531, %v524
  %v742 = vpack.c.b16 %v532, %v525
  %v743 = vpack.c.b16 %v540, %v533
  %v744 = vpack.c.b16 %v541, %v534
  %v745 = vpack.c.b16 %v542, %v535
  %v746 = vpack.c.b16 %v543, %v536
  %v747 = vpack.c.b16 %v544, %v537
  %v748 = vpack.c.b16 %v545, %v538
  %v749 = vpack.c.b16 %v546, %v539
  %v750 = vpack.c.b16 %v554, %v547
  %v751 = vpack.c.b16 %v555, %v548
  %v752 = vpack.c.b16 %v556, %v549
  %v753 = vpack.c.b16 %v557, %v550
  %v754 = vpack.c.b16 %v558, %v551
  %v755 = vpack.c.b16 %v559, %v552
  %v756 = vpack.c.b16 %v560, %v553
  %v757 = vpack.c.b16 %v568, %v561
  %v758 = vpack.c.b16 %v569, %v562
  %v759 = vpack.c.b16 %v570, %v563
  %v760 = vpack.c.b16 %v571, %v564
  %v761 = vpack.c.b16 %v572, %v565
  %v762 = vpack.c.b16 %v573, %v566
  %v763 = vpack.c.b16 %v574, %v567
  %v764 = vpack.c.b16 %v582, %v575
  %v765 = vpack.c.b16 %v583, %v576
  %v766 = vpack.c.b16 %v584, %v577
  %v767 = vpack.c.b16 %v585, %v578
  %v768 = vpack.c.b16 %v586, %v579
  %v769 = vpack.c.b16 %v587, %v580
  %v770 = vpack.c.b16 %v588, %v581
  %v771 = vpack.c.b16 %v596, %v589
  %v772 = vpack.c.b16 %v597, %v590
  %v773 = vpack.c.b16 %v598, %v591
  %v774 = vpack.c.b16 %v599, %v592
  %v775 = vpack.c.b16 %v600, %v593
  %v776 = vpack.c.b16 %v601, %v594
  %v777 = vpack.c.b16 %v602, %v595
  %v778 = vpack.c.b16 %v610, %v603
  %v779 = vpack.c.b16 %v611, %v604
  %v780 = vpack.c.b16 %v612, %v605
  %v781 = vpack.c.b16 %v613, %v606
  %v782 = vpack.c.b16 %v614, %v607
  %v783 = vpack.c.b16 %v615, %v608
  %v784 = vpack.c.b16 %v616, %v609
  %v785 = vpack.c.b16 %v624, %v617
  %v786 = vpack.c.b16 %v625, %v618
  %v787 = vpack.c.b16 %v626, %v619
  %v788 = vpack.c.b16 %v627, %v620
  %v789 = vpack.c.b16 %v628, %v621
  %v790 = vpack.c.b16 %v629, %v622
  %v791 = vpack.c.b16 %v630, %v623
  %v792 = vpack.c.b16 %v638, %v631
  %v793 = vpack.c.b16 %v639, %v632
  %v794 = vpack.c.b16 %v640, %v633
  %v795 = vpack.c.b16 %v641, %v634
  %v796 = vpack.c.b16 %v642, %v635
  %v797 = vpack.c.b16 %v643, %v636
  %v798 = vpack.c.b16 %v644, %v637
  %v799 = vpack.c.b16 %v652, %v645
  %v800 = vpack.c.b16 %v653, %v646
  %v801 = vpack.c.b16 %v654, %v647
  %v802 = vpack.c.b16 %v655, %v648
  %v803 = vpack.c.b16 %v656, %v649
  %v804 = vpack.c.b16 %v657, %v650
  %v805 = vpack.c.b16 %v658, %v651
  %v806 = vpack.c.b16 %v666, %v659
  %v807 = vpack.c.b16 %v667, %v660
  %v808 = vpack.c.b16 %v668, %v661
  %v809 = vpack.c.b16 %v669, %v662
  %v810 = vpack.c.b16 %v670, %v663
  %v811 = vpack.c.b16 %v671, %v664
  %v812 = vpack.c.b16 %v672, %v665
  %v813 = vpack.c.b16 %v680, %v673
  %v814 = vpack.c.b16 %v681, %v674
  %v815 = vpack.c.b16 %v682, %v675
  %v816 = vpack.c.b16 %v683, %v676
  %v817 = vpack.c.b16 %v684, %v677
  %v818 = vpack.c.b16 %v685, %v678
  %v819 = vpack.c.b16 %v686, %v679
  %v820 = vpack.c.b16 %v694, %v687
  %v821 = vpack.c.b16 %v695, %v688
  %v822 = vpack.c.b16 %v696, %v689
  %v823 = vpack.c.b16 %v697, %v690
  %v824 = vpack.c.b16 %v698, %v691
  %v825 = vpack.c.b16 %v699, %v692
  %v826 = vpack.c.b16 %v700, %v693
  %v827 = vpack.c.b16 %v708, %v701
  %v828 = vpack.c.b16 %v709, %v702
  %v829 = vpack.c.b16 %v710, %v703
  %v830 = vpack.c.b16 %v711, %v704
  %v831 = vpack.c.b16 %v712, %v705
  %v832 = vpack.c.b16 %v713, %v706
  %v833 = vpack.c.b16 %v714, %v707
  %v834 = vpack.c.b16 %v722, %v715
  %v835 = vpack.c.b16 %v723, %v716
  %v836 = vpack.c.b16 %v724, %v717
  %v837 = vpack.c.b16 %v725, %v718
  %v838 = vpack.c.b16 %v726, %v719
  %v839 = vpack.c.b16 %v727, %v720
  %v840 = vpack.c.b16 %v728, %v721
  %v1177 = vunpack.c.l.b16 %v153
  %v1178 = vunpack.c.h.b16 %v153
  %v1179 = vunpack.c.l.b16 %v154
  %v1180 = vunpack.c.h.b16 %v154
  %v1181 = vunpack.c.l.b16 %v155
  %v1182 = vunpack.c.h.b16 %v155
  %v1183 = vunpack.c.l.b16 %v156
  %v1184 = vunpack.c.h.b16 %v156
  %v1185 = vunpack.c.l.b16 %v157
  %v1186 = vunpack.c.h.b16 %v157
  %v1187 = vunpack.c.l.b16 %v158
  %v1188 = vunpack.c.h.b16 %v158
  %v1189 = vunpack.c.l.b16 %v159
  %v1190 = vunpack.c.h.b16 %v159
  %v1191 = vunpack.c.l.b16 %v160
  %v1192 = vunpack.c.h.b16 %v160
  %v1193 = vunpack.c.l.b16 %v161
  %v1194 = vunpack.c.h.b16 %v161
  %v1195 = vunpack.c.l.b16 %v162
  %v1196 = vunpack.c.h.b16 %v162
  %v1197 = vunpack.c.l.b16 %v163
  %v1198 = vunpack.c.h.b16 %v163
  %v1199 = vunpack.c.l.b16 %v164
  %v1200 = vunpack.c.h.b16 %v164
  %v1201 = vunpack.c.l.b16 %v165
  %v1202 = vunpack.c.h.b16 %v165
  %v1203 = vunpack.c.l.b16 %v166
  %v1204 = vunpack.c.h.b16 %v166
  %v1205 = vunpack.c.l.b16 %v167
  %v1206 = vunpack.c.h.b16 %v167
  %v1207 = vunpack.c.l.b16 %v168
  %v1208 = vunpack.c.h.b16 %v168
  %v1209 = vunpack.c.l.b16 %v169
  %v1210 = vunpack.c.h.b16 %v169
  %v1211 = vunpack.c.l.b16 %v170
  %v1212 = vunpack.c.h.b16 %v170
  %v1213 = vunpack.c.l.b16 %v171
  %v1214 = vunpack.c.h.b16 %v171
  %v1215 = vunpack.c.l.b16 %v172
  %v1216 = vunpack.c.h.b16 %v172
  %v1217 = vunpack.c.l.b16 %v173
  %v1218 = vunpack.c.h.b16 %v173
  %v1219 = vunpack.c.l.b16 %v174
  %v1220 = vunpack.c.h.b16 %v174
  %v1221 = vunpack.c.l.b16 %v175
  %v1222 = vunpack.c.h.b16 %v175
  %v1223 = vunpack.c.l.b16 %v176
  %v1224 = vunpack.c.h.b16 %v176
  %v1225 = vunpack.c.l.b16 %v177
  %v1226 = vunpack.c.h.b16 %v177
  %v1227 = vunpack.c.l.b16 %v178
  %v1228 = vunpack.c.h.b16 %v178
  %v1229 = vunpack.c.l.b16 %v179
  %v1230 = vunpack.c.h.b16 %v179
  %v1231 = vunpack.c.l.b16 %v180
  %v1232 = vunpack.c.h.b16 %v180
  %v1233 = vunpack.c.l.b16 %v181
  %v1234 = vunpack.c.h.b16 %v181
  %v1235 = vunpack.c.l.b16 %v182
  %v1236 = vunpack.c.h.b16 %v182
  %v1237 = vunpack.c.l.b16 %v183
  %v1238 = vunpack.c.h.b16 %v183
  %v1239 = vunpack.c.l.b16 %v184
  %v1240 = vunpack.c.h.b16 %v184
  %v1241 = vunpack.c.l.b16 %v185
  %v1242 = vunpack.c.h.b16 %v185
  %v1243 = vunpack.c.l.b16 %v186
  %v1244 = vunpack.c.h.b16 %v186
  %v1245 = vunpack.c.l.b16 %v187
  %v1246 = vunpack.c.h.b16 %v187
  %v1247 = vunpack.c.l.b16 %v188
  %v1248 = vunpack.c.h.b16 %v188
  %v1249 = vunpack.c.l.b16 %v189
  %v1250 = vunpack.c.h.b16 %v189
  %v1251 = vunpack.c.l.b16 %v190
  %v1252 = vunpack.c.h.b16 %v190
  %v1253 = vunpack.c.l.b16 %v191
  %v1254 = vunpack.c.h.b16 %v191
  %v1255 = vunpack.c.l.b16 %v192
  %v1256 = vunpack.c.h.b16 %v192
  %v1257 = vunpack.c.l.b16 %v193
  %v1258 = vunpack.c.h.b16 %v193
  %v1259 = vunpack.c.l.b16 %v194
  %v1260 = vunpack.c.h.b16 %v194
  %v1261 = vunpack.c.l.b16 %v195
  %v1262 = vunpack.c.h.b16 %v195
  %v1263 = vunpack.c.l.b16 %v196
  %v1264 = vunpack.c.h.b16 %v196
  %v1265 = vunpack.c.l.b16 %v197
  %v1266 = vunpack.c.h.b16 %v197
  %v1267 = vunpack.c.l.b16 %v198
  %v1268 = vunpack.c.h.b16 %v198
  %v1269 = vunpack.c.l.b16 %v199
  %v1270 = vunpack.c.h.b16 %v199
  %v1271 = vunpack.c.l.b16 %v200
  %v1272 = vunpack.c.h.b16 %v200
  %v1273 = vunpack.c.l.b16 %v201
  %v1274 = vunpack.c.h.b16 %v201
  %v1275 = vunpack.c.l.b16 %v202
  %v1276 = vunpack.c.h.b16 %v202
  %v1277 = vunpack.c.l.b16 %v203
  %v1278 = vunpack.c.h.b16 %v203
  %v1279 = vunpack.c.l.b16 %v204
  %v1280 = vunpack.c.h.b16 %v204
  %v1281 = vunpack.c.l.b16 %v205
  %v1282 = vunpack.c.h.b16 %v205
  %v1283 = vunpack.c.l.b16 %v206
  %v1284 = vunpack.c.h.b16 %v206
  %v1285 = vunpack.c.l.b16 %v207
  %v1286 = vunpack.c.h.b16 %v207
  %v1287 = vunpack.c.l.b16 %v208
  %v1288 = vunpack.c.h.b16 %v208
  %v1289 = vunpack.c.l.b16 %v209
  %v1290 = vunpack.c.h.b16 %v209
  %v1291 = vunpack.c.l.b16 %v210
  %v1292 = vunpack.c.h.b16 %v210
  %v1293 = vunpack.c.l.b16 %v211
  %v1294 = vunpack.c.h.b16 %v211
  %v1295 = vunpack.c.l.b16 %v212
  %v1296 = vunpack.c.h.b16 %v212
  %v1297 = vunpack.c.l.b16 %v213
  %v1298 = vunpack.c.h.b16 %v213
  %v1299 = vunpack.c.l.b16 %v214
  %v1300 = vunpack.c.h.b16 %v214
  %v1301 = vunpack.c.l.b16 %v215
  %v1302 = vunpack.c.h.b16 %v215
  %v1303 = vunpack.c.l.b16 %v216
  %v1304 = vunpack.c.h.b16 %v216
  %v1305 = vunpack.c.l.b16 %v217
  %v1306 = vunpack.c.h.b16 %v217
  %v1307 = vunpack.c.l.b16 %v218
  %v1308 = vunpack.c.h.b16 %v218
  %v1309 = vunpack.c.l.b16 %v219
  %v1310 = vunpack.c.h.b16 %v219
  %v1311 = vunpack.c.l.b16 %v220
  %v1312 = vunpack.c.h.b16 %v220
  %v1313 = vunpack.c.l.b16 %v221
  %v1314 = vunpack.c.h.b16 %v221
  %v1315 = vunpack.c.l.b16 %v222
  %v1316 = vunpack.c.h.b16 %v222
  %v1317 = vunpack.c.l.b16 %v223
  %v1318 = vunpack.c.h.b16 %v223
  %v1319 = vunpack.c.l.b16 %v224
  %v1320 = vunpack.c.h.b16 %v224
  %v1321 = vunpack.c.l.b16 %v225
  %v1322 = vunpack.c.h.b16 %v225
  %v1323 = vunpack.c.l.b16 %v226
  %v1324 = vunpack.c.h.b16 %v226
  %v1325 = vunpack.c.l.b16 %v227
  %v1326 = vunpack.c.h.b16 %v227
  %v1327 = vunpack.c.l.b16 %v228
  %v1328 = vunpack.c.h.b16 %v228
  %v1329 = vunpack.c.l.b16 %v229
  %v1330 = vunpack.c.h.b16 %v229
  %v1331 = vunpack.c.l.b16 %v230
  %v1332 = vunpack.c.h.b16 %v230
  %v1333 = vunpack.c.l.b16 %v231
  %v1334 = vunpack.c.h.b16 %v231
  %v1335 = vunpack.c.l.b16 %v232
  %v1336 = vunpack.c.h.b16 %v232
  %v1337 = vunpack.c.l.b16 %v233
  %v1338 = vunpack.c.h.b16 %v233
  %v1339 = vunpack.c.l.b16 %v234
  %v1340 = vunpack.c.h.b16 %v234
  %v1341 = vunpack.c.l.b16 %v235
  %v1342 = vunpack.c.h.b16 %v235
  %v1343 = vunpack.c.l.b16 %v236
  %v1344 = vunpack.c.h.b16 %v236
  %v1345 = vunpack.c.l.b16 %v237
  %v1346 = vunpack.c.h.b16 %v237
  %v1347 = vunpack.c.l.b16 %v238
  %v1348 = vunpack.c.h.b16 %v238
  %v1349 = vunpack.c.l.b16 %v239
  %v1350 = vunpack.c.h.b16 %v239
  %v1351 = vunpack.c.l.b16 %v240
  %v1352 = vunpack.c.h.b16 %v240
  %v1353 = vunpack.c.l.b16 %v241
  %v1354 = vunpack.c.h.b16 %v241
  %v1355 = vunpack.c.l.b16 %v242
  %v1356 = vunpack.c.h.b16 %v242
  %v1357 = vunpack.c.l.b16 %v243
  %v1358 = vunpack.c.h.b16 %v243
  %v1359 = vunpack.c.l.b16 %v244
  %v1360 = vunpack.c.h.b16 %v244
  %v1361 = vunpack.c.l.b16 %v245
  %v1362 = vunpack.c.h.b16 %v245
  %v1363 = vunpack.c.l.b16 %v246
  %v1364 = vunpack.c.h.b16 %v246
  %v1365 = vunpack.c.l.b16 %v247
  %v1366 = vunpack.c.h.b16 %v247
  %v1367 = vunpack.c.l.b16 %v248
  %v1368 = vunpack.c.h.b16 %v248
  %v1369 = vunpack.c.l.b16 %v249
  %v1370 = vunpack.c.h.b16 %v249
  %v1371 = vunpack.c.l.b16 %v250
  %v1372 = vunpack.c.h.b16 %v250
  %v1373 = vunpack.c.l.b16 %v251
  %v1374 = vunpack.c.h.b16 %v251
  %v1375 = vunpack.c.l.b16 %v252
  %v1376 = vunpack.c.h.b16 %v252
  %v1377 = vunpack.c.l.b16 %v253
  %v1378 = vunpack.c.h.b16 %v253
  %v1379 = vunpack.c.l.b16 %v254
  %v1380 = vunpack.c.h.b16 %v254
  %v1381 = vunpack.c.l.b16 %v255
  %v1382 = vunpack.c.h.b16 %v255
  %v1383 = vunpack.c.l.b16 %v256
  %v1384 = vunpack.c.h.b16 %v256
  %v1385 = vunpack.c.l.b16 %v257
  %v1386 = vunpack.c.h.b16 %v257
  %v1387 = vunpack.c.l.b16 %v258
  %v1388 = vunpack.c.h.b16 %v258
  %v1389 = vunpack.c.l.b16 %v259
  %v1390 = vunpack.c.h.b16 %v259
  %v1391 = vunpack.c.l.b16 %v260
  %v1392 = vunpack.c.h.b16 %v260
  %v1393 = vunpack.c.l.b16 %v261
  %v1394 = vunpack.c.h.b16 %v261
  %v1395 = vunpack.c.l.b16 %v262
  %v1396 = vunpack.c.h.b16 %v262
  %v1397 = vunpack.c.l.b16 %v263
  %v1398 = vunpack.c.h.b16 %v263
  %v1399 = vunpack.c.l.b16 %v264
  %v1400 = vunpack.c.h.b16 %v264
  %v1401 = vunpack.c.l.b16 %v265
  %v1402 = vunpack.c.h.b16 %v265
  %v1403 = vunpack.c.l.b16 %v266
  %v1404 = vunpack.c.h.b16 %v266
  %v1405 = vunpack.c.l.b16 %v267
  %v1406 = vunpack.c.h.b16 %v267
  %v1407 = vunpack.c.l.b16 %v268
  %v1408 = vunpack.c.h.b16 %v268
  %v1409 = vunpack.c.l.b16 %v269
  %v1410 = vunpack.c.h.b16 %v269
  %v1411 = vunpack.c.l.b16 %v270
  %v1412 = vunpack.c.h.b16 %v270
  %v1413 = vunpack.c.l.b16 %v271
  %v1414 = vunpack.c.h.b16 %v271
  %v1415 = vunpack.c.l.b16 %v272
  %v1416 = vunpack.c.h.b16 %v272
  %v1417 = vunpack.c.l.b16 %v273
  %v1418 = vunpack.c.h.b16 %v273
  %v1419 = vunpack.c.l.b16 %v274
  %v1420 = vunpack.c.h.b16 %v274
  %v1421 = vunpack.c.l.b16 %v275
  %v1422 = vunpack.c.h.b16 %v275
  %v1423 = vunpack.c.l.b16 %v276
  %v1424 = vunpack.c.h.b16 %v276
  %v1425 = vunpack.c.l.b16 %v277
  %v1426 = vunpack.c.h.b16 %v277
  %v1427 = vunpack.c.l.b16 %v278
  %v1428 = vunpack.c.h.b16 %v278
  %v1429 = vunpack.c.l.b16 %v279
  %v1430 = vunpack.c.h.b16 %v279
  %v1431 = vunpack.c.l.b16 %v280
  %v1432 = vunpack.c.h.b16 %v280
  %v1433 = vunpack.c.l.b16 %v281
  %v1434 = vunpack.c.h.b16 %v281
  %v1435 = vunpack.c.l.b16 %v282
  %v1436 = vunpack.c.h.b16 %v282
  %v1437 = vunpack.c.l.b16 %v283
  %v1438 = vunpack.c.h.b16 %v283
  %v1439 = vunpack.c.l.b16 %v284
  %v1440 = vunpack.c.h.b16 %v284
  %v1441 = vunpack.c.l.b16 %v285
  %v1442 = vunpack.c.h.b16 %v285
  %v1443 = vunpack.c.l.b16 %v286
  %v1444 = vunpack.c.h.b16 %v286
  %v1445 = vunpack.c.l.b16 %v287
  %v1446 = vunpack.c.h.b16 %v287
  %v1447 = vunpack.c.l.b16 %v288
  %v1448 = vunpack.c.h.b16 %v288
  %v1449 = vunpack.c.l.b16 %v289
  %v1450 = vunpack.c.h.b16 %v289
  %v1451 = vunpack.c.l.b16 %v290
  %v1452 = vunpack.c.h.b16 %v290
  %v1453 = vunpack.c.l.b16 %v291
  %v1454 = vunpack.c.h.b16 %v291
  %v1455 = vunpack.c.l.b16 %v292
  %v1456 = vunpack.c.h.b16 %v292
  %v1457 = vunpack.c.l.b16 %v293
  %v1458 = vunpack.c.h.b16 %v293
  %v1459 = vunpack.c.l.b16 %v294
  %v1460 = vunpack.c.h.b16 %v294
  %v1461 = vunpack.c.l.b16 %v295
  %v1462 = vunpack.c.h.b16 %v295
  %v1463 = vunpack.c.l.b16 %v296
  %v1464 = vunpack.c.h.b16 %v296
  %v1465 = vunpack.c.l.b16 %v297
  %v1466 = vunpack.c.h.b16 %v297
  %v1467 = vunpack.c.l.b16 %v298
  %v1468 = vunpack.c.h.b16 %v298
  %v1469 = vunpack.c.l.b16 %v299
  %v1470 = vunpack.c.h.b16 %v299
  %v1471 = vunpack.c.l.b16 %v300
  %v1472 = vunpack.c.h.b16 %v300
  %v1473 = vunpack.c.l.b16 %v301
  %v1474 = vunpack.c.h.b16 %v301
  %v1475 = vunpack.c.l.b16 %v302
  %v1476 = vunpack.c.h.b16 %v302
  %v1477 = vunpack.c.l.b16 %v303
  %v1478 = vunpack.c.h.b16 %v303
  %v1479 = vunpack.c.l.b16 %v304
  %v1480 = vunpack.c.h.b16 %v304
  %v1481 = vunpack.c.l.b16 %v305
  %v1482 = vunpack.c.h.b16 %v305
  %v1483 = vunpack.c.l.b16 %v306
  %v1484 = vunpack.c.h.b16 %v306
  %v1485 = vunpack.c.l.b16 %v307
  %v1486 = vunpack.c.h.b16 %v307
  %v1487 = vunpack.c.l.b16 %v308
  %v1488 = vunpack.c.h.b16 %v308
  %v1489 = vunpack.c.l.b16 %v309
  %v1490 = vunpack.c.h.b16 %v309
  %v1491 = vunpack.c.l.b16 %v310
  %v1492 = vunpack.c.h.b16 %v310
  %v1493 = vunpack.c.l.b16 %v311
  %v1494 = vunpack.c.h.b16 %v311
  %v1495 = vunpack.c.l.b16 %v312
  %v1496 = vunpack.c.h.b16 %v312
  %v1497 = vunpack.c.l.b16 %v313
  %v1498 = vunpack.c.h.b16 %v313
  %v1499 = vunpack.c.l.b16 %v314
  %v1500 = vunpack.c.h.b16 %v314
  %v1501 = vunpack.c.l.b16 %v315
  %v1502 = vunpack.c.h.b16 %v315
  %v1503 = vunpack.c.l.b16 %v316
  %v1504 = vunpack.c.h.b16 %v316
  %v1505 = vunpack.c.l.b16 %v317
  %v1506 = vunpack.c.h.b16 %v317
  %v1507 = vunpack.c.l.b16 %v318
  %v1508 = vunpack.c.h.b16 %v318
  %v1509 = vunpack.c.l.b16 %v319
  %v1510 = vunpack.c.h.b16 %v319
  %v1511 = vunpack.c.l.b16 %v320
  %v1512 = vunpack.c.h.b16 %v320
  %v1513 = vunpack.c.l.b16 %v321
  %v1514 = vunpack.c.h.b16 %v321
  %v1515 = vunpack.c.l.b16 %v322
  %v1516 = vunpack.c.h.b16 %v322
  %v1517 = vunpack.c.l.b16 %v323
  %v1518 = vunpack.c.h.b16 %v323
  %v1519 = vunpack.c.l.b16 %v324
  %v1520 = vunpack.c.h.b16 %v324
  %v1521 = vunpack.c.l.b16 %v325
  %v1522 = vunpack.c.h.b16 %v325
  %v1523 = vunpack.c.l.b16 %v326
  %v1524 = vunpack.c.h.b16 %v326
  %v1525 = vunpack.c.l.b16 %v327
  %v1526 = vunpack.c.h.b16 %v327
  %v1527 = vunpack.c.l.b16 %v328
  %v1528 = vunpack.c.h.b16 %v328
  %v1529 = vunpack.c.l.b16 %v329
  %v1530 = vunpack.c.h.b16 %v329
  %v1531 = vunpack.c.l.b16 %v330
  %v1532 = vunpack.c.h.b16 %v330
  %v1533 = vunpack.c.l.b16 %v331
  %v1534 = vunpack.c.h.b16 %v331
  %v1535 = vunpack.c.l.b16 %v332
  %v1536 = vunpack.c.h.b16 %v332
  %v1537 = vunpack.c.l.b16 %v333
  %v1538 = vunpack.c.h.b16 %v333
  %v1539 = vunpack.c.l.b16 %v334
  %v1540 = vunpack.c.h.b16 %v334
  %v1541 = vunpack.c.l.b16 %v335
  %v1542 = vunpack.c.h.b16 %v335
  %v1543 = vunpack.c.l.b16 %v336
  %v1544 = vunpack.c.h.b16 %v336
  %v1545 = vunpack.c.l.b16 %v337
  %v1546 = vunpack.c.h.b16 %v337
  %v1547 = vunpack.c.l.b16 %v338
  %v1548 = vunpack.c.h.b16 %v338
  %v1549 = vunpack.c.l.b16 %v339
  %v1550 = vunpack.c.h.b16 %v339
  %v1551 = vunpack.c.l.b16 %v340
  %v1552 = vunpack.c.h.b16 %v340
  %v1553 = vunpack.c.l.b16 %v341
  %v1554 = vunpack.c.h.b16 %v341
  %v1555 = vunpack.c.l.b16 %v342
  %v1556 = vunpack.c.h.b16 %v342
  %v1557 = vunpack.c.l.b16 %v343
  %v1558 = vunpack.c.h.b16 %v343
  %v1559 = vunpack.c.l.b16 %v344
  %v1560 = vunpack.c.h.b16 %v344
  %v1561 = vunpack.c.l.b16 %v345
  %v1562 = vunpack.c.h.b16 %v345
  %v1563 = vunpack.c.l.b16 %v346
  %v1564 = vunpack.c.h.b16 %v346
  %v1565 = vunpack.c.l.b16 %v347
  %v1566 = vunpack.c.h.b16 %v347
  %v1567 = vunpack.c.l.b16 %v348
  %v1568 = vunpack.c.h.b16 %v348
  %v1569 = vunpack.c.l.b16 %v349
  %v1570 = vunpack.c.h.b16 %v349
  %v1571 = vunpack.c.l.b16 %v350
  %v1572 = vunpack.c.h.b16 %v350
  %v1573 = vunpack.c.l.b16 %v351
  %v1574 = vunpack.c.h.b16 %v351
  %v1575 = vunpack.c.l.b16 %v352
  %v1576 = vunpack.c.h.b16 %v352
  %v1577 = vunpack.c.l.b16 %v353
  %v1578 = vunpack.c.h.b16 %v353
  %v1579 = vunpack.c.l.b16 %v354
  %v1580 = vunpack.c.h.b16 %v354
  %v1581 = vunpack.c.l.b16 %v355
  %v1582 = vunpack.c.h.b16 %v355
  %v1583 = vunpack.c.l.b16 %v356
  %v1584 = vunpack.c.h.b16 %v356
  %v1585 = vunpack.c.l.b16 %v357
  %v1586 = vunpack.c.h.b16 %v357
  %v1587 = vunpack.c.l.b16 %v358
  %v1588 = vunpack.c.h.b16 %v358
  %v1589 = vunpack.c.l.b16 %v359
  %v1590 = vunpack.c.h.b16 %v359
  %v1591 = vunpack.c.l.b16 %v360
  %v1592 = vunpack.c.h.b16 %v360
  %v1593 = vunpack.c.l.b16 %v361
  %v1594 = vunpack.c.h.b16 %v361
  %v1595 = vunpack.c.l.b16 %v362
  %v1596 = vunpack.c.h.b16 %v362
  %v1597 = vunpack.c.l.b16 %v363
  %v1598 = vunpack.c.h.b16 %v363
  %v1599 = vunpack.c.l.b16 %v364
  %v1600 = vunpack.c.h.b16 %v364
  %v1601 = vunpack.c.l.b16 %v365
  %v1602 = vunpack.c.h.b16 %v365
  %v1603 = vunpack.c.l.b16 %v366
  %v1604 = vunpack.c.h.b16 %v366
  %v1605 = vunpack.c.l.b16 %v367
  %v1606 = vunpack.c.h.b16 %v367
  %v1607 = vunpack.c.l.b16 %v368
  %v1608 = vunpack.c.h.b16 %v368
  %v1609 = vunpack.c.l.b16 %v369
  %v1610 = vunpack.c.h.b16 %v369
  %v1611 = vunpack.c.l.b16 %v370
  %v1612 = vunpack.c.h.b16 %v370
  %v1613 = vunpack.c.l.b16 %v371
  %v1614 = vunpack.c.h.b16 %v371
  %v1615 = vunpack.c.l.b16 %v372
  %v1616 = vunpack.c.h.b16 %v372
  %v1617 = vunpack.c.l.b16 %v373
  %v1618 = vunpack.c.h.b16 %v373
  %v1619 = vunpack.c.l.b16 %v374
  %v1620 = vunpack.c.h.b16 %v374
  %v1621 = vunpack.c.l.b16 %v375
  %v1622 = vunpack.c.h.b16 %v375
  %v1623 = vunpack.c.l.b16 %v376
  %v1624 = vunpack.c.h.b16 %v376
  %v1625 = vpack.c.b16 %v1181, %v1177
  %v1626 = vpack.c.b16 %v1182, %v1178
  %v1627 = vpack.c.b16 %v1183, %v1179
  %v1628 = vpack.c.b16 %v1184, %v1180
  %v1629 = vpack.c.b16 %v1189, %v1185
  %v1630 = vpack.c.b16 %v1190, %v1186
  %v1631 = vpack.c.b16 %v1191, %v1187
  %v1632 = vpack.c.b16 %v1192, %v1188
  %v1633 = vpack.c.b16 %v1197, %v1193
  %v1634 = vpack.c.b16 %v1198, %v1194
  %v1635 = vpack.c.b16 %v1199, %v1195
  %v1636 = vpack.c.b16 %v1200, %v1196
  %v1637 = vpack.c.b16 %v1205, %v1201
  %v1638 = vpack.c.b16 %v1206, %v1202
  %v1639 = vpack.c.b16 %v1207, %v1203
  %v1640 = vpack.c.b16 %v1208, %v1204
  %v1641 = vpack.c.b16 %v1213, %v1209
  %v1642 = vpack.c.b16 %v1214, %v1210
  %v1643 = vpack.c.b16 %v1215, %v1211
  %v1644 = vpack.c.b16 %v1216, %v1212
  %v1645 = vpack.c.b16 %v1221, %v1217
  %v1646 = vpack.c.b16 %v1222, %v1218
  %v1647 = vpack.c.b16 %v1223, %v1219
  %v1648 = vpack.c.b16 %v1224, %v1220
  %v1649 = vpack.c.b16 %v1229, %v1225
  %v1650 = vpack.c.b16 %v1230, %v1226
  %v1651 = vpack.c.b16 %v1231, %v1227
  %v1652 = vpack.c.b16 %v1232, %v1228
  %v1653 = vpack.c.b16 %v1237, %v1233
  %v1654 = vpack.c.b16 %v1238, %v1234
  %v1655 = vpack.c.b16 %v1239, %v1235
  %v1656 = vpack.c.b16 %v1240, %v1236
  %v1657 = vpack.c.b16 %v1245, %v1241
  %v1658 = vpack.c.b16 %v1246, %v1242
  %v1659 = vpack.c.b16 %v1247, %v1243
  %v1660 = vpack.c.b16 %v1248, %v1244
  %v1661 = vpack.c.b16 %v1253, %v1249
  %v1662 = vpack.c.b16 %v1254, %v1250
  %v1663 = vpack.c.b16 %v1255, %v1251
  %v1664 = vpack.c.b16 %v1256, %v1252
  %v1665 = vpack.c.b16 %v1261, %v1257
  %v1666 = vpack.c.b16 %v1262, %v1258
  %v1667 = vpack.c.b16 %v1263, %v1259
  %v1668 = vpack.c.b16 %v1264, %v1260
  %v1669 = vpack.c.b16 %v1269, %v1265
  %v1670 = vpack.c.b16 %v1270, %v1266
  %v1671 = vpack.c.b16 %v1271, %v1267
  %v1672 = vpack.c.b16 %v1272, %v1268
  %v1673 = vpack.c.b16 %v1277, %v1273
  %v1674 = vpack.c.b16 %v1278, %v1274
  %v1675 = vpack.c.b16 %v1279, %v1275
  %v1676 = vpack.c.b16 %v1280, %v1276
  %v1677 = vpack.c.b16 %v1285, %v1281
  %v1678 = vpack.c.b16 %v1286, %v1282
  %v1679 = vpack.c.b16 %v1287, %v1283
  %v1680 = vpack.c.b16 %v1288, %v1284
  %v1681 = vpack.c.b16 %v1293, %v1289
  %v1682 = vpack.c.b16 %v1294, %v1290
  %v1683 = vpack.c.b16 %v1295, %v1291
  %v1684 = vpack.c.b16 %v1296, %v1292
  %v1685 = vpack.c.b16 %v1301, %v1297
  %v1686 = vpack.c.b16 %v1302, %v1298
  %v1687 = vpack.c.b16 %v1303, %v1299
  %v1688 = vpack.c.b16 %v1304, %v1300
  %v1689 = vpack.c.b16 %v1309, %v1305
  %v1690 = vpack.c.b16 %v1310, %v1306
  %v1691 = vpack.c.b16 %v1311, %v1307
  %v1692 = vpack.c.b16 %v1312, %v1308
  %v1693 = vpack.c.b16 %v1317, %v1313
  %v1694 = vpack.c.b16 %v1318, %v1314
  %v1695 = vpack.c.b16 %v1319, %v1315
  %v1696 = vpack.c.b16 %v1320, %v1316
  %v1697 = vpack.c.b16 %v1325, %v1321
  %v1698 = vpack.c.b16 %v1326, %v1322
  %v1699 = vpack.c.b16 %v1327, %v1323
  %v1700 = vpack.c.b16 %v1328, %v1324
  %v1701 = vpack.c.b16 %v1333, %v1329
  %v1702 = vpack.c.b16 %v1334, %v1330
  %v1703 = vpack.c.b16 %v1335, %v1331
  %v1704 = vpack.c.b16 %v1336, %v1332
  %v1705 = vpack.c.b16 %v1341, %v1337
  %v1706 = vpack.c.b16 %v1342, %v1338
  %v1707 = vpack.c.b16 %v1343, %v1339
  %v1708 = vpack.c.b16 %v1344, %v1340
  %v1709 = vpack.c.b16 %v1349, %v1345
  %v1710 = vpack.c.b16 %v1350, %v1346
  %v1711 = vpack.c.b16 %v1351, %v1347
  %v1712 = vpack.c.b16 %v1352, %v1348
  %v1713 = vpack.c.b16 %v1357, %v1353
  %v1714 = vpack.c.b16 %v1358, %v1354
  %v1715 = vpack.c.b16 %v1359, %v1355
  %v1716 = vpack.c.b16 %v1360, %v1356
  %v1717 = vpack.c.b16 %v1365, %v1361
  %v1718 = vpack.c.b16 %v1366, %v1362
  %v1719 = vpack.c.b16 %v1367, %v1363
  %v1720 = vpack.c.b16 %v1368, %v1364
  %v1721 = vpack.c.b16 %v1373, %v1369
  %v1722 = vpack.c.b16 %v1374, %v1370
  %v1723 = vpack.c.b16 %v1375, %v1371
  %v1724 = vpack.c.b16 %v1376, %v1372
  %v1725 = vpack.c.b16 %v1381, %v1377
  %v1726 = vpack.c.b16 %v1382, %v1378
  %v1727 = vpack.c.b16 %v1383, %v1379
  %v1728 = vpack.c.b16 %v1384, %v1380
  %v1729 = vpack.c.b16 %v1389, %v1385
  %v1730 = vpack.c.b16 %v1390, %v1386
  %v1731 = vpack.c.b16 %v1391, %v1387
  %v1732 = vpack.c.b16 %v1392, %v1388
  %v1733 = vpack.c.b16 %v1397, %v1393
  %v1734 = vpack.c.b16 %v1398, %v1394
  %v1735 = vpack.c.b16 %v1399, %v1395
  %v1736 = vpack.c.b16 %v1400, %v1396
  %v1737 = vpack.c.b16 %v1405, %v1401
  %v1738 = vpack.c.b16 %v1406, %v1402
  %v1739 = vpack.c.b16 %v1407, %v1403
  %v1740 = vpack.c.b16 %v1408, %v1404
  %v1741 = vpack.c.b16 %v1413, %v1409
  %v1742 = vpack.c.b16 %v1414, %v1410
  %v1743 = vpack.c.b16 %v1415, %v1411
  %v1744 = vpack.c.b16 %v1416, %v1412
  %v1745 = vpack.c.b16 %v1421, %v1417
  %v1746 = vpack.c.b16 %v1422, %v1418
  %v1747 = vpack.c.b16 %v1423, %v1419
  %v1748 = vpack.c.b16 %v1424, %v1420
  %v1749 = vpack.c.b16 %v1429, %v1425
  %v1750 = vpack.c.b16 %v1430, %v1426
  %v1751 = vpack.c.b16 %v1431, %v1427
  %v1752 = vpack.c.b16 %v1432, %v1428
  %v1753 = vpack.c.b16 %v1437, %v1433
  %v1754 = vpack.c.b16 %v1438, %v1434
  %v1755 = vpack.c.b16 %v1439, %v1435
  %v1756 = vpack.c.b16 %v1440, %v1436
  %v1757 = vpack.c.b16 %v1445, %v1441
  %v1758 = vpack.c.b16 %v1446, %v1442
  %v1759 = vpack.c.b16 %v1447, %v1443
  %v1760 = vpack.c.b16 %v1448, %v1444
  %v1761 = vpack.c.b16 %v1453, %v1449
  %v1762 = vpack.c.b16 %v1454, %v1450
  %v1763 = vpack.c.b16 %v1455, %v1451
  %v1764 = vpack.c.b16 %v1456, %v1452
  %v1765 = vpack.c.b16 %v1461, %v1457
  %v1766 = vpack.c.b16 %v1462, %v1458
  %v1767 = vpack.c.b16 %v1463, %v1459
  %v1768 = vpack.c.b16 %v1464, %v1460
  %v1769 = vpack.c.b16 %v1469, %v1465
  %v1770 = vpack.c.b16 %v1470, %v1466
  %v1771 = vpack.c.b16 %v1471, %v1467
  %v1772 = vpack.c.b16 %v1472, %v1468
  %v1773 = vpack.c.b16 %v1477, %v1473
  %v1774 = vpack.c.b16 %v1478, %v1474
  %v1775 = vpack.c.b16 %v1479, %v1475
  %v1776 = vpack.c.b16 %v1480, %v1476
  %v1777 = vpack.c.b16 %v1485, %v1481
  %v1778 = vpack.c.b16 %v1486, %v1482
  %v1779 = vpack.c.b16 %v1487, %v1483
  %v1780 = vpack.c.b16 %v1488, %v1484
  %v1781 = vpack.c.b16 %v1493, %v1489
  %v1782 = vpack.c.b16 %v1494, %v1490
  %v1783 = vpack.c.b16 %v1495, %v1491
  %v1784 = vpack.c.b16 %v1496, %v1492
  %v1785 = vpack.c.b16 %v1501, %v1497
  %v1786 = vpack.c.b16 %v1502, %v1498
  %v1787 = vpack.c.b16 %v1503, %v1499
  %v1788 = vpack.c.b16 %v1504, %v1500
  %v1789 = vpack.c.b16 %v1509, %v1505
  %v1790 = vpack.c.b16 %v1510, %v1506
  %v1791 = vpack.c.b16 %v1511, %v1507
  %v1792 = vpack.c.b16 %v1512, %v1508
  %v1793 = vpack.c.b16 %v1517, %v1513
  %v1794 = vpack.c.b16 %v1518, %v1514
  %v1795 = vpack.c.b16 %v1519, %v1515
  %v1796 = vpack.c.b16 %v1520, %v1516
  %v1797 = vpack.c.b16 %v1525, %v1521
  %v1798 = vpack.c.b16 %v1526, %v1522
  %v1799 = vpack.c.b16 %v1527, %v1523
  %v1800 = vpack.c.b16 %v1528, %v1524
  %v1801 = vpack.c.b16 %v1533, %v1529
  %v1802 = vpack.c.b16 %v1534, %v1530
  %v1803 = vpack.c.b16 %v1535, %v1531
  %v1804 = vpack.c.b16 %v1536, %v1532
  %v1805 = vpack.c.b16 %v1541, %v1537
  %v1806 = vpack.c.b16 %v1542, %v1538
  %v1807 = vpack.c.b16 %v1543, %v1539
  %v1808 = vpack.c.b16 %v1544, %v1540
  %v1809 = vpack.c.b16 %v1549, %v1545
  %v1810 = vpack.c.b16 %v1550, %v1546
  %v1811 = vpack.c.b16 %v1551, %v1547
  %v1812 = vpack.c.b16 %v1552, %v1548
  %v1813 = vpack.c.b16 %v1557, %v1553
  %v1814 = vpack.c.b16 %v1558, %v1554
  %v1815 = vpack.c.b16 %v1559, %v1555
  %v1816 = vpack.c.b16 %v1560, %v1556
  %v1817 = vpack.c.b16 %v1565, %v1561
  %v1818 = vpack.c.b16 %v1566, %v1562
  %v1819 = vpack.c.b16 %v1567, %v1563
  %v1820 = vpack.c.b16 %v1568, %v1564
  %v1821 = vpack.c.b16 %v1573, %v1569
  %v1822 = vpack.c.b16 %v1574, %v1570
  %v1823 = vpack.c.b16 %v1575, %v1571
  %v1824 = vpack.c.b16 %v1576, %v1572
  %v1825 = vpack.c.b16 %v1581, %v1577
  %v1826 = vpack.c.b16 %v1582, %v1578
  %v1827 = vpack.c.b16 %v1583, %v1579
  %v1828 = vpack.c.b16 %v1584, %v1580
  %v1829 = vpack.c.b16 %v1589, %v1585
  %v1830 = vpack.c.b16 %v1590, %v1586
  %v1831 = vpack.c.b16 %v1591, %v1587
  %v1832 = vpack.c.b16 %v1592, %v1588
  %v1833 = vpack.c.b16 %v1597, %v1593
  %v1834 = vpack.c.b16 %v1598, %v1594
  %v1835 = vpack.c.b16 %v1599, %v1595
  %v1836 = vpack.c.b16 %v1600, %v1596
  %v1837 = vpack.c.b16 %v1605, %v1601
  %v1838 = vpack.c.b16 %v1606, %v1602
  %v1839 = vpack.c.b16 %v1607, %v1603
  %v1840 = vpack.c.b16 %v1608, %v1604
  %v1841 = vpack.c.b16 %v1613, %v1609
  %v1842 = vpack.c.b16 %v1614, %v1610
  %v1843 = vpack.c.b16 %v1615, %v1611
  %v1844 = vpack.c.b16 %v1616, %v1612
  %v1845 = vpack.c.b16 %v1621, %v1617
  %v1846 = vpack.c.b16 %v1622, %v1618
  %v1847 = vpack.c.b16 %v1623, %v1619
  %v1848 = vpack.c.b16 %v1624, %v1620
  %2073 = vmatprep.subr.bf16.mxu0 %v1626
  %2074 = vmatpush1.bf16.msra.mxu0 %v1625
  %2075 = vmatprep.subr.bf16.mxu0 %v1630
  %2076 = vmatpush1.bf16.msra.mxu0 %v1629
  %2077 = vmatprep.subr.bf16.mxu0 %v1634
  %2078 = vmatpush1.bf16.msra.mxu0 %v1633
  %2079 = vmatprep.subr.bf16.mxu0 %v1638
  %2080 = vmatpush1.bf16.msra.mxu0 %v1637
  %2081 = vmatprep.subr.bf16.mxu0 %v1642
  %2082 = vmatpush1.bf16.msra.mxu0 %v1641
  %2083 = vmatprep.subr.bf16.mxu0 %v1646
  %2084 = vmatpush1.bf16.msra.mxu0 %v1645
  %2085 = vmatprep.subr.bf16.mxu0 %v1650
  %2086 = vmatpush1.bf16.msra.mxu0 %v1649
  %2087 = vmatprep.subr.bf16.mxu0 %v1654
  %2088 = vmatpush1.bf16.msra.mxu0 %v1653
  %2089 = vmatprep.subr.bf16.mxu0 %v1658
  %2090 = vmatpush1.bf16.msra.mxu0 %v1657
  %2091 = vmatprep.subr.bf16.mxu0 %v1662
  %2092 = vmatpush1.bf16.msra.mxu0 %v1661
  %2093 = vmatprep.subr.bf16.mxu0 %v1666
  %2094 = vmatpush1.bf16.msra.mxu0 %v1665
  %2095 = vmatprep.subr.bf16.mxu0 %v1670
  %2096 = vmatpush1.bf16.msra.mxu0 %v1669
  %2097 = vmatprep.subr.bf16.mxu0 %v1674
  %2098 = vmatpush1.bf16.msra.mxu0 %v1673
  %2099 = vmatprep.subr.bf16.mxu0 %v1678
  %2100 = vmatpush1.bf16.msra.mxu0 %v1677
  %2101 = vmatprep.subr.bf16.mxu0 %v1682
  %2102 = vmatpush1.bf16.msra.mxu0 %v1681
  %2103 = vmatprep.subr.bf16.mxu0 %v1686
  %2104 = vmatpush1.bf16.msra.mxu0 %v1685
  %2105 = vmatprep.mubr.bf16.mxu0 %v730
  %2106 = vmatmul.mubr.bf16.gmra.mrb[0].mxu0 %v729
  %v2107 = vpop.f32.mrb[0].mxu0
  %v2108 = vadd.f32 0.0, %v2107
  %v2109 = vpop.f32.mrb[0].mxu0
  %v2110 = vadd.f32 0.0, %v2109
  %v2111 = vpop.f32.mrb[0].mxu0
  %v2112 = vadd.f32 0.0, %v2111
  %v2113 = vpop.f32.mrb[0].mxu0
  %v2114 = vadd.f32 0.0, %v2113
  %2115 = vmatprep.mubr.bf16.mxu0 %v737
  %2116 = vmatmul.mubr.bf16.gmra.mrb[0].mxu0 %v736
  %v2117 = vpop.f32.mrb[0].mxu0
  %v2118 = vadd.f32 0.0, %v2117
  %v2119 = vpop.f32.mrb[0].mxu0
  %v2120 = vadd.f32 0.0, %v2119
  %v2121 = vpop.f32.mrb[0].mxu0
  %v2122 = vadd.f32 0.0, %v2121
  %v2123 = vpop.f32.mrb[0].mxu0
  %v2124 = vadd.f32 0.0, %v2123
  %2125 = vmatprep.mubr.bf16.mxu0 %v744
  %2126 = vmatmul.mubr.bf16.gmra.mrb[0].mxu0 %v743
  %v2127 = vpop.f32.mrb[0].mxu0
  %v2128 = vadd.f32 0.0, %v2127
  %v2129 = vpop.f32.mrb[0].mxu0
  %v2130 = vadd.f32 0.0, %v2129
  %v2131 = vpop.f32.mrb[0].mxu0
  %v2132 = vadd.f32 0.0, %v2131
  %v2133 = vpop.f32.mrb[0].mxu0
  %v2134 = vadd.f32 0.0, %v2133
  %2135 = vmatprep.mubr.bf16.mxu0 %v751
  %2136 = vmatmul.mubr.bf16.gmra.mrb[0].mxu0 %v750
  %v2137 = vpop.f32.mrb[0].mxu0
  %v2138 = vadd.f32 0.0, %v2137
  %v2139 = vpop.f32.mrb[0].mxu0
  %v2140 = vadd.f32 0.0, %v2139
  %v2141 = vpop.f32.mrb[0].mxu0
  %v2142 = vadd.f32 0.0, %v2141
  %v2143 = vpop.f32.mrb[0].mxu0
  %v2144 = vadd.f32 0.0, %v2143
  %2145 = vmatprep.mubr.bf16.mxu0 %v758
  %2146 = vmatmul.mubr.bf16.gmra.mrb[0].mxu0 %v757
  %v2147 = vpop.f32.mrb[0].mxu0
  %v2148 = vadd.f32 0.0, %v2147
  %v2149 = vpop.f32.mrb[0].mxu0
  %v2150 = vadd.f32 0.0, %v2149
  %v2151 = vpop.f32.mrb[0].mxu0
  %v2152 = vadd.f32 0.0, %v2151
  %v2153 = vpop.f32.mrb[0].mxu0
  %v2154 = vadd.f32 0.0, %v2153
  %2155 = vmatprep.mubr.bf16.mxu0 %v765
  %2156 = vmatmul.mubr.bf16.gmra.mrb[0].mxu0 %v764
  %v2157 = vpop.f32.mrb[0].mxu0
  %v2158 = vadd.f32 0.0, %v2157
  %v2159 = vpop.f32.mrb[0].mxu0
  %v2160 = vadd.f32 0.0, %v2159
  %v2161 = vpop.f32.mrb[0].mxu0
  %v2162 = vadd.f32 0.0, %v2161
  %v2163 = vpop.f32.mrb[0].mxu0
  %v2164 = vadd.f32 0.0, %v2163
  %2165 = vmatprep.mubr.bf16.mxu0 %v772
  %2166 = vmatmul.mubr.bf16.gmra.mrb[0].mxu0 %v771
  %v2167 = vpop.f32.mrb[0].mxu0
  %v2168 = vadd.f32 0.0, %v2167
  %v2169 = vpop.f32.mrb[0].mxu0
  %v2170 = vadd.f32 0.0, %v2169
  %v2171 = vpop.f32.mrb[0].mxu0
  %v2172 = vadd.f32 0.0, %v2171
  %v2173 = vpop.f32.mrb[0].mxu0
  %v2174 = vadd.f32 0.0, %v2173
  %2175 = vmatprep.mubr.bf16.mxu0 %v779
  %2176 = vmatmul.mubr.bf16.gmra.mrb[0].mxu0 %v778
  %v2177 = vpop.f32.mrb[0].mxu0
  %v2178 = vadd.f32 0.0, %v2177
  %v2179 = vpop.f32.mrb[0].mxu0
  %v2180 = vadd.f32 0.0, %v2179
  %v2181 = vpop.f32.mrb[0].mxu0
  %v2182 = vadd.f32 0.0, %v2181
  %v2183 = vpop.f32.mrb[0].mxu0
  %v2184 = vadd.f32 0.0, %v2183
  %2185 = vmatprep.mubr.bf16.mxu0 %v786
  %2186 = vmatmul.mubr.bf16.gmra.mrb[0].mxu0 %v785
  %v2187 = vpop.f32.mrb[0].mxu0
  %v2188 = vadd.f32 0.0, %v2187
  %v2189 = vpop.f32.mrb[0].mxu0
  %v2190 = vadd.f32 0.0, %v2189
  %v2191 = vpop.f32.mrb[0].mxu0
  %v2192 = vadd.f32 0.0, %v2191
  %v2193 = vpop.f32.mrb[0].mxu0
  %v2194 = vadd.f32 0.0, %v2193
  %2195 = vmatprep.mubr.bf16.mxu0 %v793
  %2196 = vmatmul.mubr.bf16.gmra.mrb[0].mxu0 %v792
  %v2197 = vpop.f32.mrb[0].mxu0
  %v2198 = vadd.f32 0.0, %v2197
  %v2199 = vpop.f32.mrb[0].mxu0
  %v2200 = vadd.f32 0.0, %v2199
  %v2201 = vpop.f32.mrb[0].mxu0
  %v2202 = vadd.f32 0.0, %v2201
  %v2203 = vpop.f32.mrb[0].mxu0
  %v2204 = vadd.f32 0.0, %v2203
  %2205 = vmatprep.mubr.bf16.mxu0 %v800
  %2206 = vmatmul.mubr.bf16.gmra.mrb[0].mxu0 %v799
  %v2207 = vpop.f32.mrb[0].mxu0
  %v2208 = vadd.f32 0.0, %v2207
  %v2209 = vpop.f32.mrb[0].mxu0
  %v2210 = vadd.f32 0.0, %v2209
  %v2211 = vpop.f32.mrb[0].mxu0
  %v2212 = vadd.f32 0.0, %v2211
  %v2213 = vpop.f32.mrb[0].mxu0
  %v2214 = vadd.f32 0.0, %v2213
  %2215 = vmatprep.mubr.bf16.mxu0 %v807
  %2216 = vmatmul.mubr.bf16.gmra.mrb[0].mxu0 %v806
  %v2217 = vpop.f32.mrb[0].mxu0
  %v2218 = vadd.f32 0.0, %v2217
  %v2219 = vpop.f32.mrb[0].mxu0
  %v2220 = vadd.f32 0.0, %v2219
  %v2221 = vpop.f32.mrb[0].mxu0
  %v2222 = vadd.f32 0.0, %v2221
  %v2223 = vpop.f32.mrb[0].mxu0
  %v2224 = vadd.f32 0.0, %v2223
  %2225 = vmatprep.mubr.bf16.mxu0 %v814
  %2226 = vmatmul.mubr.bf16.gmra.mrb[0].mxu0 %v813
  %v2227 = vpop.f32.mrb[0].mxu0
  %v2228 = vadd.f32 0.0, %v2227
  %v2229 = vpop.f32.mrb[0].mxu0
  %v2230 = vadd.f32 0.0, %v2229
  %v2231 = vpop.f32.mrb[0].mxu0
  %v2232 = vadd.f32 0.0, %v2231
  %v2233 = vpop.f32.mrb[0].mxu0
  %v2234 = vadd.f32 0.0, %v2233
  %2235 = vmatprep.mubr.bf16.mxu0 %v821
  %2236 = vmatmul.mubr.bf16.gmra.mrb[0].mxu0 %v820
  %v2237 = vpop.f32.mrb[0].mxu0
  %v2238 = vadd.f32 0.0, %v2237
  %v2239 = vpop.f32.mrb[0].mxu0
  %v2240 = vadd.f32 0.0, %v2239
  %v2241 = vpop.f32.mrb[0].mxu0
  %v2242 = vadd.f32 0.0, %v2241
  %v2243 = vpop.f32.mrb[0].mxu0
  %v2244 = vadd.f32 0.0, %v2243
  %2245 = vmatprep.mubr.bf16.mxu0 %v828
  %2246 = vmatmul.mubr.bf16.gmra.mrb[0].mxu0 %v827
  %v2247 = vpop.f32.mrb[0].mxu0
  %v2248 = vadd.f32 0.0, %v2247
  %v2249 = vpop.f32.mrb[0].mxu0
  %v2250 = vadd.f32 0.0, %v2249
  %v2251 = vpop.f32.mrb[0].mxu0
  %v2252 = vadd.f32 0.0, %v2251
  %v2253 = vpop.f32.mrb[0].mxu0
  %v2254 = vadd.f32 0.0, %v2253
  %2255 = vmatprep.mubr.bf16.mxu0 %v835
  %2256 = vmatmul.mubr.bf16.gmra.mrb[0].mxu0 %v834
  %v2257 = vpop.f32.mrb[0].mxu0
  %v2258 = vadd.f32 0.0, %v2257
  %v2259 = vpop.f32.mrb[0].mxu0
  %v2260 = vadd.f32 0.0, %v2259
  %v2261 = vpop.f32.mrb[0].mxu0
  %v2262 = vadd.f32 0.0, %v2261
  %v2263 = vpop.f32.mrb[0].mxu0
  %v2264 = vadd.f32 0.0, %v2263
  %2265 = vdwg.mxu0
  %2266 = vmatprep.subr.bf16.mxu0 %v1690
  %2267 = vmatpush1.bf16.msra.mxu0 %v1689
  %2268 = vmatprep.subr.bf16.mxu0 %v1694
  %2269 = vmatpush1.bf16.msra.mxu0 %v1693
  %2270 = vmatprep.subr.bf16.mxu0 %v1698
  %2271 = vmatpush1.bf16.msra.mxu0 %v1697
  %2272 = vmatprep.subr.bf16.mxu0 %v1702
  %2273 = vmatpush1.bf16.msra.mxu0 %v1701
  %2274 = vmatprep.subr.bf16.mxu0 %v1706
  %2275 = vmatpush1.bf16.msra.mxu0 %v1705
  %2276 = vmatprep.subr.bf16.mxu0 %v1710
  %2277 = vmatpush1.bf16.msra.mxu0 %v1709
  %2278 = vmatprep.subr.bf16.mxu0 %v1714
  %2279 = vmatpush1.bf16.msra.mxu0 %v1713
  %2280 = vmatprep.subr.bf16.mxu0 %v1718
  %2281 = vmatpush1.bf16.msra.mxu0 %v1717
  %2282 = vmatprep.subr.bf16.mxu0 %v1722
  %2283 = vmatpush1.bf16.msra.mxu0 %v1721
  %2284 = vmatprep.subr.bf16.mxu0 %v1726
  %2285 = vmatpush1.bf16.msra.mxu0 %v1725
  %2286 = vmatprep.subr.bf16.mxu0 %v1730
  %2287 = vmatpush1.bf16.msra.mxu0 %v1729
  %2288 = vmatprep.subr.bf16.mxu0 %v1734
  %2289 = vmatpush1.bf16.msra.mxu0 %v1733
  %2290 = vmatprep.subr.bf16.mxu0 %v1738
  %2291 = vmatpush1.bf16.msra.mxu0 %v1737
  %2292 = vmatprep.subr.bf16.mxu0 %v1742
  %2293 = vmatpush1.bf16.msra.mxu0 %v1741
  %2294 = vmatprep.subr.bf16.mxu0 %v1746
  %2295 = vmatpush1.bf16.msra.mxu0 %v1745
  %2296 = vmatprep.subr.bf16.mxu0 %v1750
  %2297 = vmatpush1.bf16.msra.mxu0 %v1749
  %2298 = vmatprep.mubr.bf16.mxu0 %v732
  %2299 = vmatmul.mubr.bf16.gmra.mrb[0].mxu0 %v731
  %v2300 = vpop.f32.mrb[0].mxu0
  %v2301 = vadd.f32 %v2108, %v2300
  %v2302 = vpop.f32.mrb[0].mxu0
  %v2303 = vadd.f32 %v2110, %v2302
  %v2304 = vpop.f32.mrb[0].mxu0
  %v2305 = vadd.f32 %v2112, %v2304
  %v2306 = vpop.f32.mrb[0].mxu0
  %v2307 = vadd.f32 %v2114, %v2306
  %2308 = vmatprep.mubr.bf16.mxu0 %v739
  %2309 = vmatmul.mubr.bf16.gmra.mrb[0].mxu0 %v738
  %v2310 = vpop.f32.mrb[0].mxu0
  %v2311 = vadd.f32 %v2118, %v2310
  %v2312 = vpop.f32.mrb[0].mxu0
  %v2313 = vadd.f32 %v2120, %v2312
  %v2314 = vpop.f32.mrb[0].mxu0
  %v2315 = vadd.f32 %v2122, %v2314
  %v2316 = vpop.f32.mrb[0].mxu0
  %v2317 = vadd.f32 %v2124, %v2316
  %2318 = vmatprep.mubr.bf16.mxu0 %v746
  %2319 = vmatmul.mubr.bf16.gmra.mrb[0].mxu0 %v745
  %v2320 = vpop.f32.mrb[0].mxu0
  %v2321 = vadd.f32 %v2128, %v2320
  %v2322 = vpop.f32.mrb[0].mxu0
  %v2323 = vadd.f32 %v2130, %v2322
  %v2324 = vpop.f32.mrb[0].mxu0
  %v2325 = vadd.f32 %v2132, %v2324
  %v2326 = vpop.f32.mrb[0].mxu0
  %v2327 = vadd.f32 %v2134, %v2326
  %2328 = vmatprep.mubr.bf16.mxu0 %v753
  %2329 = vmatmul.mubr.bf16.gmra.mrb[0].mxu0 %v752
  %v2330 = vpop.f32.mrb[0].mxu0
  %v2331 = vadd.f32 %v2138, %v2330
  %v2332 = vpop.f32.mrb[0].mxu0
  %v2333 = vadd.f32 %v2140, %v2332
  %v2334 = vpop.f32.mrb[0].mxu0
  %v2335 = vadd.f32 %v2142, %v2334
  %v2336 = vpop.f32.mrb[0].mxu0
  %v2337 = vadd.f32 %v2144, %v2336
  %2338 = vmatprep.mubr.bf16.mxu0 %v760
  %2339 = vmatmul.mubr.bf16.gmra.mrb[0].mxu0 %v759
  %v2340 = vpop.f32.mrb[0].mxu0
  %v2341 = vadd.f32 %v2148, %v2340
  %v2342 = vpop.f32.mrb[0].mxu0
  %v2343 = vadd.f32 %v2150, %v2342
  %v2344 = vpop.f32.mrb[0].mxu0
  %v2345 = vadd.f32 %v2152, %v2344
  %v2346 = vpop.f32.mrb[0].mxu0
  %v2347 = vadd.f32 %v2154, %v2346
  %2348 = vmatprep.mubr.bf16.mxu0 %v767
  %2349 = vmatmul.mubr.bf16.gmra.mrb[0].mxu0 %v766
  %v2350 = vpop.f32.mrb[0].mxu0
  %v2351 = vadd.f32 %v2158, %v2350
  %v2352 = vpop.f32.mrb[0].mxu0
  %v2353 = vadd.f32 %v2160, %v2352
  %v2354 = vpop.f32.mrb[0].mxu0
  %v2355 = vadd.f32 %v2162, %v2354
  %v2356 = vpop.f32.mrb[0].mxu0
  %v2357 = vadd.f32 %v2164, %v2356
  %2358 = vmatprep.mubr.bf16.mxu0 %v774
  %2359 = vmatmul.mubr.bf16.gmra.mrb[0].mxu0 %v773
  %v2360 = vpop.f32.mrb[0].mxu0
  %v2361 = vadd.f32 %v2168, %v2360
  %v2362 = vpop.f32.mrb[0].mxu0
  %v2363 = vadd.f32 %v2170, %v2362
  %v2364 = vpop.f32.mrb[0].mxu0
  %v2365 = vadd.f32 %v2172, %v2364
  %v2366 = vpop.f32.mrb[0].mxu0
  %v2367 = vadd.f32 %v2174, %v2366
  %2368 = vmatprep.mubr.bf16.mxu0 %v781
  %2369 = vmatmul.mubr.bf16.gmra.mrb[0].mxu0 %v780
  %v2370 = vpop.f32.mrb[0].mxu0
  %v2371 = vadd.f32 %v2178, %v2370
  %v2372 = vpop.f32.mrb[0].mxu0
  %v2373 = vadd.f32 %v2180, %v2372
  %v2374 = vpop.f32.mrb[0].mxu0
  %v2375 = vadd.f32 %v2182, %v2374
  %v2376 = vpop.f32.mrb[0].mxu0
  %v2377 = vadd.f32 %v2184, %v2376
  %2378 = vmatprep.mubr.bf16.mxu0 %v788
  %2379 = vmatmul.mubr.bf16.gmra.mrb[0].mxu0 %v787
  %v2380 = vpop.f32.mrb[0].mxu0
  %v2381 = vadd.f32 %v2188, %v2380
  %v2382 = vpop.f32.mrb[0].mxu0
  %v2383 = vadd.f32 %v2190, %v2382
  %v2384 = vpop.f32.mrb[0].mxu0
  %v2385 = vadd.f32 %v2192, %v2384
  %v2386 = vpop.f32.mrb[0].mxu0
  %v2387 = vadd.f32 %v2194, %v2386
  %2388 = vmatprep.mubr.bf16.mxu0 %v795
  %2389 = vmatmul.mubr.bf16.gmra.mrb[0].mxu0 %v794
  %v2390 = vpop.f32.mrb[0].mxu0
  %v2391 = vadd.f32 %v2198, %v2390
  %v2392 = vpop.f32.mrb[0].mxu0
  %v2393 = vadd.f32 %v2200, %v2392
  %v2394 = vpop.f32.mrb[0].mxu0
  %v2395 = vadd.f32 %v2202, %v2394
  %v2396 = vpop.f32.mrb[0].mxu0
  %v2397 = vadd.f32 %v2204, %v2396
  %2398 = vmatprep.mubr.bf16.mxu0 %v802
  %2399 = vmatmul.mubr.bf16.gmra.mrb[0].mxu0 %v801
  %v2400 = vpop.f32.mrb[0].mxu0
  %v2401 = vadd.f32 %v2208, %v2400
  %v2402 = vpop.f32.mrb[0].mxu0
  %v2403 = vadd.f32 %v2210, %v2402
  %v2404 = vpop.f32.mrb[0].mxu0
  %v2405 = vadd.f32 %v2212, %v2404
  %v2406 = vpop.f32.mrb[0].mxu0
  %v2407 = vadd.f32 %v2214, %v2406
  %2408 = vmatprep.mubr.bf16.mxu0 %v809
  %2409 = vmatmul.mubr.bf16.gmra.mrb[0].mxu0 %v808
  %v2410 = vpop.f32.mrb[0].mxu0
  %v2411 = vadd.f32 %v2218, %v2410
  %v2412 = vpop.f32.mrb[0].mxu0
  %v2413 = vadd.f32 %v2220, %v2412
  %v2414 = vpop.f32.mrb[0].mxu0
  %v2415 = vadd.f32 %v2222, %v2414
  %v2416 = vpop.f32.mrb[0].mxu0
  %v2417 = vadd.f32 %v2224, %v2416
  %2418 = vmatprep.mubr.bf16.mxu0 %v816
  %2419 = vmatmul.mubr.bf16.gmra.mrb[0].mxu0 %v815
  %v2420 = vpop.f32.mrb[0].mxu0
  %v2421 = vadd.f32 %v2228, %v2420
  %v2422 = vpop.f32.mrb[0].mxu0
  %v2423 = vadd.f32 %v2230, %v2422
  %v2424 = vpop.f32.mrb[0].mxu0
  %v2425 = vadd.f32 %v2232, %v2424
  %v2426 = vpop.f32.mrb[0].mxu0
  %v2427 = vadd.f32 %v2234, %v2426
  %2428 = vmatprep.mubr.bf16.mxu0 %v823
  %2429 = vmatmul.mubr.bf16.gmra.mrb[0].mxu0 %v822
  %v2430 = vpop.f32.mrb[0].mxu0
  %v2431 = vadd.f32 %v2238, %v2430
  %v2432 = vpop.f32.mrb[0].mxu0
  %v2433 = vadd.f32 %v2240, %v2432
  %v2434 = vpop.f32.mrb[0].mxu0
  %v2435 = vadd.f32 %v2242, %v2434
  %v2436 = vpop.f32.mrb[0].mxu0
  %v2437 = vadd.f32 %v2244, %v2436
  %2438 = vmatprep.mubr.bf16.mxu0 %v830
  %2439 = vmatmul.mubr.bf16.gmra.mrb[0].mxu0 %v829
  %v2440 = vpop.f32.mrb[0].mxu0
  %v2441 = vadd.f32 %v2248, %v2440
  %v2442 = vpop.f32.mrb[0].mxu0
  %v2443 = vadd.f32 %v2250, %v2442
  %v2444 = vpop.f32.mrb[0].mxu0
  %v2445 = vadd.f32 %v2252, %v2444
  %v2446 = vpop.f32.mrb[0].mxu0
  %v2447 = vadd.f32 %v2254, %v2446
  %2448 = vmatprep.mubr.bf16.mxu0 %v837
  %2449 = vmatmul.mubr.bf16.gmra.mrb[0].mxu0 %v836
  %v2450 = vpop.f32.mrb[0].mxu0
  %v2451 = vadd.f32 %v2258, %v2450
  %v2452 = vpop.f32.mrb[0].mxu0
  %v2453 = vadd.f32 %v2260, %v2452
  %v2454 = vpop.f32.mrb[0].mxu0
  %v2455 = vadd.f32 %v2262, %v2454
  %v2456 = vpop.f32.mrb[0].mxu0
  %v2457 = vadd.f32 %v2264, %v2456
  %2458 = vdwg.mxu0
  %2459 = vmatprep.subr.bf16.mxu0 %v1754
  %2460 = vmatpush1.bf16.msra.mxu0 %v1753
  %2461 = vmatprep.subr.bf16.mxu0 %v1758
  %2462 = vmatpush1.bf16.msra.mxu0 %v1757
  %2463 = vmatprep.subr.bf16.mxu0 %v1762
  %2464 = vmatpush1.bf16.msra.mxu0 %v1761
  %2465 = vmatprep.subr.bf16.mxu0 %v1766
  %2466 = vmatpush1.bf16.msra.mxu0 %v1765
  %2467 = vmatprep.subr.bf16.mxu0 %v1770
  %2468 = vmatpush1.bf16.msra.mxu0 %v1769
  %2469 = vmatprep.subr.bf16.mxu0 %v1774
  %2470 = vmatpush1.bf16.msra.mxu0 %v1773
  %2471 = vmatprep.subr.bf16.mxu0 %v1778
  %2472 = vmatpush1.bf16.msra.mxu0 %v1777
  %2473 = vmatprep.subr.bf16.mxu0 %v1782
  %2474 = vmatpush1.bf16.msra.mxu0 %v1781
  %2475 = vmatprep.subr.bf16.mxu0 %v1786
  %2476 = vmatpush1.bf16.msra.mxu0 %v1785
  %2477 = vmatprep.subr.bf16.mxu0 %v1790
  %2478 = vmatpush1.bf16.msra.mxu0 %v1789
  %2479 = vmatprep.subr.bf16.mxu0 %v1794
  %2480 = vmatpush1.bf16.msra.mxu0 %v1793
  %2481 = vmatprep.subr.bf16.mxu0 %v1798
  %2482 = vmatpush1.bf16.msra.mxu0 %v1797
  %2483 = vmatprep.subr.bf16.mxu0 %v1802
  %2484 = vmatpush1.bf16.msra.mxu0 %v1801
  %2485 = vmatprep.subr.bf16.mxu0 %v1806
  %2486 = vmatpush1.bf16.msra.mxu0 %v1805
  %2487 = vmatprep.subr.bf16.mxu0 %v1810
  %2488 = vmatpush1.bf16.msra.mxu0 %v1809
  %2489 = vmatprep.subr.bf16.mxu0 %v1814
  %2490 = vmatpush1.bf16.msra.mxu0 %v1813
  %2491 = vmatprep.mubr.bf16.mxu0 %v734
  %2492 = vmatmul.mubr.bf16.gmra.mrb[0].mxu0 %v733
  %v2493 = vpop.f32.mrb[0].mxu0
  %v2494 = vadd.f32 %v2301, %v2493
  %v2495 = vpop.f32.mrb[0].mxu0
  %v2496 = vadd.f32 %v2303, %v2495
  %v2497 = vpop.f32.mrb[0].mxu0
  %v2498 = vadd.f32 %v2305, %v2497
  %v2499 = vpop.f32.mrb[0].mxu0
  %v2500 = vadd.f32 %v2307, %v2499
  %2501 = vmatprep.mubr.bf16.mxu0 %v741
  %2502 = vmatmul.mubr.bf16.gmra.mrb[0].mxu0 %v740
  %v2503 = vpop.f32.mrb[0].mxu0
  %v2504 = vadd.f32 %v2311, %v2503
  %v2505 = vpop.f32.mrb[0].mxu0
  %v2506 = vadd.f32 %v2313, %v2505
  %v2507 = vpop.f32.mrb[0].mxu0
  %v2508 = vadd.f32 %v2315, %v2507
  %v2509 = vpop.f32.mrb[0].mxu0
  %v2510 = vadd.f32 %v2317, %v2509
  %2511 = vmatprep.mubr.bf16.mxu0 %v748
  %2512 = vmatmul.mubr.bf16.gmra.mrb[0].mxu0 %v747
  %v2513 = vpop.f32.mrb[0].mxu0
  %v2514 = vadd.f32 %v2321, %v2513
  %v2515 = vpop.f32.mrb[0].mxu0
  %v2516 = vadd.f32 %v2323, %v2515
  %v2517 = vpop.f32.mrb[0].mxu0
  %v2518 = vadd.f32 %v2325, %v2517
  %v2519 = vpop.f32.mrb[0].mxu0
  %v2520 = vadd.f32 %v2327, %v2519
  %2521 = vmatprep.mubr.bf16.mxu0 %v755
  %2522 = vmatmul.mubr.bf16.gmra.mrb[0].mxu0 %v754
  %v2523 = vpop.f32.mrb[0].mxu0
  %v2524 = vadd.f32 %v2331, %v2523
  %v2525 = vpop.f32.mrb[0].mxu0
  %v2526 = vadd.f32 %v2333, %v2525
  %v2527 = vpop.f32.mrb[0].mxu0
  %v2528 = vadd.f32 %v2335, %v2527
  %v2529 = vpop.f32.mrb[0].mxu0
  %v2530 = vadd.f32 %v2337, %v2529
  %2531 = vmatprep.mubr.bf16.mxu0 %v762
  %2532 = vmatmul.mubr.bf16.gmra.mrb[0].mxu0 %v761
  %v2533 = vpop.f32.mrb[0].mxu0
  %v2534 = vadd.f32 %v2341, %v2533
  %v2535 = vpop.f32.mrb[0].mxu0
  %v2536 = vadd.f32 %v2343, %v2535
  %v2537 = vpop.f32.mrb[0].mxu0
  %v2538 = vadd.f32 %v2345, %v2537
  %v2539 = vpop.f32.mrb[0].mxu0
  %v2540 = vadd.f32 %v2347, %v2539
  %2541 = vmatprep.mubr.bf16.mxu0 %v769
  %2542 = vmatmul.mubr.bf16.gmra.mrb[0].mxu0 %v768
  %v2543 = vpop.f32.mrb[0].mxu0
  %v2544 = vadd.f32 %v2351, %v2543
  %v2545 = vpop.f32.mrb[0].mxu0
  %v2546 = vadd.f32 %v2353, %v2545
  %v2547 = vpop.f32.mrb[0].mxu0
  %v2548 = vadd.f32 %v2355, %v2547
  %v2549 = vpop.f32.mrb[0].mxu0
  %v2550 = vadd.f32 %v2357, %v2549
  %2551 = vmatprep.mubr.bf16.mxu0 %v776
  %2552 = vmatmul.mubr.bf16.gmra.mrb[0].mxu0 %v775
  %v2553 = vpop.f32.mrb[0].mxu0
  %v2554 = vadd.f32 %v2361, %v2553
  %v2555 = vpop.f32.mrb[0].mxu0
  %v2556 = vadd.f32 %v2363, %v2555
  %v2557 = vpop.f32.mrb[0].mxu0
  %v2558 = vadd.f32 %v2365, %v2557
  %v2559 = vpop.f32.mrb[0].mxu0
  %v2560 = vadd.f32 %v2367, %v2559
  %2561 = vmatprep.mubr.bf16.mxu0 %v783
  %2562 = vmatmul.mubr.bf16.gmra.mrb[0].mxu0 %v782
  %v2563 = vpop.f32.mrb[0].mxu0
  %v2564 = vadd.f32 %v2371, %v2563
  %v2565 = vpop.f32.mrb[0].mxu0
  %v2566 = vadd.f32 %v2373, %v2565
  %v2567 = vpop.f32.mrb[0].mxu0
  %v2568 = vadd.f32 %v2375, %v2567
  %v2569 = vpop.f32.mrb[0].mxu0
  %v2570 = vadd.f32 %v2377, %v2569
  %2571 = vmatprep.mubr.bf16.mxu0 %v790
  %2572 = vmatmul.mubr.bf16.gmra.mrb[0].mxu0 %v789
  %v2573 = vpop.f32.mrb[0].mxu0
  %v2574 = vadd.f32 %v2381, %v2573
  %v2575 = vpop.f32.mrb[0].mxu0
  %v2576 = vadd.f32 %v2383, %v2575
  %v2577 = vpop.f32.mrb[0].mxu0
  %v2578 = vadd.f32 %v2385, %v2577
  %v2579 = vpop.f32.mrb[0].mxu0
  %v2580 = vadd.f32 %v2387, %v2579
  %2581 = vmatprep.mubr.bf16.mxu0 %v797
  %2582 = vmatmul.mubr.bf16.gmra.mrb[0].mxu0 %v796
  %v2583 = vpop.f32.mrb[0].mxu0
  %v2584 = vadd.f32 %v2391, %v2583
  %v2585 = vpop.f32.mrb[0].mxu0
  %v2586 = vadd.f32 %v2393, %v2585
  %v2587 = vpop.f32.mrb[0].mxu0
  %v2588 = vadd.f32 %v2395, %v2587
  %v2589 = vpop.f32.mrb[0].mxu0
  %v2590 = vadd.f32 %v2397, %v2589
  %2591 = vmatprep.mubr.bf16.mxu0 %v804
  %2592 = vmatmul.mubr.bf16.gmra.mrb[0].mxu0 %v803
  %v2593 = vpop.f32.mrb[0].mxu0
  %v2594 = vadd.f32 %v2401, %v2593
  %v2595 = vpop.f32.mrb[0].mxu0
  %v2596 = vadd.f32 %v2403, %v2595
  %v2597 = vpop.f32.mrb[0].mxu0
  %v2598 = vadd.f32 %v2405, %v2597
  %v2599 = vpop.f32.mrb[0].mxu0
  %v2600 = vadd.f32 %v2407, %v2599
  %2601 = vmatprep.mubr.bf16.mxu0 %v811
  %2602 = vmatmul.mubr.bf16.gmra.mrb[0].mxu0 %v810
  %v2603 = vpop.f32.mrb[0].mxu0
  %v2604 = vadd.f32 %v2411, %v2603
  %v2605 = vpop.f32.mrb[0].mxu0
  %v2606 = vadd.f32 %v2413, %v2605
  %v2607 = vpop.f32.mrb[0].mxu0
  %v2608 = vadd.f32 %v2415, %v2607
  %v2609 = vpop.f32.mrb[0].mxu0
  %v2610 = vadd.f32 %v2417, %v2609
  %2611 = vmatprep.mubr.bf16.mxu0 %v818
  %2612 = vmatmul.mubr.bf16.gmra.mrb[0].mxu0 %v817
  %v2613 = vpop.f32.mrb[0].mxu0
  %v2614 = vadd.f32 %v2421, %v2613
  %v2615 = vpop.f32.mrb[0].mxu0
  %v2616 = vadd.f32 %v2423, %v2615
  %v2617 = vpop.f32.mrb[0].mxu0
  %v2618 = vadd.f32 %v2425, %v2617
  %v2619 = vpop.f32.mrb[0].mxu0
  %v2620 = vadd.f32 %v2427, %v2619
  %2621 = vmatprep.mubr.bf16.mxu0 %v825
  %2622 = vmatmul.mubr.bf16.gmra.mrb[0].mxu0 %v824
  %v2623 = vpop.f32.mrb[0].mxu0
  %v2624 = vadd.f32 %v2431, %v2623
  %v2625 = vpop.f32.mrb[0].mxu0
  %v2626 = vadd.f32 %v2433, %v2625
  %v2627 = vpop.f32.mrb[0].mxu0
  %v2628 = vadd.f32 %v2435, %v2627
  %v2629 = vpop.f32.mrb[0].mxu0
  %v2630 = vadd.f32 %v2437, %v2629
  %2631 = vmatprep.mubr.bf16.mxu0 %v832
  %2632 = vmatmul.mubr.bf16.gmra.mrb[0].mxu0 %v831
  %v2633 = vpop.f32.mrb[0].mxu0
  %v2634 = vadd.f32 %v2441, %v2633
  %v2635 = vpop.f32.mrb[0].mxu0
  %v2636 = vadd.f32 %v2443, %v2635
  %v2637 = vpop.f32.mrb[0].mxu0
  %v2638 = vadd.f32 %v2445, %v2637
  %v2639 = vpop.f32.mrb[0].mxu0
  %v2640 = vadd.f32 %v2447, %v2639
  %2641 = vmatprep.mubr.bf16.mxu0 %v839
  %2642 = vmatmul.mubr.bf16.gmra.mrb[0].mxu0 %v838
  %v2643 = vpop.f32.mrb[0].mxu0
  %v2644 = vadd.f32 %v2451, %v2643
  %v2645 = vpop.f32.mrb[0].mxu0
  %v2646 = vadd.f32 %v2453, %v2645
  %v2647 = vpop.f32.mrb[0].mxu0
  %v2648 = vadd.f32 %v2455, %v2647
  %v2649 = vpop.f32.mrb[0].mxu0
  %v2650 = vadd.f32 %v2457, %v2649
  %2651 = vdwg.mxu0
  %2652 = vmatprep.subr.bf16.mxu0 %v1818
  %2653 = vmatpush1.bf16.msra.mxu0 %v1817
  %2654 = vmatprep.subr.bf16.mxu0 %v1822
  %2655 = vmatpush1.bf16.msra.mxu0 %v1821
  %2656 = vmatprep.subr.bf16.mxu0 %v1826
  %2657 = vmatpush1.bf16.msra.mxu0 %v1825
  %2658 = vmatprep.subr.bf16.mxu0 %v1830
  %2659 = vmatpush1.bf16.msra.mxu0 %v1829
  %2660 = vmatprep.subr.bf16.mxu0 %v1834
  %2661 = vmatpush1.bf16.msra.mxu0 %v1833
  %2662 = vmatprep.subr.bf16.mxu0 %v1838
  %2663 = vmatpush1.bf16.msra.mxu0 %v1837
  %2664 = vmatprep.subr.bf16.mxu0 %v1842
  %2665 = vmatpush1.bf16.msra.mxu0 %v1841
  %2666 = vmatprep.subr.bf16.mxu0 %v1846
  %2667 = vmatpush1.bf16.msra.mxu0 %v1845
  %2668 = vmatprep.subr.bf16.mxu0 0
  %2669 = vmatpush1.bf16.msra.mxu0 0
  %2670 = vmatprep.subr.bf16.mxu0 0
  %2671 = vmatpush1.bf16.msra.mxu0 0
  %2672 = vmatprep.subr.bf16.mxu0 0
  %2673 = vmatpush1.bf16.msra.mxu0 0
  %2674 = vmatprep.subr.bf16.mxu0 0
  %2675 = vmatpush1.bf16.msra.mxu0 0
  %2676 = vmatprep.subr.bf16.mxu0 0
  %2677 = vmatpush1.bf16.msra.mxu0 0
  %2678 = vmatprep.subr.bf16.mxu0 0
  %2679 = vmatpush1.bf16.msra.mxu0 0
  %2680 = vmatprep.subr.bf16.mxu0 0
  %2681 = vmatpush1.bf16.msra.mxu0 0
  %2682 = vmatprep.subr.bf16.mxu0 0
  %2683 = vmatpush1.bf16.msra.mxu0 0
  %2684 = vmatprep.mubr.bf16.mxu0 0
  %2685 = vmatmul.mubr.bf16.gmra.mrb[0].mxu0 %v735
  %v2686 = vpop.f32.mrb[0].mxu0
  %v2687 = vadd.f32 %v2494, %v2686
  %v2688 = vpop.f32.mrb[0].mxu0
  %v2689 = vadd.f32 %v2496, %v2688
  %v2690 = vpop.f32.mrb[0].mxu0
  %v2691 = vadd.f32 %v2498, %v2690
  %v2692 = vpop.f32.mrb[0].mxu0
  %v2693 = vadd.f32 %v2500, %v2692
  %2694 = vmatprep.mubr.bf16.mxu0 0
  %2695 = vmatmul.mubr.bf16.gmra.mrb[0].mxu0 %v742
  %v2696 = vpop.f32.mrb[0].mxu0
  %v2697 = vadd.f32 %v2504, %v2696
  %v2698 = vpop.f32.mrb[0].mxu0
  %v2699 = vadd.f32 %v2506, %v2698
  %v2700 = vpop.f32.mrb[0].mxu0
  %v2701 = vadd.f32 %v2508, %v2700
  %v2702 = vpop.f32.mrb[0].mxu0
  %v2703 = vadd.f32 %v2510, %v2702
  %2704 = vmatprep.mubr.bf16.mxu0 0
  %2705 = vmatmul.mubr.bf16.gmra.mrb[0].mxu0 %v749
  %v2706 = vpop.f32.mrb[0].mxu0
  %v2707 = vadd.f32 %v2514, %v2706
  %v2708 = vpop.f32.mrb[0].mxu0
  %v2709 = vadd.f32 %v2516, %v2708
  %v2710 = vpop.f32.mrb[0].mxu0
  %v2711 = vadd.f32 %v2518, %v2710
  %v2712 = vpop.f32.mrb[0].mxu0
  %v2713 = vadd.f32 %v2520, %v2712
  %2714 = vmatprep.mubr.bf16.mxu0 0
  %2715 = vmatmul.mubr.bf16.gmra.mrb[0].mxu0 %v756
  %v2716 = vpop.f32.mrb[0].mxu0
  %v2717 = vadd.f32 %v2524, %v2716
  %v2718 = vpop.f32.mrb[0].mxu0
  %v2719 = vadd.f32 %v2526, %v2718
  %v2720 = vpop.f32.mrb[0].mxu0
  %v2721 = vadd.f32 %v2528, %v2720
  %v2722 = vpop.f32.mrb[0].mxu0
  %v2723 = vadd.f32 %v2530, %v2722
  %2724 = vmatprep.mubr.bf16.mxu0 0
  %2725 = vmatmul.mubr.bf16.gmra.mrb[0].mxu0 %v763
  %v2726 = vpop.f32.mrb[0].mxu0
  %v2727 = vadd.f32 %v2534, %v2726
  %v2728 = vpop.f32.mrb[0].mxu0
  %v2729 = vadd.f32 %v2536, %v2728
  %v2730 = vpop.f32.mrb[0].mxu0
  %v2731 = vadd.f32 %v2538, %v2730
  %v2732 = vpop.f32.mrb[0].mxu0
  %v2733 = vadd.f32 %v2540, %v2732
  %2734 = vmatprep.mubr.bf16.mxu0 0
  %2735 = vmatmul.mubr.bf16.gmra.mrb[0].mxu0 %v770
  %v2736 = vpop.f32.mrb[0].mxu0
  %v2737 = vadd.f32 %v2544, %v2736
  %v2738 = vpop.f32.mrb[0].mxu0
  %v2739 = vadd.f32 %v2546, %v2738
  %v2740 = vpop.f32.mrb[0].mxu0
  %v2741 = vadd.f32 %v2548, %v2740
  %v2742 = vpop.f32.mrb[0].mxu0
  %v2743 = vadd.f32 %v2550, %v2742
  %2744 = vmatprep.mubr.bf16.mxu0 0
  %2745 = vmatmul.mubr.bf16.gmra.mrb[0].mxu0 %v777
  %v2746 = vpop.f32.mrb[0].mxu0
  %v2747 = vadd.f32 %v2554, %v2746
  %v2748 = vpop.f32.mrb[0].mxu0
  %v2749 = vadd.f32 %v2556, %v2748
  %v2750 = vpop.f32.mrb[0].mxu0
  %v2751 = vadd.f32 %v2558, %v2750
  %v2752 = vpop.f32.mrb[0].mxu0
  %v2753 = vadd.f32 %v2560, %v2752
  %2754 = vmatprep.mubr.bf16.mxu0 0
  %2755 = vmatmul.mubr.bf16.gmra.mrb[0].mxu0 %v784
  %v2756 = vpop.f32.mrb[0].mxu0
  %v2757 = vadd.f32 %v2564, %v2756
  %v2758 = vpop.f32.mrb[0].mxu0
  %v2759 = vadd.f32 %v2566, %v2758
  %v2760 = vpop.f32.mrb[0].mxu0
  %v2761 = vadd.f32 %v2568, %v2760
  %v2762 = vpop.f32.mrb[0].mxu0
  %v2763 = vadd.f32 %v2570, %v2762
  %2764 = vmatprep.mubr.bf16.mxu0 0
  %2765 = vmatmul.mubr.bf16.gmra.mrb[0].mxu0 %v791
  %v2766 = vpop.f32.mrb[0].mxu0
  %v2767 = vadd.f32 %v2574, %v2766
  %v2768 = vpop.f32.mrb[0].mxu0
  %v2769 = vadd.f32 %v2576, %v2768
  %v2770 = vpop.f32.mrb[0].mxu0
  %v2771 = vadd.f32 %v2578, %v2770
  %v2772 = vpop.f32.mrb[0].mxu0
  %v2773 = vadd.f32 %v2580, %v2772
  %2774 = vmatprep.mubr.bf16.mxu0 0
  %2775 = vmatmul.mubr.bf16.gmra.mrb[0].mxu0 %v798
  %v2776 = vpop.f32.mrb[0].mxu0
  %v2777 = vadd.f32 %v2584, %v2776
  %v2778 = vpop.f32.mrb[0].mxu0
  %v2779 = vadd.f32 %v2586, %v2778
  %v2780 = vpop.f32.mrb[0].mxu0
  %v2781 = vadd.f32 %v2588, %v2780
  %v2782 = vpop.f32.mrb[0].mxu0
  %v2783 = vadd.f32 %v2590, %v2782
  %2784 = vmatprep.mubr.bf16.mxu0 0
  %2785 = vmatmul.mubr.bf16.gmra.mrb[0].mxu0 %v805
  %v2786 = vpop.f32.mrb[0].mxu0
  %v2787 = vadd.f32 %v2594, %v2786
  %v2788 = vpop.f32.mrb[0].mxu0
  %v2789 = vadd.f32 %v2596, %v2788
  %v2790 = vpop.f32.mrb[0].mxu0
  %v2791 = vadd.f32 %v2598, %v2790
  %v2792 = vpop.f32.mrb[0].mxu0
  %v2793 = vadd.f32 %v2600, %v2792
  %2794 = vmatprep.mubr.bf16.mxu0 0
  %2795 = vmatmul.mubr.bf16.gmra.mrb[0].mxu0 %v812
  %v2796 = vpop.f32.mrb[0].mxu0
  %v2797 = vadd.f32 %v2604, %v2796
  %v2798 = vpop.f32.mrb[0].mxu0
  %v2799 = vadd.f32 %v2606, %v2798
  %v2800 = vpop.f32.mrb[0].mxu0
  %v2801 = vadd.f32 %v2608, %v2800
  %v2802 = vpop.f32.mrb[0].mxu0
  %v2803 = vadd.f32 %v2610, %v2802
  %2804 = vmatprep.mubr.bf16.mxu0 0
  %2805 = vmatmul.mubr.bf16.gmra.mrb[0].mxu0 %v819
  %v2806 = vpop.f32.mrb[0].mxu0
  %v2807 = vadd.f32 %v2614, %v2806
  %v2808 = vpop.f32.mrb[0].mxu0
  %v2809 = vadd.f32 %v2616, %v2808
  %v2810 = vpop.f32.mrb[0].mxu0
  %v2811 = vadd.f32 %v2618, %v2810
  %v2812 = vpop.f32.mrb[0].mxu0
  %v2813 = vadd.f32 %v2620, %v2812
  %2814 = vmatprep.mubr.bf16.mxu0 0
  %2815 = vmatmul.mubr.bf16.gmra.mrb[0].mxu0 %v826
  %v2816 = vpop.f32.mrb[0].mxu0
  %v2817 = vadd.f32 %v2624, %v2816
  %v2818 = vpop.f32.mrb[0].mxu0
  %v2819 = vadd.f32 %v2626, %v2818
  %v2820 = vpop.f32.mrb[0].mxu0
  %v2821 = vadd.f32 %v2628, %v2820
  %v2822 = vpop.f32.mrb[0].mxu0
  %v2823 = vadd.f32 %v2630, %v2822
  %2824 = vmatprep.mubr.bf16.mxu0 0
  %2825 = vmatmul.mubr.bf16.gmra.mrb[0].mxu0 %v833
  %v2826 = vpop.f32.mrb[0].mxu0
  %v2827 = vadd.f32 %v2634, %v2826
  %v2828 = vpop.f32.mrb[0].mxu0
  %v2829 = vadd.f32 %v2636, %v2828
  %v2830 = vpop.f32.mrb[0].mxu0
  %v2831 = vadd.f32 %v2638, %v2830
  %v2832 = vpop.f32.mrb[0].mxu0
  %v2833 = vadd.f32 %v2640, %v2832
  %2834 = vmatprep.mubr.bf16.mxu0 0
  %2835 = vmatmul.mubr.bf16.gmra.mrb[0].mxu0 %v840
  %v2836 = vpop.f32.mrb[0].mxu0
  %v2837 = vadd.f32 %v2644, %v2836
  %v2838 = vpop.f32.mrb[0].mxu0
  %v2839 = vadd.f32 %v2646, %v2838
  %v2840 = vpop.f32.mrb[0].mxu0
  %v2841 = vadd.f32 %v2648, %v2840
  %v2842 = vpop.f32.mrb[0].mxu0
  %v2843 = vadd.f32 %v2650, %v2842
  %2844 = vdwg.mxu0
  %2845 = vmatprep.subr.bf16.mxu0 %v1628
  %2846 = vmatpush1.bf16.msra.mxu0 %v1627
  %2847 = vmatprep.subr.bf16.mxu0 %v1632
  %2848 = vmatpush1.bf16.msra.mxu0 %v1631
  %2849 = vmatprep.subr.bf16.mxu0 %v1636
  %2850 = vmatpush1.bf16.msra.mxu0 %v1635
  %2851 = vmatprep.subr.bf16.mxu0 %v1640
  %2852 = vmatpush1.bf16.msra.mxu0 %v1639
  %2853 = vmatprep.subr.bf16.mxu0 %v1644
  %2854 = vmatpush1.bf16.msra.mxu0 %v1643
  %2855 = vmatprep.subr.bf16.mxu0 %v1648
  %2856 = vmatpush1.bf16.msra.mxu0 %v1647
  %2857 = vmatprep.subr.bf16.mxu0 %v1652
  %2858 = vmatpush1.bf16.msra.mxu0 %v1651
  %2859 = vmatprep.subr.bf16.mxu0 %v1656
  %2860 = vmatpush1.bf16.msra.mxu0 %v1655
  %2861 = vmatprep.subr.bf16.mxu0 %v1660
  %2862 = vmatpush1.bf16.msra.mxu0 %v1659
  %2863 = vmatprep.subr.bf16.mxu0 %v1664
  %2864 = vmatpush1.bf16.msra.mxu0 %v1663
  %2865 = vmatprep.subr.bf16.mxu0 %v1668
  %2866 = vmatpush1.bf16.msra.mxu0 %v1667
  %2867 = vmatprep.subr.bf16.mxu0 %v1672
  %2868 = vmatpush1.bf16.msra.mxu0 %v1671
  %2869 = vmatprep.subr.bf16.mxu0 %v1676
  %2870 = vmatpush1.bf16.msra.mxu0 %v1675
  %2871 = vmatprep.subr.bf16.mxu0 %v1680
  %2872 = vmatpush1.bf16.msra.mxu0 %v1679
  %2873 = vmatprep.subr.bf16.mxu0 %v1684
  %2874 = vmatpush1.bf16.msra.mxu0 %v1683
  %2875 = vmatprep.subr.bf16.mxu0 %v1688
  %2876 = vmatpush1.bf16.msra.mxu0 %v1687
  %2877 = vmatprep.mubr.bf16.mxu0 %v730
  %2878 = vmatmul.mubr.bf16.gmra.mrb[0].mxu0 %v729
  %v2879 = vpop.f32.mrb[0].mxu0
  %v2880 = vadd.f32 0.0, %v2879
  %v2881 = vpop.f32.mrb[0].mxu0
  %v2882 = vadd.f32 0.0, %v2881
  %v2883 = vpop.f32.mrb[0].mxu0
  %v2884 = vadd.f32 0.0, %v2883
  %v2885 = vpop.f32.mrb[0].mxu0
  %v2886 = vadd.f32 0.0, %v2885
  %2887 = vmatprep.mubr.bf16.mxu0 %v737
  %2888 = vmatmul.mubr.bf16.gmra.mrb[0].mxu0 %v736
  %v2889 = vpop.f32.mrb[0].mxu0
  %v2890 = vadd.f32 0.0, %v2889
  %v2891 = vpop.f32.mrb[0].mxu0
  %v2892 = vadd.f32 0.0, %v2891
  %v2893 = vpop.f32.mrb[0].mxu0
  %v2894 = vadd.f32 0.0, %v2893
  %v2895 = vpop.f32.mrb[0].mxu0
  %v2896 = vadd.f32 0.0, %v2895
  %2897 = vmatprep.mubr.bf16.mxu0 %v744
  %2898 = vmatmul.mubr.bf16.gmra.mrb[0].mxu0 %v743
  %v2899 = vpop.f32.mrb[0].mxu0
  %v2900 = vadd.f32 0.0, %v2899
  %v2901 = vpop.f32.mrb[0].mxu0
  %v2902 = vadd.f32 0.0, %v2901
  %v2903 = vpop.f32.mrb[0].mxu0
  %v2904 = vadd.f32 0.0, %v2903
  %v2905 = vpop.f32.mrb[0].mxu0
  %v2906 = vadd.f32 0.0, %v2905
  %2907 = vmatprep.mubr.bf16.mxu0 %v751
  %2908 = vmatmul.mubr.bf16.gmra.mrb[0].mxu0 %v750
  %v2909 = vpop.f32.mrb[0].mxu0
  %v2910 = vadd.f32 0.0, %v2909
  %v2911 = vpop.f32.mrb[0].mxu0
  %v2912 = vadd.f32 0.0, %v2911
  %v2913 = vpop.f32.mrb[0].mxu0
  %v2914 = vadd.f32 0.0, %v2913
  %v2915 = vpop.f32.mrb[0].mxu0
  %v2916 = vadd.f32 0.0, %v2915
  %2917 = vmatprep.mubr.bf16.mxu0 %v758
  %2918 = vmatmul.mubr.bf16.gmra.mrb[0].mxu0 %v757
  %v2919 = vpop.f32.mrb[0].mxu0
  %v2920 = vadd.f32 0.0, %v2919
  %v2921 = vpop.f32.mrb[0].mxu0
  %v2922 = vadd.f32 0.0, %v2921
  %v2923 = vpop.f32.mrb[0].mxu0
  %v2924 = vadd.f32 0.0, %v2923
  %v2925 = vpop.f32.mrb[0].mxu0
  %v2926 = vadd.f32 0.0, %v2925
  %2927 = vmatprep.mubr.bf16.mxu0 %v765
  %2928 = vmatmul.mubr.bf16.gmra.mrb[0].mxu0 %v764
  %v2929 = vpop.f32.mrb[0].mxu0
  %v2930 = vadd.f32 0.0, %v2929
  %v2931 = vpop.f32.mrb[0].mxu0
  %v2932 = vadd.f32 0.0, %v2931
  %v2933 = vpop.f32.mrb[0].mxu0
  %v2934 = vadd.f32 0.0, %v2933
  %v2935 = vpop.f32.mrb[0].mxu0
  %v2936 = vadd.f32 0.0, %v2935
  %2937 = vmatprep.mubr.bf16.mxu0 %v772
  %2938 = vmatmul.mubr.bf16.gmra.mrb[0].mxu0 %v771
  %v2939 = vpop.f32.mrb[0].mxu0
  %v2940 = vadd.f32 0.0, %v2939
  %v2941 = vpop.f32.mrb[0].mxu0
  %v2942 = vadd.f32 0.0, %v2941
  %v2943 = vpop.f32.mrb[0].mxu0
  %v2944 = vadd.f32 0.0, %v2943
  %v2945 = vpop.f32.mrb[0].mxu0
  %v2946 = vadd.f32 0.0, %v2945
  %2947 = vmatprep.mubr.bf16.mxu0 %v779
  %2948 = vmatmul.mubr.bf16.gmra.mrb[0].mxu0 %v778
  %v2949 = vpop.f32.mrb[0].mxu0
  %v2950 = vadd.f32 0.0, %v2949
  %v2951 = vpop.f32.mrb[0].mxu0
  %v2952 = vadd.f32 0.0, %v2951
  %v2953 = vpop.f32.mrb[0].mxu0
  %v2954 = vadd.f32 0.0, %v2953
  %v2955 = vpop.f32.mrb[0].mxu0
  %v2956 = vadd.f32 0.0, %v2955
  %2957 = vmatprep.mubr.bf16.mxu0 %v786
  %2958 = vmatmul.mubr.bf16.gmra.mrb[0].mxu0 %v785
  %v2959 = vpop.f32.mrb[0].mxu0
  %v2960 = vadd.f32 0.0, %v2959
  %v2961 = vpop.f32.mrb[0].mxu0
  %v2962 = vadd.f32 0.0, %v2961
  %v2963 = vpop.f32.mrb[0].mxu0
  %v2964 = vadd.f32 0.0, %v2963
  %v2965 = vpop.f32.mrb[0].mxu0
  %v2966 = vadd.f32 0.0, %v2965
  %2967 = vmatprep.mubr.bf16.mxu0 %v793
  %2968 = vmatmul.mubr.bf16.gmra.mrb[0].mxu0 %v792
  %v2969 = vpop.f32.mrb[0].mxu0
  %v2970 = vadd.f32 0.0, %v2969
  %v2971 = vpop.f32.mrb[0].mxu0
  %v2972 = vadd.f32 0.0, %v2971
  %v2973 = vpop.f32.mrb[0].mxu0
  %v2974 = vadd.f32 0.0, %v2973
  %v2975 = vpop.f32.mrb[0].mxu0
  %v2976 = vadd.f32 0.0, %v2975
  %2977 = vmatprep.mubr.bf16.mxu0 %v800
  %2978 = vmatmul.mubr.bf16.gmra.mrb[0].mxu0 %v799
  %v2979 = vpop.f32.mrb[0].mxu0
  %v2980 = vadd.f32 0.0, %v2979
  %v2981 = vpop.f32.mrb[0].mxu0
  %v2982 = vadd.f32 0.0, %v2981
  %v2983 = vpop.f32.mrb[0].mxu0
  %v2984 = vadd.f32 0.0, %v2983
  %v2985 = vpop.f32.mrb[0].mxu0
  %v2986 = vadd.f32 0.0, %v2985
  %2987 = vmatprep.mubr.bf16.mxu0 %v807
  %2988 = vmatmul.mubr.bf16.gmra.mrb[0].mxu0 %v806
  %v2989 = vpop.f32.mrb[0].mxu0
  %v2990 = vadd.f32 0.0, %v2989
  %v2991 = vpop.f32.mrb[0].mxu0
  %v2992 = vadd.f32 0.0, %v2991
  %v2993 = vpop.f32.mrb[0].mxu0
  %v2994 = vadd.f32 0.0, %v2993
  %v2995 = vpop.f32.mrb[0].mxu0
  %v2996 = vadd.f32 0.0, %v2995
  %2997 = vmatprep.mubr.bf16.mxu0 %v814
  %2998 = vmatmul.mubr.bf16.gmra.mrb[0].mxu0 %v813
  %v2999 = vpop.f32.mrb[0].mxu0
  %v3000 = vadd.f32 0.0, %v2999
  %v3001 = vpop.f32.mrb[0].mxu0
  %v3002 = vadd.f32 0.0, %v3001
  %v3003 = vpop.f32.mrb[0].mxu0
  %v3004 = vadd.f32 0.0, %v3003
  %v3005 = vpop.f32.mrb[0].mxu0
  %v3006 = vadd.f32 0.0, %v3005
  %3007 = vmatprep.mubr.bf16.mxu0 %v821
  %3008 = vmatmul.mubr.bf16.gmra.mrb[0].mxu0 %v820
  %v3009 = vpop.f32.mrb[0].mxu0
  %v3010 = vadd.f32 0.0, %v3009
  %v3011 = vpop.f32.mrb[0].mxu0
  %v3012 = vadd.f32 0.0, %v3011
  %v3013 = vpop.f32.mrb[0].mxu0
  %v3014 = vadd.f32 0.0, %v3013
  %v3015 = vpop.f32.mrb[0].mxu0
  %v3016 = vadd.f32 0.0, %v3015
  %3017 = vmatprep.mubr.bf16.mxu0 %v828
  %3018 = vmatmul.mubr.bf16.gmra.mrb[0].mxu0 %v827
  %v3019 = vpop.f32.mrb[0].mxu0
  %v3020 = vadd.f32 0.0, %v3019
  %v3021 = vpop.f32.mrb[0].mxu0
  %v3022 = vadd.f32 0.0, %v3021
  %v3023 = vpop.f32.mrb[0].mxu0
  %v3024 = vadd.f32 0.0, %v3023
  %v3025 = vpop.f32.mrb[0].mxu0
  %v3026 = vadd.f32 0.0, %v3025
  %3027 = vmatprep.mubr.bf16.mxu0 %v835
  %3028 = vmatmul.mubr.bf16.gmra.mrb[0].mxu0 %v834
  %v3029 = vpop.f32.mrb[0].mxu0
  %v3030 = vadd.f32 0.0, %v3029
  %v3031 = vpop.f32.mrb[0].mxu0
  %v3032 = vadd.f32 0.0, %v3031
  %v3033 = vpop.f32.mrb[0].mxu0
  %v3034 = vadd.f32 0.0, %v3033
  %v3035 = vpop.f32.mrb[0].mxu0
  %v3036 = vadd.f32 0.0, %v3035
  %3037 = vdwg.mxu0
  %3038 = vmatprep.subr.bf16.mxu0 %v1692
  %3039 = vmatpush1.bf16.msra.mxu0 %v1691
  %3040 = vmatprep.subr.bf16.mxu0 %v1696
  %3041 = vmatpush1.bf16.msra.mxu0 %v1695
  %3042 = vmatprep.subr.bf16.mxu0 %v1700
  %3043 = vmatpush1.bf16.msra.mxu0 %v1699
  %3044 = vmatprep.subr.bf16.mxu0 %v1704
  %3045 = vmatpush1.bf16.msra.mxu0 %v1703
  %3046 = vmatprep.subr.bf16.mxu0 %v1708
  %3047 = vmatpush1.bf16.msra.mxu0 %v1707
  %3048 = vmatprep.subr.bf16.mxu0 %v1712
  %3049 = vmatpush1.bf16.msra.mxu0 %v1711
  %3050 = vmatprep.subr.bf16.mxu0 %v1716
  %3051 = vmatpush1.bf16.msra.mxu0 %v1715
  %3052 = vmatprep.subr.bf16.mxu0 %v1720
  %3053 = vmatpush1.bf16.msra.mxu0 %v1719
  %3054 = vmatprep.subr.bf16.mxu0 %v1724
  %3055 = vmatpush1.bf16.msra.mxu0 %v1723
  %3056 = vmatprep.subr.bf16.mxu0 %v1728
  %3057 = vmatpush1.bf16.msra.mxu0 %v1727
  %3058 = vmatprep.subr.bf16.mxu0 %v1732
  %3059 = vmatpush1.bf16.msra.mxu0 %v1731
  %3060 = vmatprep.subr.bf16.mxu0 %v1736
  %3061 = vmatpush1.bf16.msra.mxu0 %v1735
  %3062 = vmatprep.subr.bf16.mxu0 %v1740
  %3063 = vmatpush1.bf16.msra.mxu0 %v1739
  %3064 = vmatprep.subr.bf16.mxu0 %v1744
  %3065 = vmatpush1.bf16.msra.mxu0 %v1743
  %3066 = vmatprep.subr.bf16.mxu0 %v1748
  %3067 = vmatpush1.bf16.msra.mxu0 %v1747
  %3068 = vmatprep.subr.bf16.mxu0 %v1752
  %3069 = vmatpush1.bf16.msra.mxu0 %v1751
  %3070 = vmatprep.mubr.bf16.mxu0 %v732
  %3071 = vmatmul.mubr.bf16.gmra.mrb[0].mxu0 %v731
  %v3072 = vpop.f32.mrb[0].mxu0
  %v3073 = vadd.f32 %v2880, %v3072
  %v3074 = vpop.f32.mrb[0].mxu0
  %v3075 = vadd.f32 %v2882, %v3074
  %v3076 = vpop.f32.mrb[0].mxu0
  %v3077 = vadd.f32 %v2884, %v3076
  %v3078 = vpop.f32.mrb[0].mxu0
  %v3079 = vadd.f32 %v2886, %v3078
  %3080 = vmatprep.mubr.bf16.mxu0 %v739
  %3081 = vmatmul.mubr.bf16.gmra.mrb[0].mxu0 %v738
  %v3082 = vpop.f32.mrb[0].mxu0
  %v3083 = vadd.f32 %v2890, %v3082
  %v3084 = vpop.f32.mrb[0].mxu0
  %v3085 = vadd.f32 %v2892, %v3084
  %v3086 = vpop.f32.mrb[0].mxu0
  %v3087 = vadd.f32 %v2894, %v3086
  %v3088 = vpop.f32.mrb[0].mxu0
  %v3089 = vadd.f32 %v2896, %v3088
  %3090 = vmatprep.mubr.bf16.mxu0 %v746
  %3091 = vmatmul.mubr.bf16.gmra.mrb[0].mxu0 %v745
  %v3092 = vpop.f32.mrb[0].mxu0
  %v3093 = vadd.f32 %v2900, %v3092
  %v3094 = vpop.f32.mrb[0].mxu0
  %v3095 = vadd.f32 %v2902, %v3094
  %v3096 = vpop.f32.mrb[0].mxu0
  %v3097 = vadd.f32 %v2904, %v3096
  %v3098 = vpop.f32.mrb[0].mxu0
  %v3099 = vadd.f32 %v2906, %v3098
  %3100 = vmatprep.mubr.bf16.mxu0 %v753
  %3101 = vmatmul.mubr.bf16.gmra.mrb[0].mxu0 %v752
  %v3102 = vpop.f32.mrb[0].mxu0
  %v3103 = vadd.f32 %v2910, %v3102
  %v3104 = vpop.f32.mrb[0].mxu0
  %v3105 = vadd.f32 %v2912, %v3104
  %v3106 = vpop.f32.mrb[0].mxu0
  %v3107 = vadd.f32 %v2914, %v3106
  %v3108 = vpop.f32.mrb[0].mxu0
  %v3109 = vadd.f32 %v2916, %v3108
  %3110 = vmatprep.mubr.bf16.mxu0 %v760
  %3111 = vmatmul.mubr.bf16.gmra.mrb[0].mxu0 %v759
  %v3112 = vpop.f32.mrb[0].mxu0
  %v3113 = vadd.f32 %v2920, %v3112
  %v3114 = vpop.f32.mrb[0].mxu0
  %v3115 = vadd.f32 %v2922, %v3114
  %v3116 = vpop.f32.mrb[0].mxu0
  %v3117 = vadd.f32 %v2924, %v3116
  %v3118 = vpop.f32.mrb[0].mxu0
  %v3119 = vadd.f32 %v2926, %v3118
  %3120 = vmatprep.mubr.bf16.mxu0 %v767
  %3121 = vmatmul.mubr.bf16.gmra.mrb[0].mxu0 %v766
  %v3122 = vpop.f32.mrb[0].mxu0
  %v3123 = vadd.f32 %v2930, %v3122
  %v3124 = vpop.f32.mrb[0].mxu0
  %v3125 = vadd.f32 %v2932, %v3124
  %v3126 = vpop.f32.mrb[0].mxu0
  %v3127 = vadd.f32 %v2934, %v3126
  %v3128 = vpop.f32.mrb[0].mxu0
  %v3129 = vadd.f32 %v2936, %v3128
  %3130 = vmatprep.mubr.bf16.mxu0 %v774
  %3131 = vmatmul.mubr.bf16.gmra.mrb[0].mxu0 %v773
  %v3132 = vpop.f32.mrb[0].mxu0
  %v3133 = vadd.f32 %v2940, %v3132
  %v3134 = vpop.f32.mrb[0].mxu0
  %v3135 = vadd.f32 %v2942, %v3134
  %v3136 = vpop.f32.mrb[0].mxu0
  %v3137 = vadd.f32 %v2944, %v3136
  %v3138 = vpop.f32.mrb[0].mxu0
  %v3139 = vadd.f32 %v2946, %v3138
  %3140 = vmatprep.mubr.bf16.mxu0 %v781
  %3141 = vmatmul.mubr.bf16.gmra.mrb[0].mxu0 %v780
  %v3142 = vpop.f32.mrb[0].mxu0
  %v3143 = vadd.f32 %v2950, %v3142
  %v3144 = vpop.f32.mrb[0].mxu0
  %v3145 = vadd.f32 %v2952, %v3144
  %v3146 = vpop.f32.mrb[0].mxu0
  %v3147 = vadd.f32 %v2954, %v3146
  %v3148 = vpop.f32.mrb[0].mxu0
  %v3149 = vadd.f32 %v2956, %v3148
  %3150 = vmatprep.mubr.bf16.mxu0 %v788
  %3151 = vmatmul.mubr.bf16.gmra.mrb[0].mxu0 %v787
  %v3152 = vpop.f32.mrb[0].mxu0
  %v3153 = vadd.f32 %v2960, %v3152
  %v3154 = vpop.f32.mrb[0].mxu0
  %v3155 = vadd.f32 %v2962, %v3154
  %v3156 = vpop.f32.mrb[0].mxu0
  %v3157 = vadd.f32 %v2964, %v3156
  %v3158 = vpop.f32.mrb[0].mxu0
  %v3159 = vadd.f32 %v2966, %v3158
  %3160 = vmatprep.mubr.bf16.mxu0 %v795
  %3161 = vmatmul.mubr.bf16.gmra.mrb[0].mxu0 %v794
  %v3162 = vpop.f32.mrb[0].mxu0
  %v3163 = vadd.f32 %v2970, %v3162
  %v3164 = vpop.f32.mrb[0].mxu0
  %v3165 = vadd.f32 %v2972, %v3164
  %v3166 = vpop.f32.mrb[0].mxu0
  %v3167 = vadd.f32 %v2974, %v3166
  %v3168 = vpop.f32.mrb[0].mxu0
  %v3169 = vadd.f32 %v2976, %v3168
  %3170 = vmatprep.mubr.bf16.mxu0 %v802
  %3171 = vmatmul.mubr.bf16.gmra.mrb[0].mxu0 %v801
  %v3172 = vpop.f32.mrb[0].mxu0
  %v3173 = vadd.f32 %v2980, %v3172
  %v3174 = vpop.f32.mrb[0].mxu0
  %v3175 = vadd.f32 %v2982, %v3174
  %v3176 = vpop.f32.mrb[0].mxu0
  %v3177 = vadd.f32 %v2984, %v3176
  %v3178 = vpop.f32.mrb[0].mxu0
  %v3179 = vadd.f32 %v2986, %v3178
  %3180 = vmatprep.mubr.bf16.mxu0 %v809
  %3181 = vmatmul.mubr.bf16.gmra.mrb[0].mxu0 %v808
  %v3182 = vpop.f32.mrb[0].mxu0
  %v3183 = vadd.f32 %v2990, %v3182
  %v3184 = vpop.f32.mrb[0].mxu0
  %v3185 = vadd.f32 %v2992, %v3184
  %v3186 = vpop.f32.mrb[0].mxu0
  %v3187 = vadd.f32 %v2994, %v3186
  %v3188 = vpop.f32.mrb[0].mxu0
  %v3189 = vadd.f32 %v2996, %v3188
  %3190 = vmatprep.mubr.bf16.mxu0 %v816
  %3191 = vmatmul.mubr.bf16.gmra.mrb[0].mxu0 %v815
  %v3192 = vpop.f32.mrb[0].mxu0
  %v3193 = vadd.f32 %v3000, %v3192
  %v3194 = vpop.f32.mrb[0].mxu0
  %v3195 = vadd.f32 %v3002, %v3194
  %v3196 = vpop.f32.mrb[0].mxu0
  %v3197 = vadd.f32 %v3004, %v3196
  %v3198 = vpop.f32.mrb[0].mxu0
  %v3199 = vadd.f32 %v3006, %v3198
  %3200 = vmatprep.mubr.bf16.mxu0 %v823
  %3201 = vmatmul.mubr.bf16.gmra.mrb[0].mxu0 %v822
  %v3202 = vpop.f32.mrb[0].mxu0
  %v3203 = vadd.f32 %v3010, %v3202
  %v3204 = vpop.f32.mrb[0].mxu0
  %v3205 = vadd.f32 %v3012, %v3204
  %v3206 = vpop.f32.mrb[0].mxu0
  %v3207 = vadd.f32 %v3014, %v3206
  %v3208 = vpop.f32.mrb[0].mxu0
  %v3209 = vadd.f32 %v3016, %v3208
  %3210 = vmatprep.mubr.bf16.mxu0 %v830
  %3211 = vmatmul.mubr.bf16.gmra.mrb[0].mxu0 %v829
  %v3212 = vpop.f32.mrb[0].mxu0
  %v3213 = vadd.f32 %v3020, %v3212
  %v3214 = vpop.f32.mrb[0].mxu0
  %v3215 = vadd.f32 %v3022, %v3214
  %v3216 = vpop.f32.mrb[0].mxu0
  %v3217 = vadd.f32 %v3024, %v3216
  %v3218 = vpop.f32.mrb[0].mxu0
  %v3219 = vadd.f32 %v3026, %v3218
  %3220 = vmatprep.mubr.bf16.mxu0 %v837
  %3221 = vmatmul.mubr.bf16.gmra.mrb[0].mxu0 %v836
  %v3222 = vpop.f32.mrb[0].mxu0
  %v3223 = vadd.f32 %v3030, %v3222
  %v3224 = vpop.f32.mrb[0].mxu0
  %v3225 = vadd.f32 %v3032, %v3224
  %v3226 = vpop.f32.mrb[0].mxu0
  %v3227 = vadd.f32 %v3034, %v3226
  %v3228 = vpop.f32.mrb[0].mxu0
  %v3229 = vadd.f32 %v3036, %v3228
  %3230 = vdwg.mxu0
  %3231 = vmatprep.subr.bf16.mxu0 %v1756
  %3232 = vmatpush1.bf16.msra.mxu0 %v1755
  %3233 = vmatprep.subr.bf16.mxu0 %v1760
  %3234 = vmatpush1.bf16.msra.mxu0 %v1759
  %3235 = vmatprep.subr.bf16.mxu0 %v1764
  %3236 = vmatpush1.bf16.msra.mxu0 %v1763
  %3237 = vmatprep.subr.bf16.mxu0 %v1768
  %3238 = vmatpush1.bf16.msra.mxu0 %v1767
  %3239 = vmatprep.subr.bf16.mxu0 %v1772
  %3240 = vmatpush1.bf16.msra.mxu0 %v1771
  %3241 = vmatprep.subr.bf16.mxu0 %v1776
  %3242 = vmatpush1.bf16.msra.mxu0 %v1775
  %3243 = vmatprep.subr.bf16.mxu0 %v1780
  %3244 = vmatpush1.bf16.msra.mxu0 %v1779
  %3245 = vmatprep.subr.bf16.mxu0 %v1784
  %3246 = vmatpush1.bf16.msra.mxu0 %v1783
  %3247 = vmatprep.subr.bf16.mxu0 %v1788
  %3248 = vmatpush1.bf16.msra.mxu0 %v1787
  %3249 = vmatprep.subr.bf16.mxu0 %v1792
  %3250 = vmatpush1.bf16.msra.mxu0 %v1791
  %3251 = vmatprep.subr.bf16.mxu0 %v1796
  %3252 = vmatpush1.bf16.msra.mxu0 %v1795
  %3253 = vmatprep.subr.bf16.mxu0 %v1800
  %3254 = vmatpush1.bf16.msra.mxu0 %v1799
  %3255 = vmatprep.subr.bf16.mxu0 %v1804
  %3256 = vmatpush1.bf16.msra.mxu0 %v1803
  %3257 = vmatprep.subr.bf16.mxu0 %v1808
  %3258 = vmatpush1.bf16.msra.mxu0 %v1807
  %3259 = vmatprep.subr.bf16.mxu0 %v1812
  %3260 = vmatpush1.bf16.msra.mxu0 %v1811
  %3261 = vmatprep.subr.bf16.mxu0 %v1816
  %3262 = vmatpush1.bf16.msra.mxu0 %v1815
  %3263 = vmatprep.mubr.bf16.mxu0 %v734
  %3264 = vmatmul.mubr.bf16.gmra.mrb[0].mxu0 %v733
  %v3265 = vpop.f32.mrb[0].mxu0
  %v3266 = vadd.f32 %v3073, %v3265
  %v3267 = vpop.f32.mrb[0].mxu0
  %v3268 = vadd.f32 %v3075, %v3267
  %v3269 = vpop.f32.mrb[0].mxu0
  %v3270 = vadd.f32 %v3077, %v3269
  %v3271 = vpop.f32.mrb[0].mxu0
  %v3272 = vadd.f32 %v3079, %v3271
  %3273 = vmatprep.mubr.bf16.mxu0 %v741
  %3274 = vmatmul.mubr.bf16.gmra.mrb[0].mxu0 %v740
  %v3275 = vpop.f32.mrb[0].mxu0
  %v3276 = vadd.f32 %v3083, %v3275
  %v3277 = vpop.f32.mrb[0].mxu0
  %v3278 = vadd.f32 %v3085, %v3277
  %v3279 = vpop.f32.mrb[0].mxu0
  %v3280 = vadd.f32 %v3087, %v3279
  %v3281 = vpop.f32.mrb[0].mxu0
  %v3282 = vadd.f32 %v3089, %v3281
  %3283 = vmatprep.mubr.bf16.mxu0 %v748
  %3284 = vmatmul.mubr.bf16.gmra.mrb[0].mxu0 %v747
  %v3285 = vpop.f32.mrb[0].mxu0
  %v3286 = vadd.f32 %v3093, %v3285
  %v3287 = vpop.f32.mrb[0].mxu0
  %v3288 = vadd.f32 %v3095, %v3287
  %v3289 = vpop.f32.mrb[0].mxu0
  %v3290 = vadd.f32 %v3097, %v3289
  %v3291 = vpop.f32.mrb[0].mxu0
  %v3292 = vadd.f32 %v3099, %v3291
  %3293 = vmatprep.mubr.bf16.mxu0 %v755
  %3294 = vmatmul.mubr.bf16.gmra.mrb[0].mxu0 %v754
  %v3295 = vpop.f32.mrb[0].mxu0
  %v3296 = vadd.f32 %v3103, %v3295
  %v3297 = vpop.f32.mrb[0].mxu0
  %v3298 = vadd.f32 %v3105, %v3297
  %v3299 = vpop.f32.mrb[0].mxu0
  %v3300 = vadd.f32 %v3107, %v3299
  %v3301 = vpop.f32.mrb[0].mxu0
  %v3302 = vadd.f32 %v3109, %v3301
  %3303 = vmatprep.mubr.bf16.mxu0 %v762
  %3304 = vmatmul.mubr.bf16.gmra.mrb[0].mxu0 %v761
  %v3305 = vpop.f32.mrb[0].mxu0
  %v3306 = vadd.f32 %v3113, %v3305
  %v3307 = vpop.f32.mrb[0].mxu0
  %v3308 = vadd.f32 %v3115, %v3307
  %v3309 = vpop.f32.mrb[0].mxu0
  %v3310 = vadd.f32 %v3117, %v3309
  %v3311 = vpop.f32.mrb[0].mxu0
  %v3312 = vadd.f32 %v3119, %v3311
  %3313 = vmatprep.mubr.bf16.mxu0 %v769
  %3314 = vmatmul.mubr.bf16.gmra.mrb[0].mxu0 %v768
  %v3315 = vpop.f32.mrb[0].mxu0
  %v3316 = vadd.f32 %v3123, %v3315
  %v3317 = vpop.f32.mrb[0].mxu0
  %v3318 = vadd.f32 %v3125, %v3317
  %v3319 = vpop.f32.mrb[0].mxu0
  %v3320 = vadd.f32 %v3127, %v3319
  %v3321 = vpop.f32.mrb[0].mxu0
  %v3322 = vadd.f32 %v3129, %v3321
  %3323 = vmatprep.mubr.bf16.mxu0 %v776
  %3324 = vmatmul.mubr.bf16.gmra.mrb[0].mxu0 %v775
  %v3325 = vpop.f32.mrb[0].mxu0
  %v3326 = vadd.f32 %v3133, %v3325
  %v3327 = vpop.f32.mrb[0].mxu0
  %v3328 = vadd.f32 %v3135, %v3327
  %v3329 = vpop.f32.mrb[0].mxu0
  %v3330 = vadd.f32 %v3137, %v3329
  %v3331 = vpop.f32.mrb[0].mxu0
  %v3332 = vadd.f32 %v3139, %v3331
  %3333 = vmatprep.mubr.bf16.mxu0 %v783
  %3334 = vmatmul.mubr.bf16.gmra.mrb[0].mxu0 %v782
  %v3335 = vpop.f32.mrb[0].mxu0
  %v3336 = vadd.f32 %v3143, %v3335
  %v3337 = vpop.f32.mrb[0].mxu0
  %v3338 = vadd.f32 %v3145, %v3337
  %v3339 = vpop.f32.mrb[0].mxu0
  %v3340 = vadd.f32 %v3147, %v3339
  %v3341 = vpop.f32.mrb[0].mxu0
  %v3342 = vadd.f32 %v3149, %v3341
  %3343 = vmatprep.mubr.bf16.mxu0 %v790
  %3344 = vmatmul.mubr.bf16.gmra.mrb[0].mxu0 %v789
  %v3345 = vpop.f32.mrb[0].mxu0
  %v3346 = vadd.f32 %v3153, %v3345
  %v3347 = vpop.f32.mrb[0].mxu0
  %v3348 = vadd.f32 %v3155, %v3347
  %v3349 = vpop.f32.mrb[0].mxu0
  %v3350 = vadd.f32 %v3157, %v3349
  %v3351 = vpop.f32.mrb[0].mxu0
  %v3352 = vadd.f32 %v3159, %v3351
  %3353 = vmatprep.mubr.bf16.mxu0 %v797
  %3354 = vmatmul.mubr.bf16.gmra.mrb[0].mxu0 %v796
  %v3355 = vpop.f32.mrb[0].mxu0
  %v3356 = vadd.f32 %v3163, %v3355
  %v3357 = vpop.f32.mrb[0].mxu0
  %v3358 = vadd.f32 %v3165, %v3357
  %v3359 = vpop.f32.mrb[0].mxu0
  %v3360 = vadd.f32 %v3167, %v3359
  %v3361 = vpop.f32.mrb[0].mxu0
  %v3362 = vadd.f32 %v3169, %v3361
  %3363 = vmatprep.mubr.bf16.mxu0 %v804
  %3364 = vmatmul.mubr.bf16.gmra.mrb[0].mxu0 %v803
  %v3365 = vpop.f32.mrb[0].mxu0
  %v3366 = vadd.f32 %v3173, %v3365
  %v3367 = vpop.f32.mrb[0].mxu0
  %v3368 = vadd.f32 %v3175, %v3367
  %v3369 = vpop.f32.mrb[0].mxu0
  %v3370 = vadd.f32 %v3177, %v3369
  %v3371 = vpop.f32.mrb[0].mxu0
  %v3372 = vadd.f32 %v3179, %v3371
  %3373 = vmatprep.mubr.bf16.mxu0 %v811
  %3374 = vmatmul.mubr.bf16.gmra.mrb[0].mxu0 %v810
  %v3375 = vpop.f32.mrb[0].mxu0
  %v3376 = vadd.f32 %v3183, %v3375
  %v3377 = vpop.f32.mrb[0].mxu0
  %v3378 = vadd.f32 %v3185, %v3377
  %v3379 = vpop.f32.mrb[0].mxu0
  %v3380 = vadd.f32 %v3187, %v3379
  %v3381 = vpop.f32.mrb[0].mxu0
  %v3382 = vadd.f32 %v3189, %v3381
  %3383 = vmatprep.mubr.bf16.mxu0 %v818
  %3384 = vmatmul.mubr.bf16.gmra.mrb[0].mxu0 %v817
  %v3385 = vpop.f32.mrb[0].mxu0
  %v3386 = vadd.f32 %v3193, %v3385
  %v3387 = vpop.f32.mrb[0].mxu0
  %v3388 = vadd.f32 %v3195, %v3387
  %v3389 = vpop.f32.mrb[0].mxu0
  %v3390 = vadd.f32 %v3197, %v3389
  %v3391 = vpop.f32.mrb[0].mxu0
  %v3392 = vadd.f32 %v3199, %v3391
  %3393 = vmatprep.mubr.bf16.mxu0 %v825
  %3394 = vmatmul.mubr.bf16.gmra.mrb[0].mxu0 %v824
  %v3395 = vpop.f32.mrb[0].mxu0
  %v3396 = vadd.f32 %v3203, %v3395
  %v3397 = vpop.f32.mrb[0].mxu0
  %v3398 = vadd.f32 %v3205, %v3397
  %v3399 = vpop.f32.mrb[0].mxu0
  %v3400 = vadd.f32 %v3207, %v3399
  %v3401 = vpop.f32.mrb[0].mxu0
  %v3402 = vadd.f32 %v3209, %v3401
  %3403 = vmatprep.mubr.bf16.mxu0 %v832
  %3404 = vmatmul.mubr.bf16.gmra.mrb[0].mxu0 %v831
  %v3405 = vpop.f32.mrb[0].mxu0
  %v3406 = vadd.f32 %v3213, %v3405
  %v3407 = vpop.f32.mrb[0].mxu0
  %v3408 = vadd.f32 %v3215, %v3407
  %v3409 = vpop.f32.mrb[0].mxu0
  %v3410 = vadd.f32 %v3217, %v3409
  %v3411 = vpop.f32.mrb[0].mxu0
  %v3412 = vadd.f32 %v3219, %v3411
  %3413 = vmatprep.mubr.bf16.mxu0 %v839
  %3414 = vmatmul.mubr.bf16.gmra.mrb[0].mxu0 %v838
  %v3415 = vpop.f32.mrb[0].mxu0
  %v3416 = vadd.f32 %v3223, %v3415
  %v3417 = vpop.f32.mrb[0].mxu0
  %v3418 = vadd.f32 %v3225, %v3417
  %v3419 = vpop.f32.mrb[0].mxu0
  %v3420 = vadd.f32 %v3227, %v3419
  %v3421 = vpop.f32.mrb[0].mxu0
  %v3422 = vadd.f32 %v3229, %v3421
  %3423 = vdwg.mxu0
  %3424 = vmatprep.subr.bf16.mxu0 %v1820
  %3425 = vmatpush1.bf16.msra.mxu0 %v1819
  %3426 = vmatprep.subr.bf16.mxu0 %v1824
  %3427 = vmatpush1.bf16.msra.mxu0 %v1823
  %3428 = vmatprep.subr.bf16.mxu0 %v1828
  %3429 = vmatpush1.bf16.msra.mxu0 %v1827
  %3430 = vmatprep.subr.bf16.mxu0 %v1832
  %3431 = vmatpush1.bf16.msra.mxu0 %v1831
  %3432 = vmatprep.subr.bf16.mxu0 %v1836
  %3433 = vmatpush1.bf16.msra.mxu0 %v1835
  %3434 = vmatprep.subr.bf16.mxu0 %v1840
  %3435 = vmatpush1.bf16.msra.mxu0 %v1839
  %3436 = vmatprep.subr.bf16.mxu0 %v1844
  %3437 = vmatpush1.bf16.msra.mxu0 %v1843
  %3438 = vmatprep.subr.bf16.mxu0 %v1848
  %3439 = vmatpush1.bf16.msra.mxu0 %v1847
  %3440 = vmatprep.subr.bf16.mxu0 0
  %3441 = vmatpush1.bf16.msra.mxu0 0
  %3442 = vmatprep.subr.bf16.mxu0 0
  %3443 = vmatpush1.bf16.msra.mxu0 0
  %3444 = vmatprep.subr.bf16.mxu0 0
  %3445 = vmatpush1.bf16.msra.mxu0 0
  %3446 = vmatprep.subr.bf16.mxu0 0
  %3447 = vmatpush1.bf16.msra.mxu0 0
  %3448 = vmatprep.subr.bf16.mxu0 0
  %3449 = vmatpush1.bf16.msra.mxu0 0
  %3450 = vmatprep.subr.bf16.mxu0 0
  %3451 = vmatpush1.bf16.msra.mxu0 0
  %3452 = vmatprep.subr.bf16.mxu0 0
  %3453 = vmatpush1.bf16.msra.mxu0 0
  %3454 = vmatprep.subr.bf16.mxu0 0
  %3455 = vmatpush1.bf16.msra.mxu0 0
  %3456 = vmatprep.mubr.bf16.mxu0 0
  %3457 = vmatmul.mubr.bf16.gmra.mrb[0].mxu0 %v735
  %v3458 = vpop.f32.mrb[0].mxu0
  %v3459 = vadd.f32 %v3266, %v3458
  %v3460 = vpop.f32.mrb[0].mxu0
  %v3461 = vadd.f32 %v3268, %v3460
  %v3462 = vpop.f32.mrb[0].mxu0
  %v3463 = vadd.f32 %v3270, %v3462
  %v3464 = vpop.f32.mrb[0].mxu0
  %v3465 = vadd.f32 %v3272, %v3464
  %3466 = vmatprep.mubr.bf16.mxu0 0
  %3467 = vmatmul.mubr.bf16.gmra.mrb[0].mxu0 %v742
  %v3468 = vpop.f32.mrb[0].mxu0
  %v3469 = vadd.f32 %v3276, %v3468
  %v3470 = vpop.f32.mrb[0].mxu0
  %v3471 = vadd.f32 %v3278, %v3470
  %v3472 = vpop.f32.mrb[0].mxu0
  %v3473 = vadd.f32 %v3280, %v3472
  %v3474 = vpop.f32.mrb[0].mxu0
  %v3475 = vadd.f32 %v3282, %v3474
  %3476 = vmatprep.mubr.bf16.mxu0 0
  %3477 = vmatmul.mubr.bf16.gmra.mrb[0].mxu0 %v749
  %v3478 = vpop.f32.mrb[0].mxu0
  %v3479 = vadd.f32 %v3286, %v3478
  %v3480 = vpop.f32.mrb[0].mxu0
  %v3481 = vadd.f32 %v3288, %v3480
  %v3482 = vpop.f32.mrb[0].mxu0
  %v3483 = vadd.f32 %v3290, %v3482
  %v3484 = vpop.f32.mrb[0].mxu0
  %v3485 = vadd.f32 %v3292, %v3484
  %3486 = vmatprep.mubr.bf16.mxu0 0
  %3487 = vmatmul.mubr.bf16.gmra.mrb[0].mxu0 %v756
  %v3488 = vpop.f32.mrb[0].mxu0
  %v3489 = vadd.f32 %v3296, %v3488
  %v3490 = vpop.f32.mrb[0].mxu0
  %v3491 = vadd.f32 %v3298, %v3490
  %v3492 = vpop.f32.mrb[0].mxu0
  %v3493 = vadd.f32 %v3300, %v3492
  %v3494 = vpop.f32.mrb[0].mxu0
  %v3495 = vadd.f32 %v3302, %v3494
  %3496 = vmatprep.mubr.bf16.mxu0 0
  %3497 = vmatmul.mubr.bf16.gmra.mrb[0].mxu0 %v763
  %v3498 = vpop.f32.mrb[0].mxu0
  %v3499 = vadd.f32 %v3306, %v3498
  %v3500 = vpop.f32.mrb[0].mxu0
  %v3501 = vadd.f32 %v3308, %v3500
  %v3502 = vpop.f32.mrb[0].mxu0
  %v3503 = vadd.f32 %v3310, %v3502
  %v3504 = vpop.f32.mrb[0].mxu0
  %v3505 = vadd.f32 %v3312, %v3504
  %3506 = vmatprep.mubr.bf16.mxu0 0
  %3507 = vmatmul.mubr.bf16.gmra.mrb[0].mxu0 %v770
  %v3508 = vpop.f32.mrb[0].mxu0
  %v3509 = vadd.f32 %v3316, %v3508
  %v3510 = vpop.f32.mrb[0].mxu0
  %v3511 = vadd.f32 %v3318, %v3510
  %v3512 = vpop.f32.mrb[0].mxu0
  %v3513 = vadd.f32 %v3320, %v3512
  %v3514 = vpop.f32.mrb[0].mxu0
  %v3515 = vadd.f32 %v3322, %v3514
  %3516 = vmatprep.mubr.bf16.mxu0 0
  %3517 = vmatmul.mubr.bf16.gmra.mrb[0].mxu0 %v777
  %v3518 = vpop.f32.mrb[0].mxu0
  %v3519 = vadd.f32 %v3326, %v3518
  %v3520 = vpop.f32.mrb[0].mxu0
  %v3521 = vadd.f32 %v3328, %v3520
  %v3522 = vpop.f32.mrb[0].mxu0
  %v3523 = vadd.f32 %v3330, %v3522
  %v3524 = vpop.f32.mrb[0].mxu0
  %v3525 = vadd.f32 %v3332, %v3524
  %3526 = vmatprep.mubr.bf16.mxu0 0
  %3527 = vmatmul.mubr.bf16.gmra.mrb[0].mxu0 %v784
  %v3528 = vpop.f32.mrb[0].mxu0
  %v3529 = vadd.f32 %v3336, %v3528
  %v3530 = vpop.f32.mrb[0].mxu0
  %v3531 = vadd.f32 %v3338, %v3530
  %v3532 = vpop.f32.mrb[0].mxu0
  %v3533 = vadd.f32 %v3340, %v3532
  %v3534 = vpop.f32.mrb[0].mxu0
  %v3535 = vadd.f32 %v3342, %v3534
  %3536 = vmatprep.mubr.bf16.mxu0 0
  %3537 = vmatmul.mubr.bf16.gmra.mrb[0].mxu0 %v791
  %v3538 = vpop.f32.mrb[0].mxu0
  %v3539 = vadd.f32 %v3346, %v3538
  %v3540 = vpop.f32.mrb[0].mxu0
  %v3541 = vadd.f32 %v3348, %v3540
  %v3542 = vpop.f32.mrb[0].mxu0
  %v3543 = vadd.f32 %v3350, %v3542
  %v3544 = vpop.f32.mrb[0].mxu0
  %v3545 = vadd.f32 %v3352, %v3544
  %3546 = vmatprep.mubr.bf16.mxu0 0
  %3547 = vmatmul.mubr.bf16.gmra.mrb[0].mxu0 %v798
  %v3548 = vpop.f32.mrb[0].mxu0
  %v3549 = vadd.f32 %v3356, %v3548
  %v3550 = vpop.f32.mrb[0].mxu0
  %v3551 = vadd.f32 %v3358, %v3550
  %v3552 = vpop.f32.mrb[0].mxu0
  %v3553 = vadd.f32 %v3360, %v3552
  %v3554 = vpop.f32.mrb[0].mxu0
  %v3555 = vadd.f32 %v3362, %v3554
  %3556 = vmatprep.mubr.bf16.mxu0 0
  %3557 = vmatmul.mubr.bf16.gmra.mrb[0].mxu0 %v805
  %v3558 = vpop.f32.mrb[0].mxu0
  %v3559 = vadd.f32 %v3366, %v3558
  %v3560 = vpop.f32.mrb[0].mxu0
  %v3561 = vadd.f32 %v3368, %v3560
  %v3562 = vpop.f32.mrb[0].mxu0
  %v3563 = vadd.f32 %v3370, %v3562
  %v3564 = vpop.f32.mrb[0].mxu0
  %v3565 = vadd.f32 %v3372, %v3564
  %3566 = vmatprep.mubr.bf16.mxu0 0
  %3567 = vmatmul.mubr.bf16.gmra.mrb[0].mxu0 %v812
  %v3568 = vpop.f32.mrb[0].mxu0
  %v3569 = vadd.f32 %v3376, %v3568
  %v3570 = vpop.f32.mrb[0].mxu0
  %v3571 = vadd.f32 %v3378, %v3570
  %v3572 = vpop.f32.mrb[0].mxu0
  %v3573 = vadd.f32 %v3380, %v3572
  %v3574 = vpop.f32.mrb[0].mxu0
  %v3575 = vadd.f32 %v3382, %v3574
  %3576 = vmatprep.mubr.bf16.mxu0 0
  %3577 = vmatmul.mubr.bf16.gmra.mrb[0].mxu0 %v819
  %v3578 = vpop.f32.mrb[0].mxu0
  %v3579 = vadd.f32 %v3386, %v3578
  %v3580 = vpop.f32.mrb[0].mxu0
  %v3581 = vadd.f32 %v3388, %v3580
  %v3582 = vpop.f32.mrb[0].mxu0
  %v3583 = vadd.f32 %v3390, %v3582
  %v3584 = vpop.f32.mrb[0].mxu0
  %v3585 = vadd.f32 %v3392, %v3584
  %3586 = vmatprep.mubr.bf16.mxu0 0
  %3587 = vmatmul.mubr.bf16.gmra.mrb[0].mxu0 %v826
  %v3588 = vpop.f32.mrb[0].mxu0
  %v3589 = vadd.f32 %v3396, %v3588
  %v3590 = vpop.f32.mrb[0].mxu0
  %v3591 = vadd.f32 %v3398, %v3590
  %v3592 = vpop.f32.mrb[0].mxu0
  %v3593 = vadd.f32 %v3400, %v3592
  %v3594 = vpop.f32.mrb[0].mxu0
  %v3595 = vadd.f32 %v3402, %v3594
  %3596 = vmatprep.mubr.bf16.mxu0 0
  %3597 = vmatmul.mubr.bf16.gmra.mrb[0].mxu0 %v833
  %v3598 = vpop.f32.mrb[0].mxu0
  %v3599 = vadd.f32 %v3406, %v3598
  %v3600 = vpop.f32.mrb[0].mxu0
  %v3601 = vadd.f32 %v3408, %v3600
  %v3602 = vpop.f32.mrb[0].mxu0
  %v3603 = vadd.f32 %v3410, %v3602
  %v3604 = vpop.f32.mrb[0].mxu0
  %v3605 = vadd.f32 %v3412, %v3604
  %3606 = vmatprep.mubr.bf16.mxu0 0
  %3607 = vmatmul.mubr.bf16.gmra.mrb[0].mxu0 %v840
  %v3608 = vpop.f32.mrb[0].mxu0
  %v3609 = vadd.f32 %v3416, %v3608
  %v3610 = vpop.f32.mrb[0].mxu0
  %v3611 = vadd.f32 %v3418, %v3610
  %v3612 = vpop.f32.mrb[0].mxu0
  %v3613 = vadd.f32 %v3420, %v3612
  %v3614 = vpop.f32.mrb[0].mxu0
  %v3615 = vadd.f32 %v3422, %v3614
  %3616 = vdwg.mxu0
  %v3617 = vadd.f32 %v2687, %v2691
  %v3618 = vadd.f32 %v3617, %v2697
  %v3619 = vadd.f32 %v3618, %v2701
  %v3620 = vadd.f32 %v3619, %v2707
  %v3621 = vadd.f32 %v3620, %v2711
  %v3622 = vadd.f32 %v3621, %v2717
  %v3623 = vadd.f32 %v3622, %v2721
  %v3624 = vadd.f32 %v3623, %v2727
  %v3625 = vadd.f32 %v3624, %v2731
  %v3626 = vadd.f32 %v3625, %v2737
  %v3627 = vadd.f32 %v3626, %v2741
  %v3628 = vadd.f32 %v3627, %v2747
  %v3629 = vadd.f32 %v3628, %v2751
  %v3630 = vadd.f32 %v3629, %v2757
  %v3631 = vadd.f32 %v3630, %v2761
  %v3632 = vadd.f32 %v3631, %v2767
  %v3633 = vadd.f32 %v3632, %v2771
  %v3634 = vadd.f32 %v3633, %v2777
  %v3635 = vadd.f32 %v3634, %v2781
  %v3636 = vadd.f32 %v3635, %v2787
  %v3637 = vadd.f32 %v3636, %v2791
  %v3638 = vadd.f32 %v3637, %v2797
  %v3639 = vadd.f32 %v3638, %v2801
  %v3640 = vadd.f32 %v3639, %v2807
  %v3641 = vadd.f32 %v3640, %v2811
  %v3642 = vadd.f32 %v3641, %v2817
  %v3643 = vadd.f32 %v3642, %v2821
  %v3644 = vadd.f32 %v3643, %v2827
  %v3645 = vadd.f32 %v3644, %v2831
  %v3646 = vadd.f32 %v3645, %v2837
  %v3647 = vadd.f32 %v3646, %v2841
  %v3648 = vrot.slane %v3647, 4
  %v3649 = vadd.f32 %v3647, %v3648
  %v3650 = vrot.slane %v3649, 2
  %v3651 = vadd.f32 %v3649, %v3650
  %v3652 = vrot.slane %v3651, 1
  %v3653 = vadd.f32 %v3651, %v3652
  %v3654 = vadd.f32 %v2689, %v2693
  %v3655 = vadd.f32 %v3654, %v2699
  %v3656 = vadd.f32 %v3655, %v2703
  %v3657 = vadd.f32 %v3656, %v2709
  %v3658 = vadd.f32 %v3657, %v2713
  %v3659 = vadd.f32 %v3658, %v2719
  %v3660 = vadd.f32 %v3659, %v2723
  %v3661 = vadd.f32 %v3660, %v2729
  %v3662 = vadd.f32 %v3661, %v2733
  %v3663 = vadd.f32 %v3662, %v2739
  %v3664 = vadd.f32 %v3663, %v2743
  %v3665 = vadd.f32 %v3664, %v2749
  %v3666 = vadd.f32 %v3665, %v2753
  %v3667 = vadd.f32 %v3666, %v2759
  %v3668 = vadd.f32 %v3667, %v2763
  %v3669 = vadd.f32 %v3668, %v2769
  %v3670 = vadd.f32 %v3669, %v2773
  %v3671 = vadd.f32 %v3670, %v2779
  %v3672 = vadd.f32 %v3671, %v2783
  %v3673 = vadd.f32 %v3672, %v2789
  %v3674 = vadd.f32 %v3673, %v2793
  %v3675 = vadd.f32 %v3674, %v2799
  %v3676 = vadd.f32 %v3675, %v2803
  %v3677 = vadd.f32 %v3676, %v2809
  %v3678 = vadd.f32 %v3677, %v2813
  %v3679 = vadd.f32 %v3678, %v2819
  %v3680 = vadd.f32 %v3679, %v2823
  %v3681 = vadd.f32 %v3680, %v2829
  %v3682 = vadd.f32 %v3681, %v2833
  %v3683 = vadd.f32 %v3682, %v2839
  %v3684 = vadd.f32 %v3683, %v2843
  %v3685 = vrot.slane %v3684, 4
  %v3686 = vadd.f32 %v3684, %v3685
  %v3687 = vrot.slane %v3686, 2
  %v3688 = vadd.f32 %v3686, %v3687
  %v3689 = vrot.slane %v3688, 1
  %v3690 = vadd.f32 %v3688, %v3689
  %v3691 = vadd.f32 %v3459, %v3463
  %v3692 = vadd.f32 %v3691, %v3469
  %v3693 = vadd.f32 %v3692, %v3473
  %v3694 = vadd.f32 %v3693, %v3479
  %v3695 = vadd.f32 %v3694, %v3483
  %v3696 = vadd.f32 %v3695, %v3489
  %v3697 = vadd.f32 %v3696, %v3493
  %v3698 = vadd.f32 %v3697, %v3499
  %v3699 = vadd.f32 %v3698, %v3503
  %v3700 = vadd.f32 %v3699, %v3509
  %v3701 = vadd.f32 %v3700, %v3513
  %v3702 = vadd.f32 %v3701, %v3519
  %v3703 = vadd.f32 %v3702, %v3523
  %v3704 = vadd.f32 %v3703, %v3529
  %v3705 = vadd.f32 %v3704, %v3533
  %v3706 = vadd.f32 %v3705, %v3539
  %v3707 = vadd.f32 %v3706, %v3543
  %v3708 = vadd.f32 %v3707, %v3549
  %v3709 = vadd.f32 %v3708, %v3553
  %v3710 = vadd.f32 %v3709, %v3559
  %v3711 = vadd.f32 %v3710, %v3563
  %v3712 = vadd.f32 %v3711, %v3569
  %v3713 = vadd.f32 %v3712, %v3573
  %v3714 = vadd.f32 %v3713, %v3579
  %v3715 = vadd.f32 %v3714, %v3583
  %v3716 = vadd.f32 %v3715, %v3589
  %v3717 = vadd.f32 %v3716, %v3593
  %v3718 = vadd.f32 %v3717, %v3599
  %v3719 = vadd.f32 %v3718, %v3603
  %v3720 = vadd.f32 %v3719, %v3609
  %v3721 = vadd.f32 %v3720, %v3613
  %v3722 = vrot.slane %v3721, 4
  %v3723 = vadd.f32 %v3721, %v3722
  %v3724 = vrot.slane %v3723, 2
  %v3725 = vadd.f32 %v3723, %v3724
  %v3726 = vrot.slane %v3725, 1
  %v3727 = vadd.f32 %v3725, %v3726
  %v3728 = vadd.f32 %v3461, %v3465
  %v3729 = vadd.f32 %v3728, %v3471
  %v3730 = vadd.f32 %v3729, %v3475
  %v3731 = vadd.f32 %v3730, %v3481
  %v3732 = vadd.f32 %v3731, %v3485
  %v3733 = vadd.f32 %v3732, %v3491
  %v3734 = vadd.f32 %v3733, %v3495
  %v3735 = vadd.f32 %v3734, %v3501
  %v3736 = vadd.f32 %v3735, %v3505
  %v3737 = vadd.f32 %v3736, %v3511
  %v3738 = vadd.f32 %v3737, %v3515
  %v3739 = vadd.f32 %v3738, %v3521
  %v3740 = vadd.f32 %v3739, %v3525
  %v3741 = vadd.f32 %v3740, %v3531
  %v3742 = vadd.f32 %v3741, %v3535
  %v3743 = vadd.f32 %v3742, %v3541
  %v3744 = vadd.f32 %v3743, %v3545
  %v3745 = vadd.f32 %v3744, %v3551
  %v3746 = vadd.f32 %v3745, %v3555
  %v3747 = vadd.f32 %v3746, %v3561
  %v3748 = vadd.f32 %v3747, %v3565
  %v3749 = vadd.f32 %v3748, %v3571
  %v3750 = vadd.f32 %v3749, %v3575
  %v3751 = vadd.f32 %v3750, %v3581
  %v3752 = vadd.f32 %v3751, %v3585
  %v3753 = vadd.f32 %v3752, %v3591
  %v3754 = vadd.f32 %v3753, %v3595
  %v3755 = vadd.f32 %v3754, %v3601
  %v3756 = vadd.f32 %v3755, %v3605
  %v3757 = vadd.f32 %v3756, %v3611
  %v3758 = vadd.f32 %v3757, %v3615
  %v3759 = vrot.slane %v3758, 4
  %v3760 = vadd.f32 %v3758, %v3759
  %v3761 = vrot.slane %v3760, 2
  %v3762 = vadd.f32 %v3760, %v3761
  %v3763 = vrot.slane %v3762, 1
  %v3764 = vadd.f32 %v3762, %v3763
  %v3765 = vmul.f32 %v3653, 0.00390625
  %v3766 = vmul.f32 %v3690, 0.00390625
  %v3767 = vmul.f32 %v3727, 0.00390625
  %v3768 = vmul.f32 %v3764, 0.00390625
  %v3769 = vmul.f32 %v2687, %v2687
  %v3770 = vmul.f32 %v2689, %v2689
  %v3771 = vmul.f32 %v3459, %v3459
  %v3772 = vmul.f32 %v3461, %v3461
  %v3773 = vmul.f32 %v2691, %v2691
  %v3774 = vmul.f32 %v2693, %v2693
  %v3775 = vmul.f32 %v3463, %v3463
  %v3776 = vmul.f32 %v3465, %v3465
  %v3777 = vmul.f32 %v2697, %v2697
  %v3778 = vmul.f32 %v2699, %v2699
  %v3779 = vmul.f32 %v3469, %v3469
  %v3780 = vmul.f32 %v3471, %v3471
  %v3781 = vmul.f32 %v2701, %v2701
  %v3782 = vmul.f32 %v2703, %v2703
  %v3783 = vmul.f32 %v3473, %v3473
  %v3784 = vmul.f32 %v3475, %v3475
  %v3785 = vmul.f32 %v2707, %v2707
  %v3786 = vmul.f32 %v2709, %v2709
  %v3787 = vmul.f32 %v3479, %v3479
  %v3788 = vmul.f32 %v3481, %v3481
  %v3789 = vmul.f32 %v2711, %v2711
  %v3790 = vmul.f32 %v2713, %v2713
  %v3791 = vmul.f32 %v3483, %v3483
  %v3792 = vmul.f32 %v3485, %v3485
  %v3793 = vmul.f32 %v2717, %v2717
  %v3794 = vmul.f32 %v2719, %v2719
  %v3795 = vmul.f32 %v3489, %v3489
  %v3796 = vmul.f32 %v3491, %v3491
  %v3797 = vmul.f32 %v2721, %v2721
  %v3798 = vmul.f32 %v2723, %v2723
  %v3799 = vmul.f32 %v3493, %v3493
  %v3800 = vmul.f32 %v3495, %v3495
  %v3801 = vmul.f32 %v2727, %v2727
  %v3802 = vmul.f32 %v2729, %v2729
  %v3803 = vmul.f32 %v3499, %v3499
  %v3804 = vmul.f32 %v3501, %v3501
  %v3805 = vmul.f32 %v2731, %v2731
  %v3806 = vmul.f32 %v2733, %v2733
  %v3807 = vmul.f32 %v3503, %v3503
  %v3808 = vmul.f32 %v3505, %v3505
  %v3809 = vmul.f32 %v2737, %v2737
  %v3810 = vmul.f32 %v2739, %v2739
  %v3811 = vmul.f32 %v3509, %v3509
  %v3812 = vmul.f32 %v3511, %v3511
  %v3813 = vmul.f32 %v2741, %v2741
  %v3814 = vmul.f32 %v2743, %v2743
  %v3815 = vmul.f32 %v3513, %v3513
  %v3816 = vmul.f32 %v3515, %v3515
  %v3817 = vmul.f32 %v2747, %v2747
  %v3818 = vmul.f32 %v2749, %v2749
  %v3819 = vmul.f32 %v3519, %v3519
  %v3820 = vmul.f32 %v3521, %v3521
  %v3821 = vmul.f32 %v2751, %v2751
  %v3822 = vmul.f32 %v2753, %v2753
  %v3823 = vmul.f32 %v3523, %v3523
  %v3824 = vmul.f32 %v3525, %v3525
  %v3825 = vmul.f32 %v2757, %v2757
  %v3826 = vmul.f32 %v2759, %v2759
  %v3827 = vmul.f32 %v3529, %v3529
  %v3828 = vmul.f32 %v3531, %v3531
  %v3829 = vmul.f32 %v2761, %v2761
  %v3830 = vmul.f32 %v2763, %v2763
  %v3831 = vmul.f32 %v3533, %v3533
  %v3832 = vmul.f32 %v3535, %v3535
  %v3833 = vmul.f32 %v2767, %v2767
  %v3834 = vmul.f32 %v2769, %v2769
  %v3835 = vmul.f32 %v3539, %v3539
  %v3836 = vmul.f32 %v3541, %v3541
  %v3837 = vmul.f32 %v2771, %v2771
  %v3838 = vmul.f32 %v2773, %v2773
  %v3839 = vmul.f32 %v3543, %v3543
  %v3840 = vmul.f32 %v3545, %v3545
  %v3841 = vmul.f32 %v2777, %v2777
  %v3842 = vmul.f32 %v2779, %v2779
  %v3843 = vmul.f32 %v3549, %v3549
  %v3844 = vmul.f32 %v3551, %v3551
  %v3845 = vmul.f32 %v2781, %v2781
  %v3846 = vmul.f32 %v2783, %v2783
  %v3847 = vmul.f32 %v3553, %v3553
  %v3848 = vmul.f32 %v3555, %v3555
  %v3849 = vmul.f32 %v2787, %v2787
  %v3850 = vmul.f32 %v2789, %v2789
  %v3851 = vmul.f32 %v3559, %v3559
  %v3852 = vmul.f32 %v3561, %v3561
  %v3853 = vmul.f32 %v2791, %v2791
  %v3854 = vmul.f32 %v2793, %v2793
  %v3855 = vmul.f32 %v3563, %v3563
  %v3856 = vmul.f32 %v3565, %v3565
  %v3857 = vmul.f32 %v2797, %v2797
  %v3858 = vmul.f32 %v2799, %v2799
  %v3859 = vmul.f32 %v3569, %v3569
  %v3860 = vmul.f32 %v3571, %v3571
  %v3861 = vmul.f32 %v2801, %v2801
  %v3862 = vmul.f32 %v2803, %v2803
  %v3863 = vmul.f32 %v3573, %v3573
  %v3864 = vmul.f32 %v3575, %v3575
  %v3865 = vmul.f32 %v2807, %v2807
  %v3866 = vmul.f32 %v2809, %v2809
  %v3867 = vmul.f32 %v3579, %v3579
  %v3868 = vmul.f32 %v3581, %v3581
  %v3869 = vmul.f32 %v2811, %v2811
  %v3870 = vmul.f32 %v2813, %v2813
  %v3871 = vmul.f32 %v3583, %v3583
  %v3872 = vmul.f32 %v3585, %v3585
  %v3873 = vmul.f32 %v2817, %v2817
  %v3874 = vmul.f32 %v2819, %v2819
  %v3875 = vmul.f32 %v3589, %v3589
  %v3876 = vmul.f32 %v3591, %v3591
  %v3877 = vmul.f32 %v2821, %v2821
  %v3878 = vmul.f32 %v2823, %v2823
  %v3879 = vmul.f32 %v3593, %v3593
  %v3880 = vmul.f32 %v3595, %v3595
  %v3881 = vmul.f32 %v2827, %v2827
  %v3882 = vmul.f32 %v2829, %v2829
  %v3883 = vmul.f32 %v3599, %v3599
  %v3884 = vmul.f32 %v3601, %v3601
  %v3885 = vmul.f32 %v2831, %v2831
  %v3886 = vmul.f32 %v2833, %v2833
  %v3887 = vmul.f32 %v3603, %v3603
  %v3888 = vmul.f32 %v3605, %v3605
  %v3889 = vmul.f32 %v2837, %v2837
  %v3890 = vmul.f32 %v2839, %v2839
  %v3891 = vmul.f32 %v3609, %v3609
  %v3892 = vmul.f32 %v3611, %v3611
  %v3893 = vmul.f32 %v2841, %v2841
  %v3894 = vmul.f32 %v2843, %v2843
  %v3895 = vmul.f32 %v3613, %v3613
  %v3896 = vmul.f32 %v3615, %v3615
  %v3897 = vadd.f32 %v3769, %v3773
  %v3898 = vadd.f32 %v3897, %v3777
  %v3899 = vadd.f32 %v3898, %v3781
  %v3900 = vadd.f32 %v3899, %v3785
  %v3901 = vadd.f32 %v3900, %v3789
  %v3902 = vadd.f32 %v3901, %v3793
  %v3903 = vadd.f32 %v3902, %v3797
  %v3904 = vadd.f32 %v3903, %v3801
  %v3905 = vadd.f32 %v3904, %v3805
  %v3906 = vadd.f32 %v3905, %v3809
  %v3907 = vadd.f32 %v3906, %v3813
  %v3908 = vadd.f32 %v3907, %v3817
  %v3909 = vadd.f32 %v3908, %v3821
  %v3910 = vadd.f32 %v3909, %v3825
  %v3911 = vadd.f32 %v3910, %v3829
  %v3912 = vadd.f32 %v3911, %v3833
  %v3913 = vadd.f32 %v3912, %v3837
  %v3914 = vadd.f32 %v3913, %v3841
  %v3915 = vadd.f32 %v3914, %v3845
  %v3916 = vadd.f32 %v3915, %v3849
  %v3917 = vadd.f32 %v3916, %v3853
  %v3918 = vadd.f32 %v3917, %v3857
  %v3919 = vadd.f32 %v3918, %v3861
  %v3920 = vadd.f32 %v3919, %v3865
  %v3921 = vadd.f32 %v3920, %v3869
  %v3922 = vadd.f32 %v3921, %v3873
  %v3923 = vadd.f32 %v3922, %v3877
  %v3924 = vadd.f32 %v3923, %v3881
  %v3925 = vadd.f32 %v3924, %v3885
  %v3926 = vadd.f32 %v3925, %v3889
  %v3927 = vadd.f32 %v3926, %v3893
  %v3928 = vrot.slane %v3927, 4
  %v3929 = vadd.f32 %v3927, %v3928
  %v3930 = vrot.slane %v3929, 2
  %v3931 = vadd.f32 %v3929, %v3930
  %v3932 = vrot.slane %v3931, 1
  %v3933 = vadd.f32 %v3931, %v3932
  %v3934 = vadd.f32 %v3770, %v3774
  %v3935 = vadd.f32 %v3934, %v3778
  %v3936 = vadd.f32 %v3935, %v3782
  %v3937 = vadd.f32 %v3936, %v3786
  %v3938 = vadd.f32 %v3937, %v3790
  %v3939 = vadd.f32 %v3938, %v3794
  %v3940 = vadd.f32 %v3939, %v3798
  %v3941 = vadd.f32 %v3940, %v3802
  %v3942 = vadd.f32 %v3941, %v3806
  %v3943 = vadd.f32 %v3942, %v3810
  %v3944 = vadd.f32 %v3943, %v3814
  %v3945 = vadd.f32 %v3944, %v3818
  %v3946 = vadd.f32 %v3945, %v3822
  %v3947 = vadd.f32 %v3946, %v3826
  %v3948 = vadd.f32 %v3947, %v3830
  %v3949 = vadd.f32 %v3948, %v3834
  %v3950 = vadd.f32 %v3949, %v3838
  %v3951 = vadd.f32 %v3950, %v3842
  %v3952 = vadd.f32 %v3951, %v3846
  %v3953 = vadd.f32 %v3952, %v3850
  %v3954 = vadd.f32 %v3953, %v3854
  %v3955 = vadd.f32 %v3954, %v3858
  %v3956 = vadd.f32 %v3955, %v3862
  %v3957 = vadd.f32 %v3956, %v3866
  %v3958 = vadd.f32 %v3957, %v3870
  %v3959 = vadd.f32 %v3958, %v3874
  %v3960 = vadd.f32 %v3959, %v3878
  %v3961 = vadd.f32 %v3960, %v3882
  %v3962 = vadd.f32 %v3961, %v3886
  %v3963 = vadd.f32 %v3962, %v3890
  %v3964 = vadd.f32 %v3963, %v3894
  %v3965 = vrot.slane %v3964, 4
  %v3966 = vadd.f32 %v3964, %v3965
  %v3967 = vrot.slane %v3966, 2
  %v3968 = vadd.f32 %v3966, %v3967
  %v3969 = vrot.slane %v3968, 1
  %v3970 = vadd.f32 %v3968, %v3969
  %v3971 = vadd.f32 %v3771, %v3775
  %v3972 = vadd.f32 %v3971, %v3779
  %v3973 = vadd.f32 %v3972, %v3783
  %v3974 = vadd.f32 %v3973, %v3787
  %v3975 = vadd.f32 %v3974, %v3791
  %v3976 = vadd.f32 %v3975, %v3795
  %v3977 = vadd.f32 %v3976, %v3799
  %v3978 = vadd.f32 %v3977, %v3803
  %v3979 = vadd.f32 %v3978, %v3807
  %v3980 = vadd.f32 %v3979, %v3811
  %v3981 = vadd.f32 %v3980, %v3815
  %v3982 = vadd.f32 %v3981, %v3819
  %v3983 = vadd.f32 %v3982, %v3823
  %v3984 = vadd.f32 %v3983, %v3827
  %v3985 = vadd.f32 %v3984, %v3831
  %v3986 = vadd.f32 %v3985, %v3835
  %v3987 = vadd.f32 %v3986, %v3839
  %v3988 = vadd.f32 %v3987, %v3843
  %v3989 = vadd.f32 %v3988, %v3847
  %v3990 = vadd.f32 %v3989, %v3851
  %v3991 = vadd.f32 %v3990, %v3855
  %v3992 = vadd.f32 %v3991, %v3859
  %v3993 = vadd.f32 %v3992, %v3863
  %v3994 = vadd.f32 %v3993, %v3867
  %v3995 = vadd.f32 %v3994, %v3871
  %v3996 = vadd.f32 %v3995, %v3875
  %v3997 = vadd.f32 %v3996, %v3879
  %v3998 = vadd.f32 %v3997, %v3883
  %v3999 = vadd.f32 %v3998, %v3887
  %v4000 = vadd.f32 %v3999, %v3891
  %v4001 = vadd.f32 %v4000, %v3895
  %v4002 = vrot.slane %v4001, 4
  %v4003 = vadd.f32 %v4001, %v4002
  %v4004 = vrot.slane %v4003, 2
  %v4005 = vadd.f32 %v4003, %v4004
  %v4006 = vrot.slane %v4005, 1
  %v4007 = vadd.f32 %v4005, %v4006
  %v4008 = vadd.f32 %v3772, %v3776
  %v4009 = vadd.f32 %v4008, %v3780
  %v4010 = vadd.f32 %v4009, %v3784
  %v4011 = vadd.f32 %v4010, %v3788
  %v4012 = vadd.f32 %v4011, %v3792
  %v4013 = vadd.f32 %v4012, %v3796
  %v4014 = vadd.f32 %v4013, %v3800
  %v4015 = vadd.f32 %v4014, %v3804
  %v4016 = vadd.f32 %v4015, %v3808
  %v4017 = vadd.f32 %v4016, %v3812
  %v4018 = vadd.f32 %v4017, %v3816
  %v4019 = vadd.f32 %v4018, %v3820
  %v4020 = vadd.f32 %v4019, %v3824
  %v4021 = vadd.f32 %v4020, %v3828
  %v4022 = vadd.f32 %v4021, %v3832
  %v4023 = vadd.f32 %v4022, %v3836
  %v4024 = vadd.f32 %v4023, %v3840
  %v4025 = vadd.f32 %v4024, %v3844
  %v4026 = vadd.f32 %v4025, %v3848
  %v4027 = vadd.f32 %v4026, %v3852
  %v4028 = vadd.f32 %v4027, %v3856
  %v4029 = vadd.f32 %v4028, %v3860
  %v4030 = vadd.f32 %v4029, %v3864
  %v4031 = vadd.f32 %v4030, %v3868
  %v4032 = vadd.f32 %v4031, %v3872
  %v4033 = vadd.f32 %v4032, %v3876
  %v4034 = vadd.f32 %v4033, %v3880
  %v4035 = vadd.f32 %v4034, %v3884
  %v4036 = vadd.f32 %v4035, %v3888
  %v4037 = vadd.f32 %v4036, %v3892
  %v4038 = vadd.f32 %v4037, %v3896
  %v4039 = vrot.slane %v4038, 4
  %v4040 = vadd.f32 %v4038, %v4039
  %v4041 = vrot.slane %v4040, 2
  %v4042 = vadd.f32 %v4040, %v4041
  %v4043 = vrot.slane %v4042, 1
  %v4044 = vadd.f32 %v4042, %v4043
  %v4045 = vmul.f32 %v3933, 0.00390625
  %v4046 = vmul.f32 %v3970, 0.00390625
  %v4047 = vmul.f32 %v4007, 0.00390625
  %v4048 = vmul.f32 %v4044, 0.00390625
  %v4049 = vmul.f32 %v3765, %v3765
  %v4050 = vmul.f32 %v3766, %v3766
  %v4051 = vmul.f32 %v3767, %v3767
  %v4052 = vmul.f32 %v3768, %v3768
  %v4053 = vsub.f32 %v4045, %v4049
  %v4054 = vsub.f32 %v4046, %v4050
  %v4055 = vsub.f32 %v4047, %v4051
  %v4056 = vsub.f32 %v4048, %v4052
  %v4057 = vmax.f32 %v4053, 0.0
  %v4058 = vmax.f32 %v4054, 0.0
  %v4059 = vmax.f32 %v4055, 0.0
  %v4060 = vmax.f32 %v4056, 0.0
  %v4061 = vadd.f32 %v4057, 1e-05
  %v4062 = vadd.f32 %v4058, 1e-05
  %v4063 = vadd.f32 %v4059, 1e-05
  %v4064 = vadd.f32 %v4060, 1e-05
  %v4065 = vrsqrt.pop %v4061
  %v4066 = vrsqrt.pop %v4062
  %v4067 = vrsqrt.pop %v4063
  %v4068 = vrsqrt.pop %v4064
  %v4069 = vmul.f32 %v21, %v4065
  %v4070 = vmul.f32 %v22, %v4066
  %v4071 = vmul.f32 %v23, %v4067
  %v4072 = vmul.f32 %v24, %v4068
  %v4073 = vmul.f32 %v3765, %v4069
  %v4074 = vmul.f32 %v3766, %v4070
  %v4075 = vmul.f32 %v3767, %v4071
  %v4076 = vmul.f32 %v3768, %v4072
  %v4081 = vrot.slane %v4073, 7
  %v4082 = vrot.slane %v4074, 7
  %v4083 = vrot.slane %v4075, 7
  %v4084 = vrot.slane %v4076, 7
  %v4089 = vsub.f32 %v21, %v4081
  %v4090 = vsub.f32 %v22, %v4082
  %v4091 = vsub.f32 %v23, %v4083
  %v4092 = vsub.f32 %v24, %v4084
  %v4093 = vlaneseq
  %v4094 = vshrl.u32 %v4093, 7
  %v4095 = vsub.s32 0, %v4094
  %v4096 = vrot.slane %v4069, %v4095
  %v4097 = vlaneseq
  %v4098 = vshrl.u32 %v4097, 7
  %v4099 = vsub.s32 0, %v4098
  %v4100 = vrot.slane %v4070, %v4099
  %v4101 = vlaneseq
  %v4102 = vshrl.u32 %v4101, 7
  %v4103 = vsub.s32 0, %v4102
  %v4104 = vrot.slane %v4071, %v4103
  %v4105 = vlaneseq
  %v4106 = vshrl.u32 %v4105, 7
  %v4107 = vsub.s32 0, %v4106
  %v4108 = vrot.slane %v4072, %v4107
  %v4109 = vmul.f32 %v2687, %v4096
  %v4110 = vmul.f32 %v2689, %v4100
  %v4111 = vmul.f32 %v3459, %v4104
  %v4112 = vmul.f32 %v3461, %v4108
  %v4113 = vmul.f32 %v2691, %v4096
  %v4114 = vmul.f32 %v2693, %v4100
  %v4115 = vmul.f32 %v3463, %v4104
  %v4116 = vmul.f32 %v3465, %v4108
  %v4117 = vmul.f32 %v2697, %v4096
  %v4118 = vmul.f32 %v2699, %v4100
  %v4119 = vmul.f32 %v3469, %v4104
  %v4120 = vmul.f32 %v3471, %v4108
  %v4121 = vmul.f32 %v2701, %v4096
  %v4122 = vmul.f32 %v2703, %v4100
  %v4123 = vmul.f32 %v3473, %v4104
  %v4124 = vmul.f32 %v3475, %v4108
  %v4125 = vmul.f32 %v2707, %v4096
  %v4126 = vmul.f32 %v2709, %v4100
  %v4127 = vmul.f32 %v3479, %v4104
  %v4128 = vmul.f32 %v3481, %v4108
  %v4129 = vmul.f32 %v2711, %v4096
  %v4130 = vmul.f32 %v2713, %v4100
  %v4131 = vmul.f32 %v3483, %v4104
  %v4132 = vmul.f32 %v3485, %v4108
  %v4133 = vmul.f32 %v2717, %v4096
  %v4134 = vmul.f32 %v2719, %v4100
  %v4135 = vmul.f32 %v3489, %v4104
  %v4136 = vmul.f32 %v3491, %v4108
  %v4137 = vmul.f32 %v2721, %v4096
  %v4138 = vmul.f32 %v2723, %v4100
  %v4139 = vmul.f32 %v3493, %v4104
  %v4140 = vmul.f32 %v3495, %v4108
  %v4141 = vmul.f32 %v2727, %v4096
  %v4142 = vmul.f32 %v2729, %v4100
  %v4143 = vmul.f32 %v3499, %v4104
  %v4144 = vmul.f32 %v3501, %v4108
  %v4145 = vmul.f32 %v2731, %v4096
  %v4146 = vmul.f32 %v2733, %v4100
  %v4147 = vmul.f32 %v3503, %v4104
  %v4148 = vmul.f32 %v3505, %v4108
  %v4149 = vmul.f32 %v2737, %v4096
  %v4150 = vmul.f32 %v2739, %v4100
  %v4151 = vmul.f32 %v3509, %v4104
  %v4152 = vmul.f32 %v3511, %v4108
  %v4153 = vmul.f32 %v2741, %v4096
  %v4154 = vmul.f32 %v2743, %v4100
  %v4155 = vmul.f32 %v3513, %v4104
  %v4156 = vmul.f32 %v3515, %v4108
  %v4157 = vmul.f32 %v2747, %v4096
  %v4158 = vmul.f32 %v2749, %v4100
  %v4159 = vmul.f32 %v3519, %v4104
  %v4160 = vmul.f32 %v3521, %v4108
  %v4161 = vmul.f32 %v2751, %v4096
  %v4162 = vmul.f32 %v2753, %v4100
  %v4163 = vmul.f32 %v3523, %v4104
  %v4164 = vmul.f32 %v3525, %v4108
  %v4165 = vmul.f32 %v2757, %v4096
  %v4166 = vmul.f32 %v2759, %v4100
  %v4167 = vmul.f32 %v3529, %v4104
  %v4168 = vmul.f32 %v3531, %v4108
  %v4169 = vmul.f32 %v2761, %v4096
  %v4170 = vmul.f32 %v2763, %v4100
  %v4171 = vmul.f32 %v3533, %v4104
  %v4172 = vmul.f32 %v3535, %v4108
  %v4173 = vmul.f32 %v2767, %v4096
  %v4174 = vmul.f32 %v2769, %v4100
  %v4175 = vmul.f32 %v3539, %v4104
  %v4176 = vmul.f32 %v3541, %v4108
  %v4177 = vmul.f32 %v2771, %v4096
  %v4178 = vmul.f32 %v2773, %v4100
  %v4179 = vmul.f32 %v3543, %v4104
  %v4180 = vmul.f32 %v3545, %v4108
  %v4181 = vmul.f32 %v2777, %v4096
  %v4182 = vmul.f32 %v2779, %v4100
  %v4183 = vmul.f32 %v3549, %v4104
  %v4184 = vmul.f32 %v3551, %v4108
  %v4185 = vmul.f32 %v2781, %v4096
  %v4186 = vmul.f32 %v2783, %v4100
  %v4187 = vmul.f32 %v3553, %v4104
  %v4188 = vmul.f32 %v3555, %v4108
  %v4189 = vmul.f32 %v2787, %v4096
  %v4190 = vmul.f32 %v2789, %v4100
  %v4191 = vmul.f32 %v3559, %v4104
  %v4192 = vmul.f32 %v3561, %v4108
  %v4193 = vmul.f32 %v2791, %v4096
  %v4194 = vmul.f32 %v2793, %v4100
  %v4195 = vmul.f32 %v3563, %v4104
  %v4196 = vmul.f32 %v3565, %v4108
  %v4197 = vmul.f32 %v2797, %v4096
  %v4198 = vmul.f32 %v2799, %v4100
  %v4199 = vmul.f32 %v3569, %v4104
  %v4200 = vmul.f32 %v3571, %v4108
  %v4201 = vmul.f32 %v2801, %v4096
  %v4202 = vmul.f32 %v2803, %v4100
  %v4203 = vmul.f32 %v3573, %v4104
  %v4204 = vmul.f32 %v3575, %v4108
  %v4205 = vmul.f32 %v2807, %v4096
  %v4206 = vmul.f32 %v2809, %v4100
  %v4207 = vmul.f32 %v3579, %v4104
  %v4208 = vmul.f32 %v3581, %v4108
  %v4209 = vmul.f32 %v2811, %v4096
  %v4210 = vmul.f32 %v2813, %v4100
  %v4211 = vmul.f32 %v3583, %v4104
  %v4212 = vmul.f32 %v3585, %v4108
  %v4213 = vmul.f32 %v2817, %v4096
  %v4214 = vmul.f32 %v2819, %v4100
  %v4215 = vmul.f32 %v3589, %v4104
  %v4216 = vmul.f32 %v3591, %v4108
  %v4217 = vmul.f32 %v2821, %v4096
  %v4218 = vmul.f32 %v2823, %v4100
  %v4219 = vmul.f32 %v3593, %v4104
  %v4220 = vmul.f32 %v3595, %v4108
  %v4221 = vmul.f32 %v2827, %v4096
  %v4222 = vmul.f32 %v2829, %v4100
  %v4223 = vmul.f32 %v3599, %v4104
  %v4224 = vmul.f32 %v3601, %v4108
  %v4225 = vmul.f32 %v2831, %v4096
  %v4226 = vmul.f32 %v2833, %v4100
  %v4227 = vmul.f32 %v3603, %v4104
  %v4228 = vmul.f32 %v3605, %v4108
  %v4229 = vmul.f32 %v2837, %v4096
  %v4230 = vmul.f32 %v2839, %v4100
  %v4231 = vmul.f32 %v3609, %v4104
  %v4232 = vmul.f32 %v3611, %v4108
  %v4233 = vmul.f32 %v2841, %v4096
  %v4234 = vmul.f32 %v2843, %v4100
  %v4235 = vmul.f32 %v3613, %v4104
  %v4236 = vmul.f32 %v3615, %v4108
  %v4237 = vlaneseq
  %v4238 = vshrl.u32 %v4237, 7
  %v4239 = vsub.s32 1, %v4238
  %v4240 = vrot.slane %v4089, %v4239
  %v4241 = vlaneseq
  %v4242 = vshrl.u32 %v4241, 7
  %v4243 = vsub.s32 1, %v4242
  %v4244 = vrot.slane %v4090, %v4243
  %v4245 = vlaneseq
  %v4246 = vshrl.u32 %v4245, 7
  %v4247 = vsub.s32 1, %v4246
  %v4248 = vrot.slane %v4091, %v4247
  %v4249 = vlaneseq
  %v4250 = vshrl.u32 %v4249, 7
  %v4251 = vsub.s32 1, %v4250
  %v4252 = vrot.slane %v4092, %v4251
  %v4253 = vadd.f32 %v4109, %v4240
  %v4254 = vadd.f32 %v4110, %v4244
  %v4255 = vadd.f32 %v4111, %v4248
  %v4256 = vadd.f32 %v4112, %v4252
  %v4257 = vadd.f32 %v4113, %v4240
  %v4258 = vadd.f32 %v4114, %v4244
  %v4259 = vadd.f32 %v4115, %v4248
  %v4260 = vadd.f32 %v4116, %v4252
  %v4261 = vadd.f32 %v4117, %v4240
  %v4262 = vadd.f32 %v4118, %v4244
  %v4263 = vadd.f32 %v4119, %v4248
  %v4264 = vadd.f32 %v4120, %v4252
  %v4265 = vadd.f32 %v4121, %v4240
  %v4266 = vadd.f32 %v4122, %v4244
  %v4267 = vadd.f32 %v4123, %v4248
  %v4268 = vadd.f32 %v4124, %v4252
  %v4269 = vadd.f32 %v4125, %v4240
  %v4270 = vadd.f32 %v4126, %v4244
  %v4271 = vadd.f32 %v4127, %v4248
  %v4272 = vadd.f32 %v4128, %v4252
  %v4273 = vadd.f32 %v4129, %v4240
  %v4274 = vadd.f32 %v4130, %v4244
  %v4275 = vadd.f32 %v4131, %v4248
  %v4276 = vadd.f32 %v4132, %v4252
  %v4277 = vadd.f32 %v4133, %v4240
  %v4278 = vadd.f32 %v4134, %v4244
  %v4279 = vadd.f32 %v4135, %v4248
  %v4280 = vadd.f32 %v4136, %v4252
  %v4281 = vadd.f32 %v4137, %v4240
  %v4282 = vadd.f32 %v4138, %v4244
  %v4283 = vadd.f32 %v4139, %v4248
  %v4284 = vadd.f32 %v4140, %v4252
  %v4285 = vadd.f32 %v4141, %v4240
  %v4286 = vadd.f32 %v4142, %v4244
  %v4287 = vadd.f32 %v4143, %v4248
  %v4288 = vadd.f32 %v4144, %v4252
  %v4289 = vadd.f32 %v4145, %v4240
  %v4290 = vadd.f32 %v4146, %v4244
  %v4291 = vadd.f32 %v4147, %v4248
  %v4292 = vadd.f32 %v4148, %v4252
  %v4293 = vadd.f32 %v4149, %v4240
  %v4294 = vadd.f32 %v4150, %v4244
  %v4295 = vadd.f32 %v4151, %v4248
  %v4296 = vadd.f32 %v4152, %v4252
  %v4297 = vadd.f32 %v4153, %v4240
  %v4298 = vadd.f32 %v4154, %v4244
  %v4299 = vadd.f32 %v4155, %v4248
  %v4300 = vadd.f32 %v4156, %v4252
  %v4301 = vadd.f32 %v4157, %v4240
  %v4302 = vadd.f32 %v4158, %v4244
  %v4303 = vadd.f32 %v4159, %v4248
  %v4304 = vadd.f32 %v4160, %v4252
  %v4305 = vadd.f32 %v4161, %v4240
  %v4306 = vadd.f32 %v4162, %v4244
  %v4307 = vadd.f32 %v4163, %v4248
  %v4308 = vadd.f32 %v4164, %v4252
  %v4309 = vadd.f32 %v4165, %v4240
  %v4310 = vadd.f32 %v4166, %v4244
  %v4311 = vadd.f32 %v4167, %v4248
  %v4312 = vadd.f32 %v4168, %v4252
  %v4313 = vadd.f32 %v4169, %v4240
  %v4314 = vadd.f32 %v4170, %v4244
  %v4315 = vadd.f32 %v4171, %v4248
  %v4316 = vadd.f32 %v4172, %v4252
  %v4317 = vadd.f32 %v4173, %v4240
  %v4318 = vadd.f32 %v4174, %v4244
  %v4319 = vadd.f32 %v4175, %v4248
  %v4320 = vadd.f32 %v4176, %v4252
  %v4321 = vadd.f32 %v4177, %v4240
  %v4322 = vadd.f32 %v4178, %v4244
  %v4323 = vadd.f32 %v4179, %v4248
  %v4324 = vadd.f32 %v4180, %v4252
  %v4325 = vadd.f32 %v4181, %v4240
  %v4326 = vadd.f32 %v4182, %v4244
  %v4327 = vadd.f32 %v4183, %v4248
  %v4328 = vadd.f32 %v4184, %v4252
  %v4329 = vadd.f32 %v4185, %v4240
  %v4330 = vadd.f32 %v4186, %v4244
  %v4331 = vadd.f32 %v4187, %v4248
  %v4332 = vadd.f32 %v4188, %v4252
  %v4333 = vadd.f32 %v4189, %v4240
  %v4334 = vadd.f32 %v4190, %v4244
  %v4335 = vadd.f32 %v4191, %v4248
  %v4336 = vadd.f32 %v4192, %v4252
  %v4337 = vadd.f32 %v4193, %v4240
  %v4338 = vadd.f32 %v4194, %v4244
  %v4339 = vadd.f32 %v4195, %v4248
  %v4340 = vadd.f32 %v4196, %v4252
  %v4341 = vadd.f32 %v4197, %v4240
  %v4342 = vadd.f32 %v4198, %v4244
  %v4343 = vadd.f32 %v4199, %v4248
  %v4344 = vadd.f32 %v4200, %v4252
  %v4345 = vadd.f32 %v4201, %v4240
  %v4346 = vadd.f32 %v4202, %v4244
  %v4347 = vadd.f32 %v4203, %v4248
  %v4348 = vadd.f32 %v4204, %v4252
  %v4349 = vadd.f32 %v4205, %v4240
  %v4350 = vadd.f32 %v4206, %v4244
  %v4351 = vadd.f32 %v4207, %v4248
  %v4352 = vadd.f32 %v4208, %v4252
  %v4353 = vadd.f32 %v4209, %v4240
  %v4354 = vadd.f32 %v4210, %v4244
  %v4355 = vadd.f32 %v4211, %v4248
  %v4356 = vadd.f32 %v4212, %v4252
  %v4357 = vadd.f32 %v4213, %v4240
  %v4358 = vadd.f32 %v4214, %v4244
  %v4359 = vadd.f32 %v4215, %v4248
  %v4360 = vadd.f32 %v4216, %v4252
  %v4361 = vadd.f32 %v4217, %v4240
  %v4362 = vadd.f32 %v4218, %v4244
  %v4363 = vadd.f32 %v4219, %v4248
  %v4364 = vadd.f32 %v4220, %v4252
  %v4365 = vadd.f32 %v4221, %v4240
  %v4366 = vadd.f32 %v4222, %v4244
  %v4367 = vadd.f32 %v4223, %v4248
  %v4368 = vadd.f32 %v4224, %v4252
  %v4369 = vadd.f32 %v4225, %v4240
  %v4370 = vadd.f32 %v4226, %v4244
  %v4371 = vadd.f32 %v4227, %v4248
  %v4372 = vadd.f32 %v4228, %v4252
  %v4373 = vadd.f32 %v4229, %v4240
  %v4374 = vadd.f32 %v4230, %v4244
  %v4375 = vadd.f32 %v4231, %v4248
  %v4376 = vadd.f32 %v4232, %v4252
  %v4377 = vadd.f32 %v4233, %v4240
  %v4378 = vadd.f32 %v4234, %v4244
  %v4379 = vadd.f32 %v4235, %v4248
  %v4380 = vadd.f32 %v4236, %v4252
  %v4381 = vmax.f32 %v4253, 0.0
  %v4382 = vmax.f32 %v4254, 0.0
  %v4383 = vmax.f32 %v4255, 0.0
  %v4384 = vmax.f32 %v4256, 0.0
  %v4385 = vmax.f32 %v4257, 0.0
  %v4386 = vmax.f32 %v4258, 0.0
  %v4387 = vmax.f32 %v4259, 0.0
  %v4388 = vmax.f32 %v4260, 0.0
  %v4389 = vmax.f32 %v4261, 0.0
  %v4390 = vmax.f32 %v4262, 0.0
  %v4391 = vmax.f32 %v4263, 0.0
  %v4392 = vmax.f32 %v4264, 0.0
  %v4393 = vmax.f32 %v4265, 0.0
  %v4394 = vmax.f32 %v4266, 0.0
  %v4395 = vmax.f32 %v4267, 0.0
  %v4396 = vmax.f32 %v4268, 0.0
  %v4397 = vmax.f32 %v4269, 0.0
  %v4398 = vmax.f32 %v4270, 0.0
  %v4399 = vmax.f32 %v4271, 0.0
  %v4400 = vmax.f32 %v4272, 0.0
  %v4401 = vmax.f32 %v4273, 0.0
  %v4402 = vmax.f32 %v4274, 0.0
  %v4403 = vmax.f32 %v4275, 0.0
  %v4404 = vmax.f32 %v4276, 0.0
  %v4405 = vmax.f32 %v4277, 0.0
  %v4406 = vmax.f32 %v4278, 0.0
  %v4407 = vmax.f32 %v4279, 0.0
  %v4408 = vmax.f32 %v4280, 0.0
  %v4409 = vmax.f32 %v4281, 0.0
  %v4410 = vmax.f32 %v4282, 0.0
  %v4411 = vmax.f32 %v4283, 0.0
  %v4412 = vmax.f32 %v4284, 0.0
  %v4413 = vmax.f32 %v4285, 0.0
  %v4414 = vmax.f32 %v4286, 0.0
  %v4415 = vmax.f32 %v4287, 0.0
  %v4416 = vmax.f32 %v4288, 0.0
  %v4417 = vmax.f32 %v4289, 0.0
  %v4418 = vmax.f32 %v4290, 0.0
  %v4419 = vmax.f32 %v4291, 0.0
  %v4420 = vmax.f32 %v4292, 0.0
  %v4421 = vmax.f32 %v4293, 0.0
  %v4422 = vmax.f32 %v4294, 0.0
  %v4423 = vmax.f32 %v4295, 0.0
  %v4424 = vmax.f32 %v4296, 0.0
  %v4425 = vmax.f32 %v4297, 0.0
  %v4426 = vmax.f32 %v4298, 0.0
  %v4427 = vmax.f32 %v4299, 0.0
  %v4428 = vmax.f32 %v4300, 0.0
  %v4429 = vmax.f32 %v4301, 0.0
  %v4430 = vmax.f32 %v4302, 0.0
  %v4431 = vmax.f32 %v4303, 0.0
  %v4432 = vmax.f32 %v4304, 0.0
  %v4433 = vmax.f32 %v4305, 0.0
  %v4434 = vmax.f32 %v4306, 0.0
  %v4435 = vmax.f32 %v4307, 0.0
  %v4436 = vmax.f32 %v4308, 0.0
  %v4437 = vmax.f32 %v4309, 0.0
  %v4438 = vmax.f32 %v4310, 0.0
  %v4439 = vmax.f32 %v4311, 0.0
  %v4440 = vmax.f32 %v4312, 0.0
  %v4441 = vmax.f32 %v4313, 0.0
  %v4442 = vmax.f32 %v4314, 0.0
  %v4443 = vmax.f32 %v4315, 0.0
  %v4444 = vmax.f32 %v4316, 0.0
  %v4445 = vmax.f32 %v4317, 0.0
  %v4446 = vmax.f32 %v4318, 0.0
  %v4447 = vmax.f32 %v4319, 0.0
  %v4448 = vmax.f32 %v4320, 0.0
  %v4449 = vmax.f32 %v4321, 0.0
  %v4450 = vmax.f32 %v4322, 0.0
  %v4451 = vmax.f32 %v4323, 0.0
  %v4452 = vmax.f32 %v4324, 0.0
  %v4453 = vmax.f32 %v4325, 0.0
  %v4454 = vmax.f32 %v4326, 0.0
  %v4455 = vmax.f32 %v4327, 0.0
  %v4456 = vmax.f32 %v4328, 0.0
  %v4457 = vmax.f32 %v4329, 0.0
  %v4458 = vmax.f32 %v4330, 0.0
  %v4459 = vmax.f32 %v4331, 0.0
  %v4460 = vmax.f32 %v4332, 0.0
  %v4461 = vmax.f32 %v4333, 0.0
  %v4462 = vmax.f32 %v4334, 0.0
  %v4463 = vmax.f32 %v4335, 0.0
  %v4464 = vmax.f32 %v4336, 0.0
  %v4465 = vmax.f32 %v4337, 0.0
  %v4466 = vmax.f32 %v4338, 0.0
  %v4467 = vmax.f32 %v4339, 0.0
  %v4468 = vmax.f32 %v4340, 0.0
  %v4469 = vmax.f32 %v4341, 0.0
  %v4470 = vmax.f32 %v4342, 0.0
  %v4471 = vmax.f32 %v4343, 0.0
  %v4472 = vmax.f32 %v4344, 0.0
  %v4473 = vmax.f32 %v4345, 0.0
  %v4474 = vmax.f32 %v4346, 0.0
  %v4475 = vmax.f32 %v4347, 0.0
  %v4476 = vmax.f32 %v4348, 0.0
  %v4477 = vmax.f32 %v4349, 0.0
  %v4478 = vmax.f32 %v4350, 0.0
  %v4479 = vmax.f32 %v4351, 0.0
  %v4480 = vmax.f32 %v4352, 0.0
  %v4481 = vmax.f32 %v4353, 0.0
  %v4482 = vmax.f32 %v4354, 0.0
  %v4483 = vmax.f32 %v4355, 0.0
  %v4484 = vmax.f32 %v4356, 0.0
  %v4485 = vmax.f32 %v4357, 0.0
  %v4486 = vmax.f32 %v4358, 0.0
  %v4487 = vmax.f32 %v4359, 0.0
  %v4488 = vmax.f32 %v4360, 0.0
  %v4489 = vmax.f32 %v4361, 0.0
  %v4490 = vmax.f32 %v4362, 0.0
  %v4491 = vmax.f32 %v4363, 0.0
  %v4492 = vmax.f32 %v4364, 0.0
  %v4493 = vmax.f32 %v4365, 0.0
  %v4494 = vmax.f32 %v4366, 0.0
  %v4495 = vmax.f32 %v4367, 0.0
  %v4496 = vmax.f32 %v4368, 0.0
  %v4497 = vmax.f32 %v4369, 0.0
  %v4498 = vmax.f32 %v4370, 0.0
  %v4499 = vmax.f32 %v4371, 0.0
  %v4500 = vmax.f32 %v4372, 0.0
  %v4501 = vmax.f32 %v4373, 0.0
  %v4502 = vmax.f32 %v4374, 0.0
  %v4503 = vmax.f32 %v4375, 0.0
  %v4504 = vmax.f32 %v4376, 0.0
  %v4505 = vmax.f32 %v4377, 0.0
  %v4506 = vmax.f32 %v4378, 0.0
  %v4507 = vmax.f32 %v4379, 0.0
  %v4508 = vmax.f32 %v4380, 0.0
  %v4509 = vpack.c.bf16 %v4385, %v4381
  %v4510 = vpack.c.bf16 %v4386, %v4382
  %v4511 = vpack.c.bf16 %v4387, %v4383
  %v4512 = vpack.c.bf16 %v4388, %v4384
  %v4513 = vpack.c.bf16 %v4393, %v4389
  %v4514 = vpack.c.bf16 %v4394, %v4390
  %v4515 = vpack.c.bf16 %v4395, %v4391
  %v4516 = vpack.c.bf16 %v4396, %v4392
  %v4517 = vpack.c.bf16 %v4401, %v4397
  %v4518 = vpack.c.bf16 %v4402, %v4398
  %v4519 = vpack.c.bf16 %v4403, %v4399
  %v4520 = vpack.c.bf16 %v4404, %v4400
  %v4521 = vpack.c.bf16 %v4409, %v4405
  %v4522 = vpack.c.bf16 %v4410, %v4406
  %v4523 = vpack.c.bf16 %v4411, %v4407
  %v4524 = vpack.c.bf16 %v4412, %v4408
  %v4525 = vpack.c.bf16 %v4417, %v4413
  %v4526 = vpack.c.bf16 %v4418, %v4414
  %v4527 = vpack.c.bf16 %v4419, %v4415
  %v4528 = vpack.c.bf16 %v4420, %v4416
  %v4529 = vpack.c.bf16 %v4425, %v4421
  %v4530 = vpack.c.bf16 %v4426, %v4422
  %v4531 = vpack.c.bf16 %v4427, %v4423
  %v4532 = vpack.c.bf16 %v4428, %v4424
  %v4533 = vpack.c.bf16 %v4433, %v4429
  %v4534 = vpack.c.bf16 %v4434, %v4430
  %v4535 = vpack.c.bf16 %v4435, %v4431
  %v4536 = vpack.c.bf16 %v4436, %v4432
  %v4537 = vpack.c.bf16 %v4441, %v4437
  %v4538 = vpack.c.bf16 %v4442, %v4438
  %v4539 = vpack.c.bf16 %v4443, %v4439
  %v4540 = vpack.c.bf16 %v4444, %v4440
  %v4541 = vpack.c.bf16 %v4449, %v4445
  %v4542 = vpack.c.bf16 %v4450, %v4446
  %v4543 = vpack.c.bf16 %v4451, %v4447
  %v4544 = vpack.c.bf16 %v4452, %v4448
  %v4545 = vpack.c.bf16 %v4457, %v4453
  %v4546 = vpack.c.bf16 %v4458, %v4454
  %v4547 = vpack.c.bf16 %v4459, %v4455
  %v4548 = vpack.c.bf16 %v4460, %v4456
  %v4549 = vpack.c.bf16 %v4465, %v4461
  %v4550 = vpack.c.bf16 %v4466, %v4462
  %v4551 = vpack.c.bf16 %v4467, %v4463
  %v4552 = vpack.c.bf16 %v4468, %v4464
  %v4553 = vpack.c.bf16 %v4473, %v4469
  %v4554 = vpack.c.bf16 %v4474, %v4470
  %v4555 = vpack.c.bf16 %v4475, %v4471
  %v4556 = vpack.c.bf16 %v4476, %v4472
  %v4557 = vpack.c.bf16 %v4481, %v4477
  %v4558 = vpack.c.bf16 %v4482, %v4478
  %v4559 = vpack.c.bf16 %v4483, %v4479
  %v4560 = vpack.c.bf16 %v4484, %v4480
  %v4561 = vpack.c.bf16 %v4489, %v4485
  %v4562 = vpack.c.bf16 %v4490, %v4486
  %v4563 = vpack.c.bf16 %v4491, %v4487
  %v4564 = vpack.c.bf16 %v4492, %v4488
  %v4565 = vpack.c.bf16 %v4497, %v4493
  %v4566 = vpack.c.bf16 %v4498, %v4494
  %v4567 = vpack.c.bf16 %v4499, %v4495
  %v4568 = vpack.c.bf16 %v4500, %v4496
  %v4569 = vpack.c.bf16 %v4505, %v4501
  %v4570 = vpack.c.bf16 %v4506, %v4502
  %v4571 = vpack.c.bf16 %v4507, %v4503
  %v4572 = vpack.c.bf16 %v4508, %v4504
  %v4573 = vld [vmem:[%s2] sm:$0xff]
  %v4574 = vld [vmem:[%s2 + $0x8] sm:$0xff]
  %v4575 = vld [vmem:[%s2 + $0x10] sm:$0xff]
  %v4576 = vld [vmem:[%s2 + $0x18] sm:$0xff]
  %v4577 = vld [vmem:[%s2 + $0x20] sm:$0xff]
  %v4578 = vld [vmem:[%s2 + $0x28] sm:$0xff]
  %v4579 = vld [vmem:[%s2 + $0x30] sm:$0xff]
  %v4580 = vld [vmem:[%s2 + $0x38] sm:$0xff]
  %v4581 = vld [vmem:[%s2 + $0x40] sm:$0xff]
  %v4582 = vld [vmem:[%s2 + $0x48] sm:$0xff]
  %v4583 = vld [vmem:[%s2 + $0x50] sm:$0xff]
  %v4584 = vld [vmem:[%s2 + $0x58] sm:$0xff]
  %v4585 = vld [vmem:[%s2 + $0x60] sm:$0xff]
  %v4586 = vld [vmem:[%s2 + $0x68] sm:$0xff]
  %v4587 = vld [vmem:[%s2 + $0x70] sm:$0xff]
  %v4588 = vld [vmem:[%s2 + $0x78] sm:$0xff]
  %v4589 = vld [vmem:[%s2 + $0x80] sm:$0xff]
  %v4590 = vld [vmem:[%s2 + $0x88] sm:$0xff]
  %v4591 = vld [vmem:[%s2 + $0x90] sm:$0xff]
  %v4592 = vld [vmem:[%s2 + $0x98] sm:$0xff]
  %v4593 = vld [vmem:[%s2 + $0xa0] sm:$0xff]
  %v4594 = vld [vmem:[%s2 + $0xa8] sm:$0xff]
  %v4595 = vld [vmem:[%s2 + $0xb0] sm:$0xff]
  %v4596 = vld [vmem:[%s2 + $0xb8] sm:$0xff]
  %v4597 = vld [vmem:[%s2 + $0xc0] sm:$0xff]
  %v4598 = vld [vmem:[%s2 + $0xc8] sm:$0xff]
  %v4599 = vld [vmem:[%s2 + $0xd0] sm:$0xff]
  %v4600 = vld [vmem:[%s2 + $0xd8] sm:$0xff]
  %v4601 = vld [vmem:[%s2 + $0xe0] sm:$0xff]
  %v4602 = vld [vmem:[%s2 + $0xe8] sm:$0xff]
  %v4603 = vld [vmem:[%s2 + $0xf0] sm:$0xff]
  %v4604 = vld [vmem:[%s2 + $0xf8] sm:$0xff]
  %v4605 = vld [vmem:[%s2 + $0x100] sm:$0xff]
  %v4606 = vld [vmem:[%s2 + $0x108] sm:$0xff]
  %v4607 = vld [vmem:[%s2 + $0x110] sm:$0xff]
  %v4608 = vld [vmem:[%s2 + $0x118] sm:$0xff]
  %v4609 = vld [vmem:[%s2 + $0x120] sm:$0xff]
  %v4610 = vld [vmem:[%s2 + $0x128] sm:$0xff]
  %v4611 = vld [vmem:[%s2 + $0x130] sm:$0xff]
  %v4612 = vld [vmem:[%s2 + $0x138] sm:$0xff]
  %v4613 = vld [vmem:[%s2 + $0x140] sm:$0xff]
  %v4614 = vld [vmem:[%s2 + $0x148] sm:$0xff]
  %v4615 = vld [vmem:[%s2 + $0x150] sm:$0xff]
  %v4616 = vld [vmem:[%s2 + $0x158] sm:$0xff]
  %v4617 = vld [vmem:[%s2 + $0x160] sm:$0xff]
  %v4618 = vld [vmem:[%s2 + $0x168] sm:$0xff]
  %v4619 = vld [vmem:[%s2 + $0x170] sm:$0xff]
  %v4620 = vld [vmem:[%s2 + $0x178] sm:$0xff]
  %v4621 = vld [vmem:[%s2 + $0x180] sm:$0xff]
  %v4622 = vld [vmem:[%s2 + $0x188] sm:$0xff]
  %v4623 = vld [vmem:[%s2 + $0x190] sm:$0xff]
  %v4624 = vld [vmem:[%s2 + $0x198] sm:$0xff]
  %v4625 = vld [vmem:[%s2 + $0x1a0] sm:$0xff]
  %v4626 = vld [vmem:[%s2 + $0x1a8] sm:$0xff]
  %v4627 = vld [vmem:[%s2 + $0x1b0] sm:$0xff]
  %v4628 = vld [vmem:[%s2 + $0x1b8] sm:$0xff]
  %v4629 = vld [vmem:[%s2 + $0x1c0] sm:$0xff]
  %v4630 = vld [vmem:[%s2 + $0x1c8] sm:$0xff]
  %v4631 = vld [vmem:[%s2 + $0x1d0] sm:$0xff]
  %v4632 = vld [vmem:[%s2 + $0x1d8] sm:$0xff]
  %v4633 = vld [vmem:[%s2 + $0x1e0] sm:$0xff]
  %v4634 = vld [vmem:[%s2 + $0x1e8] sm:$0xff]
  %v4635 = vld [vmem:[%s2 + $0x1f0] sm:$0xff]
  %v4636 = vld [vmem:[%s2 + $0x1f8] sm:$0xff]
  %v4637 = vld [vmem:[%s2 + $0x200] sm:$0xff]
  %v4638 = vld [vmem:[%s2 + $0x208] sm:$0xff]
  %v4639 = vld [vmem:[%s2 + $0x210] sm:$0xff]
  %v4640 = vld [vmem:[%s2 + $0x218] sm:$0xff]
  %v4641 = vld [vmem:[%s2 + $0x220] sm:$0xff]
  %v4642 = vld [vmem:[%s2 + $0x228] sm:$0xff]
  %v4643 = vld [vmem:[%s2 + $0x230] sm:$0xff]
  %v4644 = vld [vmem:[%s2 + $0x238] sm:$0xff]
  %v4645 = vld [vmem:[%s2 + $0x240] sm:$0xff]
  %v4646 = vld [vmem:[%s2 + $0x248] sm:$0xff]
  %v4647 = vld [vmem:[%s2 + $0x250] sm:$0xff]
  %v4648 = vld [vmem:[%s2 + $0x258] sm:$0xff]
  %v4649 = vld [vmem:[%s2 + $0x260] sm:$0xff]
  %v4650 = vld [vmem:[%s2 + $0x268] sm:$0xff]
  %v4651 = vld [vmem:[%s2 + $0x270] sm:$0xff]
  %v4652 = vld [vmem:[%s2 + $0x278] sm:$0xff]
  %v4653 = vld [vmem:[%s2 + $0x280] sm:$0xff]
  %v4654 = vld [vmem:[%s2 + $0x288] sm:$0xff]
  %v4655 = vld [vmem:[%s2 + $0x290] sm:$0xff]
  %v4656 = vld [vmem:[%s2 + $0x298] sm:$0xff]
  %v4657 = vld [vmem:[%s2 + $0x2a0] sm:$0xff]
  %v4658 = vld [vmem:[%s2 + $0x2a8] sm:$0xff]
  %v4659 = vld [vmem:[%s2 + $0x2b0] sm:$0xff]
  %v4660 = vld [vmem:[%s2 + $0x2b8] sm:$0xff]
  %v4661 = vld [vmem:[%s2 + $0x2c0] sm:$0xff]
  %v4662 = vld [vmem:[%s2 + $0x2c8] sm:$0xff]
  %v4663 = vld [vmem:[%s2 + $0x2d0] sm:$0xff]
  %v4664 = vld [vmem:[%s2 + $0x2d8] sm:$0xff]
  %v4665 = vld [vmem:[%s2 + $0x2e0] sm:$0xff]
  %v4666 = vld [vmem:[%s2 + $0x2e8] sm:$0xff]
  %v4667 = vld [vmem:[%s2 + $0x2f0] sm:$0xff]
  %v4668 = vld [vmem:[%s2 + $0x2f8] sm:$0xff]
  %v4669 = vld [vmem:[%s2 + $0x300] sm:$0xff]
  %v4670 = vld [vmem:[%s2 + $0x308] sm:$0xff]
  %v4671 = vld [vmem:[%s2 + $0x310] sm:$0xff]
  %v4672 = vld [vmem:[%s2 + $0x318] sm:$0xff]
  %v4673 = vld [vmem:[%s2 + $0x320] sm:$0xff]
  %v4674 = vld [vmem:[%s2 + $0x328] sm:$0xff]
  %v4675 = vld [vmem:[%s2 + $0x330] sm:$0xff]
  %v4676 = vld [vmem:[%s2 + $0x338] sm:$0xff]
  %v4677 = vld [vmem:[%s2 + $0x340] sm:$0xff]
  %v4678 = vld [vmem:[%s2 + $0x348] sm:$0xff]
  %v4679 = vld [vmem:[%s2 + $0x350] sm:$0xff]
  %v4680 = vld [vmem:[%s2 + $0x358] sm:$0xff]
  %v4681 = vld [vmem:[%s2 + $0x360] sm:$0xff]
  %v4682 = vld [vmem:[%s2 + $0x368] sm:$0xff]
  %v4683 = vld [vmem:[%s2 + $0x370] sm:$0xff]
  %v4684 = vld [vmem:[%s2 + $0x378] sm:$0xff]
  %v4685 = vld [vmem:[%s2 + $0x380] sm:$0xff]
  %v4686 = vld [vmem:[%s2 + $0x388] sm:$0xff]
  %v4687 = vld [vmem:[%s2 + $0x390] sm:$0xff]
  %v4688 = vld [vmem:[%s2 + $0x398] sm:$0xff]
  %v4689 = vld [vmem:[%s2 + $0x3a0] sm:$0xff]
  %v4690 = vld [vmem:[%s2 + $0x3a8] sm:$0xff]
  %v4691 = vld [vmem:[%s2 + $0x3b0] sm:$0xff]
  %v4692 = vld [vmem:[%s2 + $0x3b8] sm:$0xff]
  %v4693 = vld [vmem:[%s2 + $0x3c0] sm:$0xff]
  %v4694 = vld [vmem:[%s2 + $0x3c8] sm:$0xff]
  %v4695 = vld [vmem:[%s2 + $0x3d0] sm:$0xff]
  %v4696 = vld [vmem:[%s2 + $0x3d8] sm:$0xff]
  %v4697 = vld [vmem:[%s2 + $0x3e0] sm:$0xff]
  %v4698 = vld [vmem:[%s2 + $0x3e8] sm:$0xff]
  %v4699 = vld [vmem:[%s2 + $0x3f0] sm:$0xff]
  %v4700 = vld [vmem:[%s2 + $0x3f8] sm:$0xff]
  %v4829 = vunpack.c.l.b16 %v4573
  %v4830 = vunpack.c.h.b16 %v4573
  %v4831 = vunpack.c.l.b16 %v4574
  %v4832 = vunpack.c.h.b16 %v4574
  %v4833 = vunpack.c.l.b16 %v4575
  %v4834 = vunpack.c.h.b16 %v4575
  %v4835 = vunpack.c.l.b16 %v4576
  %v4836 = vunpack.c.h.b16 %v4576
  %v4837 = vunpack.c.l.b16 %v4577
  %v4838 = vunpack.c.h.b16 %v4577
  %v4839 = vunpack.c.l.b16 %v4578
  %v4840 = vunpack.c.h.b16 %v4578
  %v4841 = vunpack.c.l.b16 %v4579
  %v4842 = vunpack.c.h.b16 %v4579
  %v4843 = vunpack.c.l.b16 %v4580
  %v4844 = vunpack.c.h.b16 %v4580
  %v4845 = vunpack.c.l.b16 %v4581
  %v4846 = vunpack.c.h.b16 %v4581
  %v4847 = vunpack.c.l.b16 %v4582
  %v4848 = vunpack.c.h.b16 %v4582
  %v4849 = vunpack.c.l.b16 %v4583
  %v4850 = vunpack.c.h.b16 %v4583
  %v4851 = vunpack.c.l.b16 %v4584
  %v4852 = vunpack.c.h.b16 %v4584
  %v4853 = vunpack.c.l.b16 %v4585
  %v4854 = vunpack.c.h.b16 %v4585
  %v4855 = vunpack.c.l.b16 %v4586
  %v4856 = vunpack.c.h.b16 %v4586
  %v4857 = vunpack.c.l.b16 %v4587
  %v4858 = vunpack.c.h.b16 %v4587
  %v4859 = vunpack.c.l.b16 %v4588
  %v4860 = vunpack.c.h.b16 %v4588
  %v4861 = vunpack.c.l.b16 %v4589
  %v4862 = vunpack.c.h.b16 %v4589
  %v4863 = vunpack.c.l.b16 %v4590
  %v4864 = vunpack.c.h.b16 %v4590
  %v4865 = vunpack.c.l.b16 %v4591
  %v4866 = vunpack.c.h.b16 %v4591
  %v4867 = vunpack.c.l.b16 %v4592
  %v4868 = vunpack.c.h.b16 %v4592
  %v4869 = vunpack.c.l.b16 %v4593
  %v4870 = vunpack.c.h.b16 %v4593
  %v4871 = vunpack.c.l.b16 %v4594
  %v4872 = vunpack.c.h.b16 %v4594
  %v4873 = vunpack.c.l.b16 %v4595
  %v4874 = vunpack.c.h.b16 %v4595
  %v4875 = vunpack.c.l.b16 %v4596
  %v4876 = vunpack.c.h.b16 %v4596
  %v4877 = vunpack.c.l.b16 %v4597
  %v4878 = vunpack.c.h.b16 %v4597
  %v4879 = vunpack.c.l.b16 %v4598
  %v4880 = vunpack.c.h.b16 %v4598
  %v4881 = vunpack.c.l.b16 %v4599
  %v4882 = vunpack.c.h.b16 %v4599
  %v4883 = vunpack.c.l.b16 %v4600
  %v4884 = vunpack.c.h.b16 %v4600
  %v4885 = vunpack.c.l.b16 %v4601
  %v4886 = vunpack.c.h.b16 %v4601
  %v4887 = vunpack.c.l.b16 %v4602
  %v4888 = vunpack.c.h.b16 %v4602
  %v4889 = vunpack.c.l.b16 %v4603
  %v4890 = vunpack.c.h.b16 %v4603
  %v4891 = vunpack.c.l.b16 %v4604
  %v4892 = vunpack.c.h.b16 %v4604
  %v4893 = vunpack.c.l.b16 %v4605
  %v4894 = vunpack.c.h.b16 %v4605
  %v4895 = vunpack.c.l.b16 %v4606
  %v4896 = vunpack.c.h.b16 %v4606
  %v4897 = vunpack.c.l.b16 %v4607
  %v4898 = vunpack.c.h.b16 %v4607
  %v4899 = vunpack.c.l.b16 %v4608
  %v4900 = vunpack.c.h.b16 %v4608
  %v4901 = vunpack.c.l.b16 %v4609
  %v4902 = vunpack.c.h.b16 %v4609
  %v4903 = vunpack.c.l.b16 %v4610
  %v4904 = vunpack.c.h.b16 %v4610
  %v4905 = vunpack.c.l.b16 %v4611
  %v4906 = vunpack.c.h.b16 %v4611
  %v4907 = vunpack.c.l.b16 %v4612
  %v4908 = vunpack.c.h.b16 %v4612
  %v4909 = vunpack.c.l.b16 %v4613
  %v4910 = vunpack.c.h.b16 %v4613
  %v4911 = vunpack.c.l.b16 %v4614
  %v4912 = vunpack.c.h.b16 %v4614
  %v4913 = vunpack.c.l.b16 %v4615
  %v4914 = vunpack.c.h.b16 %v4615
  %v4915 = vunpack.c.l.b16 %v4616
  %v4916 = vunpack.c.h.b16 %v4616
  %v4917 = vunpack.c.l.b16 %v4617
  %v4918 = vunpack.c.h.b16 %v4617
  %v4919 = vunpack.c.l.b16 %v4618
  %v4920 = vunpack.c.h.b16 %v4618
  %v4921 = vunpack.c.l.b16 %v4619
  %v4922 = vunpack.c.h.b16 %v4619
  %v4923 = vunpack.c.l.b16 %v4620
  %v4924 = vunpack.c.h.b16 %v4620
  %v4925 = vunpack.c.l.b16 %v4621
  %v4926 = vunpack.c.h.b16 %v4621
  %v4927 = vunpack.c.l.b16 %v4622
  %v4928 = vunpack.c.h.b16 %v4622
  %v4929 = vunpack.c.l.b16 %v4623
  %v4930 = vunpack.c.h.b16 %v4623
  %v4931 = vunpack.c.l.b16 %v4624
  %v4932 = vunpack.c.h.b16 %v4624
  %v4933 = vunpack.c.l.b16 %v4625
  %v4934 = vunpack.c.h.b16 %v4625
  %v4935 = vunpack.c.l.b16 %v4626
  %v4936 = vunpack.c.h.b16 %v4626
  %v4937 = vunpack.c.l.b16 %v4627
  %v4938 = vunpack.c.h.b16 %v4627
  %v4939 = vunpack.c.l.b16 %v4628
  %v4940 = vunpack.c.h.b16 %v4628
  %v4941 = vunpack.c.l.b16 %v4629
  %v4942 = vunpack.c.h.b16 %v4629
  %v4943 = vunpack.c.l.b16 %v4630
  %v4944 = vunpack.c.h.b16 %v4630
  %v4945 = vunpack.c.l.b16 %v4631
  %v4946 = vunpack.c.h.b16 %v4631
  %v4947 = vunpack.c.l.b16 %v4632
  %v4948 = vunpack.c.h.b16 %v4632
  %v4949 = vunpack.c.l.b16 %v4633
  %v4950 = vunpack.c.h.b16 %v4633
  %v4951 = vunpack.c.l.b16 %v4634
  %v4952 = vunpack.c.h.b16 %v4634
  %v4953 = vunpack.c.l.b16 %v4635
  %v4954 = vunpack.c.h.b16 %v4635
  %v4955 = vunpack.c.l.b16 %v4636
  %v4956 = vunpack.c.h.b16 %v4636
  %v4957 = vunpack.c.l.b16 %v4637
  %v4958 = vunpack.c.h.b16 %v4637
  %v4959 = vunpack.c.l.b16 %v4638
  %v4960 = vunpack.c.h.b16 %v4638
  %v4961 = vunpack.c.l.b16 %v4639
  %v4962 = vunpack.c.h.b16 %v4639
  %v4963 = vunpack.c.l.b16 %v4640
  %v4964 = vunpack.c.h.b16 %v4640
  %v4965 = vunpack.c.l.b16 %v4641
  %v4966 = vunpack.c.h.b16 %v4641
  %v4967 = vunpack.c.l.b16 %v4642
  %v4968 = vunpack.c.h.b16 %v4642
  %v4969 = vunpack.c.l.b16 %v4643
  %v4970 = vunpack.c.h.b16 %v4643
  %v4971 = vunpack.c.l.b16 %v4644
  %v4972 = vunpack.c.h.b16 %v4644
  %v4973 = vunpack.c.l.b16 %v4645
  %v4974 = vunpack.c.h.b16 %v4645
  %v4975 = vunpack.c.l.b16 %v4646
  %v4976 = vunpack.c.h.b16 %v4646
  %v4977 = vunpack.c.l.b16 %v4647
  %v4978 = vunpack.c.h.b16 %v4647
  %v4979 = vunpack.c.l.b16 %v4648
  %v4980 = vunpack.c.h.b16 %v4648
  %v4981 = vunpack.c.l.b16 %v4649
  %v4982 = vunpack.c.h.b16 %v4649
  %v4983 = vunpack.c.l.b16 %v4650
  %v4984 = vunpack.c.h.b16 %v4650
  %v4985 = vunpack.c.l.b16 %v4651
  %v4986 = vunpack.c.h.b16 %v4651
  %v4987 = vunpack.c.l.b16 %v4652
  %v4988 = vunpack.c.h.b16 %v4652
  %v4989 = vunpack.c.l.b16 %v4653
  %v4990 = vunpack.c.h.b16 %v4653
  %v4991 = vunpack.c.l.b16 %v4654
  %v4992 = vunpack.c.h.b16 %v4654
  %v4993 = vunpack.c.l.b16 %v4655
  %v4994 = vunpack.c.h.b16 %v4655
  %v4995 = vunpack.c.l.b16 %v4656
  %v4996 = vunpack.c.h.b16 %v4656
  %v4997 = vunpack.c.l.b16 %v4657
  %v4998 = vunpack.c.h.b16 %v4657
  %v4999 = vunpack.c.l.b16 %v4658
  %v5000 = vunpack.c.h.b16 %v4658
  %v5001 = vunpack.c.l.b16 %v4659
  %v5002 = vunpack.c.h.b16 %v4659
  %v5003 = vunpack.c.l.b16 %v4660
  %v5004 = vunpack.c.h.b16 %v4660
  %v5005 = vunpack.c.l.b16 %v4661
  %v5006 = vunpack.c.h.b16 %v4661
  %v5007 = vunpack.c.l.b16 %v4662
  %v5008 = vunpack.c.h.b16 %v4662
  %v5009 = vunpack.c.l.b16 %v4663
  %v5010 = vunpack.c.h.b16 %v4663
  %v5011 = vunpack.c.l.b16 %v4664
  %v5012 = vunpack.c.h.b16 %v4664
  %v5013 = vunpack.c.l.b16 %v4665
  %v5014 = vunpack.c.h.b16 %v4665
  %v5015 = vunpack.c.l.b16 %v4666
  %v5016 = vunpack.c.h.b16 %v4666
  %v5017 = vunpack.c.l.b16 %v4667
  %v5018 = vunpack.c.h.b16 %v4667
  %v5019 = vunpack.c.l.b16 %v4668
  %v5020 = vunpack.c.h.b16 %v4668
  %v5021 = vunpack.c.l.b16 %v4669
  %v5022 = vunpack.c.h.b16 %v4669
  %v5023 = vunpack.c.l.b16 %v4670
  %v5024 = vunpack.c.h.b16 %v4670
  %v5025 = vunpack.c.l.b16 %v4671
  %v5026 = vunpack.c.h.b16 %v4671
  %v5027 = vunpack.c.l.b16 %v4672
  %v5028 = vunpack.c.h.b16 %v4672
  %v5029 = vunpack.c.l.b16 %v4673
  %v5030 = vunpack.c.h.b16 %v4673
  %v5031 = vunpack.c.l.b16 %v4674
  %v5032 = vunpack.c.h.b16 %v4674
  %v5033 = vunpack.c.l.b16 %v4675
  %v5034 = vunpack.c.h.b16 %v4675
  %v5035 = vunpack.c.l.b16 %v4676
  %v5036 = vunpack.c.h.b16 %v4676
  %v5037 = vunpack.c.l.b16 %v4677
  %v5038 = vunpack.c.h.b16 %v4677
  %v5039 = vunpack.c.l.b16 %v4678
  %v5040 = vunpack.c.h.b16 %v4678
  %v5041 = vunpack.c.l.b16 %v4679
  %v5042 = vunpack.c.h.b16 %v4679
  %v5043 = vunpack.c.l.b16 %v4680
  %v5044 = vunpack.c.h.b16 %v4680
  %v5045 = vunpack.c.l.b16 %v4681
  %v5046 = vunpack.c.h.b16 %v4681
  %v5047 = vunpack.c.l.b16 %v4682
  %v5048 = vunpack.c.h.b16 %v4682
  %v5049 = vunpack.c.l.b16 %v4683
  %v5050 = vunpack.c.h.b16 %v4683
  %v5051 = vunpack.c.l.b16 %v4684
  %v5052 = vunpack.c.h.b16 %v4684
  %v5053 = vunpack.c.l.b16 %v4685
  %v5054 = vunpack.c.h.b16 %v4685
  %v5055 = vunpack.c.l.b16 %v4686
  %v5056 = vunpack.c.h.b16 %v4686
  %v5057 = vunpack.c.l.b16 %v4687
  %v5058 = vunpack.c.h.b16 %v4687
  %v5059 = vunpack.c.l.b16 %v4688
  %v5060 = vunpack.c.h.b16 %v4688
  %v5061 = vunpack.c.l.b16 %v4689
  %v5062 = vunpack.c.h.b16 %v4689
  %v5063 = vunpack.c.l.b16 %v4690
  %v5064 = vunpack.c.h.b16 %v4690
  %v5065 = vunpack.c.l.b16 %v4691
  %v5066 = vunpack.c.h.b16 %v4691
  %v5067 = vunpack.c.l.b16 %v4692
  %v5068 = vunpack.c.h.b16 %v4692
  %v5069 = vunpack.c.l.b16 %v4693
  %v5070 = vunpack.c.h.b16 %v4693
  %v5071 = vunpack.c.l.b16 %v4694
  %v5072 = vunpack.c.h.b16 %v4694
  %v5073 = vunpack.c.l.b16 %v4695
  %v5074 = vunpack.c.h.b16 %v4695
  %v5075 = vunpack.c.l.b16 %v4696
  %v5076 = vunpack.c.h.b16 %v4696
  %v5077 = vunpack.c.l.b16 %v4697
  %v5078 = vunpack.c.h.b16 %v4697
  %v5079 = vunpack.c.l.b16 %v4698
  %v5080 = vunpack.c.h.b16 %v4698
  %v5081 = vunpack.c.l.b16 %v4699
  %v5082 = vunpack.c.h.b16 %v4699
  %v5083 = vunpack.c.l.b16 %v4700
  %v5084 = vunpack.c.h.b16 %v4700
  %v5085 = vpack.c.b16 %v4833, %v4829
  %v5086 = vpack.c.b16 %v4834, %v4830
  %v5087 = vpack.c.b16 %v4835, %v4831
  %v5088 = vpack.c.b16 %v4836, %v4832
  %v5089 = vpack.c.b16 %v4841, %v4837
  %v5090 = vpack.c.b16 %v4842, %v4838
  %v5091 = vpack.c.b16 %v4843, %v4839
  %v5092 = vpack.c.b16 %v4844, %v4840
  %v5093 = vpack.c.b16 %v4849, %v4845
  %v5094 = vpack.c.b16 %v4850, %v4846
  %v5095 = vpack.c.b16 %v4851, %v4847
  %v5096 = vpack.c.b16 %v4852, %v4848
  %v5097 = vpack.c.b16 %v4857, %v4853
  %v5098 = vpack.c.b16 %v4858, %v4854
  %v5099 = vpack.c.b16 %v4859, %v4855
  %v5100 = vpack.c.b16 %v4860, %v4856
  %v5101 = vpack.c.b16 %v4865, %v4861
  %v5102 = vpack.c.b16 %v4866, %v4862
  %v5103 = vpack.c.b16 %v4867, %v4863
  %v5104 = vpack.c.b16 %v4868, %v4864
  %v5105 = vpack.c.b16 %v4873, %v4869
  %v5106 = vpack.c.b16 %v4874, %v4870
  %v5107 = vpack.c.b16 %v4875, %v4871
  %v5108 = vpack.c.b16 %v4876, %v4872
  %v5109 = vpack.c.b16 %v4881, %v4877
  %v5110 = vpack.c.b16 %v4882, %v4878
  %v5111 = vpack.c.b16 %v4883, %v4879
  %v5112 = vpack.c.b16 %v4884, %v4880
  %v5113 = vpack.c.b16 %v4889, %v4885
  %v5114 = vpack.c.b16 %v4890, %v4886
  %v5115 = vpack.c.b16 %v4891, %v4887
  %v5116 = vpack.c.b16 %v4892, %v4888
  %v5117 = vpack.c.b16 %v4897, %v4893
  %v5118 = vpack.c.b16 %v4898, %v4894
  %v5119 = vpack.c.b16 %v4899, %v4895
  %v5120 = vpack.c.b16 %v4900, %v4896
  %v5121 = vpack.c.b16 %v4905, %v4901
  %v5122 = vpack.c.b16 %v4906, %v4902
  %v5123 = vpack.c.b16 %v4907, %v4903
  %v5124 = vpack.c.b16 %v4908, %v4904
  %v5125 = vpack.c.b16 %v4913, %v4909
  %v5126 = vpack.c.b16 %v4914, %v4910
  %v5127 = vpack.c.b16 %v4915, %v4911
  %v5128 = vpack.c.b16 %v4916, %v4912
  %v5129 = vpack.c.b16 %v4921, %v4917
  %v5130 = vpack.c.b16 %v4922, %v4918
  %v5131 = vpack.c.b16 %v4923, %v4919
  %v5132 = vpack.c.b16 %v4924, %v4920
  %v5133 = vpack.c.b16 %v4929, %v4925
  %v5134 = vpack.c.b16 %v4930, %v4926
  %v5135 = vpack.c.b16 %v4931, %v4927
  %v5136 = vpack.c.b16 %v4932, %v4928
  %v5137 = vpack.c.b16 %v4937, %v4933
  %v5138 = vpack.c.b16 %v4938, %v4934
  %v5139 = vpack.c.b16 %v4939, %v4935
  %v5140 = vpack.c.b16 %v4940, %v4936
  %v5141 = vpack.c.b16 %v4945, %v4941
  %v5142 = vpack.c.b16 %v4946, %v4942
  %v5143 = vpack.c.b16 %v4947, %v4943
  %v5144 = vpack.c.b16 %v4948, %v4944
  %v5145 = vpack.c.b16 %v4953, %v4949
  %v5146 = vpack.c.b16 %v4954, %v4950
  %v5147 = vpack.c.b16 %v4955, %v4951
  %v5148 = vpack.c.b16 %v4956, %v4952
  %v5149 = vpack.c.b16 %v4961, %v4957
  %v5150 = vpack.c.b16 %v4962, %v4958
  %v5151 = vpack.c.b16 %v4963, %v4959
  %v5152 = vpack.c.b16 %v4964, %v4960
  %v5153 = vpack.c.b16 %v4969, %v4965
  %v5154 = vpack.c.b16 %v4970, %v4966
  %v5155 = vpack.c.b16 %v4971, %v4967
  %v5156 = vpack.c.b16 %v4972, %v4968
  %v5157 = vpack.c.b16 %v4977, %v4973
  %v5158 = vpack.c.b16 %v4978, %v4974
  %v5159 = vpack.c.b16 %v4979, %v4975
  %v5160 = vpack.c.b16 %v4980, %v4976
  %v5161 = vpack.c.b16 %v4985, %v4981
  %v5162 = vpack.c.b16 %v4986, %v4982
  %v5163 = vpack.c.b16 %v4987, %v4983
  %v5164 = vpack.c.b16 %v4988, %v4984
  %v5165 = vpack.c.b16 %v4993, %v4989
  %v5166 = vpack.c.b16 %v4994, %v4990
  %v5167 = vpack.c.b16 %v4995, %v4991
  %v5168 = vpack.c.b16 %v4996, %v4992
  %v5169 = vpack.c.b16 %v5001, %v4997
  %v5170 = vpack.c.b16 %v5002, %v4998
  %v5171 = vpack.c.b16 %v5003, %v4999
  %v5172 = vpack.c.b16 %v5004, %v5000
  %v5173 = vpack.c.b16 %v5009, %v5005
  %v5174 = vpack.c.b16 %v5010, %v5006
  %v5175 = vpack.c.b16 %v5011, %v5007
  %v5176 = vpack.c.b16 %v5012, %v5008
  %v5177 = vpack.c.b16 %v5017, %v5013
  %v5178 = vpack.c.b16 %v5018, %v5014
  %v5179 = vpack.c.b16 %v5019, %v5015
  %v5180 = vpack.c.b16 %v5020, %v5016
  %v5181 = vpack.c.b16 %v5025, %v5021
  %v5182 = vpack.c.b16 %v5026, %v5022
  %v5183 = vpack.c.b16 %v5027, %v5023
  %v5184 = vpack.c.b16 %v5028, %v5024
  %v5185 = vpack.c.b16 %v5033, %v5029
  %v5186 = vpack.c.b16 %v5034, %v5030
  %v5187 = vpack.c.b16 %v5035, %v5031
  %v5188 = vpack.c.b16 %v5036, %v5032
  %v5189 = vpack.c.b16 %v5041, %v5037
  %v5190 = vpack.c.b16 %v5042, %v5038
  %v5191 = vpack.c.b16 %v5043, %v5039
  %v5192 = vpack.c.b16 %v5044, %v5040
  %v5193 = vpack.c.b16 %v5049, %v5045
  %v5194 = vpack.c.b16 %v5050, %v5046
  %v5195 = vpack.c.b16 %v5051, %v5047
  %v5196 = vpack.c.b16 %v5052, %v5048
  %v5197 = vpack.c.b16 %v5057, %v5053
  %v5198 = vpack.c.b16 %v5058, %v5054
  %v5199 = vpack.c.b16 %v5059, %v5055
  %v5200 = vpack.c.b16 %v5060, %v5056
  %v5201 = vpack.c.b16 %v5065, %v5061
  %v5202 = vpack.c.b16 %v5066, %v5062
  %v5203 = vpack.c.b16 %v5067, %v5063
  %v5204 = vpack.c.b16 %v5068, %v5064
  %v5205 = vpack.c.b16 %v5073, %v5069
  %v5206 = vpack.c.b16 %v5074, %v5070
  %v5207 = vpack.c.b16 %v5075, %v5071
  %v5208 = vpack.c.b16 %v5076, %v5072
  %v5209 = vpack.c.b16 %v5081, %v5077
  %v5210 = vpack.c.b16 %v5082, %v5078
  %v5211 = vpack.c.b16 %v5083, %v5079
  %v5212 = vpack.c.b16 %v5084, %v5080
  %5341 = vmatprep.subr.bf16.mxu0 %v5086
  %5342 = vmatpush1.bf16.msra.mxu0 %v5085
  %5343 = vmatprep.subr.bf16.mxu0 %v5090
  %5344 = vmatpush1.bf16.msra.mxu0 %v5089
  %5345 = vmatprep.subr.bf16.mxu0 %v5094
  %5346 = vmatpush1.bf16.msra.mxu0 %v5093
  %5347 = vmatprep.subr.bf16.mxu0 %v5098
  %5348 = vmatpush1.bf16.msra.mxu0 %v5097
  %5349 = vmatprep.subr.bf16.mxu0 %v5102
  %5350 = vmatpush1.bf16.msra.mxu0 %v5101
  %5351 = vmatprep.subr.bf16.mxu0 %v5106
  %5352 = vmatpush1.bf16.msra.mxu0 %v5105
  %5353 = vmatprep.subr.bf16.mxu0 %v5110
  %5354 = vmatpush1.bf16.msra.mxu0 %v5109
  %5355 = vmatprep.subr.bf16.mxu0 %v5114
  %5356 = vmatpush1.bf16.msra.mxu0 %v5113
  %5357 = vmatprep.subr.bf16.mxu0 %v5118
  %5358 = vmatpush1.bf16.msra.mxu0 %v5117
  %5359 = vmatprep.subr.bf16.mxu0 %v5122
  %5360 = vmatpush1.bf16.msra.mxu0 %v5121
  %5361 = vmatprep.subr.bf16.mxu0 %v5126
  %5362 = vmatpush1.bf16.msra.mxu0 %v5125
  %5363 = vmatprep.subr.bf16.mxu0 %v5130
  %5364 = vmatpush1.bf16.msra.mxu0 %v5129
  %5365 = vmatprep.subr.bf16.mxu0 %v5134
  %5366 = vmatpush1.bf16.msra.mxu0 %v5133
  %5367 = vmatprep.subr.bf16.mxu0 %v5138
  %5368 = vmatpush1.bf16.msra.mxu0 %v5137
  %5369 = vmatprep.subr.bf16.mxu0 %v5142
  %5370 = vmatpush1.bf16.msra.mxu0 %v5141
  %5371 = vmatprep.subr.bf16.mxu0 %v5146
  %5372 = vmatpush1.bf16.msra.mxu0 %v5145
  %5373 = vmatprep.mubr.bf16.mxu0 %v4510
  %5374 = vmatmul.mubr.bf16.gmra.mrb[0].mxu0 %v4509
  %v5375 = vpop.f32.mrb[0].mxu0
  %v5376 = vadd.f32 0.0, %v5375
  %v5377 = vpop.f32.mrb[0].mxu0
  %v5378 = vadd.f32 0.0, %v5377
  %v5379 = vpop.f32.mrb[0].mxu0
  %v5380 = vadd.f32 0.0, %v5379
  %v5381 = vpop.f32.mrb[0].mxu0
  %v5382 = vadd.f32 0.0, %v5381
  %5383 = vmatprep.mubr.bf16.mxu0 %v4514
  %5384 = vmatmul.mubr.bf16.gmra.mrb[0].mxu0 %v4513
  %v5385 = vpop.f32.mrb[0].mxu0
  %v5386 = vadd.f32 0.0, %v5385
  %v5387 = vpop.f32.mrb[0].mxu0
  %v5388 = vadd.f32 0.0, %v5387
  %v5389 = vpop.f32.mrb[0].mxu0
  %v5390 = vadd.f32 0.0, %v5389
  %v5391 = vpop.f32.mrb[0].mxu0
  %v5392 = vadd.f32 0.0, %v5391
  %5393 = vmatprep.mubr.bf16.mxu0 %v4518
  %5394 = vmatmul.mubr.bf16.gmra.mrb[0].mxu0 %v4517
  %v5395 = vpop.f32.mrb[0].mxu0
  %v5396 = vadd.f32 0.0, %v5395
  %v5397 = vpop.f32.mrb[0].mxu0
  %v5398 = vadd.f32 0.0, %v5397
  %v5399 = vpop.f32.mrb[0].mxu0
  %v5400 = vadd.f32 0.0, %v5399
  %v5401 = vpop.f32.mrb[0].mxu0
  %v5402 = vadd.f32 0.0, %v5401
  %5403 = vmatprep.mubr.bf16.mxu0 %v4522
  %5404 = vmatmul.mubr.bf16.gmra.mrb[0].mxu0 %v4521
  %v5405 = vpop.f32.mrb[0].mxu0
  %v5406 = vadd.f32 0.0, %v5405
  %v5407 = vpop.f32.mrb[0].mxu0
  %v5408 = vadd.f32 0.0, %v5407
  %v5409 = vpop.f32.mrb[0].mxu0
  %v5410 = vadd.f32 0.0, %v5409
  %v5411 = vpop.f32.mrb[0].mxu0
  %v5412 = vadd.f32 0.0, %v5411
  %5413 = vmatprep.mubr.bf16.mxu0 %v4526
  %5414 = vmatmul.mubr.bf16.gmra.mrb[0].mxu0 %v4525
  %v5415 = vpop.f32.mrb[0].mxu0
  %v5416 = vadd.f32 0.0, %v5415
  %v5417 = vpop.f32.mrb[0].mxu0
  %v5418 = vadd.f32 0.0, %v5417
  %v5419 = vpop.f32.mrb[0].mxu0
  %v5420 = vadd.f32 0.0, %v5419
  %v5421 = vpop.f32.mrb[0].mxu0
  %v5422 = vadd.f32 0.0, %v5421
  %5423 = vmatprep.mubr.bf16.mxu0 %v4530
  %5424 = vmatmul.mubr.bf16.gmra.mrb[0].mxu0 %v4529
  %v5425 = vpop.f32.mrb[0].mxu0
  %v5426 = vadd.f32 0.0, %v5425
  %v5427 = vpop.f32.mrb[0].mxu0
  %v5428 = vadd.f32 0.0, %v5427
  %v5429 = vpop.f32.mrb[0].mxu0
  %v5430 = vadd.f32 0.0, %v5429
  %v5431 = vpop.f32.mrb[0].mxu0
  %v5432 = vadd.f32 0.0, %v5431
  %5433 = vmatprep.mubr.bf16.mxu0 %v4534
  %5434 = vmatmul.mubr.bf16.gmra.mrb[0].mxu0 %v4533
  %v5435 = vpop.f32.mrb[0].mxu0
  %v5436 = vadd.f32 0.0, %v5435
  %v5437 = vpop.f32.mrb[0].mxu0
  %v5438 = vadd.f32 0.0, %v5437
  %v5439 = vpop.f32.mrb[0].mxu0
  %v5440 = vadd.f32 0.0, %v5439
  %v5441 = vpop.f32.mrb[0].mxu0
  %v5442 = vadd.f32 0.0, %v5441
  %5443 = vmatprep.mubr.bf16.mxu0 %v4538
  %5444 = vmatmul.mubr.bf16.gmra.mrb[0].mxu0 %v4537
  %v5445 = vpop.f32.mrb[0].mxu0
  %v5446 = vadd.f32 0.0, %v5445
  %v5447 = vpop.f32.mrb[0].mxu0
  %v5448 = vadd.f32 0.0, %v5447
  %v5449 = vpop.f32.mrb[0].mxu0
  %v5450 = vadd.f32 0.0, %v5449
  %v5451 = vpop.f32.mrb[0].mxu0
  %v5452 = vadd.f32 0.0, %v5451
  %5453 = vmatprep.mubr.bf16.mxu0 %v4542
  %5454 = vmatmul.mubr.bf16.gmra.mrb[0].mxu0 %v4541
  %v5455 = vpop.f32.mrb[0].mxu0
  %v5456 = vadd.f32 0.0, %v5455
  %v5457 = vpop.f32.mrb[0].mxu0
  %v5458 = vadd.f32 0.0, %v5457
  %v5459 = vpop.f32.mrb[0].mxu0
  %v5460 = vadd.f32 0.0, %v5459
  %v5461 = vpop.f32.mrb[0].mxu0
  %v5462 = vadd.f32 0.0, %v5461
  %5463 = vmatprep.mubr.bf16.mxu0 %v4546
  %5464 = vmatmul.mubr.bf16.gmra.mrb[0].mxu0 %v4545
  %v5465 = vpop.f32.mrb[0].mxu0
  %v5466 = vadd.f32 0.0, %v5465
  %v5467 = vpop.f32.mrb[0].mxu0
  %v5468 = vadd.f32 0.0, %v5467
  %v5469 = vpop.f32.mrb[0].mxu0
  %v5470 = vadd.f32 0.0, %v5469
  %v5471 = vpop.f32.mrb[0].mxu0
  %v5472 = vadd.f32 0.0, %v5471
  %5473 = vmatprep.mubr.bf16.mxu0 %v4550
  %5474 = vmatmul.mubr.bf16.gmra.mrb[0].mxu0 %v4549
  %v5475 = vpop.f32.mrb[0].mxu0
  %v5476 = vadd.f32 0.0, %v5475
  %v5477 = vpop.f32.mrb[0].mxu0
  %v5478 = vadd.f32 0.0, %v5477
  %v5479 = vpop.f32.mrb[0].mxu0
  %v5480 = vadd.f32 0.0, %v5479
  %v5481 = vpop.f32.mrb[0].mxu0
  %v5482 = vadd.f32 0.0, %v5481
  %5483 = vmatprep.mubr.bf16.mxu0 %v4554
  %5484 = vmatmul.mubr.bf16.gmra.mrb[0].mxu0 %v4553
  %v5485 = vpop.f32.mrb[0].mxu0
  %v5486 = vadd.f32 0.0, %v5485
  %v5487 = vpop.f32.mrb[0].mxu0
  %v5488 = vadd.f32 0.0, %v5487
  %v5489 = vpop.f32.mrb[0].mxu0
  %v5490 = vadd.f32 0.0, %v5489
  %v5491 = vpop.f32.mrb[0].mxu0
  %v5492 = vadd.f32 0.0, %v5491
  %5493 = vmatprep.mubr.bf16.mxu0 %v4558
  %5494 = vmatmul.mubr.bf16.gmra.mrb[0].mxu0 %v4557
  %v5495 = vpop.f32.mrb[0].mxu0
  %v5496 = vadd.f32 0.0, %v5495
  %v5497 = vpop.f32.mrb[0].mxu0
  %v5498 = vadd.f32 0.0, %v5497
  %v5499 = vpop.f32.mrb[0].mxu0
  %v5500 = vadd.f32 0.0, %v5499
  %v5501 = vpop.f32.mrb[0].mxu0
  %v5502 = vadd.f32 0.0, %v5501
  %5503 = vmatprep.mubr.bf16.mxu0 %v4562
  %5504 = vmatmul.mubr.bf16.gmra.mrb[0].mxu0 %v4561
  %v5505 = vpop.f32.mrb[0].mxu0
  %v5506 = vadd.f32 0.0, %v5505
  %v5507 = vpop.f32.mrb[0].mxu0
  %v5508 = vadd.f32 0.0, %v5507
  %v5509 = vpop.f32.mrb[0].mxu0
  %v5510 = vadd.f32 0.0, %v5509
  %v5511 = vpop.f32.mrb[0].mxu0
  %v5512 = vadd.f32 0.0, %v5511
  %5513 = vmatprep.mubr.bf16.mxu0 %v4566
  %5514 = vmatmul.mubr.bf16.gmra.mrb[0].mxu0 %v4565
  %v5515 = vpop.f32.mrb[0].mxu0
  %v5516 = vadd.f32 0.0, %v5515
  %v5517 = vpop.f32.mrb[0].mxu0
  %v5518 = vadd.f32 0.0, %v5517
  %v5519 = vpop.f32.mrb[0].mxu0
  %v5520 = vadd.f32 0.0, %v5519
  %v5521 = vpop.f32.mrb[0].mxu0
  %v5522 = vadd.f32 0.0, %v5521
  %5523 = vmatprep.mubr.bf16.mxu0 %v4570
  %5524 = vmatmul.mubr.bf16.gmra.mrb[0].mxu0 %v4569
  %v5525 = vpop.f32.mrb[0].mxu0
  %v5526 = vadd.f32 0.0, %v5525
  %v5527 = vpop.f32.mrb[0].mxu0
  %v5528 = vadd.f32 0.0, %v5527
  %v5529 = vpop.f32.mrb[0].mxu0
  %v5530 = vadd.f32 0.0, %v5529
  %v5531 = vpop.f32.mrb[0].mxu0
  %v5532 = vadd.f32 0.0, %v5531
  %5533 = vdwg.mxu0
  %5534 = vmatprep.subr.bf16.mxu0 %v5150
  %5535 = vmatpush1.bf16.msra.mxu0 %v5149
  %5536 = vmatprep.subr.bf16.mxu0 %v5154
  %5537 = vmatpush1.bf16.msra.mxu0 %v5153
  %5538 = vmatprep.subr.bf16.mxu0 %v5158
  %5539 = vmatpush1.bf16.msra.mxu0 %v5157
  %5540 = vmatprep.subr.bf16.mxu0 %v5162
  %5541 = vmatpush1.bf16.msra.mxu0 %v5161
  %5542 = vmatprep.subr.bf16.mxu0 %v5166
  %5543 = vmatpush1.bf16.msra.mxu0 %v5165
  %5544 = vmatprep.subr.bf16.mxu0 %v5170
  %5545 = vmatpush1.bf16.msra.mxu0 %v5169
  %5546 = vmatprep.subr.bf16.mxu0 %v5174
  %5547 = vmatpush1.bf16.msra.mxu0 %v5173
  %5548 = vmatprep.subr.bf16.mxu0 %v5178
  %5549 = vmatpush1.bf16.msra.mxu0 %v5177
  %5550 = vmatprep.subr.bf16.mxu0 %v5182
  %5551 = vmatpush1.bf16.msra.mxu0 %v5181
  %5552 = vmatprep.subr.bf16.mxu0 %v5186
  %5553 = vmatpush1.bf16.msra.mxu0 %v5185
  %5554 = vmatprep.subr.bf16.mxu0 %v5190
  %5555 = vmatpush1.bf16.msra.mxu0 %v5189
  %5556 = vmatprep.subr.bf16.mxu0 %v5194
  %5557 = vmatpush1.bf16.msra.mxu0 %v5193
  %5558 = vmatprep.subr.bf16.mxu0 %v5198
  %5559 = vmatpush1.bf16.msra.mxu0 %v5197
  %5560 = vmatprep.subr.bf16.mxu0 %v5202
  %5561 = vmatpush1.bf16.msra.mxu0 %v5201
  %5562 = vmatprep.subr.bf16.mxu0 %v5206
  %5563 = vmatpush1.bf16.msra.mxu0 %v5205
  %5564 = vmatprep.subr.bf16.mxu0 %v5210
  %5565 = vmatpush1.bf16.msra.mxu0 %v5209
  %5566 = vmatprep.mubr.bf16.mxu0 %v4512
  %5567 = vmatmul.mubr.bf16.gmra.mrb[0].mxu0 %v4511
  %v5568 = vpop.f32.mrb[0].mxu0
  %v5569 = vadd.f32 %v5376, %v5568
  %v5570 = vpop.f32.mrb[0].mxu0
  %v5571 = vadd.f32 %v5378, %v5570
  %v5572 = vpop.f32.mrb[0].mxu0
  %v5573 = vadd.f32 %v5380, %v5572
  %v5574 = vpop.f32.mrb[0].mxu0
  %v5575 = vadd.f32 %v5382, %v5574
  %5576 = vmatprep.mubr.bf16.mxu0 %v4516
  %5577 = vmatmul.mubr.bf16.gmra.mrb[0].mxu0 %v4515
  %v5578 = vpop.f32.mrb[0].mxu0
  %v5579 = vadd.f32 %v5386, %v5578
  %v5580 = vpop.f32.mrb[0].mxu0
  %v5581 = vadd.f32 %v5388, %v5580
  %v5582 = vpop.f32.mrb[0].mxu0
  %v5583 = vadd.f32 %v5390, %v5582
  %v5584 = vpop.f32.mrb[0].mxu0
  %v5585 = vadd.f32 %v5392, %v5584
  %5586 = vmatprep.mubr.bf16.mxu0 %v4520
  %5587 = vmatmul.mubr.bf16.gmra.mrb[0].mxu0 %v4519
  %v5588 = vpop.f32.mrb[0].mxu0
  %v5589 = vadd.f32 %v5396, %v5588
  %v5590 = vpop.f32.mrb[0].mxu0
  %v5591 = vadd.f32 %v5398, %v5590
  %v5592 = vpop.f32.mrb[0].mxu0
  %v5593 = vadd.f32 %v5400, %v5592
  %v5594 = vpop.f32.mrb[0].mxu0
  %v5595 = vadd.f32 %v5402, %v5594
  %5596 = vmatprep.mubr.bf16.mxu0 %v4524
  %5597 = vmatmul.mubr.bf16.gmra.mrb[0].mxu0 %v4523
  %v5598 = vpop.f32.mrb[0].mxu0
  %v5599 = vadd.f32 %v5406, %v5598
  %v5600 = vpop.f32.mrb[0].mxu0
  %v5601 = vadd.f32 %v5408, %v5600
  %v5602 = vpop.f32.mrb[0].mxu0
  %v5603 = vadd.f32 %v5410, %v5602
  %v5604 = vpop.f32.mrb[0].mxu0
  %v5605 = vadd.f32 %v5412, %v5604
  %5606 = vmatprep.mubr.bf16.mxu0 %v4528
  %5607 = vmatmul.mubr.bf16.gmra.mrb[0].mxu0 %v4527
  %v5608 = vpop.f32.mrb[0].mxu0
  %v5609 = vadd.f32 %v5416, %v5608
  %v5610 = vpop.f32.mrb[0].mxu0
  %v5611 = vadd.f32 %v5418, %v5610
  %v5612 = vpop.f32.mrb[0].mxu0
  %v5613 = vadd.f32 %v5420, %v5612
  %v5614 = vpop.f32.mrb[0].mxu0
  %v5615 = vadd.f32 %v5422, %v5614
  %5616 = vmatprep.mubr.bf16.mxu0 %v4532
  %5617 = vmatmul.mubr.bf16.gmra.mrb[0].mxu0 %v4531
  %v5618 = vpop.f32.mrb[0].mxu0
  %v5619 = vadd.f32 %v5426, %v5618
  %v5620 = vpop.f32.mrb[0].mxu0
  %v5621 = vadd.f32 %v5428, %v5620
  %v5622 = vpop.f32.mrb[0].mxu0
  %v5623 = vadd.f32 %v5430, %v5622
  %v5624 = vpop.f32.mrb[0].mxu0
  %v5625 = vadd.f32 %v5432, %v5624
  %5626 = vmatprep.mubr.bf16.mxu0 %v4536
  %5627 = vmatmul.mubr.bf16.gmra.mrb[0].mxu0 %v4535
  %v5628 = vpop.f32.mrb[0].mxu0
  %v5629 = vadd.f32 %v5436, %v5628
  %v5630 = vpop.f32.mrb[0].mxu0
  %v5631 = vadd.f32 %v5438, %v5630
  %v5632 = vpop.f32.mrb[0].mxu0
  %v5633 = vadd.f32 %v5440, %v5632
  %v5634 = vpop.f32.mrb[0].mxu0
  %v5635 = vadd.f32 %v5442, %v5634
  %5636 = vmatprep.mubr.bf16.mxu0 %v4540
  %5637 = vmatmul.mubr.bf16.gmra.mrb[0].mxu0 %v4539
  %v5638 = vpop.f32.mrb[0].mxu0
  %v5639 = vadd.f32 %v5446, %v5638
  %v5640 = vpop.f32.mrb[0].mxu0
  %v5641 = vadd.f32 %v5448, %v5640
  %v5642 = vpop.f32.mrb[0].mxu0
  %v5643 = vadd.f32 %v5450, %v5642
  %v5644 = vpop.f32.mrb[0].mxu0
  %v5645 = vadd.f32 %v5452, %v5644
  %5646 = vmatprep.mubr.bf16.mxu0 %v4544
  %5647 = vmatmul.mubr.bf16.gmra.mrb[0].mxu0 %v4543
  %v5648 = vpop.f32.mrb[0].mxu0
  %v5649 = vadd.f32 %v5456, %v5648
  %v5650 = vpop.f32.mrb[0].mxu0
  %v5651 = vadd.f32 %v5458, %v5650
  %v5652 = vpop.f32.mrb[0].mxu0
  %v5653 = vadd.f32 %v5460, %v5652
  %v5654 = vpop.f32.mrb[0].mxu0
  %v5655 = vadd.f32 %v5462, %v5654
  %5656 = vmatprep.mubr.bf16.mxu0 %v4548
  %5657 = vmatmul.mubr.bf16.gmra.mrb[0].mxu0 %v4547
  %v5658 = vpop.f32.mrb[0].mxu0
  %v5659 = vadd.f32 %v5466, %v5658
  %v5660 = vpop.f32.mrb[0].mxu0
  %v5661 = vadd.f32 %v5468, %v5660
  %v5662 = vpop.f32.mrb[0].mxu0
  %v5663 = vadd.f32 %v5470, %v5662
  %v5664 = vpop.f32.mrb[0].mxu0
  %v5665 = vadd.f32 %v5472, %v5664
  %5666 = vmatprep.mubr.bf16.mxu0 %v4552
  %5667 = vmatmul.mubr.bf16.gmra.mrb[0].mxu0 %v4551
  %v5668 = vpop.f32.mrb[0].mxu0
  %v5669 = vadd.f32 %v5476, %v5668
  %v5670 = vpop.f32.mrb[0].mxu0
  %v5671 = vadd.f32 %v5478, %v5670
  %v5672 = vpop.f32.mrb[0].mxu0
  %v5673 = vadd.f32 %v5480, %v5672
  %v5674 = vpop.f32.mrb[0].mxu0
  %v5675 = vadd.f32 %v5482, %v5674
  %5676 = vmatprep.mubr.bf16.mxu0 %v4556
  %5677 = vmatmul.mubr.bf16.gmra.mrb[0].mxu0 %v4555
  %v5678 = vpop.f32.mrb[0].mxu0
  %v5679 = vadd.f32 %v5486, %v5678
  %v5680 = vpop.f32.mrb[0].mxu0
  %v5681 = vadd.f32 %v5488, %v5680
  %v5682 = vpop.f32.mrb[0].mxu0
  %v5683 = vadd.f32 %v5490, %v5682
  %v5684 = vpop.f32.mrb[0].mxu0
  %v5685 = vadd.f32 %v5492, %v5684
  %5686 = vmatprep.mubr.bf16.mxu0 %v4560
  %5687 = vmatmul.mubr.bf16.gmra.mrb[0].mxu0 %v4559
  %v5688 = vpop.f32.mrb[0].mxu0
  %v5689 = vadd.f32 %v5496, %v5688
  %v5690 = vpop.f32.mrb[0].mxu0
  %v5691 = vadd.f32 %v5498, %v5690
  %v5692 = vpop.f32.mrb[0].mxu0
  %v5693 = vadd.f32 %v5500, %v5692
  %v5694 = vpop.f32.mrb[0].mxu0
  %v5695 = vadd.f32 %v5502, %v5694
  %5696 = vmatprep.mubr.bf16.mxu0 %v4564
  %5697 = vmatmul.mubr.bf16.gmra.mrb[0].mxu0 %v4563
  %v5698 = vpop.f32.mrb[0].mxu0
  %v5699 = vadd.f32 %v5506, %v5698
  %v5700 = vpop.f32.mrb[0].mxu0
  %v5701 = vadd.f32 %v5508, %v5700
  %v5702 = vpop.f32.mrb[0].mxu0
  %v5703 = vadd.f32 %v5510, %v5702
  %v5704 = vpop.f32.mrb[0].mxu0
  %v5705 = vadd.f32 %v5512, %v5704
  %5706 = vmatprep.mubr.bf16.mxu0 %v4568
  %5707 = vmatmul.mubr.bf16.gmra.mrb[0].mxu0 %v4567
  %v5708 = vpop.f32.mrb[0].mxu0
  %v5709 = vadd.f32 %v5516, %v5708
  %v5710 = vpop.f32.mrb[0].mxu0
  %v5711 = vadd.f32 %v5518, %v5710
  %v5712 = vpop.f32.mrb[0].mxu0
  %v5713 = vadd.f32 %v5520, %v5712
  %v5714 = vpop.f32.mrb[0].mxu0
  %v5715 = vadd.f32 %v5522, %v5714
  %5716 = vmatprep.mubr.bf16.mxu0 %v4572
  %5717 = vmatmul.mubr.bf16.gmra.mrb[0].mxu0 %v4571
  %v5718 = vpop.f32.mrb[0].mxu0
  %v5719 = vadd.f32 %v5526, %v5718
  %v5720 = vpop.f32.mrb[0].mxu0
  %v5721 = vadd.f32 %v5528, %v5720
  %v5722 = vpop.f32.mrb[0].mxu0
  %v5723 = vadd.f32 %v5530, %v5722
  %v5724 = vpop.f32.mrb[0].mxu0
  %v5725 = vadd.f32 %v5532, %v5724
  %5726 = vdwg.mxu0
  %5727 = vmatprep.subr.bf16.mxu0 %v5088
  %5728 = vmatpush1.bf16.msra.mxu0 %v5087
  %5729 = vmatprep.subr.bf16.mxu0 %v5092
  %5730 = vmatpush1.bf16.msra.mxu0 %v5091
  %5731 = vmatprep.subr.bf16.mxu0 %v5096
  %5732 = vmatpush1.bf16.msra.mxu0 %v5095
  %5733 = vmatprep.subr.bf16.mxu0 %v5100
  %5734 = vmatpush1.bf16.msra.mxu0 %v5099
  %5735 = vmatprep.subr.bf16.mxu0 %v5104
  %5736 = vmatpush1.bf16.msra.mxu0 %v5103
  %5737 = vmatprep.subr.bf16.mxu0 %v5108
  %5738 = vmatpush1.bf16.msra.mxu0 %v5107
  %5739 = vmatprep.subr.bf16.mxu0 %v5112
  %5740 = vmatpush1.bf16.msra.mxu0 %v5111
  %5741 = vmatprep.subr.bf16.mxu0 %v5116
  %5742 = vmatpush1.bf16.msra.mxu0 %v5115
  %5743 = vmatprep.subr.bf16.mxu0 %v5120
  %5744 = vmatpush1.bf16.msra.mxu0 %v5119
  %5745 = vmatprep.subr.bf16.mxu0 %v5124
  %5746 = vmatpush1.bf16.msra.mxu0 %v5123
  %5747 = vmatprep.subr.bf16.mxu0 %v5128
  %5748 = vmatpush1.bf16.msra.mxu0 %v5127
  %5749 = vmatprep.subr.bf16.mxu0 %v5132
  %5750 = vmatpush1.bf16.msra.mxu0 %v5131
  %5751 = vmatprep.subr.bf16.mxu0 %v5136
  %5752 = vmatpush1.bf16.msra.mxu0 %v5135
  %5753 = vmatprep.subr.bf16.mxu0 %v5140
  %5754 = vmatpush1.bf16.msra.mxu0 %v5139
  %5755 = vmatprep.subr.bf16.mxu0 %v5144
  %5756 = vmatpush1.bf16.msra.mxu0 %v5143
  %5757 = vmatprep.subr.bf16.mxu0 %v5148
  %5758 = vmatpush1.bf16.msra.mxu0 %v5147
  %5759 = vmatprep.mubr.bf16.mxu0 %v4510
  %5760 = vmatmul.mubr.bf16.gmra.mrb[0].mxu0 %v4509
  %v5761 = vpop.f32.mrb[0].mxu0
  %v5762 = vadd.f32 0.0, %v5761
  %v5763 = vpop.f32.mrb[0].mxu0
  %v5764 = vadd.f32 0.0, %v5763
  %v5765 = vpop.f32.mrb[0].mxu0
  %v5766 = vadd.f32 0.0, %v5765
  %v5767 = vpop.f32.mrb[0].mxu0
  %v5768 = vadd.f32 0.0, %v5767
  %5769 = vmatprep.mubr.bf16.mxu0 %v4514
  %5770 = vmatmul.mubr.bf16.gmra.mrb[0].mxu0 %v4513
  %v5771 = vpop.f32.mrb[0].mxu0
  %v5772 = vadd.f32 0.0, %v5771
  %v5773 = vpop.f32.mrb[0].mxu0
  %v5774 = vadd.f32 0.0, %v5773
  %v5775 = vpop.f32.mrb[0].mxu0
  %v5776 = vadd.f32 0.0, %v5775
  %v5777 = vpop.f32.mrb[0].mxu0
  %v5778 = vadd.f32 0.0, %v5777
  %5779 = vmatprep.mubr.bf16.mxu0 %v4518
  %5780 = vmatmul.mubr.bf16.gmra.mrb[0].mxu0 %v4517
  %v5781 = vpop.f32.mrb[0].mxu0
  %v5782 = vadd.f32 0.0, %v5781
  %v5783 = vpop.f32.mrb[0].mxu0
  %v5784 = vadd.f32 0.0, %v5783
  %v5785 = vpop.f32.mrb[0].mxu0
  %v5786 = vadd.f32 0.0, %v5785
  %v5787 = vpop.f32.mrb[0].mxu0
  %v5788 = vadd.f32 0.0, %v5787
  %5789 = vmatprep.mubr.bf16.mxu0 %v4522
  %5790 = vmatmul.mubr.bf16.gmra.mrb[0].mxu0 %v4521
  %v5791 = vpop.f32.mrb[0].mxu0
  %v5792 = vadd.f32 0.0, %v5791
  %v5793 = vpop.f32.mrb[0].mxu0
  %v5794 = vadd.f32 0.0, %v5793
  %v5795 = vpop.f32.mrb[0].mxu0
  %v5796 = vadd.f32 0.0, %v5795
  %v5797 = vpop.f32.mrb[0].mxu0
  %v5798 = vadd.f32 0.0, %v5797
  %5799 = vmatprep.mubr.bf16.mxu0 %v4526
  %5800 = vmatmul.mubr.bf16.gmra.mrb[0].mxu0 %v4525
  %v5801 = vpop.f32.mrb[0].mxu0
  %v5802 = vadd.f32 0.0, %v5801
  %v5803 = vpop.f32.mrb[0].mxu0
  %v5804 = vadd.f32 0.0, %v5803
  %v5805 = vpop.f32.mrb[0].mxu0
  %v5806 = vadd.f32 0.0, %v5805
  %v5807 = vpop.f32.mrb[0].mxu0
  %v5808 = vadd.f32 0.0, %v5807
  %5809 = vmatprep.mubr.bf16.mxu0 %v4530
  %5810 = vmatmul.mubr.bf16.gmra.mrb[0].mxu0 %v4529
  %v5811 = vpop.f32.mrb[0].mxu0
  %v5812 = vadd.f32 0.0, %v5811
  %v5813 = vpop.f32.mrb[0].mxu0
  %v5814 = vadd.f32 0.0, %v5813
  %v5815 = vpop.f32.mrb[0].mxu0
  %v5816 = vadd.f32 0.0, %v5815
  %v5817 = vpop.f32.mrb[0].mxu0
  %v5818 = vadd.f32 0.0, %v5817
  %5819 = vmatprep.mubr.bf16.mxu0 %v4534
  %5820 = vmatmul.mubr.bf16.gmra.mrb[0].mxu0 %v4533
  %v5821 = vpop.f32.mrb[0].mxu0
  %v5822 = vadd.f32 0.0, %v5821
  %v5823 = vpop.f32.mrb[0].mxu0
  %v5824 = vadd.f32 0.0, %v5823
  %v5825 = vpop.f32.mrb[0].mxu0
  %v5826 = vadd.f32 0.0, %v5825
  %v5827 = vpop.f32.mrb[0].mxu0
  %v5828 = vadd.f32 0.0, %v5827
  %5829 = vmatprep.mubr.bf16.mxu0 %v4538
  %5830 = vmatmul.mubr.bf16.gmra.mrb[0].mxu0 %v4537
  %v5831 = vpop.f32.mrb[0].mxu0
  %v5832 = vadd.f32 0.0, %v5831
  %v5833 = vpop.f32.mrb[0].mxu0
  %v5834 = vadd.f32 0.0, %v5833
  %v5835 = vpop.f32.mrb[0].mxu0
  %v5836 = vadd.f32 0.0, %v5835
  %v5837 = vpop.f32.mrb[0].mxu0
  %v5838 = vadd.f32 0.0, %v5837
  %5839 = vmatprep.mubr.bf16.mxu0 %v4542
  %5840 = vmatmul.mubr.bf16.gmra.mrb[0].mxu0 %v4541
  %v5841 = vpop.f32.mrb[0].mxu0
  %v5842 = vadd.f32 0.0, %v5841
  %v5843 = vpop.f32.mrb[0].mxu0
  %v5844 = vadd.f32 0.0, %v5843
  %v5845 = vpop.f32.mrb[0].mxu0
  %v5846 = vadd.f32 0.0, %v5845
  %v5847 = vpop.f32.mrb[0].mxu0
  %v5848 = vadd.f32 0.0, %v5847
  %5849 = vmatprep.mubr.bf16.mxu0 %v4546
  %5850 = vmatmul.mubr.bf16.gmra.mrb[0].mxu0 %v4545
  %v5851 = vpop.f32.mrb[0].mxu0
  %v5852 = vadd.f32 0.0, %v5851
  %v5853 = vpop.f32.mrb[0].mxu0
  %v5854 = vadd.f32 0.0, %v5853
  %v5855 = vpop.f32.mrb[0].mxu0
  %v5856 = vadd.f32 0.0, %v5855
  %v5857 = vpop.f32.mrb[0].mxu0
  %v5858 = vadd.f32 0.0, %v5857
  %5859 = vmatprep.mubr.bf16.mxu0 %v4550
  %5860 = vmatmul.mubr.bf16.gmra.mrb[0].mxu0 %v4549
  %v5861 = vpop.f32.mrb[0].mxu0
  %v5862 = vadd.f32 0.0, %v5861
  %v5863 = vpop.f32.mrb[0].mxu0
  %v5864 = vadd.f32 0.0, %v5863
  %v5865 = vpop.f32.mrb[0].mxu0
  %v5866 = vadd.f32 0.0, %v5865
  %v5867 = vpop.f32.mrb[0].mxu0
  %v5868 = vadd.f32 0.0, %v5867
  %5869 = vmatprep.mubr.bf16.mxu0 %v4554
  %5870 = vmatmul.mubr.bf16.gmra.mrb[0].mxu0 %v4553
  %v5871 = vpop.f32.mrb[0].mxu0
  %v5872 = vadd.f32 0.0, %v5871
  %v5873 = vpop.f32.mrb[0].mxu0
  %v5874 = vadd.f32 0.0, %v5873
  %v5875 = vpop.f32.mrb[0].mxu0
  %v5876 = vadd.f32 0.0, %v5875
  %v5877 = vpop.f32.mrb[0].mxu0
  %v5878 = vadd.f32 0.0, %v5877
  %5879 = vmatprep.mubr.bf16.mxu0 %v4558
  %5880 = vmatmul.mubr.bf16.gmra.mrb[0].mxu0 %v4557
  %v5881 = vpop.f32.mrb[0].mxu0
  %v5882 = vadd.f32 0.0, %v5881
  %v5883 = vpop.f32.mrb[0].mxu0
  %v5884 = vadd.f32 0.0, %v5883
  %v5885 = vpop.f32.mrb[0].mxu0
  %v5886 = vadd.f32 0.0, %v5885
  %v5887 = vpop.f32.mrb[0].mxu0
  %v5888 = vadd.f32 0.0, %v5887
  %5889 = vmatprep.mubr.bf16.mxu0 %v4562
  %5890 = vmatmul.mubr.bf16.gmra.mrb[0].mxu0 %v4561
  %v5891 = vpop.f32.mrb[0].mxu0
  %v5892 = vadd.f32 0.0, %v5891
  %v5893 = vpop.f32.mrb[0].mxu0
  %v5894 = vadd.f32 0.0, %v5893
  %v5895 = vpop.f32.mrb[0].mxu0
  %v5896 = vadd.f32 0.0, %v5895
  %v5897 = vpop.f32.mrb[0].mxu0
  %v5898 = vadd.f32 0.0, %v5897
  %5899 = vmatprep.mubr.bf16.mxu0 %v4566
  %5900 = vmatmul.mubr.bf16.gmra.mrb[0].mxu0 %v4565
  %v5901 = vpop.f32.mrb[0].mxu0
  %v5902 = vadd.f32 0.0, %v5901
  %v5903 = vpop.f32.mrb[0].mxu0
  %v5904 = vadd.f32 0.0, %v5903
  %v5905 = vpop.f32.mrb[0].mxu0
  %v5906 = vadd.f32 0.0, %v5905
  %v5907 = vpop.f32.mrb[0].mxu0
  %v5908 = vadd.f32 0.0, %v5907
  %5909 = vmatprep.mubr.bf16.mxu0 %v4570
  %5910 = vmatmul.mubr.bf16.gmra.mrb[0].mxu0 %v4569
  %v5911 = vpop.f32.mrb[0].mxu0
  %v5912 = vadd.f32 0.0, %v5911
  %v5913 = vpop.f32.mrb[0].mxu0
  %v5914 = vadd.f32 0.0, %v5913
  %v5915 = vpop.f32.mrb[0].mxu0
  %v5916 = vadd.f32 0.0, %v5915
  %v5917 = vpop.f32.mrb[0].mxu0
  %v5918 = vadd.f32 0.0, %v5917
  %5919 = vdwg.mxu0
  %5920 = vmatprep.subr.bf16.mxu0 %v5152
  %5921 = vmatpush1.bf16.msra.mxu0 %v5151
  %5922 = vmatprep.subr.bf16.mxu0 %v5156
  %5923 = vmatpush1.bf16.msra.mxu0 %v5155
  %5924 = vmatprep.subr.bf16.mxu0 %v5160
  %5925 = vmatpush1.bf16.msra.mxu0 %v5159
  %5926 = vmatprep.subr.bf16.mxu0 %v5164
  %5927 = vmatpush1.bf16.msra.mxu0 %v5163
  %5928 = vmatprep.subr.bf16.mxu0 %v5168
  %5929 = vmatpush1.bf16.msra.mxu0 %v5167
  %5930 = vmatprep.subr.bf16.mxu0 %v5172
  %5931 = vmatpush1.bf16.msra.mxu0 %v5171
  %5932 = vmatprep.subr.bf16.mxu0 %v5176
  %5933 = vmatpush1.bf16.msra.mxu0 %v5175
  %5934 = vmatprep.subr.bf16.mxu0 %v5180
  %5935 = vmatpush1.bf16.msra.mxu0 %v5179
  %5936 = vmatprep.subr.bf16.mxu0 %v5184
  %5937 = vmatpush1.bf16.msra.mxu0 %v5183
  %5938 = vmatprep.subr.bf16.mxu0 %v5188
  %5939 = vmatpush1.bf16.msra.mxu0 %v5187
  %5940 = vmatprep.subr.bf16.mxu0 %v5192
  %5941 = vmatpush1.bf16.msra.mxu0 %v5191
  %5942 = vmatprep.subr.bf16.mxu0 %v5196
  %5943 = vmatpush1.bf16.msra.mxu0 %v5195
  %5944 = vmatprep.subr.bf16.mxu0 %v5200
  %5945 = vmatpush1.bf16.msra.mxu0 %v5199
  %5946 = vmatprep.subr.bf16.mxu0 %v5204
  %5947 = vmatpush1.bf16.msra.mxu0 %v5203
  %5948 = vmatprep.subr.bf16.mxu0 %v5208
  %5949 = vmatpush1.bf16.msra.mxu0 %v5207
  %5950 = vmatprep.subr.bf16.mxu0 %v5212
  %5951 = vmatpush1.bf16.msra.mxu0 %v5211
  %5952 = vmatprep.mubr.bf16.mxu0 %v4512
  %5953 = vmatmul.mubr.bf16.gmra.mrb[0].mxu0 %v4511
  %v5954 = vpop.f32.mrb[0].mxu0
  %v5955 = vadd.f32 %v5762, %v5954
  %v5956 = vpop.f32.mrb[0].mxu0
  %v5957 = vadd.f32 %v5764, %v5956
  %v5958 = vpop.f32.mrb[0].mxu0
  %v5959 = vadd.f32 %v5766, %v5958
  %v5960 = vpop.f32.mrb[0].mxu0
  %v5961 = vadd.f32 %v5768, %v5960
  %5962 = vmatprep.mubr.bf16.mxu0 %v4516
  %5963 = vmatmul.mubr.bf16.gmra.mrb[0].mxu0 %v4515
  %v5964 = vpop.f32.mrb[0].mxu0
  %v5965 = vadd.f32 %v5772, %v5964
  %v5966 = vpop.f32.mrb[0].mxu0
  %v5967 = vadd.f32 %v5774, %v5966
  %v5968 = vpop.f32.mrb[0].mxu0
  %v5969 = vadd.f32 %v5776, %v5968
  %v5970 = vpop.f32.mrb[0].mxu0
  %v5971 = vadd.f32 %v5778, %v5970
  %5972 = vmatprep.mubr.bf16.mxu0 %v4520
  %5973 = vmatmul.mubr.bf16.gmra.mrb[0].mxu0 %v4519
  %v5974 = vpop.f32.mrb[0].mxu0
  %v5975 = vadd.f32 %v5782, %v5974
  %v5976 = vpop.f32.mrb[0].mxu0
  %v5977 = vadd.f32 %v5784, %v5976
  %v5978 = vpop.f32.mrb[0].mxu0
  %v5979 = vadd.f32 %v5786, %v5978
  %v5980 = vpop.f32.mrb[0].mxu0
  %v5981 = vadd.f32 %v5788, %v5980
  %5982 = vmatprep.mubr.bf16.mxu0 %v4524
  %5983 = vmatmul.mubr.bf16.gmra.mrb[0].mxu0 %v4523
  %v5984 = vpop.f32.mrb[0].mxu0
  %v5985 = vadd.f32 %v5792, %v5984
  %v5986 = vpop.f32.mrb[0].mxu0
  %v5987 = vadd.f32 %v5794, %v5986
  %v5988 = vpop.f32.mrb[0].mxu0
  %v5989 = vadd.f32 %v5796, %v5988
  %v5990 = vpop.f32.mrb[0].mxu0
  %v5991 = vadd.f32 %v5798, %v5990
  %5992 = vmatprep.mubr.bf16.mxu0 %v4528
  %5993 = vmatmul.mubr.bf16.gmra.mrb[0].mxu0 %v4527
  %v5994 = vpop.f32.mrb[0].mxu0
  %v5995 = vadd.f32 %v5802, %v5994
  %v5996 = vpop.f32.mrb[0].mxu0
  %v5997 = vadd.f32 %v5804, %v5996
  %v5998 = vpop.f32.mrb[0].mxu0
  %v5999 = vadd.f32 %v5806, %v5998
  %v6000 = vpop.f32.mrb[0].mxu0
  %v6001 = vadd.f32 %v5808, %v6000
  %6002 = vmatprep.mubr.bf16.mxu0 %v4532
  %6003 = vmatmul.mubr.bf16.gmra.mrb[0].mxu0 %v4531
  %v6004 = vpop.f32.mrb[0].mxu0
  %v6005 = vadd.f32 %v5812, %v6004
  %v6006 = vpop.f32.mrb[0].mxu0
  %v6007 = vadd.f32 %v5814, %v6006
  %v6008 = vpop.f32.mrb[0].mxu0
  %v6009 = vadd.f32 %v5816, %v6008
  %v6010 = vpop.f32.mrb[0].mxu0
  %v6011 = vadd.f32 %v5818, %v6010
  %6012 = vmatprep.mubr.bf16.mxu0 %v4536
  %6013 = vmatmul.mubr.bf16.gmra.mrb[0].mxu0 %v4535
  %v6014 = vpop.f32.mrb[0].mxu0
  %v6015 = vadd.f32 %v5822, %v6014
  %v6016 = vpop.f32.mrb[0].mxu0
  %v6017 = vadd.f32 %v5824, %v6016
  %v6018 = vpop.f32.mrb[0].mxu0
  %v6019 = vadd.f32 %v5826, %v6018
  %v6020 = vpop.f32.mrb[0].mxu0
  %v6021 = vadd.f32 %v5828, %v6020
  %6022 = vmatprep.mubr.bf16.mxu0 %v4540
  %6023 = vmatmul.mubr.bf16.gmra.mrb[0].mxu0 %v4539
  %v6024 = vpop.f32.mrb[0].mxu0
  %v6025 = vadd.f32 %v5832, %v6024
  %v6026 = vpop.f32.mrb[0].mxu0
  %v6027 = vadd.f32 %v5834, %v6026
  %v6028 = vpop.f32.mrb[0].mxu0
  %v6029 = vadd.f32 %v5836, %v6028
  %v6030 = vpop.f32.mrb[0].mxu0
  %v6031 = vadd.f32 %v5838, %v6030
  %6032 = vmatprep.mubr.bf16.mxu0 %v4544
  %6033 = vmatmul.mubr.bf16.gmra.mrb[0].mxu0 %v4543
  %v6034 = vpop.f32.mrb[0].mxu0
  %v6035 = vadd.f32 %v5842, %v6034
  %v6036 = vpop.f32.mrb[0].mxu0
  %v6037 = vadd.f32 %v5844, %v6036
  %v6038 = vpop.f32.mrb[0].mxu0
  %v6039 = vadd.f32 %v5846, %v6038
  %v6040 = vpop.f32.mrb[0].mxu0
  %v6041 = vadd.f32 %v5848, %v6040
  %6042 = vmatprep.mubr.bf16.mxu0 %v4548
  %6043 = vmatmul.mubr.bf16.gmra.mrb[0].mxu0 %v4547
  %v6044 = vpop.f32.mrb[0].mxu0
  %v6045 = vadd.f32 %v5852, %v6044
  %v6046 = vpop.f32.mrb[0].mxu0
  %v6047 = vadd.f32 %v5854, %v6046
  %v6048 = vpop.f32.mrb[0].mxu0
  %v6049 = vadd.f32 %v5856, %v6048
  %v6050 = vpop.f32.mrb[0].mxu0
  %v6051 = vadd.f32 %v5858, %v6050
  %6052 = vmatprep.mubr.bf16.mxu0 %v4552
  %6053 = vmatmul.mubr.bf16.gmra.mrb[0].mxu0 %v4551
  %v6054 = vpop.f32.mrb[0].mxu0
  %v6055 = vadd.f32 %v5862, %v6054
  %v6056 = vpop.f32.mrb[0].mxu0
  %v6057 = vadd.f32 %v5864, %v6056
  %v6058 = vpop.f32.mrb[0].mxu0
  %v6059 = vadd.f32 %v5866, %v6058
  %v6060 = vpop.f32.mrb[0].mxu0
  %v6061 = vadd.f32 %v5868, %v6060
  %6062 = vmatprep.mubr.bf16.mxu0 %v4556
  %6063 = vmatmul.mubr.bf16.gmra.mrb[0].mxu0 %v4555
  %v6064 = vpop.f32.mrb[0].mxu0
  %v6065 = vadd.f32 %v5872, %v6064
  %v6066 = vpop.f32.mrb[0].mxu0
  %v6067 = vadd.f32 %v5874, %v6066
  %v6068 = vpop.f32.mrb[0].mxu0
  %v6069 = vadd.f32 %v5876, %v6068
  %v6070 = vpop.f32.mrb[0].mxu0
  %v6071 = vadd.f32 %v5878, %v6070
  %6072 = vmatprep.mubr.bf16.mxu0 %v4560
  %6073 = vmatmul.mubr.bf16.gmra.mrb[0].mxu0 %v4559
  %v6074 = vpop.f32.mrb[0].mxu0
  %v6075 = vadd.f32 %v5882, %v6074
  %v6076 = vpop.f32.mrb[0].mxu0
  %v6077 = vadd.f32 %v5884, %v6076
  %v6078 = vpop.f32.mrb[0].mxu0
  %v6079 = vadd.f32 %v5886, %v6078
  %v6080 = vpop.f32.mrb[0].mxu0
  %v6081 = vadd.f32 %v5888, %v6080
  %6082 = vmatprep.mubr.bf16.mxu0 %v4564
  %6083 = vmatmul.mubr.bf16.gmra.mrb[0].mxu0 %v4563
  %v6084 = vpop.f32.mrb[0].mxu0
  %v6085 = vadd.f32 %v5892, %v6084
  %v6086 = vpop.f32.mrb[0].mxu0
  %v6087 = vadd.f32 %v5894, %v6086
  %v6088 = vpop.f32.mrb[0].mxu0
  %v6089 = vadd.f32 %v5896, %v6088
  %v6090 = vpop.f32.mrb[0].mxu0
  %v6091 = vadd.f32 %v5898, %v6090
  %6092 = vmatprep.mubr.bf16.mxu0 %v4568
  %6093 = vmatmul.mubr.bf16.gmra.mrb[0].mxu0 %v4567
  %v6094 = vpop.f32.mrb[0].mxu0
  %v6095 = vadd.f32 %v5902, %v6094
  %v6096 = vpop.f32.mrb[0].mxu0
  %v6097 = vadd.f32 %v5904, %v6096
  %v6098 = vpop.f32.mrb[0].mxu0
  %v6099 = vadd.f32 %v5906, %v6098
  %v6100 = vpop.f32.mrb[0].mxu0
  %v6101 = vadd.f32 %v5908, %v6100
  %6102 = vmatprep.mubr.bf16.mxu0 %v4572
  %6103 = vmatmul.mubr.bf16.gmra.mrb[0].mxu0 %v4571
  %v6104 = vpop.f32.mrb[0].mxu0
  %v6105 = vadd.f32 %v5912, %v6104
  %v6106 = vpop.f32.mrb[0].mxu0
  %v6107 = vadd.f32 %v5914, %v6106
  %v6108 = vpop.f32.mrb[0].mxu0
  %v6109 = vadd.f32 %v5916, %v6108
  %v6110 = vpop.f32.mrb[0].mxu0
  %v6111 = vadd.f32 %v5918, %v6110
  %6112 = vdwg.mxu0
  %v6113 = vadd.f32 %v5569, %v5573
  %v6114 = vadd.f32 %v6113, %v5579
  %v6115 = vadd.f32 %v6114, %v5583
  %v6116 = vadd.f32 %v6115, %v5589
  %v6117 = vadd.f32 %v6116, %v5593
  %v6118 = vadd.f32 %v6117, %v5599
  %v6119 = vadd.f32 %v6118, %v5603
  %v6120 = vadd.f32 %v6119, %v5609
  %v6121 = vadd.f32 %v6120, %v5613
  %v6122 = vadd.f32 %v6121, %v5619
  %v6123 = vadd.f32 %v6122, %v5623
  %v6124 = vadd.f32 %v6123, %v5629
  %v6125 = vadd.f32 %v6124, %v5633
  %v6126 = vadd.f32 %v6125, %v5639
  %v6127 = vadd.f32 %v6126, %v5643
  %v6128 = vadd.f32 %v6127, %v5649
  %v6129 = vadd.f32 %v6128, %v5653
  %v6130 = vadd.f32 %v6129, %v5659
  %v6131 = vadd.f32 %v6130, %v5663
  %v6132 = vadd.f32 %v6131, %v5669
  %v6133 = vadd.f32 %v6132, %v5673
  %v6134 = vadd.f32 %v6133, %v5679
  %v6135 = vadd.f32 %v6134, %v5683
  %v6136 = vadd.f32 %v6135, %v5689
  %v6137 = vadd.f32 %v6136, %v5693
  %v6138 = vadd.f32 %v6137, %v5699
  %v6139 = vadd.f32 %v6138, %v5703
  %v6140 = vadd.f32 %v6139, %v5709
  %v6141 = vadd.f32 %v6140, %v5713
  %v6142 = vadd.f32 %v6141, %v5719
  %v6143 = vadd.f32 %v6142, %v5723
  %v6144 = vrot.slane %v6143, 4
  %v6145 = vadd.f32 %v6143, %v6144
  %v6146 = vrot.slane %v6145, 2
  %v6147 = vadd.f32 %v6145, %v6146
  %v6148 = vrot.slane %v6147, 1
  %v6149 = vadd.f32 %v6147, %v6148
  %v6150 = vadd.f32 %v5571, %v5575
  %v6151 = vadd.f32 %v6150, %v5581
  %v6152 = vadd.f32 %v6151, %v5585
  %v6153 = vadd.f32 %v6152, %v5591
  %v6154 = vadd.f32 %v6153, %v5595
  %v6155 = vadd.f32 %v6154, %v5601
  %v6156 = vadd.f32 %v6155, %v5605
  %v6157 = vadd.f32 %v6156, %v5611
  %v6158 = vadd.f32 %v6157, %v5615
  %v6159 = vadd.f32 %v6158, %v5621
  %v6160 = vadd.f32 %v6159, %v5625
  %v6161 = vadd.f32 %v6160, %v5631
  %v6162 = vadd.f32 %v6161, %v5635
  %v6163 = vadd.f32 %v6162, %v5641
  %v6164 = vadd.f32 %v6163, %v5645
  %v6165 = vadd.f32 %v6164, %v5651
  %v6166 = vadd.f32 %v6165, %v5655
  %v6167 = vadd.f32 %v6166, %v5661
  %v6168 = vadd.f32 %v6167, %v5665
  %v6169 = vadd.f32 %v6168, %v5671
  %v6170 = vadd.f32 %v6169, %v5675
  %v6171 = vadd.f32 %v6170, %v5681
  %v6172 = vadd.f32 %v6171, %v5685
  %v6173 = vadd.f32 %v6172, %v5691
  %v6174 = vadd.f32 %v6173, %v5695
  %v6175 = vadd.f32 %v6174, %v5701
  %v6176 = vadd.f32 %v6175, %v5705
  %v6177 = vadd.f32 %v6176, %v5711
  %v6178 = vadd.f32 %v6177, %v5715
  %v6179 = vadd.f32 %v6178, %v5721
  %v6180 = vadd.f32 %v6179, %v5725
  %v6181 = vrot.slane %v6180, 4
  %v6182 = vadd.f32 %v6180, %v6181
  %v6183 = vrot.slane %v6182, 2
  %v6184 = vadd.f32 %v6182, %v6183
  %v6185 = vrot.slane %v6184, 1
  %v6186 = vadd.f32 %v6184, %v6185
  %v6187 = vadd.f32 %v5955, %v5959
  %v6188 = vadd.f32 %v6187, %v5965
  %v6189 = vadd.f32 %v6188, %v5969
  %v6190 = vadd.f32 %v6189, %v5975
  %v6191 = vadd.f32 %v6190, %v5979
  %v6192 = vadd.f32 %v6191, %v5985
  %v6193 = vadd.f32 %v6192, %v5989
  %v6194 = vadd.f32 %v6193, %v5995
  %v6195 = vadd.f32 %v6194, %v5999
  %v6196 = vadd.f32 %v6195, %v6005
  %v6197 = vadd.f32 %v6196, %v6009
  %v6198 = vadd.f32 %v6197, %v6015
  %v6199 = vadd.f32 %v6198, %v6019
  %v6200 = vadd.f32 %v6199, %v6025
  %v6201 = vadd.f32 %v6200, %v6029
  %v6202 = vadd.f32 %v6201, %v6035
  %v6203 = vadd.f32 %v6202, %v6039
  %v6204 = vadd.f32 %v6203, %v6045
  %v6205 = vadd.f32 %v6204, %v6049
  %v6206 = vadd.f32 %v6205, %v6055
  %v6207 = vadd.f32 %v6206, %v6059
  %v6208 = vadd.f32 %v6207, %v6065
  %v6209 = vadd.f32 %v6208, %v6069
  %v6210 = vadd.f32 %v6209, %v6075
  %v6211 = vadd.f32 %v6210, %v6079
  %v6212 = vadd.f32 %v6211, %v6085
  %v6213 = vadd.f32 %v6212, %v6089
  %v6214 = vadd.f32 %v6213, %v6095
  %v6215 = vadd.f32 %v6214, %v6099
  %v6216 = vadd.f32 %v6215, %v6105
  %v6217 = vadd.f32 %v6216, %v6109
  %v6218 = vrot.slane %v6217, 4
  %v6219 = vadd.f32 %v6217, %v6218
  %v6220 = vrot.slane %v6219, 2
  %v6221 = vadd.f32 %v6219, %v6220
  %v6222 = vrot.slane %v6221, 1
  %v6223 = vadd.f32 %v6221, %v6222
  %v6224 = vadd.f32 %v5957, %v5961
  %v6225 = vadd.f32 %v6224, %v5967
  %v6226 = vadd.f32 %v6225, %v5971
  %v6227 = vadd.f32 %v6226, %v5977
  %v6228 = vadd.f32 %v6227, %v5981
  %v6229 = vadd.f32 %v6228, %v5987
  %v6230 = vadd.f32 %v6229, %v5991
  %v6231 = vadd.f32 %v6230, %v5997
  %v6232 = vadd.f32 %v6231, %v6001
  %v6233 = vadd.f32 %v6232, %v6007
  %v6234 = vadd.f32 %v6233, %v6011
  %v6235 = vadd.f32 %v6234, %v6017
  %v6236 = vadd.f32 %v6235, %v6021
  %v6237 = vadd.f32 %v6236, %v6027
  %v6238 = vadd.f32 %v6237, %v6031
  %v6239 = vadd.f32 %v6238, %v6037
  %v6240 = vadd.f32 %v6239, %v6041
  %v6241 = vadd.f32 %v6240, %v6047
  %v6242 = vadd.f32 %v6241, %v6051
  %v6243 = vadd.f32 %v6242, %v6057
  %v6244 = vadd.f32 %v6243, %v6061
  %v6245 = vadd.f32 %v6244, %v6067
  %v6246 = vadd.f32 %v6245, %v6071
  %v6247 = vadd.f32 %v6246, %v6077
  %v6248 = vadd.f32 %v6247, %v6081
  %v6249 = vadd.f32 %v6248, %v6087
  %v6250 = vadd.f32 %v6249, %v6091
  %v6251 = vadd.f32 %v6250, %v6097
  %v6252 = vadd.f32 %v6251, %v6101
  %v6253 = vadd.f32 %v6252, %v6107
  %v6254 = vadd.f32 %v6253, %v6111
  %v6255 = vrot.slane %v6254, 4
  %v6256 = vadd.f32 %v6254, %v6255
  %v6257 = vrot.slane %v6256, 2
  %v6258 = vadd.f32 %v6256, %v6257
  %v6259 = vrot.slane %v6258, 1
  %v6260 = vadd.f32 %v6258, %v6259
  %v6261 = vmul.f32 %v6149, 0.00390625
  %v6262 = vmul.f32 %v6186, 0.00390625
  %v6263 = vmul.f32 %v6223, 0.00390625
  %v6264 = vmul.f32 %v6260, 0.00390625
  %v6265 = vmul.f32 %v5569, %v5569
  %v6266 = vmul.f32 %v5571, %v5571
  %v6267 = vmul.f32 %v5955, %v5955
  %v6268 = vmul.f32 %v5957, %v5957
  %v6269 = vmul.f32 %v5573, %v5573
  %v6270 = vmul.f32 %v5575, %v5575
  %v6271 = vmul.f32 %v5959, %v5959
  %v6272 = vmul.f32 %v5961, %v5961
  %v6273 = vmul.f32 %v5579, %v5579
  %v6274 = vmul.f32 %v5581, %v5581
  %v6275 = vmul.f32 %v5965, %v5965
  %v6276 = vmul.f32 %v5967, %v5967
  %v6277 = vmul.f32 %v5583, %v5583
  %v6278 = vmul.f32 %v5585, %v5585
  %v6279 = vmul.f32 %v5969, %v5969
  %v6280 = vmul.f32 %v5971, %v5971
  %v6281 = vmul.f32 %v5589, %v5589
  %v6282 = vmul.f32 %v5591, %v5591
  %v6283 = vmul.f32 %v5975, %v5975
  %v6284 = vmul.f32 %v5977, %v5977
  %v6285 = vmul.f32 %v5593, %v5593
  %v6286 = vmul.f32 %v5595, %v5595
  %v6287 = vmul.f32 %v5979, %v5979
  %v6288 = vmul.f32 %v5981, %v5981
  %v6289 = vmul.f32 %v5599, %v5599
  %v6290 = vmul.f32 %v5601, %v5601
  %v6291 = vmul.f32 %v5985, %v5985
  %v6292 = vmul.f32 %v5987, %v5987
  %v6293 = vmul.f32 %v5603, %v5603
  %v6294 = vmul.f32 %v5605, %v5605
  %v6295 = vmul.f32 %v5989, %v5989
  %v6296 = vmul.f32 %v5991, %v5991
  %v6297 = vmul.f32 %v5609, %v5609
  %v6298 = vmul.f32 %v5611, %v5611
  %v6299 = vmul.f32 %v5995, %v5995
  %v6300 = vmul.f32 %v5997, %v5997
  %v6301 = vmul.f32 %v5613, %v5613
  %v6302 = vmul.f32 %v5615, %v5615
  %v6303 = vmul.f32 %v5999, %v5999
  %v6304 = vmul.f32 %v6001, %v6001
  %v6305 = vmul.f32 %v5619, %v5619
  %v6306 = vmul.f32 %v5621, %v5621
  %v6307 = vmul.f32 %v6005, %v6005
  %v6308 = vmul.f32 %v6007, %v6007
  %v6309 = vmul.f32 %v5623, %v5623
  %v6310 = vmul.f32 %v5625, %v5625
  %v6311 = vmul.f32 %v6009, %v6009
  %v6312 = vmul.f32 %v6011, %v6011
  %v6313 = vmul.f32 %v5629, %v5629
  %v6314 = vmul.f32 %v5631, %v5631
  %v6315 = vmul.f32 %v6015, %v6015
  %v6316 = vmul.f32 %v6017, %v6017
  %v6317 = vmul.f32 %v5633, %v5633
  %v6318 = vmul.f32 %v5635, %v5635
  %v6319 = vmul.f32 %v6019, %v6019
  %v6320 = vmul.f32 %v6021, %v6021
  %v6321 = vmul.f32 %v5639, %v5639
  %v6322 = vmul.f32 %v5641, %v5641
  %v6323 = vmul.f32 %v6025, %v6025
  %v6324 = vmul.f32 %v6027, %v6027
  %v6325 = vmul.f32 %v5643, %v5643
  %v6326 = vmul.f32 %v5645, %v5645
  %v6327 = vmul.f32 %v6029, %v6029
  %v6328 = vmul.f32 %v6031, %v6031
  %v6329 = vmul.f32 %v5649, %v5649
  %v6330 = vmul.f32 %v5651, %v5651
  %v6331 = vmul.f32 %v6035, %v6035
  %v6332 = vmul.f32 %v6037, %v6037
  %v6333 = vmul.f32 %v5653, %v5653
  %v6334 = vmul.f32 %v5655, %v5655
  %v6335 = vmul.f32 %v6039, %v6039
  %v6336 = vmul.f32 %v6041, %v6041
  %v6337 = vmul.f32 %v5659, %v5659
  %v6338 = vmul.f32 %v5661, %v5661
  %v6339 = vmul.f32 %v6045, %v6045
  %v6340 = vmul.f32 %v6047, %v6047
  %v6341 = vmul.f32 %v5663, %v5663
  %v6342 = vmul.f32 %v5665, %v5665
  %v6343 = vmul.f32 %v6049, %v6049
  %v6344 = vmul.f32 %v6051, %v6051
  %v6345 = vmul.f32 %v5669, %v5669
  %v6346 = vmul.f32 %v5671, %v5671
  %v6347 = vmul.f32 %v6055, %v6055
  %v6348 = vmul.f32 %v6057, %v6057
  %v6349 = vmul.f32 %v5673, %v5673
  %v6350 = vmul.f32 %v5675, %v5675
  %v6351 = vmul.f32 %v6059, %v6059
  %v6352 = vmul.f32 %v6061, %v6061
  %v6353 = vmul.f32 %v5679, %v5679
  %v6354 = vmul.f32 %v5681, %v5681
  %v6355 = vmul.f32 %v6065, %v6065
  %v6356 = vmul.f32 %v6067, %v6067
  %v6357 = vmul.f32 %v5683, %v5683
  %v6358 = vmul.f32 %v5685, %v5685
  %v6359 = vmul.f32 %v6069, %v6069
  %v6360 = vmul.f32 %v6071, %v6071
  %v6361 = vmul.f32 %v5689, %v5689
  %v6362 = vmul.f32 %v5691, %v5691
  %v6363 = vmul.f32 %v6075, %v6075
  %v6364 = vmul.f32 %v6077, %v6077
  %v6365 = vmul.f32 %v5693, %v5693
  %v6366 = vmul.f32 %v5695, %v5695
  %v6367 = vmul.f32 %v6079, %v6079
  %v6368 = vmul.f32 %v6081, %v6081
  %v6369 = vmul.f32 %v5699, %v5699
  %v6370 = vmul.f32 %v5701, %v5701
  %v6371 = vmul.f32 %v6085, %v6085
  %v6372 = vmul.f32 %v6087, %v6087
  %v6373 = vmul.f32 %v5703, %v5703
  %v6374 = vmul.f32 %v5705, %v5705
  %v6375 = vmul.f32 %v6089, %v6089
  %v6376 = vmul.f32 %v6091, %v6091
  %v6377 = vmul.f32 %v5709, %v5709
  %v6378 = vmul.f32 %v5711, %v5711
  %v6379 = vmul.f32 %v6095, %v6095
  %v6380 = vmul.f32 %v6097, %v6097
  %v6381 = vmul.f32 %v5713, %v5713
  %v6382 = vmul.f32 %v5715, %v5715
  %v6383 = vmul.f32 %v6099, %v6099
  %v6384 = vmul.f32 %v6101, %v6101
  %v6385 = vmul.f32 %v5719, %v5719
  %v6386 = vmul.f32 %v5721, %v5721
  %v6387 = vmul.f32 %v6105, %v6105
  %v6388 = vmul.f32 %v6107, %v6107
  %v6389 = vmul.f32 %v5723, %v5723
  %v6390 = vmul.f32 %v5725, %v5725
  %v6391 = vmul.f32 %v6109, %v6109
  %v6392 = vmul.f32 %v6111, %v6111
  %v6393 = vadd.f32 %v6265, %v6269
  %v6394 = vadd.f32 %v6393, %v6273
  %v6395 = vadd.f32 %v6394, %v6277
  %v6396 = vadd.f32 %v6395, %v6281
  %v6397 = vadd.f32 %v6396, %v6285
  %v6398 = vadd.f32 %v6397, %v6289
  %v6399 = vadd.f32 %v6398, %v6293
  %v6400 = vadd.f32 %v6399, %v6297
  %v6401 = vadd.f32 %v6400, %v6301
  %v6402 = vadd.f32 %v6401, %v6305
  %v6403 = vadd.f32 %v6402, %v6309
  %v6404 = vadd.f32 %v6403, %v6313
  %v6405 = vadd.f32 %v6404, %v6317
  %v6406 = vadd.f32 %v6405, %v6321
  %v6407 = vadd.f32 %v6406, %v6325
  %v6408 = vadd.f32 %v6407, %v6329
  %v6409 = vadd.f32 %v6408, %v6333
  %v6410 = vadd.f32 %v6409, %v6337
  %v6411 = vadd.f32 %v6410, %v6341
  %v6412 = vadd.f32 %v6411, %v6345
  %v6413 = vadd.f32 %v6412, %v6349
  %v6414 = vadd.f32 %v6413, %v6353
  %v6415 = vadd.f32 %v6414, %v6357
  %v6416 = vadd.f32 %v6415, %v6361
  %v6417 = vadd.f32 %v6416, %v6365
  %v6418 = vadd.f32 %v6417, %v6369
  %v6419 = vadd.f32 %v6418, %v6373
  %v6420 = vadd.f32 %v6419, %v6377
  %v6421 = vadd.f32 %v6420, %v6381
  %v6422 = vadd.f32 %v6421, %v6385
  %v6423 = vadd.f32 %v6422, %v6389
  %v6424 = vrot.slane %v6423, 4
  %v6425 = vadd.f32 %v6423, %v6424
  %v6426 = vrot.slane %v6425, 2
  %v6427 = vadd.f32 %v6425, %v6426
  %v6428 = vrot.slane %v6427, 1
  %v6429 = vadd.f32 %v6427, %v6428
  %v6430 = vadd.f32 %v6266, %v6270
  %v6431 = vadd.f32 %v6430, %v6274
  %v6432 = vadd.f32 %v6431, %v6278
  %v6433 = vadd.f32 %v6432, %v6282
  %v6434 = vadd.f32 %v6433, %v6286
  %v6435 = vadd.f32 %v6434, %v6290
  %v6436 = vadd.f32 %v6435, %v6294
  %v6437 = vadd.f32 %v6436, %v6298
  %v6438 = vadd.f32 %v6437, %v6302
  %v6439 = vadd.f32 %v6438, %v6306
  %v6440 = vadd.f32 %v6439, %v6310
  %v6441 = vadd.f32 %v6440, %v6314
  %v6442 = vadd.f32 %v6441, %v6318
  %v6443 = vadd.f32 %v6442, %v6322
  %v6444 = vadd.f32 %v6443, %v6326
  %v6445 = vadd.f32 %v6444, %v6330
  %v6446 = vadd.f32 %v6445, %v6334
  %v6447 = vadd.f32 %v6446, %v6338
  %v6448 = vadd.f32 %v6447, %v6342
  %v6449 = vadd.f32 %v6448, %v6346
  %v6450 = vadd.f32 %v6449, %v6350
  %v6451 = vadd.f32 %v6450, %v6354
  %v6452 = vadd.f32 %v6451, %v6358
  %v6453 = vadd.f32 %v6452, %v6362
  %v6454 = vadd.f32 %v6453, %v6366
  %v6455 = vadd.f32 %v6454, %v6370
  %v6456 = vadd.f32 %v6455, %v6374
  %v6457 = vadd.f32 %v6456, %v6378
  %v6458 = vadd.f32 %v6457, %v6382
  %v6459 = vadd.f32 %v6458, %v6386
  %v6460 = vadd.f32 %v6459, %v6390
  %v6461 = vrot.slane %v6460, 4
  %v6462 = vadd.f32 %v6460, %v6461
  %v6463 = vrot.slane %v6462, 2
  %v6464 = vadd.f32 %v6462, %v6463
  %v6465 = vrot.slane %v6464, 1
  %v6466 = vadd.f32 %v6464, %v6465
  %v6467 = vadd.f32 %v6267, %v6271
  %v6468 = vadd.f32 %v6467, %v6275
  %v6469 = vadd.f32 %v6468, %v6279
  %v6470 = vadd.f32 %v6469, %v6283
  %v6471 = vadd.f32 %v6470, %v6287
  %v6472 = vadd.f32 %v6471, %v6291
  %v6473 = vadd.f32 %v6472, %v6295
  %v6474 = vadd.f32 %v6473, %v6299
  %v6475 = vadd.f32 %v6474, %v6303
  %v6476 = vadd.f32 %v6475, %v6307
  %v6477 = vadd.f32 %v6476, %v6311
  %v6478 = vadd.f32 %v6477, %v6315
  %v6479 = vadd.f32 %v6478, %v6319
  %v6480 = vadd.f32 %v6479, %v6323
  %v6481 = vadd.f32 %v6480, %v6327
  %v6482 = vadd.f32 %v6481, %v6331
  %v6483 = vadd.f32 %v6482, %v6335
  %v6484 = vadd.f32 %v6483, %v6339
  %v6485 = vadd.f32 %v6484, %v6343
  %v6486 = vadd.f32 %v6485, %v6347
  %v6487 = vadd.f32 %v6486, %v6351
  %v6488 = vadd.f32 %v6487, %v6355
  %v6489 = vadd.f32 %v6488, %v6359
  %v6490 = vadd.f32 %v6489, %v6363
  %v6491 = vadd.f32 %v6490, %v6367
  %v6492 = vadd.f32 %v6491, %v6371
  %v6493 = vadd.f32 %v6492, %v6375
  %v6494 = vadd.f32 %v6493, %v6379
  %v6495 = vadd.f32 %v6494, %v6383
  %v6496 = vadd.f32 %v6495, %v6387
  %v6497 = vadd.f32 %v6496, %v6391
  %v6498 = vrot.slane %v6497, 4
  %v6499 = vadd.f32 %v6497, %v6498
  %v6500 = vrot.slane %v6499, 2
  %v6501 = vadd.f32 %v6499, %v6500
  %v6502 = vrot.slane %v6501, 1
  %v6503 = vadd.f32 %v6501, %v6502
  %v6504 = vadd.f32 %v6268, %v6272
  %v6505 = vadd.f32 %v6504, %v6276
  %v6506 = vadd.f32 %v6505, %v6280
  %v6507 = vadd.f32 %v6506, %v6284
  %v6508 = vadd.f32 %v6507, %v6288
  %v6509 = vadd.f32 %v6508, %v6292
  %v6510 = vadd.f32 %v6509, %v6296
  %v6511 = vadd.f32 %v6510, %v6300
  %v6512 = vadd.f32 %v6511, %v6304
  %v6513 = vadd.f32 %v6512, %v6308
  %v6514 = vadd.f32 %v6513, %v6312
  %v6515 = vadd.f32 %v6514, %v6316
  %v6516 = vadd.f32 %v6515, %v6320
  %v6517 = vadd.f32 %v6516, %v6324
  %v6518 = vadd.f32 %v6517, %v6328
  %v6519 = vadd.f32 %v6518, %v6332
  %v6520 = vadd.f32 %v6519, %v6336
  %v6521 = vadd.f32 %v6520, %v6340
  %v6522 = vadd.f32 %v6521, %v6344
  %v6523 = vadd.f32 %v6522, %v6348
  %v6524 = vadd.f32 %v6523, %v6352
  %v6525 = vadd.f32 %v6524, %v6356
  %v6526 = vadd.f32 %v6525, %v6360
  %v6527 = vadd.f32 %v6526, %v6364
  %v6528 = vadd.f32 %v6527, %v6368
  %v6529 = vadd.f32 %v6528, %v6372
  %v6530 = vadd.f32 %v6529, %v6376
  %v6531 = vadd.f32 %v6530, %v6380
  %v6532 = vadd.f32 %v6531, %v6384
  %v6533 = vadd.f32 %v6532, %v6388
  %v6534 = vadd.f32 %v6533, %v6392
  %v6535 = vrot.slane %v6534, 4
  %v6536 = vadd.f32 %v6534, %v6535
  %v6537 = vrot.slane %v6536, 2
  %v6538 = vadd.f32 %v6536, %v6537
  %v6539 = vrot.slane %v6538, 1
  %v6540 = vadd.f32 %v6538, %v6539
  %v6541 = vmul.f32 %v6429, 0.00390625
  %v6542 = vmul.f32 %v6466, 0.00390625
  %v6543 = vmul.f32 %v6503, 0.00390625
  %v6544 = vmul.f32 %v6540, 0.00390625
  %v6545 = vmul.f32 %v6261, %v6261
  %v6546 = vmul.f32 %v6262, %v6262
  %v6547 = vmul.f32 %v6263, %v6263
  %v6548 = vmul.f32 %v6264, %v6264
  %v6549 = vsub.f32 %v6541, %v6545
  %v6550 = vsub.f32 %v6542, %v6546
  %v6551 = vsub.f32 %v6543, %v6547
  %v6552 = vsub.f32 %v6544, %v6548
  %v6553 = vmax.f32 %v6549, 0.0
  %v6554 = vmax.f32 %v6550, 0.0
  %v6555 = vmax.f32 %v6551, 0.0
  %v6556 = vmax.f32 %v6552, 0.0
  %v6557 = vadd.f32 %v6553, 1e-05
  %v6558 = vadd.f32 %v6554, 1e-05
  %v6559 = vadd.f32 %v6555, 1e-05
  %v6560 = vadd.f32 %v6556, 1e-05
  %v6561 = vrsqrt.pop %v6557
  %v6562 = vrsqrt.pop %v6558
  %v6563 = vrsqrt.pop %v6559
  %v6564 = vrsqrt.pop %v6560
  %v6565 = vmul.f32 %v21, %v6561
  %v6566 = vmul.f32 %v22, %v6562
  %v6567 = vmul.f32 %v23, %v6563
  %v6568 = vmul.f32 %v24, %v6564
  %v6569 = vmul.f32 %v6261, %v6565
  %v6570 = vmul.f32 %v6262, %v6566
  %v6571 = vmul.f32 %v6263, %v6567
  %v6572 = vmul.f32 %v6264, %v6568
  %v6577 = vrot.slane %v6569, 7
  %v6578 = vrot.slane %v6570, 7
  %v6579 = vrot.slane %v6571, 7
  %v6580 = vrot.slane %v6572, 7
  %v6585 = vsub.f32 %v21, %v6577
  %v6586 = vsub.f32 %v22, %v6578
  %v6587 = vsub.f32 %v23, %v6579
  %v6588 = vsub.f32 %v24, %v6580
  %v6589 = vlaneseq
  %v6590 = vshrl.u32 %v6589, 7
  %v6591 = vsub.s32 2, %v6590
  %v6592 = vrot.slane %v6565, %v6591
  %v6593 = vlaneseq
  %v6594 = vshrl.u32 %v6593, 7
  %v6595 = vsub.s32 2, %v6594
  %v6596 = vrot.slane %v6566, %v6595
  %v6597 = vlaneseq
  %v6598 = vshrl.u32 %v6597, 7
  %v6599 = vsub.s32 2, %v6598
  %v6600 = vrot.slane %v6567, %v6599
  %v6601 = vlaneseq
  %v6602 = vshrl.u32 %v6601, 7
  %v6603 = vsub.s32 2, %v6602
  %v6604 = vrot.slane %v6568, %v6603
  %v6605 = vmul.f32 %v5569, %v6592
  %v6606 = vmul.f32 %v5571, %v6596
  %v6607 = vmul.f32 %v5955, %v6600
  %v6608 = vmul.f32 %v5957, %v6604
  %v6609 = vmul.f32 %v5573, %v6592
  %v6610 = vmul.f32 %v5575, %v6596
  %v6611 = vmul.f32 %v5959, %v6600
  %v6612 = vmul.f32 %v5961, %v6604
  %v6613 = vmul.f32 %v5579, %v6592
  %v6614 = vmul.f32 %v5581, %v6596
  %v6615 = vmul.f32 %v5965, %v6600
  %v6616 = vmul.f32 %v5967, %v6604
  %v6617 = vmul.f32 %v5583, %v6592
  %v6618 = vmul.f32 %v5585, %v6596
  %v6619 = vmul.f32 %v5969, %v6600
  %v6620 = vmul.f32 %v5971, %v6604
  %v6621 = vmul.f32 %v5589, %v6592
  %v6622 = vmul.f32 %v5591, %v6596
  %v6623 = vmul.f32 %v5975, %v6600
  %v6624 = vmul.f32 %v5977, %v6604
  %v6625 = vmul.f32 %v5593, %v6592
  %v6626 = vmul.f32 %v5595, %v6596
  %v6627 = vmul.f32 %v5979, %v6600
  %v6628 = vmul.f32 %v5981, %v6604
  %v6629 = vmul.f32 %v5599, %v6592
  %v6630 = vmul.f32 %v5601, %v6596
  %v6631 = vmul.f32 %v5985, %v6600
  %v6632 = vmul.f32 %v5987, %v6604
  %v6633 = vmul.f32 %v5603, %v6592
  %v6634 = vmul.f32 %v5605, %v6596
  %v6635 = vmul.f32 %v5989, %v6600
  %v6636 = vmul.f32 %v5991, %v6604
  %v6637 = vmul.f32 %v5609, %v6592
  %v6638 = vmul.f32 %v5611, %v6596
  %v6639 = vmul.f32 %v5995, %v6600
  %v6640 = vmul.f32 %v5997, %v6604
  %v6641 = vmul.f32 %v5613, %v6592
  %v6642 = vmul.f32 %v5615, %v6596
  %v6643 = vmul.f32 %v5999, %v6600
  %v6644 = vmul.f32 %v6001, %v6604
  %v6645 = vmul.f32 %v5619, %v6592
  %v6646 = vmul.f32 %v5621, %v6596
  %v6647 = vmul.f32 %v6005, %v6600
  %v6648 = vmul.f32 %v6007, %v6604
  %v6649 = vmul.f32 %v5623, %v6592
  %v6650 = vmul.f32 %v5625, %v6596
  %v6651 = vmul.f32 %v6009, %v6600
  %v6652 = vmul.f32 %v6011, %v6604
  %v6653 = vmul.f32 %v5629, %v6592
  %v6654 = vmul.f32 %v5631, %v6596
  %v6655 = vmul.f32 %v6015, %v6600
  %v6656 = vmul.f32 %v6017, %v6604
  %v6657 = vmul.f32 %v5633, %v6592
  %v6658 = vmul.f32 %v5635, %v6596
  %v6659 = vmul.f32 %v6019, %v6600
  %v6660 = vmul.f32 %v6021, %v6604
  %v6661 = vmul.f32 %v5639, %v6592
  %v6662 = vmul.f32 %v5641, %v6596
  %v6663 = vmul.f32 %v6025, %v6600
  %v6664 = vmul.f32 %v6027, %v6604
  %v6665 = vmul.f32 %v5643, %v6592
  %v6666 = vmul.f32 %v5645, %v6596
  %v6667 = vmul.f32 %v6029, %v6600
  %v6668 = vmul.f32 %v6031, %v6604
  %v6669 = vmul.f32 %v5649, %v6592
  %v6670 = vmul.f32 %v5651, %v6596
  %v6671 = vmul.f32 %v6035, %v6600
  %v6672 = vmul.f32 %v6037, %v6604
  %v6673 = vmul.f32 %v5653, %v6592
  %v6674 = vmul.f32 %v5655, %v6596
  %v6675 = vmul.f32 %v6039, %v6600
  %v6676 = vmul.f32 %v6041, %v6604
  %v6677 = vmul.f32 %v5659, %v6592
  %v6678 = vmul.f32 %v5661, %v6596
  %v6679 = vmul.f32 %v6045, %v6600
  %v6680 = vmul.f32 %v6047, %v6604
  %v6681 = vmul.f32 %v5663, %v6592
  %v6682 = vmul.f32 %v5665, %v6596
  %v6683 = vmul.f32 %v6049, %v6600
  %v6684 = vmul.f32 %v6051, %v6604
  %v6685 = vmul.f32 %v5669, %v6592
  %v6686 = vmul.f32 %v5671, %v6596
  %v6687 = vmul.f32 %v6055, %v6600
  %v6688 = vmul.f32 %v6057, %v6604
  %v6689 = vmul.f32 %v5673, %v6592
  %v6690 = vmul.f32 %v5675, %v6596
  %v6691 = vmul.f32 %v6059, %v6600
  %v6692 = vmul.f32 %v6061, %v6604
  %v6693 = vmul.f32 %v5679, %v6592
  %v6694 = vmul.f32 %v5681, %v6596
  %v6695 = vmul.f32 %v6065, %v6600
  %v6696 = vmul.f32 %v6067, %v6604
  %v6697 = vmul.f32 %v5683, %v6592
  %v6698 = vmul.f32 %v5685, %v6596
  %v6699 = vmul.f32 %v6069, %v6600
  %v6700 = vmul.f32 %v6071, %v6604
  %v6701 = vmul.f32 %v5689, %v6592
  %v6702 = vmul.f32 %v5691, %v6596
  %v6703 = vmul.f32 %v6075, %v6600
  %v6704 = vmul.f32 %v6077, %v6604
  %v6705 = vmul.f32 %v5693, %v6592
  %v6706 = vmul.f32 %v5695, %v6596
  %v6707 = vmul.f32 %v6079, %v6600
  %v6708 = vmul.f32 %v6081, %v6604
  %v6709 = vmul.f32 %v5699, %v6592
  %v6710 = vmul.f32 %v5701, %v6596
  %v6711 = vmul.f32 %v6085, %v6600
  %v6712 = vmul.f32 %v6087, %v6604
  %v6713 = vmul.f32 %v5703, %v6592
  %v6714 = vmul.f32 %v5705, %v6596
  %v6715 = vmul.f32 %v6089, %v6600
  %v6716 = vmul.f32 %v6091, %v6604
  %v6717 = vmul.f32 %v5709, %v6592
  %v6718 = vmul.f32 %v5711, %v6596
  %v6719 = vmul.f32 %v6095, %v6600
  %v6720 = vmul.f32 %v6097, %v6604
  %v6721 = vmul.f32 %v5713, %v6592
  %v6722 = vmul.f32 %v5715, %v6596
  %v6723 = vmul.f32 %v6099, %v6600
  %v6724 = vmul.f32 %v6101, %v6604
  %v6725 = vmul.f32 %v5719, %v6592
  %v6726 = vmul.f32 %v5721, %v6596
  %v6727 = vmul.f32 %v6105, %v6600
  %v6728 = vmul.f32 %v6107, %v6604
  %v6729 = vmul.f32 %v5723, %v6592
  %v6730 = vmul.f32 %v5725, %v6596
  %v6731 = vmul.f32 %v6109, %v6600
  %v6732 = vmul.f32 %v6111, %v6604
  %v6733 = vlaneseq
  %v6734 = vshrl.u32 %v6733, 7
  %v6735 = vsub.s32 3, %v6734
  %v6736 = vrot.slane %v6585, %v6735
  %v6737 = vlaneseq
  %v6738 = vshrl.u32 %v6737, 7
  %v6739 = vsub.s32 3, %v6738
  %v6740 = vrot.slane %v6586, %v6739
  %v6741 = vlaneseq
  %v6742 = vshrl.u32 %v6741, 7
  %v6743 = vsub.s32 3, %v6742
  %v6744 = vrot.slane %v6587, %v6743
  %v6745 = vlaneseq
  %v6746 = vshrl.u32 %v6745, 7
  %v6747 = vsub.s32 3, %v6746
  %v6748 = vrot.slane %v6588, %v6747
  %v6749 = vadd.f32 %v6605, %v6736
  %v6750 = vadd.f32 %v6606, %v6740
  %v6751 = vadd.f32 %v6607, %v6744
  %v6752 = vadd.f32 %v6608, %v6748
  %v6753 = vadd.f32 %v6609, %v6736
  %v6754 = vadd.f32 %v6610, %v6740
  %v6755 = vadd.f32 %v6611, %v6744
  %v6756 = vadd.f32 %v6612, %v6748
  %v6757 = vadd.f32 %v6613, %v6736
  %v6758 = vadd.f32 %v6614, %v6740
  %v6759 = vadd.f32 %v6615, %v6744
  %v6760 = vadd.f32 %v6616, %v6748
  %v6761 = vadd.f32 %v6617, %v6736
  %v6762 = vadd.f32 %v6618, %v6740
  %v6763 = vadd.f32 %v6619, %v6744
  %v6764 = vadd.f32 %v6620, %v6748
  %v6765 = vadd.f32 %v6621, %v6736
  %v6766 = vadd.f32 %v6622, %v6740
  %v6767 = vadd.f32 %v6623, %v6744
  %v6768 = vadd.f32 %v6624, %v6748
  %v6769 = vadd.f32 %v6625, %v6736
  %v6770 = vadd.f32 %v6626, %v6740
  %v6771 = vadd.f32 %v6627, %v6744
  %v6772 = vadd.f32 %v6628, %v6748
  %v6773 = vadd.f32 %v6629, %v6736
  %v6774 = vadd.f32 %v6630, %v6740
  %v6775 = vadd.f32 %v6631, %v6744
  %v6776 = vadd.f32 %v6632, %v6748
  %v6777 = vadd.f32 %v6633, %v6736
  %v6778 = vadd.f32 %v6634, %v6740
  %v6779 = vadd.f32 %v6635, %v6744
  %v6780 = vadd.f32 %v6636, %v6748
  %v6781 = vadd.f32 %v6637, %v6736
  %v6782 = vadd.f32 %v6638, %v6740
  %v6783 = vadd.f32 %v6639, %v6744
  %v6784 = vadd.f32 %v6640, %v6748
  %v6785 = vadd.f32 %v6641, %v6736
  %v6786 = vadd.f32 %v6642, %v6740
  %v6787 = vadd.f32 %v6643, %v6744
  %v6788 = vadd.f32 %v6644, %v6748
  %v6789 = vadd.f32 %v6645, %v6736
  %v6790 = vadd.f32 %v6646, %v6740
  %v6791 = vadd.f32 %v6647, %v6744
  %v6792 = vadd.f32 %v6648, %v6748
  %v6793 = vadd.f32 %v6649, %v6736
  %v6794 = vadd.f32 %v6650, %v6740
  %v6795 = vadd.f32 %v6651, %v6744
  %v6796 = vadd.f32 %v6652, %v6748
  %v6797 = vadd.f32 %v6653, %v6736
  %v6798 = vadd.f32 %v6654, %v6740
  %v6799 = vadd.f32 %v6655, %v6744
  %v6800 = vadd.f32 %v6656, %v6748
  %v6801 = vadd.f32 %v6657, %v6736
  %v6802 = vadd.f32 %v6658, %v6740
  %v6803 = vadd.f32 %v6659, %v6744
  %v6804 = vadd.f32 %v6660, %v6748
  %v6805 = vadd.f32 %v6661, %v6736
  %v6806 = vadd.f32 %v6662, %v6740
  %v6807 = vadd.f32 %v6663, %v6744
  %v6808 = vadd.f32 %v6664, %v6748
  %v6809 = vadd.f32 %v6665, %v6736
  %v6810 = vadd.f32 %v6666, %v6740
  %v6811 = vadd.f32 %v6667, %v6744
  %v6812 = vadd.f32 %v6668, %v6748
  %v6813 = vadd.f32 %v6669, %v6736
  %v6814 = vadd.f32 %v6670, %v6740
  %v6815 = vadd.f32 %v6671, %v6744
  %v6816 = vadd.f32 %v6672, %v6748
  %v6817 = vadd.f32 %v6673, %v6736
  %v6818 = vadd.f32 %v6674, %v6740
  %v6819 = vadd.f32 %v6675, %v6744
  %v6820 = vadd.f32 %v6676, %v6748
  %v6821 = vadd.f32 %v6677, %v6736
  %v6822 = vadd.f32 %v6678, %v6740
  %v6823 = vadd.f32 %v6679, %v6744
  %v6824 = vadd.f32 %v6680, %v6748
  %v6825 = vadd.f32 %v6681, %v6736
  %v6826 = vadd.f32 %v6682, %v6740
  %v6827 = vadd.f32 %v6683, %v6744
  %v6828 = vadd.f32 %v6684, %v6748
  %v6829 = vadd.f32 %v6685, %v6736
  %v6830 = vadd.f32 %v6686, %v6740
  %v6831 = vadd.f32 %v6687, %v6744
  %v6832 = vadd.f32 %v6688, %v6748
  %v6833 = vadd.f32 %v6689, %v6736
  %v6834 = vadd.f32 %v6690, %v6740
  %v6835 = vadd.f32 %v6691, %v6744
  %v6836 = vadd.f32 %v6692, %v6748
  %v6837 = vadd.f32 %v6693, %v6736
  %v6838 = vadd.f32 %v6694, %v6740
  %v6839 = vadd.f32 %v6695, %v6744
  %v6840 = vadd.f32 %v6696, %v6748
  %v6841 = vadd.f32 %v6697, %v6736
  %v6842 = vadd.f32 %v6698, %v6740
  %v6843 = vadd.f32 %v6699, %v6744
  %v6844 = vadd.f32 %v6700, %v6748
  %v6845 = vadd.f32 %v6701, %v6736
  %v6846 = vadd.f32 %v6702, %v6740
  %v6847 = vadd.f32 %v6703, %v6744
  %v6848 = vadd.f32 %v6704, %v6748
  %v6849 = vadd.f32 %v6705, %v6736
  %v6850 = vadd.f32 %v6706, %v6740
  %v6851 = vadd.f32 %v6707, %v6744
  %v6852 = vadd.f32 %v6708, %v6748
  %v6853 = vadd.f32 %v6709, %v6736
  %v6854 = vadd.f32 %v6710, %v6740
  %v6855 = vadd.f32 %v6711, %v6744
  %v6856 = vadd.f32 %v6712, %v6748
  %v6857 = vadd.f32 %v6713, %v6736
  %v6858 = vadd.f32 %v6714, %v6740
  %v6859 = vadd.f32 %v6715, %v6744
  %v6860 = vadd.f32 %v6716, %v6748
  %v6861 = vadd.f32 %v6717, %v6736
  %v6862 = vadd.f32 %v6718, %v6740
  %v6863 = vadd.f32 %v6719, %v6744
  %v6864 = vadd.f32 %v6720, %v6748
  %v6865 = vadd.f32 %v6721, %v6736
  %v6866 = vadd.f32 %v6722, %v6740
  %v6867 = vadd.f32 %v6723, %v6744
  %v6868 = vadd.f32 %v6724, %v6748
  %v6869 = vadd.f32 %v6725, %v6736
  %v6870 = vadd.f32 %v6726, %v6740
  %v6871 = vadd.f32 %v6727, %v6744
  %v6872 = vadd.f32 %v6728, %v6748
  %v6873 = vadd.f32 %v6729, %v6736
  %v6874 = vadd.f32 %v6730, %v6740
  %v6875 = vadd.f32 %v6731, %v6744
  %v6876 = vadd.f32 %v6732, %v6748
  %v6877 = vmax.f32 %v6749, 0.0
  %v6878 = vmax.f32 %v6750, 0.0
  %v6879 = vmax.f32 %v6751, 0.0
  %v6880 = vmax.f32 %v6752, 0.0
  %v6881 = vmax.f32 %v6753, 0.0
  %v6882 = vmax.f32 %v6754, 0.0
  %v6883 = vmax.f32 %v6755, 0.0
  %v6884 = vmax.f32 %v6756, 0.0
  %v6885 = vmax.f32 %v6757, 0.0
  %v6886 = vmax.f32 %v6758, 0.0
  %v6887 = vmax.f32 %v6759, 0.0
  %v6888 = vmax.f32 %v6760, 0.0
  %v6889 = vmax.f32 %v6761, 0.0
  %v6890 = vmax.f32 %v6762, 0.0
  %v6891 = vmax.f32 %v6763, 0.0
  %v6892 = vmax.f32 %v6764, 0.0
  %v6893 = vmax.f32 %v6765, 0.0
  %v6894 = vmax.f32 %v6766, 0.0
  %v6895 = vmax.f32 %v6767, 0.0
  %v6896 = vmax.f32 %v6768, 0.0
  %v6897 = vmax.f32 %v6769, 0.0
  %v6898 = vmax.f32 %v6770, 0.0
  %v6899 = vmax.f32 %v6771, 0.0
  %v6900 = vmax.f32 %v6772, 0.0
  %v6901 = vmax.f32 %v6773, 0.0
  %v6902 = vmax.f32 %v6774, 0.0
  %v6903 = vmax.f32 %v6775, 0.0
  %v6904 = vmax.f32 %v6776, 0.0
  %v6905 = vmax.f32 %v6777, 0.0
  %v6906 = vmax.f32 %v6778, 0.0
  %v6907 = vmax.f32 %v6779, 0.0
  %v6908 = vmax.f32 %v6780, 0.0
  %v6909 = vmax.f32 %v6781, 0.0
  %v6910 = vmax.f32 %v6782, 0.0
  %v6911 = vmax.f32 %v6783, 0.0
  %v6912 = vmax.f32 %v6784, 0.0
  %v6913 = vmax.f32 %v6785, 0.0
  %v6914 = vmax.f32 %v6786, 0.0
  %v6915 = vmax.f32 %v6787, 0.0
  %v6916 = vmax.f32 %v6788, 0.0
  %v6917 = vmax.f32 %v6789, 0.0
  %v6918 = vmax.f32 %v6790, 0.0
  %v6919 = vmax.f32 %v6791, 0.0
  %v6920 = vmax.f32 %v6792, 0.0
  %v6921 = vmax.f32 %v6793, 0.0
  %v6922 = vmax.f32 %v6794, 0.0
  %v6923 = vmax.f32 %v6795, 0.0
  %v6924 = vmax.f32 %v6796, 0.0
  %v6925 = vmax.f32 %v6797, 0.0
  %v6926 = vmax.f32 %v6798, 0.0
  %v6927 = vmax.f32 %v6799, 0.0
  %v6928 = vmax.f32 %v6800, 0.0
  %v6929 = vmax.f32 %v6801, 0.0
  %v6930 = vmax.f32 %v6802, 0.0
  %v6931 = vmax.f32 %v6803, 0.0
  %v6932 = vmax.f32 %v6804, 0.0
  %v6933 = vmax.f32 %v6805, 0.0
  %v6934 = vmax.f32 %v6806, 0.0
  %v6935 = vmax.f32 %v6807, 0.0
  %v6936 = vmax.f32 %v6808, 0.0
  %v6937 = vmax.f32 %v6809, 0.0
  %v6938 = vmax.f32 %v6810, 0.0
  %v6939 = vmax.f32 %v6811, 0.0
  %v6940 = vmax.f32 %v6812, 0.0
  %v6941 = vmax.f32 %v6813, 0.0
  %v6942 = vmax.f32 %v6814, 0.0
  %v6943 = vmax.f32 %v6815, 0.0
  %v6944 = vmax.f32 %v6816, 0.0
  %v6945 = vmax.f32 %v6817, 0.0
  %v6946 = vmax.f32 %v6818, 0.0
  %v6947 = vmax.f32 %v6819, 0.0
  %v6948 = vmax.f32 %v6820, 0.0
  %v6949 = vmax.f32 %v6821, 0.0
  %v6950 = vmax.f32 %v6822, 0.0
  %v6951 = vmax.f32 %v6823, 0.0
  %v6952 = vmax.f32 %v6824, 0.0
  %v6953 = vmax.f32 %v6825, 0.0
  %v6954 = vmax.f32 %v6826, 0.0
  %v6955 = vmax.f32 %v6827, 0.0
  %v6956 = vmax.f32 %v6828, 0.0
  %v6957 = vmax.f32 %v6829, 0.0
  %v6958 = vmax.f32 %v6830, 0.0
  %v6959 = vmax.f32 %v6831, 0.0
  %v6960 = vmax.f32 %v6832, 0.0
  %v6961 = vmax.f32 %v6833, 0.0
  %v6962 = vmax.f32 %v6834, 0.0
  %v6963 = vmax.f32 %v6835, 0.0
  %v6964 = vmax.f32 %v6836, 0.0
  %v6965 = vmax.f32 %v6837, 0.0
  %v6966 = vmax.f32 %v6838, 0.0
  %v6967 = vmax.f32 %v6839, 0.0
  %v6968 = vmax.f32 %v6840, 0.0
  %v6969 = vmax.f32 %v6841, 0.0
  %v6970 = vmax.f32 %v6842, 0.0
  %v6971 = vmax.f32 %v6843, 0.0
  %v6972 = vmax.f32 %v6844, 0.0
  %v6973 = vmax.f32 %v6845, 0.0
  %v6974 = vmax.f32 %v6846, 0.0
  %v6975 = vmax.f32 %v6847, 0.0
  %v6976 = vmax.f32 %v6848, 0.0
  %v6977 = vmax.f32 %v6849, 0.0
  %v6978 = vmax.f32 %v6850, 0.0
  %v6979 = vmax.f32 %v6851, 0.0
  %v6980 = vmax.f32 %v6852, 0.0
  %v6981 = vmax.f32 %v6853, 0.0
  %v6982 = vmax.f32 %v6854, 0.0
  %v6983 = vmax.f32 %v6855, 0.0
  %v6984 = vmax.f32 %v6856, 0.0
  %v6985 = vmax.f32 %v6857, 0.0
  %v6986 = vmax.f32 %v6858, 0.0
  %v6987 = vmax.f32 %v6859, 0.0
  %v6988 = vmax.f32 %v6860, 0.0
  %v6989 = vmax.f32 %v6861, 0.0
  %v6990 = vmax.f32 %v6862, 0.0
  %v6991 = vmax.f32 %v6863, 0.0
  %v6992 = vmax.f32 %v6864, 0.0
  %v6993 = vmax.f32 %v6865, 0.0
  %v6994 = vmax.f32 %v6866, 0.0
  %v6995 = vmax.f32 %v6867, 0.0
  %v6996 = vmax.f32 %v6868, 0.0
  %v6997 = vmax.f32 %v6869, 0.0
  %v6998 = vmax.f32 %v6870, 0.0
  %v6999 = vmax.f32 %v6871, 0.0
  %v7000 = vmax.f32 %v6872, 0.0
  %v7001 = vmax.f32 %v6873, 0.0
  %v7002 = vmax.f32 %v6874, 0.0
  %v7003 = vmax.f32 %v6875, 0.0
  %v7004 = vmax.f32 %v6876, 0.0
  %v7005 = vpack.c.bf16 %v6881, %v6877
  %v7006 = vpack.c.bf16 %v6882, %v6878
  %v7007 = vpack.c.bf16 %v6883, %v6879
  %v7008 = vpack.c.bf16 %v6884, %v6880
  %v7009 = vpack.c.bf16 %v6889, %v6885
  %v7010 = vpack.c.bf16 %v6890, %v6886
  %v7011 = vpack.c.bf16 %v6891, %v6887
  %v7012 = vpack.c.bf16 %v6892, %v6888
  %v7013 = vpack.c.bf16 %v6897, %v6893
  %v7014 = vpack.c.bf16 %v6898, %v6894
  %v7015 = vpack.c.bf16 %v6899, %v6895
  %v7016 = vpack.c.bf16 %v6900, %v6896
  %v7017 = vpack.c.bf16 %v6905, %v6901
  %v7018 = vpack.c.bf16 %v6906, %v6902
  %v7019 = vpack.c.bf16 %v6907, %v6903
  %v7020 = vpack.c.bf16 %v6908, %v6904
  %v7021 = vpack.c.bf16 %v6913, %v6909
  %v7022 = vpack.c.bf16 %v6914, %v6910
  %v7023 = vpack.c.bf16 %v6915, %v6911
  %v7024 = vpack.c.bf16 %v6916, %v6912
  %v7025 = vpack.c.bf16 %v6921, %v6917
  %v7026 = vpack.c.bf16 %v6922, %v6918
  %v7027 = vpack.c.bf16 %v6923, %v6919
  %v7028 = vpack.c.bf16 %v6924, %v6920
  %v7029 = vpack.c.bf16 %v6929, %v6925
  %v7030 = vpack.c.bf16 %v6930, %v6926
  %v7031 = vpack.c.bf16 %v6931, %v6927
  %v7032 = vpack.c.bf16 %v6932, %v6928
  %v7033 = vpack.c.bf16 %v6937, %v6933
  %v7034 = vpack.c.bf16 %v6938, %v6934
  %v7035 = vpack.c.bf16 %v6939, %v6935
  %v7036 = vpack.c.bf16 %v6940, %v6936
  %v7037 = vpack.c.bf16 %v6945, %v6941
  %v7038 = vpack.c.bf16 %v6946, %v6942
  %v7039 = vpack.c.bf16 %v6947, %v6943
  %v7040 = vpack.c.bf16 %v6948, %v6944
  %v7041 = vpack.c.bf16 %v6953, %v6949
  %v7042 = vpack.c.bf16 %v6954, %v6950
  %v7043 = vpack.c.bf16 %v6955, %v6951
  %v7044 = vpack.c.bf16 %v6956, %v6952
  %v7045 = vpack.c.bf16 %v6961, %v6957
  %v7046 = vpack.c.bf16 %v6962, %v6958
  %v7047 = vpack.c.bf16 %v6963, %v6959
  %v7048 = vpack.c.bf16 %v6964, %v6960
  %v7049 = vpack.c.bf16 %v6969, %v6965
  %v7050 = vpack.c.bf16 %v6970, %v6966
  %v7051 = vpack.c.bf16 %v6971, %v6967
  %v7052 = vpack.c.bf16 %v6972, %v6968
  %v7053 = vpack.c.bf16 %v6977, %v6973
  %v7054 = vpack.c.bf16 %v6978, %v6974
  %v7055 = vpack.c.bf16 %v6979, %v6975
  %v7056 = vpack.c.bf16 %v6980, %v6976
  %v7057 = vpack.c.bf16 %v6985, %v6981
  %v7058 = vpack.c.bf16 %v6986, %v6982
  %v7059 = vpack.c.bf16 %v6987, %v6983
  %v7060 = vpack.c.bf16 %v6988, %v6984
  %v7061 = vpack.c.bf16 %v6993, %v6989
  %v7062 = vpack.c.bf16 %v6994, %v6990
  %v7063 = vpack.c.bf16 %v6995, %v6991
  %v7064 = vpack.c.bf16 %v6996, %v6992
  %v7065 = vpack.c.bf16 %v7001, %v6997
  %v7066 = vpack.c.bf16 %v7002, %v6998
  %v7067 = vpack.c.bf16 %v7003, %v6999
  %v7068 = vpack.c.bf16 %v7004, %v7000
  %v7069 = vld [vmem:[%s3] sm:$0xf]
  %v7070 = vld [vmem:[%s3 + $0x4] sm:$0xf]
  %v7071 = vld [vmem:[%s3 + $0x8] sm:$0xf]
  %v7072 = vld [vmem:[%s3 + $0xc] sm:$0xf]
  %v7073 = vld [vmem:[%s3 + $0x10] sm:$0xf]
  %v7074 = vld [vmem:[%s3 + $0x14] sm:$0xf]
  %v7075 = vld [vmem:[%s3 + $0x18] sm:$0xf]
  %v7076 = vld [vmem:[%s3 + $0x1c] sm:$0xf]
  %v7077 = vld [vmem:[%s3 + $0x20] sm:$0xf]
  %v7078 = vld [vmem:[%s3 + $0x24] sm:$0xf]
  %v7079 = vld [vmem:[%s3 + $0x28] sm:$0xf]
  %v7080 = vld [vmem:[%s3 + $0x2c] sm:$0xf]
  %v7081 = vld [vmem:[%s3 + $0x30] sm:$0xf]
  %v7082 = vld [vmem:[%s3 + $0x34] sm:$0xf]
  %v7083 = vld [vmem:[%s3 + $0x38] sm:$0xf]
  %v7084 = vld [vmem:[%s3 + $0x3c] sm:$0xf]
  %v7085 = vld [vmem:[%s3 + $0x40] sm:$0xf]
  %v7086 = vld [vmem:[%s3 + $0x44] sm:$0xf]
  %v7087 = vld [vmem:[%s3 + $0x48] sm:$0xf]
  %v7088 = vld [vmem:[%s3 + $0x4c] sm:$0xf]
  %v7089 = vld [vmem:[%s3 + $0x50] sm:$0xf]
  %v7090 = vld [vmem:[%s3 + $0x54] sm:$0xf]
  %v7091 = vld [vmem:[%s3 + $0x58] sm:$0xf]
  %v7092 = vld [vmem:[%s3 + $0x5c] sm:$0xf]
  %v7093 = vld [vmem:[%s3 + $0x60] sm:$0xf]
  %v7094 = vld [vmem:[%s3 + $0x64] sm:$0xf]
  %v7095 = vld [vmem:[%s3 + $0x68] sm:$0xf]
  %v7096 = vld [vmem:[%s3 + $0x6c] sm:$0xf]
  %v7097 = vld [vmem:[%s3 + $0x70] sm:$0xf]
  %v7098 = vld [vmem:[%s3 + $0x74] sm:$0xf]
  %v7099 = vld [vmem:[%s3 + $0x78] sm:$0xf]
  %v7100 = vld [vmem:[%s3 + $0x7c] sm:$0xf]
  %v7101 = vld [vmem:[%s3 + $0x80] sm:$0xf]
  %v7102 = vld [vmem:[%s3 + $0x84] sm:$0xf]
  %v7103 = vld [vmem:[%s3 + $0x88] sm:$0xf]
  %v7104 = vld [vmem:[%s3 + $0x8c] sm:$0xf]
  %v7105 = vld [vmem:[%s3 + $0x90] sm:$0xf]
  %v7106 = vld [vmem:[%s3 + $0x94] sm:$0xf]
  %v7107 = vld [vmem:[%s3 + $0x98] sm:$0xf]
  %v7108 = vld [vmem:[%s3 + $0x9c] sm:$0xf]
  %v7109 = vld [vmem:[%s3 + $0xa0] sm:$0xf]
  %v7110 = vld [vmem:[%s3 + $0xa4] sm:$0xf]
  %v7111 = vld [vmem:[%s3 + $0xa8] sm:$0xf]
  %v7112 = vld [vmem:[%s3 + $0xac] sm:$0xf]
  %v7113 = vld [vmem:[%s3 + $0xb0] sm:$0xf]
  %v7114 = vld [vmem:[%s3 + $0xb4] sm:$0xf]
  %v7115 = vld [vmem:[%s3 + $0xb8] sm:$0xf]
  %v7116 = vld [vmem:[%s3 + $0xbc] sm:$0xf]
  %v7117 = vld [vmem:[%s3 + $0xc0] sm:$0xf]
  %v7118 = vld [vmem:[%s3 + $0xc4] sm:$0xf]
  %v7119 = vld [vmem:[%s3 + $0xc8] sm:$0xf]
  %v7120 = vld [vmem:[%s3 + $0xcc] sm:$0xf]
  %v7121 = vld [vmem:[%s3 + $0xd0] sm:$0xf]
  %v7122 = vld [vmem:[%s3 + $0xd4] sm:$0xf]
  %v7123 = vld [vmem:[%s3 + $0xd8] sm:$0xf]
  %v7124 = vld [vmem:[%s3 + $0xdc] sm:$0xf]
  %v7125 = vld [vmem:[%s3 + $0xe0] sm:$0xf]
  %v7126 = vld [vmem:[%s3 + $0xe4] sm:$0xf]
  %v7127 = vld [vmem:[%s3 + $0xe8] sm:$0xf]
  %v7128 = vld [vmem:[%s3 + $0xec] sm:$0xf]
  %v7129 = vld [vmem:[%s3 + $0xf0] sm:$0xf]
  %v7130 = vld [vmem:[%s3 + $0xf4] sm:$0xf]
  %v7131 = vld [vmem:[%s3 + $0xf8] sm:$0xf]
  %v7132 = vld [vmem:[%s3 + $0xfc] sm:$0xf]
  %v7133 = vlaneseq
  %v7134 = vshrl.u32 %v7133, 7
  %v7135 = vsub.s32 4, %v7134
  %v7136 = vrot.slane %v21, %v7135
  %v7201 = vunpack.c.l.b16 %v7069
  %v7202 = vunpack.c.l.b16 %v7070
  %v7203 = vunpack.c.l.b16 %v7071
  %v7204 = vunpack.c.l.b16 %v7072
  %v7205 = vunpack.c.l.b16 %v7073
  %v7206 = vunpack.c.l.b16 %v7074
  %v7207 = vunpack.c.l.b16 %v7075
  %v7208 = vunpack.c.l.b16 %v7076
  %v7209 = vunpack.c.l.b16 %v7077
  %v7210 = vunpack.c.l.b16 %v7078
  %v7211 = vunpack.c.l.b16 %v7079
  %v7212 = vunpack.c.l.b16 %v7080
  %v7213 = vunpack.c.l.b16 %v7081
  %v7214 = vunpack.c.l.b16 %v7082
  %v7215 = vunpack.c.l.b16 %v7083
  %v7216 = vunpack.c.l.b16 %v7084
  %v7217 = vunpack.c.l.b16 %v7085
  %v7218 = vunpack.c.l.b16 %v7086
  %v7219 = vunpack.c.l.b16 %v7087
  %v7220 = vunpack.c.l.b16 %v7088
  %v7221 = vunpack.c.l.b16 %v7089
  %v7222 = vunpack.c.l.b16 %v7090
  %v7223 = vunpack.c.l.b16 %v7091
  %v7224 = vunpack.c.l.b16 %v7092
  %v7225 = vunpack.c.l.b16 %v7093
  %v7226 = vunpack.c.l.b16 %v7094
  %v7227 = vunpack.c.l.b16 %v7095
  %v7228 = vunpack.c.l.b16 %v7096
  %v7229 = vunpack.c.l.b16 %v7097
  %v7230 = vunpack.c.l.b16 %v7098
  %v7231 = vunpack.c.l.b16 %v7099
  %v7232 = vunpack.c.l.b16 %v7100
  %v7233 = vunpack.c.l.b16 %v7101
  %v7234 = vunpack.c.l.b16 %v7102
  %v7235 = vunpack.c.l.b16 %v7103
  %v7236 = vunpack.c.l.b16 %v7104
  %v7237 = vunpack.c.l.b16 %v7105
  %v7238 = vunpack.c.l.b16 %v7106
  %v7239 = vunpack.c.l.b16 %v7107
  %v7240 = vunpack.c.l.b16 %v7108
  %v7241 = vunpack.c.l.b16 %v7109
  %v7242 = vunpack.c.l.b16 %v7110
  %v7243 = vunpack.c.l.b16 %v7111
  %v7244 = vunpack.c.l.b16 %v7112
  %v7245 = vunpack.c.l.b16 %v7113
  %v7246 = vunpack.c.l.b16 %v7114
  %v7247 = vunpack.c.l.b16 %v7115
  %v7248 = vunpack.c.l.b16 %v7116
  %v7249 = vunpack.c.l.b16 %v7117
  %v7250 = vunpack.c.l.b16 %v7118
  %v7251 = vunpack.c.l.b16 %v7119
  %v7252 = vunpack.c.l.b16 %v7120
  %v7253 = vunpack.c.l.b16 %v7121
  %v7254 = vunpack.c.l.b16 %v7122
  %v7255 = vunpack.c.l.b16 %v7123
  %v7256 = vunpack.c.l.b16 %v7124
  %v7257 = vunpack.c.l.b16 %v7125
  %v7258 = vunpack.c.l.b16 %v7126
  %v7259 = vunpack.c.l.b16 %v7127
  %v7260 = vunpack.c.l.b16 %v7128
  %v7261 = vunpack.c.l.b16 %v7129
  %v7262 = vunpack.c.l.b16 %v7130
  %v7263 = vunpack.c.l.b16 %v7131
  %v7264 = vunpack.c.l.b16 %v7132
  %v7265 = vpack.c.b16 %v7202, %v7201
  %v7266 = vpack.c.b16 %v7204, %v7203
  %v7267 = vpack.c.b16 %v7206, %v7205
  %v7268 = vpack.c.b16 %v7208, %v7207
  %v7269 = vpack.c.b16 %v7210, %v7209
  %v7270 = vpack.c.b16 %v7212, %v7211
  %v7271 = vpack.c.b16 %v7214, %v7213
  %v7272 = vpack.c.b16 %v7216, %v7215
  %v7273 = vpack.c.b16 %v7218, %v7217
  %v7274 = vpack.c.b16 %v7220, %v7219
  %v7275 = vpack.c.b16 %v7222, %v7221
  %v7276 = vpack.c.b16 %v7224, %v7223
  %v7277 = vpack.c.b16 %v7226, %v7225
  %v7278 = vpack.c.b16 %v7228, %v7227
  %v7279 = vpack.c.b16 %v7230, %v7229
  %v7280 = vpack.c.b16 %v7232, %v7231
  %v7281 = vpack.c.b16 %v7234, %v7233
  %v7282 = vpack.c.b16 %v7236, %v7235
  %v7283 = vpack.c.b16 %v7238, %v7237
  %v7284 = vpack.c.b16 %v7240, %v7239
  %v7285 = vpack.c.b16 %v7242, %v7241
  %v7286 = vpack.c.b16 %v7244, %v7243
  %v7287 = vpack.c.b16 %v7246, %v7245
  %v7288 = vpack.c.b16 %v7248, %v7247
  %v7289 = vpack.c.b16 %v7250, %v7249
  %v7290 = vpack.c.b16 %v7252, %v7251
  %v7291 = vpack.c.b16 %v7254, %v7253
  %v7292 = vpack.c.b16 %v7256, %v7255
  %v7293 = vpack.c.b16 %v7258, %v7257
  %v7294 = vpack.c.b16 %v7260, %v7259
  %v7295 = vpack.c.b16 %v7262, %v7261
  %v7296 = vpack.c.b16 %v7264, %v7263
  %7329 = vmatprep.subr.bf16.mxu0 0
  %7330 = vmatpush1.bf16.msra.mxu0 %v7265
  %7331 = vmatprep.subr.bf16.mxu0 0
  %7332 = vmatpush1.bf16.msra.mxu0 %v7266
  %7333 = vmatprep.subr.bf16.mxu0 0
  %7334 = vmatpush1.bf16.msra.mxu0 %v7267
  %7335 = vmatprep.subr.bf16.mxu0 0
  %7336 = vmatpush1.bf16.msra.mxu0 %v7268
  %7337 = vmatprep.subr.bf16.mxu0 0
  %7338 = vmatpush1.bf16.msra.mxu0 %v7269
  %7339 = vmatprep.subr.bf16.mxu0 0
  %7340 = vmatpush1.bf16.msra.mxu0 %v7270
  %7341 = vmatprep.subr.bf16.mxu0 0
  %7342 = vmatpush1.bf16.msra.mxu0 %v7271
  %7343 = vmatprep.subr.bf16.mxu0 0
  %7344 = vmatpush1.bf16.msra.mxu0 %v7272
  %7345 = vmatprep.subr.bf16.mxu0 0
  %7346 = vmatpush1.bf16.msra.mxu0 %v7273
  %7347 = vmatprep.subr.bf16.mxu0 0
  %7348 = vmatpush1.bf16.msra.mxu0 %v7274
  %7349 = vmatprep.subr.bf16.mxu0 0
  %7350 = vmatpush1.bf16.msra.mxu0 %v7275
  %7351 = vmatprep.subr.bf16.mxu0 0
  %7352 = vmatpush1.bf16.msra.mxu0 %v7276
  %7353 = vmatprep.subr.bf16.mxu0 0
  %7354 = vmatpush1.bf16.msra.mxu0 %v7277
  %7355 = vmatprep.subr.bf16.mxu0 0
  %7356 = vmatpush1.bf16.msra.mxu0 %v7278
  %7357 = vmatprep.subr.bf16.mxu0 0
  %7358 = vmatpush1.bf16.msra.mxu0 %v7279
  %7359 = vmatprep.subr.bf16.mxu0 0
  %7360 = vmatpush1.bf16.msra.mxu0 %v7280
  %7361 = vmatprep.mubr.bf16.mxu0 %v7006
  %7362 = vmatmul.mubr.bf16.gmra.mrb[0].mxu0 %v7005
  %v7363 = vpop.f32.mrb[0].mxu0
  %v7364 = vadd.f32 %v7136, %v7363
  %v7365 = vpop.f32.mrb[0].mxu0
  %v7366 = vpop.f32.mrb[0].mxu0
  %v7367 = vadd.f32 %v7136, %v7366
  %v7368 = vpop.f32.mrb[0].mxu0
  %7369 = vmatprep.mubr.bf16.mxu0 %v7010
  %7370 = vmatmul.mubr.bf16.gmra.mrb[0].mxu0 %v7009
  %v7371 = vpop.f32.mrb[0].mxu0
  %v7372 = vadd.f32 %v7136, %v7371
  %v7373 = vpop.f32.mrb[0].mxu0
  %v7374 = vpop.f32.mrb[0].mxu0
  %v7375 = vadd.f32 %v7136, %v7374
  %v7376 = vpop.f32.mrb[0].mxu0
  %7377 = vmatprep.mubr.bf16.mxu0 %v7014
  %7378 = vmatmul.mubr.bf16.gmra.mrb[0].mxu0 %v7013
  %v7379 = vpop.f32.mrb[0].mxu0
  %v7380 = vadd.f32 %v7136, %v7379
  %v7381 = vpop.f32.mrb[0].mxu0
  %v7382 = vpop.f32.mrb[0].mxu0
  %v7383 = vadd.f32 %v7136, %v7382
  %v7384 = vpop.f32.mrb[0].mxu0
  %7385 = vmatprep.mubr.bf16.mxu0 %v7018
  %7386 = vmatmul.mubr.bf16.gmra.mrb[0].mxu0 %v7017
  %v7387 = vpop.f32.mrb[0].mxu0
  %v7388 = vadd.f32 %v7136, %v7387
  %v7389 = vpop.f32.mrb[0].mxu0
  %v7390 = vpop.f32.mrb[0].mxu0
  %v7391 = vadd.f32 %v7136, %v7390
  %v7392 = vpop.f32.mrb[0].mxu0
  %7393 = vmatprep.mubr.bf16.mxu0 %v7022
  %7394 = vmatmul.mubr.bf16.gmra.mrb[0].mxu0 %v7021
  %v7395 = vpop.f32.mrb[0].mxu0
  %v7396 = vadd.f32 %v7136, %v7395
  %v7397 = vpop.f32.mrb[0].mxu0
  %v7398 = vpop.f32.mrb[0].mxu0
  %v7399 = vadd.f32 %v7136, %v7398
  %v7400 = vpop.f32.mrb[0].mxu0
  %7401 = vmatprep.mubr.bf16.mxu0 %v7026
  %7402 = vmatmul.mubr.bf16.gmra.mrb[0].mxu0 %v7025
  %v7403 = vpop.f32.mrb[0].mxu0
  %v7404 = vadd.f32 %v7136, %v7403
  %v7405 = vpop.f32.mrb[0].mxu0
  %v7406 = vpop.f32.mrb[0].mxu0
  %v7407 = vadd.f32 %v7136, %v7406
  %v7408 = vpop.f32.mrb[0].mxu0
  %7409 = vmatprep.mubr.bf16.mxu0 %v7030
  %7410 = vmatmul.mubr.bf16.gmra.mrb[0].mxu0 %v7029
  %v7411 = vpop.f32.mrb[0].mxu0
  %v7412 = vadd.f32 %v7136, %v7411
  %v7413 = vpop.f32.mrb[0].mxu0
  %v7414 = vpop.f32.mrb[0].mxu0
  %v7415 = vadd.f32 %v7136, %v7414
  %v7416 = vpop.f32.mrb[0].mxu0
  %7417 = vmatprep.mubr.bf16.mxu0 %v7034
  %7418 = vmatmul.mubr.bf16.gmra.mrb[0].mxu0 %v7033
  %v7419 = vpop.f32.mrb[0].mxu0
  %v7420 = vadd.f32 %v7136, %v7419
  %v7421 = vpop.f32.mrb[0].mxu0
  %v7422 = vpop.f32.mrb[0].mxu0
  %v7423 = vadd.f32 %v7136, %v7422
  %v7424 = vpop.f32.mrb[0].mxu0
  %7425 = vmatprep.mubr.bf16.mxu0 %v7038
  %7426 = vmatmul.mubr.bf16.gmra.mrb[0].mxu0 %v7037
  %v7427 = vpop.f32.mrb[0].mxu0
  %v7428 = vadd.f32 %v7136, %v7427
  %v7429 = vpop.f32.mrb[0].mxu0
  %v7430 = vpop.f32.mrb[0].mxu0
  %v7431 = vadd.f32 %v7136, %v7430
  %v7432 = vpop.f32.mrb[0].mxu0
  %7433 = vmatprep.mubr.bf16.mxu0 %v7042
  %7434 = vmatmul.mubr.bf16.gmra.mrb[0].mxu0 %v7041
  %v7435 = vpop.f32.mrb[0].mxu0
  %v7436 = vadd.f32 %v7136, %v7435
  %v7437 = vpop.f32.mrb[0].mxu0
  %v7438 = vpop.f32.mrb[0].mxu0
  %v7439 = vadd.f32 %v7136, %v7438
  %v7440 = vpop.f32.mrb[0].mxu0
  %7441 = vmatprep.mubr.bf16.mxu0 %v7046
  %7442 = vmatmul.mubr.bf16.gmra.mrb[0].mxu0 %v7045
  %v7443 = vpop.f32.mrb[0].mxu0
  %v7444 = vadd.f32 %v7136, %v7443
  %v7445 = vpop.f32.mrb[0].mxu0
  %v7446 = vpop.f32.mrb[0].mxu0
  %v7447 = vadd.f32 %v7136, %v7446
  %v7448 = vpop.f32.mrb[0].mxu0
  %7449 = vmatprep.mubr.bf16.mxu0 %v7050
  %7450 = vmatmul.mubr.bf16.gmra.mrb[0].mxu0 %v7049
  %v7451 = vpop.f32.mrb[0].mxu0
  %v7452 = vadd.f32 %v7136, %v7451
  %v7453 = vpop.f32.mrb[0].mxu0
  %v7454 = vpop.f32.mrb[0].mxu0
  %v7455 = vadd.f32 %v7136, %v7454
  %v7456 = vpop.f32.mrb[0].mxu0
  %7457 = vmatprep.mubr.bf16.mxu0 %v7054
  %7458 = vmatmul.mubr.bf16.gmra.mrb[0].mxu0 %v7053
  %v7459 = vpop.f32.mrb[0].mxu0
  %v7460 = vadd.f32 %v7136, %v7459
  %v7461 = vpop.f32.mrb[0].mxu0
  %v7462 = vpop.f32.mrb[0].mxu0
  %v7463 = vadd.f32 %v7136, %v7462
  %v7464 = vpop.f32.mrb[0].mxu0
  %7465 = vmatprep.mubr.bf16.mxu0 %v7058
  %7466 = vmatmul.mubr.bf16.gmra.mrb[0].mxu0 %v7057
  %v7467 = vpop.f32.mrb[0].mxu0
  %v7468 = vadd.f32 %v7136, %v7467
  %v7469 = vpop.f32.mrb[0].mxu0
  %v7470 = vpop.f32.mrb[0].mxu0
  %v7471 = vadd.f32 %v7136, %v7470
  %v7472 = vpop.f32.mrb[0].mxu0
  %7473 = vmatprep.mubr.bf16.mxu0 %v7062
  %7474 = vmatmul.mubr.bf16.gmra.mrb[0].mxu0 %v7061
  %v7475 = vpop.f32.mrb[0].mxu0
  %v7476 = vadd.f32 %v7136, %v7475
  %v7477 = vpop.f32.mrb[0].mxu0
  %v7478 = vpop.f32.mrb[0].mxu0
  %v7479 = vadd.f32 %v7136, %v7478
  %v7480 = vpop.f32.mrb[0].mxu0
  %7481 = vmatprep.mubr.bf16.mxu0 %v7066
  %7482 = vmatmul.mubr.bf16.gmra.mrb[0].mxu0 %v7065
  %v7483 = vpop.f32.mrb[0].mxu0
  %v7484 = vadd.f32 %v7136, %v7483
  %v7485 = vpop.f32.mrb[0].mxu0
  %v7486 = vpop.f32.mrb[0].mxu0
  %v7487 = vadd.f32 %v7136, %v7486
  %v7488 = vpop.f32.mrb[0].mxu0
  %7489 = vdwg.mxu0
  %7490 = vmatprep.subr.bf16.mxu0 0
  %7491 = vmatpush1.bf16.msra.mxu0 %v7281
  %7492 = vmatprep.subr.bf16.mxu0 0
  %7493 = vmatpush1.bf16.msra.mxu0 %v7282
  %7494 = vmatprep.subr.bf16.mxu0 0
  %7495 = vmatpush1.bf16.msra.mxu0 %v7283
  %7496 = vmatprep.subr.bf16.mxu0 0
  %7497 = vmatpush1.bf16.msra.mxu0 %v7284
  %7498 = vmatprep.subr.bf16.mxu0 0
  %7499 = vmatpush1.bf16.msra.mxu0 %v7285
  %7500 = vmatprep.subr.bf16.mxu0 0
  %7501 = vmatpush1.bf16.msra.mxu0 %v7286
  %7502 = vmatprep.subr.bf16.mxu0 0
  %7503 = vmatpush1.bf16.msra.mxu0 %v7287
  %7504 = vmatprep.subr.bf16.mxu0 0
  %7505 = vmatpush1.bf16.msra.mxu0 %v7288
  %7506 = vmatprep.subr.bf16.mxu0 0
  %7507 = vmatpush1.bf16.msra.mxu0 %v7289
  %7508 = vmatprep.subr.bf16.mxu0 0
  %7509 = vmatpush1.bf16.msra.mxu0 %v7290
  %7510 = vmatprep.subr.bf16.mxu0 0
  %7511 = vmatpush1.bf16.msra.mxu0 %v7291
  %7512 = vmatprep.subr.bf16.mxu0 0
  %7513 = vmatpush1.bf16.msra.mxu0 %v7292
  %7514 = vmatprep.subr.bf16.mxu0 0
  %7515 = vmatpush1.bf16.msra.mxu0 %v7293
  %7516 = vmatprep.subr.bf16.mxu0 0
  %7517 = vmatpush1.bf16.msra.mxu0 %v7294
  %7518 = vmatprep.subr.bf16.mxu0 0
  %7519 = vmatpush1.bf16.msra.mxu0 %v7295
  %7520 = vmatprep.subr.bf16.mxu0 0
  %7521 = vmatpush1.bf16.msra.mxu0 %v7296
  %7522 = vmatprep.mubr.bf16.mxu0 %v7008
  %7523 = vmatmul.mubr.bf16.gmra.mrb[0].mxu0 %v7007
  %v7524 = vpop.f32.mrb[0].mxu0
  %v7525 = vadd.f32 %v7364, %v7524
  %v7526 = vpop.f32.mrb[0].mxu0
  %v7527 = vpop.f32.mrb[0].mxu0
  %v7528 = vadd.f32 %v7367, %v7527
  %v7529 = vpop.f32.mrb[0].mxu0
  %7530 = vmatprep.mubr.bf16.mxu0 %v7012
  %7531 = vmatmul.mubr.bf16.gmra.mrb[0].mxu0 %v7011
  %v7532 = vpop.f32.mrb[0].mxu0
  %v7533 = vadd.f32 %v7372, %v7532
  %v7534 = vpop.f32.mrb[0].mxu0
  %v7535 = vpop.f32.mrb[0].mxu0
  %v7536 = vadd.f32 %v7375, %v7535
  %v7537 = vpop.f32.mrb[0].mxu0
  %7538 = vmatprep.mubr.bf16.mxu0 %v7016
  %7539 = vmatmul.mubr.bf16.gmra.mrb[0].mxu0 %v7015
  %v7540 = vpop.f32.mrb[0].mxu0
  %v7541 = vadd.f32 %v7380, %v7540
  %v7542 = vpop.f32.mrb[0].mxu0
  %v7543 = vpop.f32.mrb[0].mxu0
  %v7544 = vadd.f32 %v7383, %v7543
  %v7545 = vpop.f32.mrb[0].mxu0
  %7546 = vmatprep.mubr.bf16.mxu0 %v7020
  %7547 = vmatmul.mubr.bf16.gmra.mrb[0].mxu0 %v7019
  %v7548 = vpop.f32.mrb[0].mxu0
  %v7549 = vadd.f32 %v7388, %v7548
  %v7550 = vpop.f32.mrb[0].mxu0
  %v7551 = vpop.f32.mrb[0].mxu0
  %v7552 = vadd.f32 %v7391, %v7551
  %v7553 = vpop.f32.mrb[0].mxu0
  %7554 = vmatprep.mubr.bf16.mxu0 %v7024
  %7555 = vmatmul.mubr.bf16.gmra.mrb[0].mxu0 %v7023
  %v7556 = vpop.f32.mrb[0].mxu0
  %v7557 = vadd.f32 %v7396, %v7556
  %v7558 = vpop.f32.mrb[0].mxu0
  %v7559 = vpop.f32.mrb[0].mxu0
  %v7560 = vadd.f32 %v7399, %v7559
  %v7561 = vpop.f32.mrb[0].mxu0
  %7562 = vmatprep.mubr.bf16.mxu0 %v7028
  %7563 = vmatmul.mubr.bf16.gmra.mrb[0].mxu0 %v7027
  %v7564 = vpop.f32.mrb[0].mxu0
  %v7565 = vadd.f32 %v7404, %v7564
  %v7566 = vpop.f32.mrb[0].mxu0
  %v7567 = vpop.f32.mrb[0].mxu0
  %v7568 = vadd.f32 %v7407, %v7567
  %v7569 = vpop.f32.mrb[0].mxu0
  %7570 = vmatprep.mubr.bf16.mxu0 %v7032
  %7571 = vmatmul.mubr.bf16.gmra.mrb[0].mxu0 %v7031
  %v7572 = vpop.f32.mrb[0].mxu0
  %v7573 = vadd.f32 %v7412, %v7572
  %v7574 = vpop.f32.mrb[0].mxu0
  %v7575 = vpop.f32.mrb[0].mxu0
  %v7576 = vadd.f32 %v7415, %v7575
  %v7577 = vpop.f32.mrb[0].mxu0
  %7578 = vmatprep.mubr.bf16.mxu0 %v7036
  %7579 = vmatmul.mubr.bf16.gmra.mrb[0].mxu0 %v7035
  %v7580 = vpop.f32.mrb[0].mxu0
  %v7581 = vadd.f32 %v7420, %v7580
  %v7582 = vpop.f32.mrb[0].mxu0
  %v7583 = vpop.f32.mrb[0].mxu0
  %v7584 = vadd.f32 %v7423, %v7583
  %v7585 = vpop.f32.mrb[0].mxu0
  %7586 = vmatprep.mubr.bf16.mxu0 %v7040
  %7587 = vmatmul.mubr.bf16.gmra.mrb[0].mxu0 %v7039
  %v7588 = vpop.f32.mrb[0].mxu0
  %v7589 = vadd.f32 %v7428, %v7588
  %v7590 = vpop.f32.mrb[0].mxu0
  %v7591 = vpop.f32.mrb[0].mxu0
  %v7592 = vadd.f32 %v7431, %v7591
  %v7593 = vpop.f32.mrb[0].mxu0
  %7594 = vmatprep.mubr.bf16.mxu0 %v7044
  %7595 = vmatmul.mubr.bf16.gmra.mrb[0].mxu0 %v7043
  %v7596 = vpop.f32.mrb[0].mxu0
  %v7597 = vadd.f32 %v7436, %v7596
  %v7598 = vpop.f32.mrb[0].mxu0
  %v7599 = vpop.f32.mrb[0].mxu0
  %v7600 = vadd.f32 %v7439, %v7599
  %v7601 = vpop.f32.mrb[0].mxu0
  %7602 = vmatprep.mubr.bf16.mxu0 %v7048
  %7603 = vmatmul.mubr.bf16.gmra.mrb[0].mxu0 %v7047
  %v7604 = vpop.f32.mrb[0].mxu0
  %v7605 = vadd.f32 %v7444, %v7604
  %v7606 = vpop.f32.mrb[0].mxu0
  %v7607 = vpop.f32.mrb[0].mxu0
  %v7608 = vadd.f32 %v7447, %v7607
  %v7609 = vpop.f32.mrb[0].mxu0
  %7610 = vmatprep.mubr.bf16.mxu0 %v7052
  %7611 = vmatmul.mubr.bf16.gmra.mrb[0].mxu0 %v7051
  %v7612 = vpop.f32.mrb[0].mxu0
  %v7613 = vadd.f32 %v7452, %v7612
  %v7614 = vpop.f32.mrb[0].mxu0
  %v7615 = vpop.f32.mrb[0].mxu0
  %v7616 = vadd.f32 %v7455, %v7615
  %v7617 = vpop.f32.mrb[0].mxu0
  %7618 = vmatprep.mubr.bf16.mxu0 %v7056
  %7619 = vmatmul.mubr.bf16.gmra.mrb[0].mxu0 %v7055
  %v7620 = vpop.f32.mrb[0].mxu0
  %v7621 = vadd.f32 %v7460, %v7620
  %v7622 = vpop.f32.mrb[0].mxu0
  %v7623 = vpop.f32.mrb[0].mxu0
  %v7624 = vadd.f32 %v7463, %v7623
  %v7625 = vpop.f32.mrb[0].mxu0
  %7626 = vmatprep.mubr.bf16.mxu0 %v7060
  %7627 = vmatmul.mubr.bf16.gmra.mrb[0].mxu0 %v7059
  %v7628 = vpop.f32.mrb[0].mxu0
  %v7629 = vadd.f32 %v7468, %v7628
  %v7630 = vpop.f32.mrb[0].mxu0
  %v7631 = vpop.f32.mrb[0].mxu0
  %v7632 = vadd.f32 %v7471, %v7631
  %v7633 = vpop.f32.mrb[0].mxu0
  %7634 = vmatprep.mubr.bf16.mxu0 %v7064
  %7635 = vmatmul.mubr.bf16.gmra.mrb[0].mxu0 %v7063
  %v7636 = vpop.f32.mrb[0].mxu0
  %v7637 = vadd.f32 %v7476, %v7636
  %v7638 = vpop.f32.mrb[0].mxu0
  %v7639 = vpop.f32.mrb[0].mxu0
  %v7640 = vadd.f32 %v7479, %v7639
  %v7641 = vpop.f32.mrb[0].mxu0
  %7642 = vmatprep.mubr.bf16.mxu0 %v7068
  %7643 = vmatmul.mubr.bf16.gmra.mrb[0].mxu0 %v7067
  %v7644 = vpop.f32.mrb[0].mxu0
  %v7645 = vadd.f32 %v7484, %v7644
  %v7646 = vpop.f32.mrb[0].mxu0
  %v7647 = vpop.f32.mrb[0].mxu0
  %v7648 = vadd.f32 %v7487, %v7647
  %v7649 = vpop.f32.mrb[0].mxu0
  %7650 = vdwg.mxu0
  %7651 = vst [vmem:[%s5] sm:$0xff] %v7525
  %7652 = vst [vmem:[%s5 + $0x8] sm:$0xff] %v7528
  %7653 = vst [vmem:[%s5 + $0x10] sm:$0xff] %v7533
  %7654 = vst [vmem:[%s5 + $0x18] sm:$0xff] %v7536
  %7655 = vst [vmem:[%s5 + $0x20] sm:$0xff] %v7541
  %7656 = vst [vmem:[%s5 + $0x28] sm:$0xff] %v7544
  %7657 = vst [vmem:[%s5 + $0x30] sm:$0xff] %v7549
  %7658 = vst [vmem:[%s5 + $0x38] sm:$0xff] %v7552
  %7659 = vst [vmem:[%s5 + $0x40] sm:$0xff] %v7557
  %7660 = vst [vmem:[%s5 + $0x48] sm:$0xff] %v7560
  %7661 = vst [vmem:[%s5 + $0x50] sm:$0xff] %v7565
  %7662 = vst [vmem:[%s5 + $0x58] sm:$0xff] %v7568
  %7663 = vst [vmem:[%s5 + $0x60] sm:$0xff] %v7573
  %7664 = vst [vmem:[%s5 + $0x68] sm:$0xff] %v7576
  %7665 = vst [vmem:[%s5 + $0x70] sm:$0xff] %v7581
  %7666 = vst [vmem:[%s5 + $0x78] sm:$0xff] %v7584
  %7667 = vst [vmem:[%s5 + $0x80] sm:$0xff] %v7589
  %7668 = vst [vmem:[%s5 + $0x88] sm:$0xff] %v7592
  %7669 = vst [vmem:[%s5 + $0x90] sm:$0xff] %v7597
  %7670 = vst [vmem:[%s5 + $0x98] sm:$0xff] %v7600
  %7671 = vst [vmem:[%s5 + $0xa0] sm:$0xff] %v7605
  %7672 = vst [vmem:[%s5 + $0xa8] sm:$0xff] %v7608
  %7673 = vst [vmem:[%s5 + $0xb0] sm:$0xff] %v7613
  %7674 = vst [vmem:[%s5 + $0xb8] sm:$0xff] %v7616
  %7675 = vst [vmem:[%s5 + $0xc0] sm:$0xff] %v7621
  %7676 = vst [vmem:[%s5 + $0xc8] sm:$0xff] %v7624
  %7677 = vst [vmem:[%s5 + $0xd0] sm:$0xff] %v7629
  %7678 = vst [vmem:[%s5 + $0xd8] sm:$0xff] %v7632
  %7679 = vst [vmem:[%s5 + $0xe0] sm:$0xff] %v7637
  %7680 = vst [vmem:[%s5 + $0xe8] sm:$0xff] %v7640
  %7681 = vst [vmem:[%s5 + $0xf0] sm:$0xff] %v7645
  %7682 = vst [vmem:[%s5 + $0xf8] sm:$0xff] %v7648
  // Predicated region
  $region22: #{net_forward.1} parent=0 // pred_check
    _
  $region23: #{net_forward.1} parent=0 // pred_check_branch
    %7684 = sbr.rel (0) target = $region25
  $region24: #{net_forward.1} parent=0 // pred_region
    _
  $region25: #{net_forward.1} parent=0 // pred_fallthru
    _
  // Predicated region
  $region26: #{net_forward.1} parent=0 // pred_check
    _
  $region27: #{net_forward.1} parent=0 // pred_check_branch
    %7686 = sbr.rel (0) target = $region29
  $region28: #{net_forward.1} parent=0 // pred_region
    _
  $region29: #{net_forward.1} parent=0 // pred_fallthru
    _

</llo_original>
